<compile_context>
chip_gen: v7x
topology: tpu7x:2x2x1
jax: 0.10.0
libtpu: 0.0.40
codegen_flags: <defaults>
</compile_context>

<pallas_src>
import jax
import jax.numpy as jnp
from jax.experimental import pallas as pl
from jax.experimental.pallas import tpu as pltpu

# ----------------------------- config ----------------------------------------
BATCH = 256        # fills the 256-wide MXU M-dimension on v6e/v7x
LATENT_DIM = 32    # opt.latent_dim
CHANNELS = 1       # opt.channels
IMG_SIZE = 8       # opt.img_size
IMG_FLAT = CHANNELS * IMG_SIZE * IMG_SIZE   # = 64
BN_EPS = 0.8       # nn.BatchNorm1d(out_feat, 0.8) -> eps = 0.8
LRELU_SLOPE = 0.2

HIDDEN = (128, 256, 512, 1024)


# ------------------------------ Pallas kernel ---------------------------------
def _generator_kernel(
    z_ref,
    w1_ref, b1_ref,
    w2_hbm, g2_ref, be2_ref,
    w3_hbm, g3_ref, be3_ref,
    w4_hbm, g4_ref, be4_ref,
    w5_hbm, b5_ref,
    out_ref,
    w2_vmem, w3_vmem, w4_vmem, w5_vmem, dma_sem,
):
    # Kick off every weight DMA (HBM -> VMEM scratch) immediately so all transfers
    # overlap with earlier-layer compute; wait for each only right before its matmul.
    cp_w2 = pltpu.make_async_copy(w2_hbm, w2_vmem, dma_sem.at[0])
    cp_w3 = pltpu.make_async_copy(w3_hbm, w3_vmem, dma_sem.at[1])
    cp_w4 = pltpu.make_async_copy(w4_hbm, w4_vmem, dma_sem.at[2])
    cp_w5 = pltpu.make_async_copy(w5_hbm, w5_vmem, dma_sem.at[3])
    cp_w2.start()
    cp_w3.start()
    cp_w4.start()
    cp_w5.start()

    def matmul(x_f32, w_bf16):
        # bf16 operands on the MXU, f32 accumulation.
        return jnp.dot(x_f32.astype(jnp.bfloat16), w_bf16,
                       preferred_element_type=jnp.float32)

    def batchnorm(x, g_ref, be_ref):
        # Training-mode BatchNorm1d: per-feature batch mean / biased variance,
        # eps=0.8. One-pass stats (sum + sum-of-squares) folded into a single
        # per-feature scale/shift. Safe numerically with eps=0.8.
        inv_b = 1.0 / x.shape[0]
        mean = jnp.sum(x, axis=0, keepdims=True) * inv_b
        mean_sq = jnp.sum(x * x, axis=0, keepdims=True) * inv_b
        var = mean_sq - mean * mean
        scale = g_ref[...] * jax.lax.rsqrt(var + BN_EPS)
        shift = be_ref[...] - mean * scale
        return x * scale + shift

    def leaky_relu(x):
        # Valid for slope in (0, 1): max(x, 0.2*x) == leaky_relu(x, 0.2).
        return jnp.maximum(x, LRELU_SLOPE * x)

    x = z_ref[...].astype(jnp.float32)

    # block 1: Linear (+bias) -> LeakyReLU (tiny w1/b1 ride the auto pipeline)
    x = leaky_relu(matmul(x, w1_ref[...]) + b1_ref[...])

    # blocks 2..4: Linear (bias dropped: exactly absorbed by batch-stat BN)
    #              -> BatchNorm1d -> LeakyReLU
    cp_w2.wait()
    x = leaky_relu(batchnorm(matmul(x, w2_vmem[...]), g2_ref, be2_ref))
    cp_w3.wait()
    x = leaky_relu(batchnorm(matmul(x, w3_vmem[...]), g3_ref, be3_ref))
    cp_w4.wait()
    x = leaky_relu(batchnorm(matmul(x, w4_vmem[...]), g4_ref, be4_ref))

    # output head: Linear -> Tanh (exact (B, 64) store; w5 unpadded in HBM).
    cp_w5.wait()
    out_ref[...] = jnp.tanh(matmul(x, w5_vmem[...]) + b5_ref[...]).astype(out_ref.dtype)


# ------------------------------ wrapper ----------------------------------------
def prepare_params(params_f32):
    """One-time conversion of f32 module params to kernel-ready layout:
    bf16 weights (halves HBM traffic); b2/b3/b4 dropped (training-mode BN subtracts
    the batch mean, which absorbs the linear bias exactly)."""
    (w1, b1,
     w2, _b2, g2, be2,
     w3, _b3, g3, be3,
     w4, _b4, g4, be4,
     w5, b5) = params_f32

    bf = lambda w: w.astype(jnp.bfloat16)
    return (bf(w1), b1,
            bf(w2), g2, be2,
            bf(w3), g3, be3,
            bf(w4), g4, be4,
            bf(w5), b5)


@jax.jit
def generator_forward(z, kernel_params):
    """z: (B, LATENT_DIM) f32 -> img: (B, CHANNELS, IMG_SIZE, IMG_SIZE) f32."""
    flat_inputs = [z] + list(kernel_params)

    vmem = pl.BlockSpec(memory_space=pltpu.MemorySpace.VMEM)
    hbm = pl.BlockSpec(memory_space=pl.ANY)
    in_specs = [vmem] * len(flat_inputs)
    # All non-trivial weights stay in HBM and are streamed manually (overlapped
    # with compute): w2 (idx 3), w3 (idx 6), w4 (idx 9), w5 (idx 12).
    in_specs[3] = hbm
    in_specs[6] = hbm
    in_specs[9] = hbm
    in_specs[12] = hbm

    img_flat = pl.pallas_call(
        _generator_kernel,
        out_shape=jax.ShapeDtypeStruct((z.shape[0], IMG_FLAT), jnp.float32),
        in_specs=in_specs,
        out_specs=vmem,
        scratch_shapes=[
            pltpu.VMEM((HIDDEN[0], HIDDEN[1]), jnp.bfloat16),  # w2 staging (128x256)
            pltpu.VMEM((HIDDEN[1], HIDDEN[2]), jnp.bfloat16),  # w3 staging (256x512)
            pltpu.VMEM((HIDDEN[2], HIDDEN[3]), jnp.bfloat16),  # w4 staging (512x1024)
            pltpu.VMEM((HIDDEN[3], IMG_FLAT), jnp.bfloat16),   # w5 staging (1024x64)
            pltpu.SemaphoreType.DMA((4,)),
        ],
    )(*flat_inputs)

    # reshape (img.view(B, C, H, W)) — pure glue, outside kernel.
    return img_flat.reshape(z.shape[0], CHANNELS, IMG_SIZE, IMG_SIZE)


# ------------------------------ parameter init ---------------------------------
def init_params(key):
    """Deterministic init (PyTorch-style uniform(-1/sqrt(fan_in), 1/sqrt(fan_in)))."""
    dims = [LATENT_DIM] + list(HIDDEN) + [IMG_FLAT]
    params = []
    keys = jax.random.split(key, 2 * (len(dims) - 1))

    def lin_init(kw, kb, fan_in, fan_out):
        bound = 1.0 / jnp.sqrt(jnp.float32(fan_in))
        w = jax.random.uniform(kw, (fan_in, fan_out), jnp.float32, -bound, bound)
        b = jax.random.uniform(kb, (1, fan_out), jnp.float32, -bound, bound)
        return w, b

    # layer 1 (no BN)
    w, b = lin_init(keys[0], keys[1], dims[0], dims[1])
    params += [w, b]
    # layers 2-4 (with BN: gamma=1, beta=0 as in nn.BatchNorm1d init)
    for i in range(1, 4):
        w, b = lin_init(keys[2 * i], keys[2 * i + 1], dims[i], dims[i + 1])
        gamma = jnp.ones((1, dims[i + 1]), jnp.float32)
        beta = jnp.zeros((1, dims[i + 1]), jnp.float32)
        params += [w, b, gamma, beta]
    # output layer (no BN)
    w, b = lin_init(keys[8], keys[9], dims[4], dims[5])
    params += [w, b]
    return tuple(params)


# ------------------------------ main --------------------------------------------
if __name__ == "__main__":
    key = jax.random.PRNGKey(0)
    k_z, k_p = jax.random.split(key)

    z = jax.random.normal(k_z, (BATCH, LATENT_DIM), jnp.float32)
    params_f32 = init_params(k_p)
    kernel_params = prepare_params(params_f32)   # bf16 weights, BN biases dropped

    img = generator_forward(z, kernel_params)
    img = jax.block_until_ready(img)

    assert img.shape == (BATCH, CHANNELS, IMG_SIZE, IMG_SIZE), img.shape
    assert img.dtype == jnp.float32
    assert bool(jnp.all(jnp.isfinite(img)))
    assert bool(jnp.all(jnp.abs(img) <= 1.0))  # tanh output range

    print("KERNEL_OK")
</pallas_src>

<mosaic_0001>
module attributes {stable_mosaic.version = 11 : i64} {
  func.func @_generator_kernel(%arg0: memref<256x32xf32, #tpu.memory_space<vmem>>, %arg1: memref<32x128xbf16, #tpu.memory_space<vmem>>, %arg2: memref<1x128xf32, #tpu.memory_space<vmem>>, %arg3: memref<128x256xbf16, #tpu.memory_space<any>>, %arg4: memref<1x256xf32, #tpu.memory_space<vmem>>, %arg5: memref<1x256xf32, #tpu.memory_space<vmem>>, %arg6: memref<256x512xbf16, #tpu.memory_space<any>>, %arg7: memref<1x512xf32, #tpu.memory_space<vmem>>, %arg8: memref<1x512xf32, #tpu.memory_space<vmem>>, %arg9: memref<512x1024xbf16, #tpu.memory_space<any>>, %arg10: memref<1x1024xf32, #tpu.memory_space<vmem>>, %arg11: memref<1x1024xf32, #tpu.memory_space<vmem>>, %arg12: memref<1024x64xbf16, #tpu.memory_space<any>>, %arg13: memref<1x64xf32, #tpu.memory_space<vmem>>, %arg14: memref<256x64xf32, #tpu.memory_space<vmem>>, %arg15: memref<128x256xbf16, #tpu.memory_space<vmem>>, %arg16: memref<256x512xbf16, #tpu.memory_space<vmem>>, %arg17: memref<512x1024xbf16, #tpu.memory_space<vmem>>, %arg18: memref<1024x64xbf16, #tpu.memory_space<vmem>>, %arg19: memref<4x!tpu.dma_semaphore, #tpu.memory_space<semaphore_mem>>) attributes {dimension_semantics = [], scalar_prefetch = 0 : i64, scratch_operands = 5 : i64, tpu.core_type = #tpu.core_type<tc>} {
    %c0_i32 = arith.constant 0 : i32
    %0 = tpu.memref_slice %arg19[%c0_i32] : memref<4x!tpu.dma_semaphore, #tpu.memory_space<semaphore_mem>> -> memref<1x!tpu.dma_semaphore, #tpu.memory_space<semaphore_mem>>
    %1 = tpu.memref_squeeze %0 : memref<1x!tpu.dma_semaphore, #tpu.memory_space<semaphore_mem>> -> memref<!tpu.dma_semaphore, #tpu.memory_space<semaphore_mem>>
    tpu.enqueue_dma source(%arg3 : memref<128x256xbf16, #tpu.memory_space<any>>) target(%arg15 : memref<128x256xbf16, #tpu.memory_space<vmem>>) target_semaphore(%1 : memref<!tpu.dma_semaphore, #tpu.memory_space<semaphore_mem>>)
    %c1_i32 = arith.constant 1 : i32
    %2 = tpu.memref_slice %arg19[%c1_i32] : memref<4x!tpu.dma_semaphore, #tpu.memory_space<semaphore_mem>> -> memref<1x!tpu.dma_semaphore, #tpu.memory_space<semaphore_mem>>
    %3 = tpu.memref_squeeze %2 : memref<1x!tpu.dma_semaphore, #tpu.memory_space<semaphore_mem>> -> memref<!tpu.dma_semaphore, #tpu.memory_space<semaphore_mem>>
    tpu.enqueue_dma source(%arg6 : memref<256x512xbf16, #tpu.memory_space<any>>) target(%arg16 : memref<256x512xbf16, #tpu.memory_space<vmem>>) target_semaphore(%3 : memref<!tpu.dma_semaphore, #tpu.memory_space<semaphore_mem>>)
    %c2_i32 = arith.constant 2 : i32
    %4 = tpu.memref_slice %arg19[%c2_i32] : memref<4x!tpu.dma_semaphore, #tpu.memory_space<semaphore_mem>> -> memref<1x!tpu.dma_semaphore, #tpu.memory_space<semaphore_mem>>
    %5 = tpu.memref_squeeze %4 : memref<1x!tpu.dma_semaphore, #tpu.memory_space<semaphore_mem>> -> memref<!tpu.dma_semaphore, #tpu.memory_space<semaphore_mem>>
    tpu.enqueue_dma source(%arg9 : memref<512x1024xbf16, #tpu.memory_space<any>>) target(%arg17 : memref<512x1024xbf16, #tpu.memory_space<vmem>>) target_semaphore(%5 : memref<!tpu.dma_semaphore, #tpu.memory_space<semaphore_mem>>)
    %c3_i32 = arith.constant 3 : i32
    %6 = tpu.memref_slice %arg19[%c3_i32] : memref<4x!tpu.dma_semaphore, #tpu.memory_space<semaphore_mem>> -> memref<1x!tpu.dma_semaphore, #tpu.memory_space<semaphore_mem>>
    %7 = tpu.memref_squeeze %6 : memref<1x!tpu.dma_semaphore, #tpu.memory_space<semaphore_mem>> -> memref<!tpu.dma_semaphore, #tpu.memory_space<semaphore_mem>>
    tpu.enqueue_dma source(%arg12 : memref<1024x64xbf16, #tpu.memory_space<any>>) target(%arg18 : memref<1024x64xbf16, #tpu.memory_space<vmem>>) target_semaphore(%7 : memref<!tpu.dma_semaphore, #tpu.memory_space<semaphore_mem>>)
    %c0 = arith.constant 0 : index
    %c0_0 = arith.constant 0 : index
    %8 = vector.load %arg0[%c0, %c0_0] : memref<256x32xf32, #tpu.memory_space<vmem>>, vector<256x32xf32>
    %c0_1 = arith.constant 0 : index
    %c0_2 = arith.constant 0 : index
    %9 = vector.load %arg1[%c0_1, %c0_2] : memref<32x128xbf16, #tpu.memory_space<vmem>>, vector<32x128xbf16>
    %10 = arith.truncf %8 : vector<256x32xf32> to vector<256x32xbf16>
    %cst = arith.constant dense<0.000000e+00> : vector<256x128xf32>
    %11 = tpu.matmul %10, %9, %cst {dimension_numbers = #tpu.dot_dimension_numbers<[1], [0], [0], [1], [0, 0, 1, 1], [], []>} : vector<256x32xbf16>, vector<32x128xbf16>, vector<256x128xf32> -> vector<256x128xf32>
    %c0_3 = arith.constant 0 : index
    %c0_4 = arith.constant 0 : index
    %12 = vector.load %arg2[%c0_3, %c0_4] : memref<1x128xf32, #tpu.memory_space<vmem>>, vector<1x128xf32>
    %13 = vector.broadcast %12 : vector<1x128xf32> to vector<256x128xf32>
    %14 = arith.addf %11, %13 : vector<256x128xf32>
    %cst_5 = arith.constant 2.000000e-01 : f32
    %15 = vector.broadcast %cst_5 : f32 to vector<256x128xf32>
    %16 = arith.mulf %15, %14 : vector<256x128xf32>
    %17 = arith.maximumf %14, %16 : vector<256x128xf32>
    %c0_i32_6 = arith.constant 0 : i32
    %18 = tpu.memref_slice %arg19[%c0_i32_6] : memref<4x!tpu.dma_semaphore, #tpu.memory_space<semaphore_mem>> -> memref<1x!tpu.dma_semaphore, #tpu.memory_space<semaphore_mem>>
    %19 = tpu.memref_squeeze %18 : memref<1x!tpu.dma_semaphore, #tpu.memory_space<semaphore_mem>> -> memref<!tpu.dma_semaphore, #tpu.memory_space<semaphore_mem>>
    tpu.wait_dma2 semaphore(%19 : memref<!tpu.dma_semaphore, #tpu.memory_space<semaphore_mem>>) src(%arg3 : memref<128x256xbf16, #tpu.memory_space<any>>) dst(%arg15 : memref<128x256xbf16, #tpu.memory_space<vmem>>)
    %c0_7 = arith.constant 0 : index
    %c0_8 = arith.constant 0 : index
    %20 = vector.load %arg15[%c0_7, %c0_8] : memref<128x256xbf16, #tpu.memory_space<vmem>>, vector<128x256xbf16>
    %21 = arith.truncf %17 : vector<256x128xf32> to vector<256x128xbf16>
    %cst_9 = arith.constant dense<0.000000e+00> : vector<256x256xf32>
    %22 = tpu.matmul %21, %20, %cst_9 {dimension_numbers = #tpu.dot_dimension_numbers<[1], [0], [0], [1], [0, 0, 1, 1], [], []>} : vector<256x128xbf16>, vector<128x256xbf16>, vector<256x256xf32> -> vector<256x256xf32>
    %cst_10 = arith.constant dense<0.000000e+00> : vector<256xf32>
    %23 = vector.multi_reduction <add>, %22, %cst_10 [0] : vector<256x256xf32> to vector<256xf32>
    %24 = vector.shape_cast %23 : vector<256xf32> to vector<1x256xf32>
    %cst_11 = arith.constant 3.906250e-03 : f32
    %25 = vector.broadcast %cst_11 : f32 to vector<1x256xf32>
    %26 = arith.mulf %24, %25 : vector<1x256xf32>
    %27 = arith.mulf %22, %22 : vector<256x256xf32>
    %cst_12 = arith.constant dense<0.000000e+00> : vector<256xf32>
    %28 = vector.multi_reduction <add>, %27, %cst_12 [0] : vector<256x256xf32> to vector<256xf32>
    %29 = vector.shape_cast %28 : vector<256xf32> to vector<1x256xf32>
    %cst_13 = arith.constant 3.906250e-03 : f32
    %30 = vector.broadcast %cst_13 : f32 to vector<1x256xf32>
    %31 = arith.mulf %29, %30 : vector<1x256xf32>
    %32 = arith.mulf %26, %26 : vector<1x256xf32>
    %33 = arith.subf %31, %32 : vector<1x256xf32>
    %c0_14 = arith.constant 0 : index
    %c0_15 = arith.constant 0 : index
    %34 = vector.load %arg4[%c0_14, %c0_15] : memref<1x256xf32, #tpu.memory_space<vmem>>, vector<1x256xf32>
    %cst_16 = arith.constant 8.000000e-01 : f32
    %35 = vector.broadcast %cst_16 : f32 to vector<1x256xf32>
    %36 = arith.addf %33, %35 : vector<1x256xf32>
    %37 = math.rsqrt %36 : vector<1x256xf32>
    %38 = arith.mulf %34, %37 : vector<1x256xf32>
    %c0_17 = arith.constant 0 : index
    %c0_18 = arith.constant 0 : index
    %39 = vector.load %arg5[%c0_17, %c0_18] : memref<1x256xf32, #tpu.memory_space<vmem>>, vector<1x256xf32>
    %40 = arith.mulf %26, %38 : vector<1x256xf32>
    %41 = arith.subf %39, %40 : vector<1x256xf32>
    %42 = vector.broadcast %38 : vector<1x256xf32> to vector<256x256xf32>
    %43 = arith.mulf %22, %42 : vector<256x256xf32>
    %44 = vector.broadcast %41 : vector<1x256xf32> to vector<256x256xf32>
    %45 = arith.addf %43, %44 : vector<256x256xf32>
    %cst_19 = arith.constant 2.000000e-01 : f32
    %46 = vector.broadcast %cst_19 : f32 to vector<256x256xf32>
    %47 = arith.mulf %46, %45 : vector<256x256xf32>
    %48 = arith.maximumf %45, %47 : vector<256x256xf32>
    %c1_i32_20 = arith.constant 1 : i32
    %49 = tpu.memref_slice %arg19[%c1_i32_20] : memref<4x!tpu.dma_semaphore, #tpu.memory_space<semaphore_mem>> -> memref<1x!tpu.dma_semaphore, #tpu.memory_space<semaphore_mem>>
    %50 = tpu.memref_squeeze %49 : memref<1x!tpu.dma_semaphore, #tpu.memory_space<semaphore_mem>> -> memref<!tpu.dma_semaphore, #tpu.memory_space<semaphore_mem>>
    tpu.wait_dma2 semaphore(%50 : memref<!tpu.dma_semaphore, #tpu.memory_space<semaphore_mem>>) src(%arg6 : memref<256x512xbf16, #tpu.memory_space<any>>) dst(%arg16 : memref<256x512xbf16, #tpu.memory_space<vmem>>)
    %c0_21 = arith.constant 0 : index
    %c0_22 = arith.constant 0 : index
    %51 = vector.load %arg16[%c0_21, %c0_22] : memref<256x512xbf16, #tpu.memory_space<vmem>>, vector<256x512xbf16>
    %52 = arith.truncf %48 : vector<256x256xf32> to vector<256x256xbf16>
    %cst_23 = arith.constant dense<0.000000e+00> : vector<256x512xf32>
    %53 = tpu.matmul %52, %51, %cst_23 {dimension_numbers = #tpu.dot_dimension_numbers<[1], [0], [0], [1], [0, 0, 1, 1], [], []>} : vector<256x256xbf16>, vector<256x512xbf16>, vector<256x512xf32> -> vector<256x512xf32>
    %cst_24 = arith.constant dense<0.000000e+00> : vector<512xf32>
    %54 = vector.multi_reduction <add>, %53, %cst_24 [0] : vector<256x512xf32> to vector<512xf32>
    %55 = vector.shape_cast %54 : vector<512xf32> to vector<1x512xf32>
    %cst_25 = arith.constant 3.906250e-03 : f32
    %56 = vector.broadcast %cst_25 : f32 to vector<1x512xf32>
    %57 = arith.mulf %55, %56 : vector<1x512xf32>
    %58 = arith.mulf %53, %53 : vector<256x512xf32>
    %cst_26 = arith.constant dense<0.000000e+00> : vector<512xf32>
    %59 = vector.multi_reduction <add>, %58, %cst_26 [0] : vector<256x512xf32> to vector<512xf32>
    %60 = vector.shape_cast %59 : vector<512xf32> to vector<1x512xf32>
    %cst_27 = arith.constant 3.906250e-03 : f32
    %61 = vector.broadcast %cst_27 : f32 to vector<1x512xf32>
    %62 = arith.mulf %60, %61 : vector<1x512xf32>
    %63 = arith.mulf %57, %57 : vector<1x512xf32>
    %64 = arith.subf %62, %63 : vector<1x512xf32>
    %c0_28 = arith.constant 0 : index
    %c0_29 = arith.constant 0 : index
    %65 = vector.load %arg7[%c0_28, %c0_29] : memref<1x512xf32, #tpu.memory_space<vmem>>, vector<1x512xf32>
    %cst_30 = arith.constant 8.000000e-01 : f32
    %66 = vector.broadcast %cst_30 : f32 to vector<1x512xf32>
    %67 = arith.addf %64, %66 : vector<1x512xf32>
    %68 = math.rsqrt %67 : vector<1x512xf32>
    %69 = arith.mulf %65, %68 : vector<1x512xf32>
    %c0_31 = arith.constant 0 : index
    %c0_32 = arith.constant 0 : index
    %70 = vector.load %arg8[%c0_31, %c0_32] : memref<1x512xf32, #tpu.memory_space<vmem>>, vector<1x512xf32>
    %71 = arith.mulf %57, %69 : vector<1x512xf32>
    %72 = arith.subf %70, %71 : vector<1x512xf32>
    %73 = vector.broadcast %69 : vector<1x512xf32> to vector<256x512xf32>
    %74 = arith.mulf %53, %73 : vector<256x512xf32>
    %75 = vector.broadcast %72 : vector<1x512xf32> to vector<256x512xf32>
    %76 = arith.addf %74, %75 : vector<256x512xf32>
    %cst_33 = arith.constant 2.000000e-01 : f32
    %77 = vector.broadcast %cst_33 : f32 to vector<256x512xf32>
    %78 = arith.mulf %77, %76 : vector<256x512xf32>
    %79 = arith.maximumf %76, %78 : vector<256x512xf32>
    %c2_i32_34 = arith.constant 2 : i32
    %80 = tpu.memref_slice %arg19[%c2_i32_34] : memref<4x!tpu.dma_semaphore, #tpu.memory_space<semaphore_mem>> -> memref<1x!tpu.dma_semaphore, #tpu.memory_space<semaphore_mem>>
    %81 = tpu.memref_squeeze %80 : memref<1x!tpu.dma_semaphore, #tpu.memory_space<semaphore_mem>> -> memref<!tpu.dma_semaphore, #tpu.memory_space<semaphore_mem>>
    tpu.wait_dma2 semaphore(%81 : memref<!tpu.dma_semaphore, #tpu.memory_space<semaphore_mem>>) src(%arg9 : memref<512x1024xbf16, #tpu.memory_space<any>>) dst(%arg17 : memref<512x1024xbf16, #tpu.memory_space<vmem>>)
    %c0_35 = arith.constant 0 : index
    %c0_36 = arith.constant 0 : index
    %82 = vector.load %arg17[%c0_35, %c0_36] : memref<512x1024xbf16, #tpu.memory_space<vmem>>, vector<512x1024xbf16>
    %83 = arith.truncf %79 : vector<256x512xf32> to vector<256x512xbf16>
    %cst_37 = arith.constant dense<0.000000e+00> : vector<256x1024xf32>
    %84 = tpu.matmul %83, %82, %cst_37 {dimension_numbers = #tpu.dot_dimension_numbers<[1], [0], [0], [1], [0, 0, 1, 1], [], []>} : vector<256x512xbf16>, vector<512x1024xbf16>, vector<256x1024xf32> -> vector<256x1024xf32>
    %cst_38 = arith.constant dense<0.000000e+00> : vector<1024xf32>
    %85 = vector.multi_reduction <add>, %84, %cst_38 [0] : vector<256x1024xf32> to vector<1024xf32>
    %86 = vector.shape_cast %85 : vector<1024xf32> to vector<1x1024xf32>
    %cst_39 = arith.constant 3.906250e-03 : f32
    %87 = vector.broadcast %cst_39 : f32 to vector<1x1024xf32>
    %88 = arith.mulf %86, %87 : vector<1x1024xf32>
    %89 = arith.mulf %84, %84 : vector<256x1024xf32>
    %cst_40 = arith.constant dense<0.000000e+00> : vector<1024xf32>
    %90 = vector.multi_reduction <add>, %89, %cst_40 [0] : vector<256x1024xf32> to vector<1024xf32>
    %91 = vector.shape_cast %90 : vector<1024xf32> to vector<1x1024xf32>
    %cst_41 = arith.constant 3.906250e-03 : f32
    %92 = vector.broadcast %cst_41 : f32 to vector<1x1024xf32>
    %93 = arith.mulf %91, %92 : vector<1x1024xf32>
    %94 = arith.mulf %88, %88 : vector<1x1024xf32>
    %95 = arith.subf %93, %94 : vector<1x1024xf32>
    %c0_42 = arith.constant 0 : index
    %c0_43 = arith.constant 0 : index
    %96 = vector.load %arg10[%c0_42, %c0_43] : memref<1x1024xf32, #tpu.memory_space<vmem>>, vector<1x1024xf32>
    %cst_44 = arith.constant 8.000000e-01 : f32
    %97 = vector.broadcast %cst_44 : f32 to vector<1x1024xf32>
    %98 = arith.addf %95, %97 : vector<1x1024xf32>
    %99 = math.rsqrt %98 : vector<1x1024xf32>
    %100 = arith.mulf %96, %99 : vector<1x1024xf32>
    %c0_45 = arith.constant 0 : index
    %c0_46 = arith.constant 0 : index
    %101 = vector.load %arg11[%c0_45, %c0_46] : memref<1x1024xf32, #tpu.memory_space<vmem>>, vector<1x1024xf32>
    %102 = arith.mulf %88, %100 : vector<1x1024xf32>
    %103 = arith.subf %101, %102 : vector<1x1024xf32>
    %104 = vector.broadcast %100 : vector<1x1024xf32> to vector<256x1024xf32>
    %105 = arith.mulf %84, %104 : vector<256x1024xf32>
    %106 = vector.broadcast %103 : vector<1x1024xf32> to vector<256x1024xf32>
    %107 = arith.addf %105, %106 : vector<256x1024xf32>
    %cst_47 = arith.constant 2.000000e-01 : f32
    %108 = vector.broadcast %cst_47 : f32 to vector<256x1024xf32>
    %109 = arith.mulf %108, %107 : vector<256x1024xf32>
    %110 = arith.maximumf %107, %109 : vector<256x1024xf32>
    %c3_i32_48 = arith.constant 3 : i32
    %111 = tpu.memref_slice %arg19[%c3_i32_48] : memref<4x!tpu.dma_semaphore, #tpu.memory_space<semaphore_mem>> -> memref<1x!tpu.dma_semaphore, #tpu.memory_space<semaphore_mem>>
    %112 = tpu.memref_squeeze %111 : memref<1x!tpu.dma_semaphore, #tpu.memory_space<semaphore_mem>> -> memref<!tpu.dma_semaphore, #tpu.memory_space<semaphore_mem>>
    tpu.wait_dma2 semaphore(%112 : memref<!tpu.dma_semaphore, #tpu.memory_space<semaphore_mem>>) src(%arg12 : memref<1024x64xbf16, #tpu.memory_space<any>>) dst(%arg18 : memref<1024x64xbf16, #tpu.memory_space<vmem>>)
    %c0_49 = arith.constant 0 : index
    %c0_50 = arith.constant 0 : index
    %113 = vector.load %arg18[%c0_49, %c0_50] : memref<1024x64xbf16, #tpu.memory_space<vmem>>, vector<1024x64xbf16>
    %114 = arith.truncf %110 : vector<256x1024xf32> to vector<256x1024xbf16>
    %cst_51 = arith.constant dense<0.000000e+00> : vector<256x64xf32>
    %115 = tpu.matmul %114, %113, %cst_51 {dimension_numbers = #tpu.dot_dimension_numbers<[1], [0], [0], [1], [0, 0, 1, 1], [], []>} : vector<256x1024xbf16>, vector<1024x64xbf16>, vector<256x64xf32> -> vector<256x64xf32>
    %c0_52 = arith.constant 0 : index
    %c0_53 = arith.constant 0 : index
    %116 = vector.load %arg13[%c0_52, %c0_53] : memref<1x64xf32, #tpu.memory_space<vmem>>, vector<1x64xf32>
    %117 = vector.broadcast %116 : vector<1x64xf32> to vector<256x64xf32>
    %118 = arith.addf %115, %117 : vector<256x64xf32>
    %119 = math.tanh %118 : vector<256x64xf32>
    %c0_54 = arith.constant 0 : index
    %c0_55 = arith.constant 0 : index
    %120 = vector.load %arg14[%c0_54, %c0_55] : memref<256x64xf32, #tpu.memory_space<vmem>>, vector<256x64xf32>
    tpu.vector_store %arg14[%c0_54, %c0_55], %119 {strides = array<i32>} : memref<256x64xf32, #tpu.memory_space<vmem>>, vector<256x64xf32>,
    return
  }
}

</mosaic_0001>

<llo_original>
// kernel: generator_forward.1
$region0: #{generator_forward.1}
  #allocation0 [shape = 'u32[]', space=smem, size = 0x4, offset = 0x4, fixed_abs, tag = 'smem constant byte address 0x4 - core index']
  #allocation1 [shape = 'u32[144,128]{1,0:T(1,128)}', space=vmem, size = 0x12000, scoped, tag = 'internal scratch']
  #allocation2 [shape = 'bf16[128,256]{1,0:T(16,128)(2,1)}', space=vmem, size = 0x10000, scoped, tag = 'scratch operand']
  #allocation3 [shape = 'bf16[256,512]{1,0:T(16,128)(2,1)}', space=vmem, size = 0x40000, scoped, tag = 'scratch operand']
  #allocation4 [shape = 'bf16[512,1024]{1,0:T(16,128)(2,1)}', space=vmem, size = 0x100000, scoped, tag = 'scratch operand']
  #allocation5 [shape = 'bf16[1024,64]{1,0:T(16,128)(2,1)}', space=vmem, size = 0x40000, scoped, tag = 'scratch operand']
  #allocation6 [shape = 's32[4]{0}', space=sflag, size = 0x10, scoped, tag = 'scratch operand']
  #allocation7 [shape = 's32[]', space=sflag, size = 0x4, offset = 0, fixed_abs, tag = 'sflag constant byte address 0x0 - dummy sync flag']
  #allocation8 [shape = 's32[]', space=sflag, size = 0x4, offset = 0, fixed_abs, tag = 'sflag constant byte address 0x0 - dummy sync flag']
  #allocation9 [shape = 's32[]', space=sflag, size = 0x4, offset = 0, fixed_abs, tag = 'sflag constant byte address 0x0 - dummy sync flag']
  #allocation11 [shape = 's32[]', space=sflag, size = 0x4, offset = 0, fixed_abs, tag = 'sflag constant byte address 0x0 - dummy sync flag']
  %s0 = inlined_call_operand.vmem [shape: f32[256,32], index: 0, kind: input, shape index: {}]
  %s1 = inlined_call_operand.vmem [shape: bf16[32,128], index: 1, kind: input, shape index: {}]
  %s2 = inlined_call_operand.vmem [shape: f32[1,128], index: 2, kind: input, shape index: {}]
  %s3 = inlined_call_operand.vmem [shape: bf16[128,256], index: 3, kind: input, shape index: {}]
  %s4 = inlined_call_operand.vmem [shape: f32[1,256], index: 4, kind: input, shape index: {}]
  %s5 = inlined_call_operand.vmem [shape: f32[1,256], index: 5, kind: input, shape index: {}]
  %s6 = inlined_call_operand.vmem [shape: bf16[256,512], index: 6, kind: input, shape index: {}]
  %s7 = inlined_call_operand.vmem [shape: f32[1,512], index: 7, kind: input, shape index: {}]
  %s8 = inlined_call_operand.vmem [shape: f32[1,512], index: 8, kind: input, shape index: {}]
  %s9 = inlined_call_operand.hbm [shape: bf16[512,1024], index: 9, kind: input, shape index: {}]
  %s10 = inlined_call_operand.vmem [shape: f32[1,1024], index: 10, kind: input, shape index: {}]
  %s11 = inlined_call_operand.vmem [shape: f32[1,1024], index: 11, kind: input, shape index: {}]
  %s12 = inlined_call_operand.vmem [shape: bf16[1024,64], index: 12, kind: input, shape index: {}]
  %s13 = inlined_call_operand.vmem [shape: f32[1,64], index: 13, kind: input, shape index: {}]
  %s14 = inlined_call_operand.vmem [shape: f32[256,64], index: 14, kind: output, shape index: {}]
  %s15 = sld [smem:[#allocation0]]
  $region158: #{generator_forward.1} parent=0
    _
  %s17 = ssub.s32 1, %s15
  %s18 = scalar_select 0, %s17, %s15
  $region1: #{generator_forward.1} parent=0
    #allocation10 [shape = 'u32[9]{0}', space=smem, size = 0x24, scoped, tag = 'DMA stride descriptor']
    // Predicated region
    $region2: #{generator_forward.1} parent=1 // pred_check
      _
    $region3: #{generator_forward.1} parent=1 // pred_check_branch
      %20 = sbr.rel (0) target = $region5
    $region4: #{generator_forward.1} parent=1 // pred_region
      _
    $region5: #{generator_forward.1} parent=1 // pred_fallthru
      _
    // Predicated region
    $region6: #{generator_forward.1} parent=1 // pred_check
      _
    $region7: #{generator_forward.1} parent=1 // pred_check_branch
      %22 = sbr.rel (0) target = $region9
    $region8: #{generator_forward.1} parent=1 // pred_region
      _
    $region9: #{generator_forward.1} parent=1 // pred_fallthru
      _
    // Predicated region
    $region10: #{generator_forward.1} parent=1 // pred_check
      _
    $region11: #{generator_forward.1} parent=1 // pred_check_branch
      %24 = sbr.rel (0) target = $region13
    $region12: #{generator_forward.1} parent=1 // pred_region
      _
    $region13: #{generator_forward.1} parent=1 // pred_fallthru
      _
    // Predicated region
    $region14: #{generator_forward.1} parent=1 // pred_check
      _
    $region15: #{generator_forward.1} parent=1 // pred_check_branch
      %26 = sbr.rel (0) target = $region17
    $region16: #{generator_forward.1} parent=1 // pred_region
      _
    $region17: #{generator_forward.1} parent=1 // pred_fallthru
      _
    // Predicated region
    $region18: #{generator_forward.1} parent=1 // pred_check
      _
    $region19: #{generator_forward.1} parent=1 // pred_check_branch
      %28 = sbr.rel (0) target = $region21
    $region20: #{generator_forward.1} parent=1 // pred_region
      _
    $region21: #{generator_forward.1} parent=1 // pred_fallthru
      _
    // Predicated region
    $region22: #{generator_forward.1} parent=1 // pred_check
      _
    $region23: #{generator_forward.1} parent=1 // pred_check_branch
      %30 = sbr.rel (0) target = $region25
    $region24: #{generator_forward.1} parent=1 // pred_region
      _
    $region25: #{generator_forward.1} parent=1 // pred_fallthru
      _
    // Predicated region
    $region26: #{generator_forward.1} parent=1 // pred_check
      _
    $region27: #{generator_forward.1} parent=1 // pred_check_branch
      %32 = sbr.rel (0) target = $region29
    $region28: #{generator_forward.1} parent=1 // pred_region
      _
    $region29: #{generator_forward.1} parent=1 // pred_fallthru
      _
    // Predicated region
    $region30: #{generator_forward.1} parent=1 // pred_check
      _
    $region31: #{generator_forward.1} parent=1 // pred_check_branch
      %34 = sbr.rel (0) target = $region33
    $region32: #{generator_forward.1} parent=1 // pred_region
      _
    $region33: #{generator_forward.1} parent=1 // pred_fallthru
      _
    // Predicated region
    $region34: #{generator_forward.1} parent=1 // pred_check
      _
    $region35: #{generator_forward.1} parent=1 // pred_check_branch
      %36 = sbr.rel (0) target = $region37
    $region36: #{generator_forward.1} parent=1 // pred_region
      _
    $region37: #{generator_forward.1} parent=1 // pred_fallthru
      _
    // Predicated region
    $region38: #{generator_forward.1} parent=1 // pred_check
      _
    $region39: #{generator_forward.1} parent=1 // pred_check_branch
      %38 = sbr.rel (0) target = $region41
    $region40: #{generator_forward.1} parent=1 // pred_region
      _
    $region41: #{generator_forward.1} parent=1 // pred_fallthru
      _
    %p41 = scmp.lt.u32.totalorder 4, 8
    %p42 = pneg %p41
    // Predicated region
    $region42: #{generator_forward.1} parent=1 // pred_check
      _
    $region43: #{generator_forward.1} parent=1 // pred_check_branch
      %44 = sbr.rel (%p41) target = $region45
    $region44: #{generator_forward.1} parent=1 // pred_region
      %s121 = sand.u32 4, 7
      %p122 = scmp.eq.s32.totalorder %s121, 0
      %p123 = pneg %p122
      // Predicated region
      $region57: #{generator_forward.1} parent=44 // pred_check
        _
      $region58: #{generator_forward.1} parent=44 // pred_check_branch
        %125 = sbr.rel (%p122) target = $region60
      $region59: #{generator_forward.1} parent=44 // pred_region
        %s126 = sand.u32 4, 7
        %s127 = ssub.s32 4, %s126
        %s128 = scalar_lea.vmem %s3, %s127
        %s129 = ssub.s32 4, %s126
        %s130 = scalar_lea.vmem [#allocation2], %s129
        loop: start=0, step=1, limit=1
        $region61: #{generator_forward.1} parent=59 // loop_pre_header
          _
        $region62: #{generator_forward.1} parent=59 // loop_header
          %s132 = sphi 0, %s136
          %p133 = scmp.ge.s32.totalorder %s132, 1
          %s137 = sphi %s3, %s3
          %s138 = sphi [#allocation2], [#allocation2]
        $region63: #{generator_forward.1} parent=59 // loop_header_branch
          %135 = sbr.rel (%p133) target = $region67
        $region64: #{generator_forward.1} parent=59 // loop_body
          _
        $region65: #{generator_forward.1} parent=59 // loop_footer
          %s136 = sadd.s32 1, %s132
        $region66: #{generator_forward.1} parent=59 // loop_footer_branch
          %131 = sbr.rel target = $region62
        $region67: #{generator_forward.1} parent=59 // loop_exit
          _
        %s139 = sshllo.u32 0, %s126
        loop: start=0, step=1, limit=1
        $region68: #{generator_forward.1} parent=59 // loop_pre_header
          _
        $region69: #{generator_forward.1} parent=59 // loop_header
          %s141 = sphi 0, %s145
          %p142 = scmp.ge.s32.totalorder %s141, 1
          %s146 = sphi %s128, %s128
          %s147 = sphi %s130, %s130
        $region70: #{generator_forward.1} parent=59 // loop_header_branch
          %144 = sbr.rel (%p142) target = $region74
        $region71: #{generator_forward.1} parent=59 // loop_body
          %v148 = vld [vmem:[%s146] sm:%s139]
          %149 = vst [vmem:[%s147] sm:%s139] %v148
          %v150 = vld [vmem:[%s146 + $0x8] sm:%s139]
          %151 = vst [vmem:[%s147 + $0x4] sm:%s139] %v150
          %v152 = vld [vmem:[%s146 + $0x4] sm:%s139]
          %153 = vst [vmem:[%s147 + $0x8] sm:%s139] %v152
          %v154 = vld [vmem:[%s146 + $0xc] sm:%s139]
          %155 = vst [vmem:[%s147 + $0xc] sm:%s139] %v154
          %v156 = vld [vmem:[%s146 + $0x10] sm:%s139]
          %157 = vst [vmem:[%s147 + $0x10] sm:%s139] %v156
          %v158 = vld [vmem:[%s146 + $0x18] sm:%s139]
          %159 = vst [vmem:[%s147 + $0x14] sm:%s139] %v158
          %v160 = vld [vmem:[%s146 + $0x14] sm:%s139]
          %161 = vst [vmem:[%s147 + $0x18] sm:%s139] %v160
          %v162 = vld [vmem:[%s146 + $0x1c] sm:%s139]
          %163 = vst [vmem:[%s147 + $0x1c] sm:%s139] %v162
          %v164 = vld [vmem:[%s146 + $0x20] sm:%s139]
          %165 = vst [vmem:[%s147 + $0x20] sm:%s139] %v164
          %v166 = vld [vmem:[%s146 + $0x28] sm:%s139]
          %167 = vst [vmem:[%s147 + $0x24] sm:%s139] %v166
          %v168 = vld [vmem:[%s146 + $0x24] sm:%s139]
          %169 = vst [vmem:[%s147 + $0x28] sm:%s139] %v168
          %v170 = vld [vmem:[%s146 + $0x2c] sm:%s139]
          %171 = vst [vmem:[%s147 + $0x2c] sm:%s139] %v170
          %v172 = vld [vmem:[%s146 + $0x30] sm:%s139]
          %173 = vst [vmem:[%s147 + $0x30] sm:%s139] %v172
          %v174 = vld [vmem:[%s146 + $0x38] sm:%s139]
          %175 = vst [vmem:[%s147 + $0x34] sm:%s139] %v174
          %v176 = vld [vmem:[%s146 + $0x34] sm:%s139]
          %177 = vst [vmem:[%s147 + $0x38] sm:%s139] %v176
          %v178 = vld [vmem:[%s146 + $0x3c] sm:%s139]
          %179 = vst [vmem:[%s147 + $0x3c] sm:%s139] %v178
          %v180 = vld [vmem:[%s146 + $0x40] sm:%s139]
          %181 = vst [vmem:[%s147 + $0x40] sm:%s139] %v180
          %v182 = vld [vmem:[%s146 + $0x48] sm:%s139]
          %183 = vst [vmem:[%s147 + $0x44] sm:%s139] %v182
          %v184 = vld [vmem:[%s146 + $0x44] sm:%s139]
          %185 = vst [vmem:[%s147 + $0x48] sm:%s139] %v184
          %v186 = vld [vmem:[%s146 + $0x4c] sm:%s139]
          %187 = vst [vmem:[%s147 + $0x4c] sm:%s139] %v186
          %v188 = vld [vmem:[%s146 + $0x50] sm:%s139]
          %189 = vst [vmem:[%s147 + $0x50] sm:%s139] %v188
          %v190 = vld [vmem:[%s146 + $0x58] sm:%s139]
          %191 = vst [vmem:[%s147 + $0x54] sm:%s139] %v190
          %v192 = vld [vmem:[%s146 + $0x54] sm:%s139]
          %193 = vst [vmem:[%s147 + $0x58] sm:%s139] %v192
          %v194 = vld [vmem:[%s146 + $0x5c] sm:%s139]
          %195 = vst [vmem:[%s147 + $0x5c] sm:%s139] %v194
          %v196 = vld [vmem:[%s146 + $0x60] sm:%s139]
          %197 = vst [vmem:[%s147 + $0x60] sm:%s139] %v196
          %v198 = vld [vmem:[%s146 + $0x68] sm:%s139]
          %199 = vst [vmem:[%s147 + $0x64] sm:%s139] %v198
          %v200 = vld [vmem:[%s146 + $0x64] sm:%s139]
          %201 = vst [vmem:[%s147 + $0x68] sm:%s139] %v200
          %v202 = vld [vmem:[%s146 + $0x6c] sm:%s139]
          %203 = vst [vmem:[%s147 + $0x6c] sm:%s139] %v202
          %v204 = vld [vmem:[%s146 + $0x70] sm:%s139]
          %205 = vst [vmem:[%s147 + $0x70] sm:%s139] %v204
          %v206 = vld [vmem:[%s146 + $0x78] sm:%s139]
          %207 = vst [vmem:[%s147 + $0x74] sm:%s139] %v206
          %v208 = vld [vmem:[%s146 + $0x74] sm:%s139]
          %209 = vst [vmem:[%s147 + $0x78] sm:%s139] %v208
          %v210 = vld [vmem:[%s146 + $0x7c] sm:%s139]
          %211 = vst [vmem:[%s147 + $0x7c] sm:%s139] %v210
        $region72: #{generator_forward.1} parent=59 // loop_footer
          %s145 = sadd.s32 1, %s141
        $region73: #{generator_forward.1} parent=59 // loop_footer_branch
          %140 = sbr.rel target = $region69
        $region74: #{generator_forward.1} parent=59 // loop_exit
          _
      $region60: #{generator_forward.1} parent=44 // pred_fallthru
        _
    $region45: #{generator_forward.1} parent=1 // pred_fallthru
      _
    // Predicated region
    $region46: #{generator_forward.1} parent=1 // pred_check
      %p45 = pneg %p41
    $region47: #{generator_forward.1} parent=1 // pred_check_branch
      %47 = sbr.rel (%p45) target = $region49
    $region48: #{generator_forward.1} parent=1 // pred_region
      %s48 = sshllo.u32 0, 4
      loop: start=0, step=1, limit=1
      $region50: #{generator_forward.1} parent=48 // loop_pre_header
        _
      $region51: #{generator_forward.1} parent=48 // loop_header
        %s50 = sphi 0, %s54
        %p51 = scmp.ge.s32.totalorder %s50, 1
        %s55 = sphi %s3, %s3
        %s56 = sphi [#allocation2], [#allocation2]
      $region52: #{generator_forward.1} parent=48 // loop_header_branch
        %53 = sbr.rel (%p51) target = $region56
      $region53: #{generator_forward.1} parent=48 // loop_body
        %v57 = vld [vmem:[%s55] sm:%s48]
        %58 = vst [vmem:[%s56] sm:%s48] %v57
        %v59 = vld [vmem:[%s55 + $0x8] sm:%s48]
        %60 = vst [vmem:[%s56 + $0x4] sm:%s48] %v59
        %v61 = vld [vmem:[%s55 + $0x4] sm:%s48]
        %62 = vst [vmem:[%s56 + $0x8] sm:%s48] %v61
        %v63 = vld [vmem:[%s55 + $0xc] sm:%s48]
        %64 = vst [vmem:[%s56 + $0xc] sm:%s48] %v63
        %v65 = vld [vmem:[%s55 + $0x10] sm:%s48]
        %66 = vst [vmem:[%s56 + $0x10] sm:%s48] %v65
        %v67 = vld [vmem:[%s55 + $0x18] sm:%s48]
        %68 = vst [vmem:[%s56 + $0x14] sm:%s48] %v67
        %v69 = vld [vmem:[%s55 + $0x14] sm:%s48]
        %70 = vst [vmem:[%s56 + $0x18] sm:%s48] %v69
        %v71 = vld [vmem:[%s55 + $0x1c] sm:%s48]
        %72 = vst [vmem:[%s56 + $0x1c] sm:%s48] %v71
        %v73 = vld [vmem:[%s55 + $0x20] sm:%s48]
        %74 = vst [vmem:[%s56 + $0x20] sm:%s48] %v73
        %v75 = vld [vmem:[%s55 + $0x28] sm:%s48]
        %76 = vst [vmem:[%s56 + $0x24] sm:%s48] %v75
        %v77 = vld [vmem:[%s55 + $0x24] sm:%s48]
        %78 = vst [vmem:[%s56 + $0x28] sm:%s48] %v77
        %v79 = vld [vmem:[%s55 + $0x2c] sm:%s48]
        %80 = vst [vmem:[%s56 + $0x2c] sm:%s48] %v79
        %v81 = vld [vmem:[%s55 + $0x30] sm:%s48]
        %82 = vst [vmem:[%s56 + $0x30] sm:%s48] %v81
        %v83 = vld [vmem:[%s55 + $0x38] sm:%s48]
        %84 = vst [vmem:[%s56 + $0x34] sm:%s48] %v83
        %v85 = vld [vmem:[%s55 + $0x34] sm:%s48]
        %86 = vst [vmem:[%s56 + $0x38] sm:%s48] %v85
        %v87 = vld [vmem:[%s55 + $0x3c] sm:%s48]
        %88 = vst [vmem:[%s56 + $0x3c] sm:%s48] %v87
        %v89 = vld [vmem:[%s55 + $0x40] sm:%s48]
        %90 = vst [vmem:[%s56 + $0x40] sm:%s48] %v89
        %v91 = vld [vmem:[%s55 + $0x48] sm:%s48]
        %92 = vst [vmem:[%s56 + $0x44] sm:%s48] %v91
        %v93 = vld [vmem:[%s55 + $0x44] sm:%s48]
        %94 = vst [vmem:[%s56 + $0x48] sm:%s48] %v93
        %v95 = vld [vmem:[%s55 + $0x4c] sm:%s48]
        %96 = vst [vmem:[%s56 + $0x4c] sm:%s48] %v95
        %v97 = vld [vmem:[%s55 + $0x50] sm:%s48]
        %98 = vst [vmem:[%s56 + $0x50] sm:%s48] %v97
        %v99 = vld [vmem:[%s55 + $0x58] sm:%s48]
        %100 = vst [vmem:[%s56 + $0x54] sm:%s48] %v99
        %v101 = vld [vmem:[%s55 + $0x54] sm:%s48]
        %102 = vst [vmem:[%s56 + $0x58] sm:%s48] %v101
        %v103 = vld [vmem:[%s55 + $0x5c] sm:%s48]
        %104 = vst [vmem:[%s56 + $0x5c] sm:%s48] %v103
        %v105 = vld [vmem:[%s55 + $0x60] sm:%s48]
        %106 = vst [vmem:[%s56 + $0x60] sm:%s48] %v105
        %v107 = vld [vmem:[%s55 + $0x68] sm:%s48]
        %108 = vst [vmem:[%s56 + $0x64] sm:%s48] %v107
        %v109 = vld [vmem:[%s55 + $0x64] sm:%s48]
        %110 = vst [vmem:[%s56 + $0x68] sm:%s48] %v109
        %v111 = vld [vmem:[%s55 + $0x6c] sm:%s48]
        %112 = vst [vmem:[%s56 + $0x6c] sm:%s48] %v111
        %v113 = vld [vmem:[%s55 + $0x70] sm:%s48]
        %114 = vst [vmem:[%s56 + $0x70] sm:%s48] %v113
        %v115 = vld [vmem:[%s55 + $0x78] sm:%s48]
        %116 = vst [vmem:[%s56 + $0x74] sm:%s48] %v115
        %v117 = vld [vmem:[%s55 + $0x74] sm:%s48]
        %118 = vst [vmem:[%s56 + $0x78] sm:%s48] %v117
        %v119 = vld [vmem:[%s55 + $0x7c] sm:%s48]
        %120 = vst [vmem:[%s56 + $0x7c] sm:%s48] %v119
      $region54: #{generator_forward.1} parent=48 // loop_footer
        %s54 = sadd.s32 1, %s50
      $region55: #{generator_forward.1} parent=48 // loop_footer_branch
        %49 = sbr.rel target = $region51
      $region56: #{generator_forward.1} parent=48 // loop_exit
        _
    $region49: #{generator_forward.1} parent=1 // pred_fallthru
      _
    // Predicated region
    $region75: #{generator_forward.1} parent=1 // pred_check
      _
    $region76: #{generator_forward.1} parent=1 // pred_check_branch
      %214 = sbr.rel (0) target = $region78
    $region77: #{generator_forward.1} parent=1 // pred_region
      %215 = vsyncadd [#allocation6], 2048
    $region78: #{generator_forward.1} parent=1 // pred_fallthru
      _
    %s216 = scalar_lea.sflag [#allocation6], 1
    %p218 = scmp.lt.u32.totalorder 4, 8
    %p219 = pneg %p218
    // Predicated region
    $region79: #{generator_forward.1} parent=1 // pred_check
      _
    $region80: #{generator_forward.1} parent=1 // pred_check_branch
      %221 = sbr.rel (%p218) target = $region82
    $region81: #{generator_forward.1} parent=1 // pred_region
      %s490 = sand.u32 4, 7
      %p491 = scmp.eq.s32.totalorder %s490, 0
      %p492 = pneg %p491
      // Predicated region
      $region94: #{generator_forward.1} parent=81 // pred_check
        _
      $region95: #{generator_forward.1} parent=81 // pred_check_branch
        %494 = sbr.rel (%p491) target = $region97
      $region96: #{generator_forward.1} parent=81 // pred_region
        %s495 = sand.u32 4, 7
        %s496 = ssub.s32 4, %s495
        %s497 = scalar_lea.vmem %s6, %s496
        %s498 = ssub.s32 4, %s495
        %s499 = scalar_lea.vmem [#allocation3], %s498
        loop: start=0, step=1, limit=1
        $region98: #{generator_forward.1} parent=96 // loop_pre_header
          _
        $region99: #{generator_forward.1} parent=96 // loop_header
          %s501 = sphi 0, %s505
          %p502 = scmp.ge.s32.totalorder %s501, 1
          %s506 = sphi %s6, %s6
          %s507 = sphi [#allocation3], [#allocation3]
        $region100: #{generator_forward.1} parent=96 // loop_header_branch
          %504 = sbr.rel (%p502) target = $region104
        $region101: #{generator_forward.1} parent=96 // loop_body
          _
        $region102: #{generator_forward.1} parent=96 // loop_footer
          %s505 = sadd.s32 1, %s501
        $region103: #{generator_forward.1} parent=96 // loop_footer_branch
          %500 = sbr.rel target = $region99
        $region104: #{generator_forward.1} parent=96 // loop_exit
          _
        %s508 = sshllo.u32 0, %s495
        loop: start=0, step=1, limit=1
        $region105: #{generator_forward.1} parent=96 // loop_pre_header
          _
        $region106: #{generator_forward.1} parent=96 // loop_header
          %s510 = sphi 0, %s514
          %p511 = scmp.ge.s32.totalorder %s510, 1
          %s515 = sphi %s497, %s497
          %s516 = sphi %s499, %s499
        $region107: #{generator_forward.1} parent=96 // loop_header_branch
          %513 = sbr.rel (%p511) target = $region111
        $region108: #{generator_forward.1} parent=96 // loop_body
          %v517 = vld [vmem:[%s515] sm:%s508]
          %518 = vst [vmem:[%s516] sm:%s508] %v517
          %v519 = vld [vmem:[%s515 + $0x10] sm:%s508]
          %520 = vst [vmem:[%s516 + $0x4] sm:%s508] %v519
          %v521 = vld [vmem:[%s515 + $0x4] sm:%s508]
          %522 = vst [vmem:[%s516 + $0x8] sm:%s508] %v521
          %v523 = vld [vmem:[%s515 + $0x14] sm:%s508]
          %524 = vst [vmem:[%s516 + $0xc] sm:%s508] %v523
          %v525 = vld [vmem:[%s515 + $0x8] sm:%s508]
          %526 = vst [vmem:[%s516 + $0x10] sm:%s508] %v525
          %v527 = vld [vmem:[%s515 + $0x18] sm:%s508]
          %528 = vst [vmem:[%s516 + $0x14] sm:%s508] %v527
          %v529 = vld [vmem:[%s515 + $0xc] sm:%s508]
          %530 = vst [vmem:[%s516 + $0x18] sm:%s508] %v529
          %v531 = vld [vmem:[%s515 + $0x1c] sm:%s508]
          %532 = vst [vmem:[%s516 + $0x1c] sm:%s508] %v531
          %v533 = vld [vmem:[%s515 + $0x20] sm:%s508]
          %534 = vst [vmem:[%s516 + $0x20] sm:%s508] %v533
          %v535 = vld [vmem:[%s515 + $0x30] sm:%s508]
          %536 = vst [vmem:[%s516 + $0x24] sm:%s508] %v535
          %v537 = vld [vmem:[%s515 + $0x24] sm:%s508]
          %538 = vst [vmem:[%s516 + $0x28] sm:%s508] %v537
          %v539 = vld [vmem:[%s515 + $0x34] sm:%s508]
          %540 = vst [vmem:[%s516 + $0x2c] sm:%s508] %v539
          %v541 = vld [vmem:[%s515 + $0x28] sm:%s508]
          %542 = vst [vmem:[%s516 + $0x30] sm:%s508] %v541
          %v543 = vld [vmem:[%s515 + $0x38] sm:%s508]
          %544 = vst [vmem:[%s516 + $0x34] sm:%s508] %v543
          %v545 = vld [vmem:[%s515 + $0x2c] sm:%s508]
          %546 = vst [vmem:[%s516 + $0x38] sm:%s508] %v545
          %v547 = vld [vmem:[%s515 + $0x3c] sm:%s508]
          %548 = vst [vmem:[%s516 + $0x3c] sm:%s508] %v547
          %v549 = vld [vmem:[%s515 + $0x40] sm:%s508]
          %550 = vst [vmem:[%s516 + $0x40] sm:%s508] %v549
          %v551 = vld [vmem:[%s515 + $0x50] sm:%s508]
          %552 = vst [vmem:[%s516 + $0x44] sm:%s508] %v551
          %v553 = vld [vmem:[%s515 + $0x44] sm:%s508]
          %554 = vst [vmem:[%s516 + $0x48] sm:%s508] %v553
          %v555 = vld [vmem:[%s515 + $0x54] sm:%s508]
          %556 = vst [vmem:[%s516 + $0x4c] sm:%s508] %v555
          %v557 = vld [vmem:[%s515 + $0x48] sm:%s508]
          %558 = vst [vmem:[%s516 + $0x50] sm:%s508] %v557
          %v559 = vld [vmem:[%s515 + $0x58] sm:%s508]
          %560 = vst [vmem:[%s516 + $0x54] sm:%s508] %v559
          %v561 = vld [vmem:[%s515 + $0x4c] sm:%s508]
          %562 = vst [vmem:[%s516 + $0x58] sm:%s508] %v561
          %v563 = vld [vmem:[%s515 + $0x5c] sm:%s508]
          %564 = vst [vmem:[%s516 + $0x5c] sm:%s508] %v563
          %v565 = vld [vmem:[%s515 + $0x60] sm:%s508]
          %566 = vst [vmem:[%s516 + $0x60] sm:%s508] %v565
          %v567 = vld [vmem:[%s515 + $0x70] sm:%s508]
          %568 = vst [vmem:[%s516 + $0x64] sm:%s508] %v567
          %v569 = vld [vmem:[%s515 + $0x64] sm:%s508]
          %570 = vst [vmem:[%s516 + $0x68] sm:%s508] %v569
          %v571 = vld [vmem:[%s515 + $0x74] sm:%s508]
          %572 = vst [vmem:[%s516 + $0x6c] sm:%s508] %v571
          %v573 = vld [vmem:[%s515 + $0x68] sm:%s508]
          %574 = vst [vmem:[%s516 + $0x70] sm:%s508] %v573
          %v575 = vld [vmem:[%s515 + $0x78] sm:%s508]
          %576 = vst [vmem:[%s516 + $0x74] sm:%s508] %v575
          %v577 = vld [vmem:[%s515 + $0x6c] sm:%s508]
          %578 = vst [vmem:[%s516 + $0x78] sm:%s508] %v577
          %v579 = vld [vmem:[%s515 + $0x7c] sm:%s508]
          %580 = vst [vmem:[%s516 + $0x7c] sm:%s508] %v579
          %v581 = vld [vmem:[%s515 + $0x80] sm:%s508]
          %582 = vst [vmem:[%s516 + $0x80] sm:%s508] %v581
          %v583 = vld [vmem:[%s515 + $0x90] sm:%s508]
          %584 = vst [vmem:[%s516 + $0x84] sm:%s508] %v583
          %v585 = vld [vmem:[%s515 + $0x84] sm:%s508]
          %586 = vst [vmem:[%s516 + $0x88] sm:%s508] %v585
          %v587 = vld [vmem:[%s515 + $0x94] sm:%s508]
          %588 = vst [vmem:[%s516 + $0x8c] sm:%s508] %v587
          %v589 = vld [vmem:[%s515 + $0x88] sm:%s508]
          %590 = vst [vmem:[%s516 + $0x90] sm:%s508] %v589
          %v591 = vld [vmem:[%s515 + $0x98] sm:%s508]
          %592 = vst [vmem:[%s516 + $0x94] sm:%s508] %v591
          %v593 = vld [vmem:[%s515 + $0x8c] sm:%s508]
          %594 = vst [vmem:[%s516 + $0x98] sm:%s508] %v593
          %v595 = vld [vmem:[%s515 + $0x9c] sm:%s508]
          %596 = vst [vmem:[%s516 + $0x9c] sm:%s508] %v595
          %v597 = vld [vmem:[%s515 + $0xa0] sm:%s508]
          %598 = vst [vmem:[%s516 + $0xa0] sm:%s508] %v597
          %v599 = vld [vmem:[%s515 + $0xb0] sm:%s508]
          %600 = vst [vmem:[%s516 + $0xa4] sm:%s508] %v599
          %v601 = vld [vmem:[%s515 + $0xa4] sm:%s508]
          %602 = vst [vmem:[%s516 + $0xa8] sm:%s508] %v601
          %v603 = vld [vmem:[%s515 + $0xb4] sm:%s508]
          %604 = vst [vmem:[%s516 + $0xac] sm:%s508] %v603
          %v605 = vld [vmem:[%s515 + $0xa8] sm:%s508]
          %606 = vst [vmem:[%s516 + $0xb0] sm:%s508] %v605
          %v607 = vld [vmem:[%s515 + $0xb8] sm:%s508]
          %608 = vst [vmem:[%s516 + $0xb4] sm:%s508] %v607
          %v609 = vld [vmem:[%s515 + $0xac] sm:%s508]
          %610 = vst [vmem:[%s516 + $0xb8] sm:%s508] %v609
          %v611 = vld [vmem:[%s515 + $0xbc] sm:%s508]
          %612 = vst [vmem:[%s516 + $0xbc] sm:%s508] %v611
          %v613 = vld [vmem:[%s515 + $0xc0] sm:%s508]
          %614 = vst [vmem:[%s516 + $0xc0] sm:%s508] %v613
          %v615 = vld [vmem:[%s515 + $0xd0] sm:%s508]
          %616 = vst [vmem:[%s516 + $0xc4] sm:%s508] %v615
          %v617 = vld [vmem:[%s515 + $0xc4] sm:%s508]
          %618 = vst [vmem:[%s516 + $0xc8] sm:%s508] %v617
          %v619 = vld [vmem:[%s515 + $0xd4] sm:%s508]
          %620 = vst [vmem:[%s516 + $0xcc] sm:%s508] %v619
          %v621 = vld [vmem:[%s515 + $0xc8] sm:%s508]
          %622 = vst [vmem:[%s516 + $0xd0] sm:%s508] %v621
          %v623 = vld [vmem:[%s515 + $0xd8] sm:%s508]
          %624 = vst [vmem:[%s516 + $0xd4] sm:%s508] %v623
          %v625 = vld [vmem:[%s515 + $0xcc] sm:%s508]
          %626 = vst [vmem:[%s516 + $0xd8] sm:%s508] %v625
          %v627 = vld [vmem:[%s515 + $0xdc] sm:%s508]
          %628 = vst [vmem:[%s516 + $0xdc] sm:%s508] %v627
          %v629 = vld [vmem:[%s515 + $0xe0] sm:%s508]
          %630 = vst [vmem:[%s516 + $0xe0] sm:%s508] %v629
          %v631 = vld [vmem:[%s515 + $0xf0] sm:%s508]
          %632 = vst [vmem:[%s516 + $0xe4] sm:%s508] %v631
          %v633 = vld [vmem:[%s515 + $0xe4] sm:%s508]
          %634 = vst [vmem:[%s516 + $0xe8] sm:%s508] %v633
          %v635 = vld [vmem:[%s515 + $0xf4] sm:%s508]
          %636 = vst [vmem:[%s516 + $0xec] sm:%s508] %v635
          %v637 = vld [vmem:[%s515 + $0xe8] sm:%s508]
          %638 = vst [vmem:[%s516 + $0xf0] sm:%s508] %v637
          %v639 = vld [vmem:[%s515 + $0xf8] sm:%s508]
          %640 = vst [vmem:[%s516 + $0xf4] sm:%s508] %v639
          %v641 = vld [vmem:[%s515 + $0xec] sm:%s508]
          %642 = vst [vmem:[%s516 + $0xf8] sm:%s508] %v641
          %v643 = vld [vmem:[%s515 + $0xfc] sm:%s508]
          %644 = vst [vmem:[%s516 + $0xfc] sm:%s508] %v643
          %v645 = vld [vmem:[%s515 + $0x100] sm:%s508]
          %646 = vst [vmem:[%s516 + $0x100] sm:%s508] %v645
          %v647 = vld [vmem:[%s515 + $0x110] sm:%s508]
          %648 = vst [vmem:[%s516 + $0x104] sm:%s508] %v647
          %v649 = vld [vmem:[%s515 + $0x104] sm:%s508]
          %650 = vst [vmem:[%s516 + $0x108] sm:%s508] %v649
          %v651 = vld [vmem:[%s515 + $0x114] sm:%s508]
          %652 = vst [vmem:[%s516 + $0x10c] sm:%s508] %v651
          %v653 = vld [vmem:[%s515 + $0x108] sm:%s508]
          %654 = vst [vmem:[%s516 + $0x110] sm:%s508] %v653
          %v655 = vld [vmem:[%s515 + $0x118] sm:%s508]
          %656 = vst [vmem:[%s516 + $0x114] sm:%s508] %v655
          %v657 = vld [vmem:[%s515 + $0x10c] sm:%s508]
          %658 = vst [vmem:[%s516 + $0x118] sm:%s508] %v657
          %v659 = vld [vmem:[%s515 + $0x11c] sm:%s508]
          %660 = vst [vmem:[%s516 + $0x11c] sm:%s508] %v659
          %v661 = vld [vmem:[%s515 + $0x120] sm:%s508]
          %662 = vst [vmem:[%s516 + $0x120] sm:%s508] %v661
          %v663 = vld [vmem:[%s515 + $0x130] sm:%s508]
          %664 = vst [vmem:[%s516 + $0x124] sm:%s508] %v663
          %v665 = vld [vmem:[%s515 + $0x124] sm:%s508]
          %666 = vst [vmem:[%s516 + $0x128] sm:%s508] %v665
          %v667 = vld [vmem:[%s515 + $0x134] sm:%s508]
          %668 = vst [vmem:[%s516 + $0x12c] sm:%s508] %v667
          %v669 = vld [vmem:[%s515 + $0x128] sm:%s508]
          %670 = vst [vmem:[%s516 + $0x130] sm:%s508] %v669
          %v671 = vld [vmem:[%s515 + $0x138] sm:%s508]
          %672 = vst [vmem:[%s516 + $0x134] sm:%s508] %v671
          %v673 = vld [vmem:[%s515 + $0x12c] sm:%s508]
          %674 = vst [vmem:[%s516 + $0x138] sm:%s508] %v673
          %v675 = vld [vmem:[%s515 + $0x13c] sm:%s508]
          %676 = vst [vmem:[%s516 + $0x13c] sm:%s508] %v675
          %v677 = vld [vmem:[%s515 + $0x140] sm:%s508]
          %678 = vst [vmem:[%s516 + $0x140] sm:%s508] %v677
          %v679 = vld [vmem:[%s515 + $0x150] sm:%s508]
          %680 = vst [vmem:[%s516 + $0x144] sm:%s508] %v679
          %v681 = vld [vmem:[%s515 + $0x144] sm:%s508]
          %682 = vst [vmem:[%s516 + $0x148] sm:%s508] %v681
          %v683 = vld [vmem:[%s515 + $0x154] sm:%s508]
          %684 = vst [vmem:[%s516 + $0x14c] sm:%s508] %v683
          %v685 = vld [vmem:[%s515 + $0x148] sm:%s508]
          %686 = vst [vmem:[%s516 + $0x150] sm:%s508] %v685
          %v687 = vld [vmem:[%s515 + $0x158] sm:%s508]
          %688 = vst [vmem:[%s516 + $0x154] sm:%s508] %v687
          %v689 = vld [vmem:[%s515 + $0x14c] sm:%s508]
          %690 = vst [vmem:[%s516 + $0x158] sm:%s508] %v689
          %v691 = vld [vmem:[%s515 + $0x15c] sm:%s508]
          %692 = vst [vmem:[%s516 + $0x15c] sm:%s508] %v691
          %v693 = vld [vmem:[%s515 + $0x160] sm:%s508]
          %694 = vst [vmem:[%s516 + $0x160] sm:%s508] %v693
          %v695 = vld [vmem:[%s515 + $0x170] sm:%s508]
          %696 = vst [vmem:[%s516 + $0x164] sm:%s508] %v695
          %v697 = vld [vmem:[%s515 + $0x164] sm:%s508]
          %698 = vst [vmem:[%s516 + $0x168] sm:%s508] %v697
          %v699 = vld [vmem:[%s515 + $0x174] sm:%s508]
          %700 = vst [vmem:[%s516 + $0x16c] sm:%s508] %v699
          %v701 = vld [vmem:[%s515 + $0x168] sm:%s508]
          %702 = vst [vmem:[%s516 + $0x170] sm:%s508] %v701
          %v703 = vld [vmem:[%s515 + $0x178] sm:%s508]
          %704 = vst [vmem:[%s516 + $0x174] sm:%s508] %v703
          %v705 = vld [vmem:[%s515 + $0x16c] sm:%s508]
          %706 = vst [vmem:[%s516 + $0x178] sm:%s508] %v705
          %v707 = vld [vmem:[%s515 + $0x17c] sm:%s508]
          %708 = vst [vmem:[%s516 + $0x17c] sm:%s508] %v707
          %v709 = vld [vmem:[%s515 + $0x180] sm:%s508]
          %710 = vst [vmem:[%s516 + $0x180] sm:%s508] %v709
          %v711 = vld [vmem:[%s515 + $0x190] sm:%s508]
          %712 = vst [vmem:[%s516 + $0x184] sm:%s508] %v711
          %v713 = vld [vmem:[%s515 + $0x184] sm:%s508]
          %714 = vst [vmem:[%s516 + $0x188] sm:%s508] %v713
          %v715 = vld [vmem:[%s515 + $0x194] sm:%s508]
          %716 = vst [vmem:[%s516 + $0x18c] sm:%s508] %v715
          %v717 = vld [vmem:[%s515 + $0x188] sm:%s508]
          %718 = vst [vmem:[%s516 + $0x190] sm:%s508] %v717
          %v719 = vld [vmem:[%s515 + $0x198] sm:%s508]
          %720 = vst [vmem:[%s516 + $0x194] sm:%s508] %v719
          %v721 = vld [vmem:[%s515 + $0x18c] sm:%s508]
          %722 = vst [vmem:[%s516 + $0x198] sm:%s508] %v721
          %v723 = vld [vmem:[%s515 + $0x19c] sm:%s508]
          %724 = vst [vmem:[%s516 + $0x19c] sm:%s508] %v723
          %v725 = vld [vmem:[%s515 + $0x1a0] sm:%s508]
          %726 = vst [vmem:[%s516 + $0x1a0] sm:%s508] %v725
          %v727 = vld [vmem:[%s515 + $0x1b0] sm:%s508]
          %728 = vst [vmem:[%s516 + $0x1a4] sm:%s508] %v727
          %v729 = vld [vmem:[%s515 + $0x1a4] sm:%s508]
          %730 = vst [vmem:[%s516 + $0x1a8] sm:%s508] %v729
          %v731 = vld [vmem:[%s515 + $0x1b4] sm:%s508]
          %732 = vst [vmem:[%s516 + $0x1ac] sm:%s508] %v731
          %v733 = vld [vmem:[%s515 + $0x1a8] sm:%s508]
          %734 = vst [vmem:[%s516 + $0x1b0] sm:%s508] %v733
          %v735 = vld [vmem:[%s515 + $0x1b8] sm:%s508]
          %736 = vst [vmem:[%s516 + $0x1b4] sm:%s508] %v735
          %v737 = vld [vmem:[%s515 + $0x1ac] sm:%s508]
          %738 = vst [vmem:[%s516 + $0x1b8] sm:%s508] %v737
          %v739 = vld [vmem:[%s515 + $0x1bc] sm:%s508]
          %740 = vst [vmem:[%s516 + $0x1bc] sm:%s508] %v739
          %v741 = vld [vmem:[%s515 + $0x1c0] sm:%s508]
          %742 = vst [vmem:[%s516 + $0x1c0] sm:%s508] %v741
          %v743 = vld [vmem:[%s515 + $0x1d0] sm:%s508]
          %744 = vst [vmem:[%s516 + $0x1c4] sm:%s508] %v743
          %v745 = vld [vmem:[%s515 + $0x1c4] sm:%s508]
          %746 = vst [vmem:[%s516 + $0x1c8] sm:%s508] %v745
          %v747 = vld [vmem:[%s515 + $0x1d4] sm:%s508]
          %748 = vst [vmem:[%s516 + $0x1cc] sm:%s508] %v747
          %v749 = vld [vmem:[%s515 + $0x1c8] sm:%s508]
          %750 = vst [vmem:[%s516 + $0x1d0] sm:%s508] %v749
          %v751 = vld [vmem:[%s515 + $0x1d8] sm:%s508]
          %752 = vst [vmem:[%s516 + $0x1d4] sm:%s508] %v751
          %v753 = vld [vmem:[%s515 + $0x1cc] sm:%s508]
          %754 = vst [vmem:[%s516 + $0x1d8] sm:%s508] %v753
          %v755 = vld [vmem:[%s515 + $0x1dc] sm:%s508]
          %756 = vst [vmem:[%s516 + $0x1dc] sm:%s508] %v755
          %v757 = vld [vmem:[%s515 + $0x1e0] sm:%s508]
          %758 = vst [vmem:[%s516 + $0x1e0] sm:%s508] %v757
          %v759 = vld [vmem:[%s515 + $0x1f0] sm:%s508]
          %760 = vst [vmem:[%s516 + $0x1e4] sm:%s508] %v759
          %v761 = vld [vmem:[%s515 + $0x1e4] sm:%s508]
          %762 = vst [vmem:[%s516 + $0x1e8] sm:%s508] %v761
          %v763 = vld [vmem:[%s515 + $0x1f4] sm:%s508]
          %764 = vst [vmem:[%s516 + $0x1ec] sm:%s508] %v763
          %v765 = vld [vmem:[%s515 + $0x1e8] sm:%s508]
          %766 = vst [vmem:[%s516 + $0x1f0] sm:%s508] %v765
          %v767 = vld [vmem:[%s515 + $0x1f8] sm:%s508]
          %768 = vst [vmem:[%s516 + $0x1f4] sm:%s508] %v767
          %v769 = vld [vmem:[%s515 + $0x1ec] sm:%s508]
          %770 = vst [vmem:[%s516 + $0x1f8] sm:%s508] %v769
          %v771 = vld [vmem:[%s515 + $0x1fc] sm:%s508]
          %772 = vst [vmem:[%s516 + $0x1fc] sm:%s508] %v771
        $region109: #{generator_forward.1} parent=96 // loop_footer
          %s514 = sadd.s32 1, %s510
        $region110: #{generator_forward.1} parent=96 // loop_footer_branch
          %509 = sbr.rel target = $region106
        $region111: #{generator_forward.1} parent=96 // loop_exit
          _
      $region97: #{generator_forward.1} parent=81 // pred_fallthru
        _
    $region82: #{generator_forward.1} parent=1 // pred_fallthru
      _
    // Predicated region
    $region83: #{generator_forward.1} parent=1 // pred_check
      %p222 = pneg %p218
    $region84: #{generator_forward.1} parent=1 // pred_check_branch
      %224 = sbr.rel (%p222) target = $region86
    $region85: #{generator_forward.1} parent=1 // pred_region
      %s225 = sshllo.u32 0, 4
      loop: start=0, step=1, limit=1
      $region87: #{generator_forward.1} parent=85 // loop_pre_header
        _
      $region88: #{generator_forward.1} parent=85 // loop_header
        %s227 = sphi 0, %s231
        %p228 = scmp.ge.s32.totalorder %s227, 1
        %s232 = sphi %s6, %s6
        %s233 = sphi [#allocation3], [#allocation3]
      $region89: #{generator_forward.1} parent=85 // loop_header_branch
        %230 = sbr.rel (%p228) target = $region93
      $region90: #{generator_forward.1} parent=85 // loop_body
        %v234 = vld [vmem:[%s232] sm:%s225]
        %235 = vst [vmem:[%s233] sm:%s225] %v234
        %v236 = vld [vmem:[%s232 + $0x10] sm:%s225]
        %237 = vst [vmem:[%s233 + $0x4] sm:%s225] %v236
        %v238 = vld [vmem:[%s232 + $0x4] sm:%s225]
        %239 = vst [vmem:[%s233 + $0x8] sm:%s225] %v238
        %v240 = vld [vmem:[%s232 + $0x14] sm:%s225]
        %241 = vst [vmem:[%s233 + $0xc] sm:%s225] %v240
        %v242 = vld [vmem:[%s232 + $0x8] sm:%s225]
        %243 = vst [vmem:[%s233 + $0x10] sm:%s225] %v242
        %v244 = vld [vmem:[%s232 + $0x18] sm:%s225]
        %245 = vst [vmem:[%s233 + $0x14] sm:%s225] %v244
        %v246 = vld [vmem:[%s232 + $0xc] sm:%s225]
        %247 = vst [vmem:[%s233 + $0x18] sm:%s225] %v246
        %v248 = vld [vmem:[%s232 + $0x1c] sm:%s225]
        %249 = vst [vmem:[%s233 + $0x1c] sm:%s225] %v248
        %v250 = vld [vmem:[%s232 + $0x20] sm:%s225]
        %251 = vst [vmem:[%s233 + $0x20] sm:%s225] %v250
        %v252 = vld [vmem:[%s232 + $0x30] sm:%s225]
        %253 = vst [vmem:[%s233 + $0x24] sm:%s225] %v252
        %v254 = vld [vmem:[%s232 + $0x24] sm:%s225]
        %255 = vst [vmem:[%s233 + $0x28] sm:%s225] %v254
        %v256 = vld [vmem:[%s232 + $0x34] sm:%s225]
        %257 = vst [vmem:[%s233 + $0x2c] sm:%s225] %v256
        %v258 = vld [vmem:[%s232 + $0x28] sm:%s225]
        %259 = vst [vmem:[%s233 + $0x30] sm:%s225] %v258
        %v260 = vld [vmem:[%s232 + $0x38] sm:%s225]
        %261 = vst [vmem:[%s233 + $0x34] sm:%s225] %v260
        %v262 = vld [vmem:[%s232 + $0x2c] sm:%s225]
        %263 = vst [vmem:[%s233 + $0x38] sm:%s225] %v262
        %v264 = vld [vmem:[%s232 + $0x3c] sm:%s225]
        %265 = vst [vmem:[%s233 + $0x3c] sm:%s225] %v264
        %v266 = vld [vmem:[%s232 + $0x40] sm:%s225]
        %267 = vst [vmem:[%s233 + $0x40] sm:%s225] %v266
        %v268 = vld [vmem:[%s232 + $0x50] sm:%s225]
        %269 = vst [vmem:[%s233 + $0x44] sm:%s225] %v268
        %v270 = vld [vmem:[%s232 + $0x44] sm:%s225]
        %271 = vst [vmem:[%s233 + $0x48] sm:%s225] %v270
        %v272 = vld [vmem:[%s232 + $0x54] sm:%s225]
        %273 = vst [vmem:[%s233 + $0x4c] sm:%s225] %v272
        %v274 = vld [vmem:[%s232 + $0x48] sm:%s225]
        %275 = vst [vmem:[%s233 + $0x50] sm:%s225] %v274
        %v276 = vld [vmem:[%s232 + $0x58] sm:%s225]
        %277 = vst [vmem:[%s233 + $0x54] sm:%s225] %v276
        %v278 = vld [vmem:[%s232 + $0x4c] sm:%s225]
        %279 = vst [vmem:[%s233 + $0x58] sm:%s225] %v278
        %v280 = vld [vmem:[%s232 + $0x5c] sm:%s225]
        %281 = vst [vmem:[%s233 + $0x5c] sm:%s225] %v280
        %v282 = vld [vmem:[%s232 + $0x60] sm:%s225]
        %283 = vst [vmem:[%s233 + $0x60] sm:%s225] %v282
        %v284 = vld [vmem:[%s232 + $0x70] sm:%s225]
        %285 = vst [vmem:[%s233 + $0x64] sm:%s225] %v284
        %v286 = vld [vmem:[%s232 + $0x64] sm:%s225]
        %287 = vst [vmem:[%s233 + $0x68] sm:%s225] %v286
        %v288 = vld [vmem:[%s232 + $0x74] sm:%s225]
        %289 = vst [vmem:[%s233 + $0x6c] sm:%s225] %v288
        %v290 = vld [vmem:[%s232 + $0x68] sm:%s225]
        %291 = vst [vmem:[%s233 + $0x70] sm:%s225] %v290
        %v292 = vld [vmem:[%s232 + $0x78] sm:%s225]
        %293 = vst [vmem:[%s233 + $0x74] sm:%s225] %v292
        %v294 = vld [vmem:[%s232 + $0x6c] sm:%s225]
        %295 = vst [vmem:[%s233 + $0x78] sm:%s225] %v294
        %v296 = vld [vmem:[%s232 + $0x7c] sm:%s225]
        %297 = vst [vmem:[%s233 + $0x7c] sm:%s225] %v296
        %v298 = vld [vmem:[%s232 + $0x80] sm:%s225]
        %299 = vst [vmem:[%s233 + $0x80] sm:%s225] %v298
        %v300 = vld [vmem:[%s232 + $0x90] sm:%s225]
        %301 = vst [vmem:[%s233 + $0x84] sm:%s225] %v300
        %v302 = vld [vmem:[%s232 + $0x84] sm:%s225]
        %303 = vst [vmem:[%s233 + $0x88] sm:%s225] %v302
        %v304 = vld [vmem:[%s232 + $0x94] sm:%s225]
        %305 = vst [vmem:[%s233 + $0x8c] sm:%s225] %v304
        %v306 = vld [vmem:[%s232 + $0x88] sm:%s225]
        %307 = vst [vmem:[%s233 + $0x90] sm:%s225] %v306
        %v308 = vld [vmem:[%s232 + $0x98] sm:%s225]
        %309 = vst [vmem:[%s233 + $0x94] sm:%s225] %v308
        %v310 = vld [vmem:[%s232 + $0x8c] sm:%s225]
        %311 = vst [vmem:[%s233 + $0x98] sm:%s225] %v310
        %v312 = vld [vmem:[%s232 + $0x9c] sm:%s225]
        %313 = vst [vmem:[%s233 + $0x9c] sm:%s225] %v312
        %v314 = vld [vmem:[%s232 + $0xa0] sm:%s225]
        %315 = vst [vmem:[%s233 + $0xa0] sm:%s225] %v314
        %v316 = vld [vmem:[%s232 + $0xb0] sm:%s225]
        %317 = vst [vmem:[%s233 + $0xa4] sm:%s225] %v316
        %v318 = vld [vmem:[%s232 + $0xa4] sm:%s225]
        %319 = vst [vmem:[%s233 + $0xa8] sm:%s225] %v318
        %v320 = vld [vmem:[%s232 + $0xb4] sm:%s225]
        %321 = vst [vmem:[%s233 + $0xac] sm:%s225] %v320
        %v322 = vld [vmem:[%s232 + $0xa8] sm:%s225]
        %323 = vst [vmem:[%s233 + $0xb0] sm:%s225] %v322
        %v324 = vld [vmem:[%s232 + $0xb8] sm:%s225]
        %325 = vst [vmem:[%s233 + $0xb4] sm:%s225] %v324
        %v326 = vld [vmem:[%s232 + $0xac] sm:%s225]
        %327 = vst [vmem:[%s233 + $0xb8] sm:%s225] %v326
        %v328 = vld [vmem:[%s232 + $0xbc] sm:%s225]
        %329 = vst [vmem:[%s233 + $0xbc] sm:%s225] %v328
        %v330 = vld [vmem:[%s232 + $0xc0] sm:%s225]
        %331 = vst [vmem:[%s233 + $0xc0] sm:%s225] %v330
        %v332 = vld [vmem:[%s232 + $0xd0] sm:%s225]
        %333 = vst [vmem:[%s233 + $0xc4] sm:%s225] %v332
        %v334 = vld [vmem:[%s232 + $0xc4] sm:%s225]
        %335 = vst [vmem:[%s233 + $0xc8] sm:%s225] %v334
        %v336 = vld [vmem:[%s232 + $0xd4] sm:%s225]
        %337 = vst [vmem:[%s233 + $0xcc] sm:%s225] %v336
        %v338 = vld [vmem:[%s232 + $0xc8] sm:%s225]
        %339 = vst [vmem:[%s233 + $0xd0] sm:%s225] %v338
        %v340 = vld [vmem:[%s232 + $0xd8] sm:%s225]
        %341 = vst [vmem:[%s233 + $0xd4] sm:%s225] %v340
        %v342 = vld [vmem:[%s232 + $0xcc] sm:%s225]
        %343 = vst [vmem:[%s233 + $0xd8] sm:%s225] %v342
        %v344 = vld [vmem:[%s232 + $0xdc] sm:%s225]
        %345 = vst [vmem:[%s233 + $0xdc] sm:%s225] %v344
        %v346 = vld [vmem:[%s232 + $0xe0] sm:%s225]
        %347 = vst [vmem:[%s233 + $0xe0] sm:%s225] %v346
        %v348 = vld [vmem:[%s232 + $0xf0] sm:%s225]
        %349 = vst [vmem:[%s233 + $0xe4] sm:%s225] %v348
        %v350 = vld [vmem:[%s232 + $0xe4] sm:%s225]
        %351 = vst [vmem:[%s233 + $0xe8] sm:%s225] %v350
        %v352 = vld [vmem:[%s232 + $0xf4] sm:%s225]
        %353 = vst [vmem:[%s233 + $0xec] sm:%s225] %v352
        %v354 = vld [vmem:[%s232 + $0xe8] sm:%s225]
        %355 = vst [vmem:[%s233 + $0xf0] sm:%s225] %v354
        %v356 = vld [vmem:[%s232 + $0xf8] sm:%s225]
        %357 = vst [vmem:[%s233 + $0xf4] sm:%s225] %v356
        %v358 = vld [vmem:[%s232 + $0xec] sm:%s225]
        %359 = vst [vmem:[%s233 + $0xf8] sm:%s225] %v358
        %v360 = vld [vmem:[%s232 + $0xfc] sm:%s225]
        %361 = vst [vmem:[%s233 + $0xfc] sm:%s225] %v360
        %v362 = vld [vmem:[%s232 + $0x100] sm:%s225]
        %363 = vst [vmem:[%s233 + $0x100] sm:%s225] %v362
        %v364 = vld [vmem:[%s232 + $0x110] sm:%s225]
        %365 = vst [vmem:[%s233 + $0x104] sm:%s225] %v364
        %v366 = vld [vmem:[%s232 + $0x104] sm:%s225]
        %367 = vst [vmem:[%s233 + $0x108] sm:%s225] %v366
        %v368 = vld [vmem:[%s232 + $0x114] sm:%s225]
        %369 = vst [vmem:[%s233 + $0x10c] sm:%s225] %v368
        %v370 = vld [vmem:[%s232 + $0x108] sm:%s225]
        %371 = vst [vmem:[%s233 + $0x110] sm:%s225] %v370
        %v372 = vld [vmem:[%s232 + $0x118] sm:%s225]
        %373 = vst [vmem:[%s233 + $0x114] sm:%s225] %v372
        %v374 = vld [vmem:[%s232 + $0x10c] sm:%s225]
        %375 = vst [vmem:[%s233 + $0x118] sm:%s225] %v374
        %v376 = vld [vmem:[%s232 + $0x11c] sm:%s225]
        %377 = vst [vmem:[%s233 + $0x11c] sm:%s225] %v376
        %v378 = vld [vmem:[%s232 + $0x120] sm:%s225]
        %379 = vst [vmem:[%s233 + $0x120] sm:%s225] %v378
        %v380 = vld [vmem:[%s232 + $0x130] sm:%s225]
        %381 = vst [vmem:[%s233 + $0x124] sm:%s225] %v380
        %v382 = vld [vmem:[%s232 + $0x124] sm:%s225]
        %383 = vst [vmem:[%s233 + $0x128] sm:%s225] %v382
        %v384 = vld [vmem:[%s232 + $0x134] sm:%s225]
        %385 = vst [vmem:[%s233 + $0x12c] sm:%s225] %v384
        %v386 = vld [vmem:[%s232 + $0x128] sm:%s225]
        %387 = vst [vmem:[%s233 + $0x130] sm:%s225] %v386
        %v388 = vld [vmem:[%s232 + $0x138] sm:%s225]
        %389 = vst [vmem:[%s233 + $0x134] sm:%s225] %v388
        %v390 = vld [vmem:[%s232 + $0x12c] sm:%s225]
        %391 = vst [vmem:[%s233 + $0x138] sm:%s225] %v390
        %v392 = vld [vmem:[%s232 + $0x13c] sm:%s225]
        %393 = vst [vmem:[%s233 + $0x13c] sm:%s225] %v392
        %v394 = vld [vmem:[%s232 + $0x140] sm:%s225]
        %395 = vst [vmem:[%s233 + $0x140] sm:%s225] %v394
        %v396 = vld [vmem:[%s232 + $0x150] sm:%s225]
        %397 = vst [vmem:[%s233 + $0x144] sm:%s225] %v396
        %v398 = vld [vmem:[%s232 + $0x144] sm:%s225]
        %399 = vst [vmem:[%s233 + $0x148] sm:%s225] %v398
        %v400 = vld [vmem:[%s232 + $0x154] sm:%s225]
        %401 = vst [vmem:[%s233 + $0x14c] sm:%s225] %v400
        %v402 = vld [vmem:[%s232 + $0x148] sm:%s225]
        %403 = vst [vmem:[%s233 + $0x150] sm:%s225] %v402
        %v404 = vld [vmem:[%s232 + $0x158] sm:%s225]
        %405 = vst [vmem:[%s233 + $0x154] sm:%s225] %v404
        %v406 = vld [vmem:[%s232 + $0x14c] sm:%s225]
        %407 = vst [vmem:[%s233 + $0x158] sm:%s225] %v406
        %v408 = vld [vmem:[%s232 + $0x15c] sm:%s225]
        %409 = vst [vmem:[%s233 + $0x15c] sm:%s225] %v408
        %v410 = vld [vmem:[%s232 + $0x160] sm:%s225]
        %411 = vst [vmem:[%s233 + $0x160] sm:%s225] %v410
        %v412 = vld [vmem:[%s232 + $0x170] sm:%s225]
        %413 = vst [vmem:[%s233 + $0x164] sm:%s225] %v412
        %v414 = vld [vmem:[%s232 + $0x164] sm:%s225]
        %415 = vst [vmem:[%s233 + $0x168] sm:%s225] %v414
        %v416 = vld [vmem:[%s232 + $0x174] sm:%s225]
        %417 = vst [vmem:[%s233 + $0x16c] sm:%s225] %v416
        %v418 = vld [vmem:[%s232 + $0x168] sm:%s225]
        %419 = vst [vmem:[%s233 + $0x170] sm:%s225] %v418
        %v420 = vld [vmem:[%s232 + $0x178] sm:%s225]
        %421 = vst [vmem:[%s233 + $0x174] sm:%s225] %v420
        %v422 = vld [vmem:[%s232 + $0x16c] sm:%s225]
        %423 = vst [vmem:[%s233 + $0x178] sm:%s225] %v422
        %v424 = vld [vmem:[%s232 + $0x17c] sm:%s225]
        %425 = vst [vmem:[%s233 + $0x17c] sm:%s225] %v424
        %v426 = vld [vmem:[%s232 + $0x180] sm:%s225]
        %427 = vst [vmem:[%s233 + $0x180] sm:%s225] %v426
        %v428 = vld [vmem:[%s232 + $0x190] sm:%s225]
        %429 = vst [vmem:[%s233 + $0x184] sm:%s225] %v428
        %v430 = vld [vmem:[%s232 + $0x184] sm:%s225]
        %431 = vst [vmem:[%s233 + $0x188] sm:%s225] %v430
        %v432 = vld [vmem:[%s232 + $0x194] sm:%s225]
        %433 = vst [vmem:[%s233 + $0x18c] sm:%s225] %v432
        %v434 = vld [vmem:[%s232 + $0x188] sm:%s225]
        %435 = vst [vmem:[%s233 + $0x190] sm:%s225] %v434
        %v436 = vld [vmem:[%s232 + $0x198] sm:%s225]
        %437 = vst [vmem:[%s233 + $0x194] sm:%s225] %v436
        %v438 = vld [vmem:[%s232 + $0x18c] sm:%s225]
        %439 = vst [vmem:[%s233 + $0x198] sm:%s225] %v438
        %v440 = vld [vmem:[%s232 + $0x19c] sm:%s225]
        %441 = vst [vmem:[%s233 + $0x19c] sm:%s225] %v440
        %v442 = vld [vmem:[%s232 + $0x1a0] sm:%s225]
        %443 = vst [vmem:[%s233 + $0x1a0] sm:%s225] %v442
        %v444 = vld [vmem:[%s232 + $0x1b0] sm:%s225]
        %445 = vst [vmem:[%s233 + $0x1a4] sm:%s225] %v444
        %v446 = vld [vmem:[%s232 + $0x1a4] sm:%s225]
        %447 = vst [vmem:[%s233 + $0x1a8] sm:%s225] %v446
        %v448 = vld [vmem:[%s232 + $0x1b4] sm:%s225]
        %449 = vst [vmem:[%s233 + $0x1ac] sm:%s225] %v448
        %v450 = vld [vmem:[%s232 + $0x1a8] sm:%s225]
        %451 = vst [vmem:[%s233 + $0x1b0] sm:%s225] %v450
        %v452 = vld [vmem:[%s232 + $0x1b8] sm:%s225]
        %453 = vst [vmem:[%s233 + $0x1b4] sm:%s225] %v452
        %v454 = vld [vmem:[%s232 + $0x1ac] sm:%s225]
        %455 = vst [vmem:[%s233 + $0x1b8] sm:%s225] %v454
        %v456 = vld [vmem:[%s232 + $0x1bc] sm:%s225]
        %457 = vst [vmem:[%s233 + $0x1bc] sm:%s225] %v456
        %v458 = vld [vmem:[%s232 + $0x1c0] sm:%s225]
        %459 = vst [vmem:[%s233 + $0x1c0] sm:%s225] %v458
        %v460 = vld [vmem:[%s232 + $0x1d0] sm:%s225]
        %461 = vst [vmem:[%s233 + $0x1c4] sm:%s225] %v460
        %v462 = vld [vmem:[%s232 + $0x1c4] sm:%s225]
        %463 = vst [vmem:[%s233 + $0x1c8] sm:%s225] %v462
        %v464 = vld [vmem:[%s232 + $0x1d4] sm:%s225]
        %465 = vst [vmem:[%s233 + $0x1cc] sm:%s225] %v464
        %v466 = vld [vmem:[%s232 + $0x1c8] sm:%s225]
        %467 = vst [vmem:[%s233 + $0x1d0] sm:%s225] %v466
        %v468 = vld [vmem:[%s232 + $0x1d8] sm:%s225]
        %469 = vst [vmem:[%s233 + $0x1d4] sm:%s225] %v468
        %v470 = vld [vmem:[%s232 + $0x1cc] sm:%s225]
        %471 = vst [vmem:[%s233 + $0x1d8] sm:%s225] %v470
        %v472 = vld [vmem:[%s232 + $0x1dc] sm:%s225]
        %473 = vst [vmem:[%s233 + $0x1dc] sm:%s225] %v472
        %v474 = vld [vmem:[%s232 + $0x1e0] sm:%s225]
        %475 = vst [vmem:[%s233 + $0x1e0] sm:%s225] %v474
        %v476 = vld [vmem:[%s232 + $0x1f0] sm:%s225]
        %477 = vst [vmem:[%s233 + $0x1e4] sm:%s225] %v476
        %v478 = vld [vmem:[%s232 + $0x1e4] sm:%s225]
        %479 = vst [vmem:[%s233 + $0x1e8] sm:%s225] %v478
        %v480 = vld [vmem:[%s232 + $0x1f4] sm:%s225]
        %481 = vst [vmem:[%s233 + $0x1ec] sm:%s225] %v480
        %v482 = vld [vmem:[%s232 + $0x1e8] sm:%s225]
        %483 = vst [vmem:[%s233 + $0x1f0] sm:%s225] %v482
        %v484 = vld [vmem:[%s232 + $0x1f8] sm:%s225]
        %485 = vst [vmem:[%s233 + $0x1f4] sm:%s225] %v484
        %v486 = vld [vmem:[%s232 + $0x1ec] sm:%s225]
        %487 = vst [vmem:[%s233 + $0x1f8] sm:%s225] %v486
        %v488 = vld [vmem:[%s232 + $0x1fc] sm:%s225]
        %489 = vst [vmem:[%s233 + $0x1fc] sm:%s225] %v488
      $region91: #{generator_forward.1} parent=85 // loop_footer
        %s231 = sadd.s32 1, %s227
      $region92: #{generator_forward.1} parent=85 // loop_footer_branch
        %226 = sbr.rel target = $region88
      $region93: #{generator_forward.1} parent=85 // loop_exit
        _
    $region86: #{generator_forward.1} parent=1 // pred_fallthru
      _
    // Predicated region
    $region112: #{generator_forward.1} parent=1 // pred_check
      _
    $region113: #{generator_forward.1} parent=1 // pred_check_branch
      %775 = sbr.rel (0) target = $region115
    $region114: #{generator_forward.1} parent=1 // pred_region
      %776 = vsyncadd %s216, 8192
    $region115: #{generator_forward.1} parent=1 // pred_fallthru
      _
    %s777 = scalar_lea.sflag [#allocation6], 2
    %s779 = sshll.u32 1, 14
    %s780 = sxor.u32 4294967295, %s779
    %s782 = sld [smem:[#allocation0]]
    %s783 = sadd.s32 2, %s782
    %s785 = sshll.u32 7, 26
    %s786 = sxor.u32 4294967295, %s785
    %s787 = sand.u32 0, %s786
    %s788 = sshll.u32 %s783, 26
    %s789 = sor.u32 %s787, %s788
    %s790 = sshll.u32 [#allocation4], 4
    %s791 = int_to_ptr.vmem [resolvable:$true] %s790
    %794 = sst [smem:[#allocation10]] 1024
    %s795 = scalar_lea.smem [#allocation10], 1
    %796 = sst [smem:[%s795]] 1024
    %s797 = scalar_lea.smem [#allocation10], 2
    %798 = sst [smem:[%s797]] 8
    %s799 = scalar_lea.smem [#allocation10], 3
    %800 = sst [smem:[%s799]] 64
    %s801 = scalar_lea.smem [#allocation10], 4
    %802 = sst [smem:[%s801]] 128
    %s803 = scalar_lea.smem [#allocation10], 5
    %804 = sst [smem:[%s803]] 2
    %s805 = scalar_lea.smem [#allocation10], 6
    %806 = sst [smem:[%s805]] 512
    %s807 = scalar_lea.smem [#allocation10], 7
    %808 = sst [smem:[%s807]] 64
    %s809 = scalar_lea.smem [#allocation10], 8
    %810 = sst [smem:[%s809]] 4
    %812 = dma.general %s9, 32768, %s791, %s777, [#allocation9], [#allocation10], %s789, 0
    %s813 = scalar_lea.sflag [#allocation6], 3
    %p815 = scmp.lt.u32.totalorder 512, 8
    %p816 = pneg %p815
    // Predicated region
    $region116: #{generator_forward.1} parent=1 // pred_check
      _
    $region117: #{generator_forward.1} parent=1 // pred_check_branch
      %818 = sbr.rel (%p815) target = $region119
    $region118: #{generator_forward.1} parent=1 // pred_region
      %s833 = sand.u32 512, 7
      %p834 = scmp.eq.s32.totalorder %s833, 0
      // Predicated region
      $region131: #{generator_forward.1} parent=118 // pred_check
        %p835 = pneg %p834
      $region132: #{generator_forward.1} parent=118 // pred_check_branch
        %837 = sbr.rel (%p835) target = $region134
      $region133: #{generator_forward.1} parent=118 // pred_region
        loop: start=0, step=1, limit=1
        $region135: #{generator_forward.1} parent=133 // loop_pre_header
          _
        $region136: #{generator_forward.1} parent=133 // loop_header
          %s839 = sphi 0, %s843
          %p840 = scmp.ge.s32.totalorder %s839, 1
          %s844 = sphi %s12, %s12
          %s845 = sphi [#allocation5], [#allocation5]
        $region137: #{generator_forward.1} parent=133 // loop_header_branch
          %842 = sbr.rel (%p840) target = $region141
        $region138: #{generator_forward.1} parent=133 // loop_body
          %v846 = vld [vmem:[%s844] sm:$0xff]
          %847 = vst [vmem:[%s845] sm:$0xff] %v846
          %v848 = vld [vmem:[%s844 + $0x8] sm:$0xff]
          %849 = vst [vmem:[%s845 + $0x8] sm:$0xff] %v848
          %v850 = vld [vmem:[%s844 + $0x10] sm:$0xff]
          %851 = vst [vmem:[%s845 + $0x10] sm:$0xff] %v850
          %v852 = vld [vmem:[%s844 + $0x18] sm:$0xff]
          %853 = vst [vmem:[%s845 + $0x18] sm:$0xff] %v852
          %v854 = vld [vmem:[%s844 + $0x20] sm:$0xff]
          %855 = vst [vmem:[%s845 + $0x20] sm:$0xff] %v854
          %v856 = vld [vmem:[%s844 + $0x28] sm:$0xff]
          %857 = vst [vmem:[%s845 + $0x28] sm:$0xff] %v856
          %v858 = vld [vmem:[%s844 + $0x30] sm:$0xff]
          %859 = vst [vmem:[%s845 + $0x30] sm:$0xff] %v858
          %v860 = vld [vmem:[%s844 + $0x38] sm:$0xff]
          %861 = vst [vmem:[%s845 + $0x38] sm:$0xff] %v860
          %v862 = vld [vmem:[%s844 + $0x40] sm:$0xff]
          %863 = vst [vmem:[%s845 + $0x40] sm:$0xff] %v862
          %v864 = vld [vmem:[%s844 + $0x48] sm:$0xff]
          %865 = vst [vmem:[%s845 + $0x48] sm:$0xff] %v864
          %v866 = vld [vmem:[%s844 + $0x50] sm:$0xff]
          %867 = vst [vmem:[%s845 + $0x50] sm:$0xff] %v866
          %v868 = vld [vmem:[%s844 + $0x58] sm:$0xff]
          %869 = vst [vmem:[%s845 + $0x58] sm:$0xff] %v868
          %v870 = vld [vmem:[%s844 + $0x60] sm:$0xff]
          %871 = vst [vmem:[%s845 + $0x60] sm:$0xff] %v870
          %v872 = vld [vmem:[%s844 + $0x68] sm:$0xff]
          %873 = vst [vmem:[%s845 + $0x68] sm:$0xff] %v872
          %v874 = vld [vmem:[%s844 + $0x70] sm:$0xff]
          %875 = vst [vmem:[%s845 + $0x70] sm:$0xff] %v874
          %v876 = vld [vmem:[%s844 + $0x78] sm:$0xff]
          %877 = vst [vmem:[%s845 + $0x78] sm:$0xff] %v876
          %v878 = vld [vmem:[%s844 + $0x80] sm:$0xff]
          %879 = vst [vmem:[%s845 + $0x80] sm:$0xff] %v878
          %v880 = vld [vmem:[%s844 + $0x88] sm:$0xff]
          %881 = vst [vmem:[%s845 + $0x88] sm:$0xff] %v880
          %v882 = vld [vmem:[%s844 + $0x90] sm:$0xff]
          %883 = vst [vmem:[%s845 + $0x90] sm:$0xff] %v882
          %v884 = vld [vmem:[%s844 + $0x98] sm:$0xff]
          %885 = vst [vmem:[%s845 + $0x98] sm:$0xff] %v884
          %v886 = vld [vmem:[%s844 + $0xa0] sm:$0xff]
          %887 = vst [vmem:[%s845 + $0xa0] sm:$0xff] %v886
          %v888 = vld [vmem:[%s844 + $0xa8] sm:$0xff]
          %889 = vst [vmem:[%s845 + $0xa8] sm:$0xff] %v888
          %v890 = vld [vmem:[%s844 + $0xb0] sm:$0xff]
          %891 = vst [vmem:[%s845 + $0xb0] sm:$0xff] %v890
          %v892 = vld [vmem:[%s844 + $0xb8] sm:$0xff]
          %893 = vst [vmem:[%s845 + $0xb8] sm:$0xff] %v892
          %v894 = vld [vmem:[%s844 + $0xc0] sm:$0xff]
          %895 = vst [vmem:[%s845 + $0xc0] sm:$0xff] %v894
          %v896 = vld [vmem:[%s844 + $0xc8] sm:$0xff]
          %897 = vst [vmem:[%s845 + $0xc8] sm:$0xff] %v896
          %v898 = vld [vmem:[%s844 + $0xd0] sm:$0xff]
          %899 = vst [vmem:[%s845 + $0xd0] sm:$0xff] %v898
          %v900 = vld [vmem:[%s844 + $0xd8] sm:$0xff]
          %901 = vst [vmem:[%s845 + $0xd8] sm:$0xff] %v900
          %v902 = vld [vmem:[%s844 + $0xe0] sm:$0xff]
          %903 = vst [vmem:[%s845 + $0xe0] sm:$0xff] %v902
          %v904 = vld [vmem:[%s844 + $0xe8] sm:$0xff]
          %905 = vst [vmem:[%s845 + $0xe8] sm:$0xff] %v904
          %v906 = vld [vmem:[%s844 + $0xf0] sm:$0xff]
          %907 = vst [vmem:[%s845 + $0xf0] sm:$0xff] %v906
          %v908 = vld [vmem:[%s844 + $0xf8] sm:$0xff]
          %909 = vst [vmem:[%s845 + $0xf8] sm:$0xff] %v908
          %v910 = vld [vmem:[%s844 + $0x100] sm:$0xff]
          %911 = vst [vmem:[%s845 + $0x100] sm:$0xff] %v910
          %v912 = vld [vmem:[%s844 + $0x108] sm:$0xff]
          %913 = vst [vmem:[%s845 + $0x108] sm:$0xff] %v912
          %v914 = vld [vmem:[%s844 + $0x110] sm:$0xff]
          %915 = vst [vmem:[%s845 + $0x110] sm:$0xff] %v914
          %v916 = vld [vmem:[%s844 + $0x118] sm:$0xff]
          %917 = vst [vmem:[%s845 + $0x118] sm:$0xff] %v916
          %v918 = vld [vmem:[%s844 + $0x120] sm:$0xff]
          %919 = vst [vmem:[%s845 + $0x120] sm:$0xff] %v918
          %v920 = vld [vmem:[%s844 + $0x128] sm:$0xff]
          %921 = vst [vmem:[%s845 + $0x128] sm:$0xff] %v920
          %v922 = vld [vmem:[%s844 + $0x130] sm:$0xff]
          %923 = vst [vmem:[%s845 + $0x130] sm:$0xff] %v922
          %v924 = vld [vmem:[%s844 + $0x138] sm:$0xff]
          %925 = vst [vmem:[%s845 + $0x138] sm:$0xff] %v924
          %v926 = vld [vmem:[%s844 + $0x140] sm:$0xff]
          %927 = vst [vmem:[%s845 + $0x140] sm:$0xff] %v926
          %v928 = vld [vmem:[%s844 + $0x148] sm:$0xff]
          %929 = vst [vmem:[%s845 + $0x148] sm:$0xff] %v928
          %v930 = vld [vmem:[%s844 + $0x150] sm:$0xff]
          %931 = vst [vmem:[%s845 + $0x150] sm:$0xff] %v930
          %v932 = vld [vmem:[%s844 + $0x158] sm:$0xff]
          %933 = vst [vmem:[%s845 + $0x158] sm:$0xff] %v932
          %v934 = vld [vmem:[%s844 + $0x160] sm:$0xff]
          %935 = vst [vmem:[%s845 + $0x160] sm:$0xff] %v934
          %v936 = vld [vmem:[%s844 + $0x168] sm:$0xff]
          %937 = vst [vmem:[%s845 + $0x168] sm:$0xff] %v936
          %v938 = vld [vmem:[%s844 + $0x170] sm:$0xff]
          %939 = vst [vmem:[%s845 + $0x170] sm:$0xff] %v938
          %v940 = vld [vmem:[%s844 + $0x178] sm:$0xff]
          %941 = vst [vmem:[%s845 + $0x178] sm:$0xff] %v940
          %v942 = vld [vmem:[%s844 + $0x180] sm:$0xff]
          %943 = vst [vmem:[%s845 + $0x180] sm:$0xff] %v942
          %v944 = vld [vmem:[%s844 + $0x188] sm:$0xff]
          %945 = vst [vmem:[%s845 + $0x188] sm:$0xff] %v944
          %v946 = vld [vmem:[%s844 + $0x190] sm:$0xff]
          %947 = vst [vmem:[%s845 + $0x190] sm:$0xff] %v946
          %v948 = vld [vmem:[%s844 + $0x198] sm:$0xff]
          %949 = vst [vmem:[%s845 + $0x198] sm:$0xff] %v948
          %v950 = vld [vmem:[%s844 + $0x1a0] sm:$0xff]
          %951 = vst [vmem:[%s845 + $0x1a0] sm:$0xff] %v950
          %v952 = vld [vmem:[%s844 + $0x1a8] sm:$0xff]
          %953 = vst [vmem:[%s845 + $0x1a8] sm:$0xff] %v952
          %v954 = vld [vmem:[%s844 + $0x1b0] sm:$0xff]
          %955 = vst [vmem:[%s845 + $0x1b0] sm:$0xff] %v954
          %v956 = vld [vmem:[%s844 + $0x1b8] sm:$0xff]
          %957 = vst [vmem:[%s845 + $0x1b8] sm:$0xff] %v956
          %v958 = vld [vmem:[%s844 + $0x1c0] sm:$0xff]
          %959 = vst [vmem:[%s845 + $0x1c0] sm:$0xff] %v958
          %v960 = vld [vmem:[%s844 + $0x1c8] sm:$0xff]
          %961 = vst [vmem:[%s845 + $0x1c8] sm:$0xff] %v960
          %v962 = vld [vmem:[%s844 + $0x1d0] sm:$0xff]
          %963 = vst [vmem:[%s845 + $0x1d0] sm:$0xff] %v962
          %v964 = vld [vmem:[%s844 + $0x1d8] sm:$0xff]
          %965 = vst [vmem:[%s845 + $0x1d8] sm:$0xff] %v964
          %v966 = vld [vmem:[%s844 + $0x1e0] sm:$0xff]
          %967 = vst [vmem:[%s845 + $0x1e0] sm:$0xff] %v966
          %v968 = vld [vmem:[%s844 + $0x1e8] sm:$0xff]
          %969 = vst [vmem:[%s845 + $0x1e8] sm:$0xff] %v968
          %v970 = vld [vmem:[%s844 + $0x1f0] sm:$0xff]
          %971 = vst [vmem:[%s845 + $0x1f0] sm:$0xff] %v970
          %v972 = vld [vmem:[%s844 + $0x1f8] sm:$0xff]
          %973 = vst [vmem:[%s845 + $0x1f8] sm:$0xff] %v972
        $region139: #{generator_forward.1} parent=133 // loop_footer
          %s843 = sadd.s32 1, %s839
        $region140: #{generator_forward.1} parent=133 // loop_footer_branch
          %838 = sbr.rel target = $region136
        $region141: #{generator_forward.1} parent=133 // loop_exit
          _
      $region134: #{generator_forward.1} parent=118 // pred_fallthru
        _
      %p974 = pneg %p834
      // Predicated region
      $region142: #{generator_forward.1} parent=118 // pred_check
        _
      $region143: #{generator_forward.1} parent=118 // pred_check_branch
        %976 = sbr.rel (%p834) target = $region145
      $region144: #{generator_forward.1} parent=118 // pred_region
        %s977 = sand.u32 512, 7
      $region145: #{generator_forward.1} parent=118 // pred_fallthru
        _
    $region119: #{generator_forward.1} parent=1 // pred_fallthru
      _
    // Predicated region
    $region120: #{generator_forward.1} parent=1 // pred_check
      %p819 = pneg %p815
    $region121: #{generator_forward.1} parent=1 // pred_check_branch
      %821 = sbr.rel (%p819) target = $region123
    $region122: #{generator_forward.1} parent=1 // pred_region
      %s822 = sshllo.u32 0, 512
      loop: start=0, step=1, limit=1
      $region124: #{generator_forward.1} parent=122 // loop_pre_header
        _
      $region125: #{generator_forward.1} parent=122 // loop_header
        %s824 = sphi 0, %s828
        %p825 = scmp.ge.s32.totalorder %s824, 1
        %s829 = sphi %s12, %s12
        %s830 = sphi [#allocation5], [#allocation5]
      $region126: #{generator_forward.1} parent=122 // loop_header_branch
        %827 = sbr.rel (%p825) target = $region130
      $region127: #{generator_forward.1} parent=122 // loop_body
        %v831 = vld [vmem:[%s829] sm:%s822]
        %832 = vst [vmem:[%s830] sm:%s822] %v831
      $region128: #{generator_forward.1} parent=122 // loop_footer
        %s828 = sadd.s32 1, %s824
      $region129: #{generator_forward.1} parent=122 // loop_footer_branch
        %823 = sbr.rel target = $region125
      $region130: #{generator_forward.1} parent=122 // loop_exit
        _
    $region123: #{generator_forward.1} parent=1 // pred_fallthru
      _
    // Predicated region
    $region146: #{generator_forward.1} parent=1 // pred_check
      _
    $region147: #{generator_forward.1} parent=1 // pred_check_branch
      %980 = sbr.rel (0) target = $region149
    $region148: #{generator_forward.1} parent=1 // pred_region
      %981 = vsyncadd %s813, 8192
    $region149: #{generator_forward.1} parent=1 // pred_fallthru
      _
    %v982 = vld [vmem:[%s0] sm:$0xff]
    %v983 = vld [vmem:[%s0 + $0x8] sm:$0xff]
    %v984 = vld [vmem:[%s0 + $0x10] sm:$0xff]
    %v985 = vld [vmem:[%s0 + $0x18] sm:$0xff]
    %v986 = vld [vmem:[%s0 + $0x20] sm:$0xff]
    %v987 = vld [vmem:[%s0 + $0x28] sm:$0xff]
    %v988 = vld [vmem:[%s0 + $0x30] sm:$0xff]
    %v989 = vld [vmem:[%s0 + $0x38] sm:$0xff]
    %v990 = vld [vmem:[%s0 + $0x40] sm:$0xff]
    %v991 = vld [vmem:[%s0 + $0x48] sm:$0xff]
    %v992 = vld [vmem:[%s0 + $0x50] sm:$0xff]
    %v993 = vld [vmem:[%s0 + $0x58] sm:$0xff]
    %v994 = vld [vmem:[%s0 + $0x60] sm:$0xff]
    %v995 = vld [vmem:[%s0 + $0x68] sm:$0xff]
    %v996 = vld [vmem:[%s0 + $0x70] sm:$0xff]
    %v997 = vld [vmem:[%s0 + $0x78] sm:$0xff]
    %v998 = vld [vmem:[%s0 + $0x80] sm:$0xff]
    %v999 = vld [vmem:[%s0 + $0x88] sm:$0xff]
    %v1000 = vld [vmem:[%s0 + $0x90] sm:$0xff]
    %v1001 = vld [vmem:[%s0 + $0x98] sm:$0xff]
    %v1002 = vld [vmem:[%s0 + $0xa0] sm:$0xff]
    %v1003 = vld [vmem:[%s0 + $0xa8] sm:$0xff]
    %v1004 = vld [vmem:[%s0 + $0xb0] sm:$0xff]
    %v1005 = vld [vmem:[%s0 + $0xb8] sm:$0xff]
    %v1006 = vld [vmem:[%s0 + $0xc0] sm:$0xff]
    %v1007 = vld [vmem:[%s0 + $0xc8] sm:$0xff]
    %v1008 = vld [vmem:[%s0 + $0xd0] sm:$0xff]
    %v1009 = vld [vmem:[%s0 + $0xd8] sm:$0xff]
    %v1010 = vld [vmem:[%s0 + $0xe0] sm:$0xff]
    %v1011 = vld [vmem:[%s0 + $0xe8] sm:$0xff]
    %v1012 = vld [vmem:[%s0 + $0xf0] sm:$0xff]
    %v1013 = vld [vmem:[%s0 + $0xf8] sm:$0xff]
    %v1014 = vld [vmem:[%s1] sm:$0xf]
    %v1015 = vld [vmem:[%s1 + $0x4] sm:$0xf]
    %v1016 = vld [vmem:[%s1 + $0x8] sm:$0xf]
    %v1017 = vld [vmem:[%s1 + $0xc] sm:$0xf]
    %v1018 = vpack.c.bf16 %v983, %v982
    %v1019 = vpack.c.bf16 %v985, %v984
    %v1020 = vpack.c.bf16 %v987, %v986
    %v1021 = vpack.c.bf16 %v989, %v988
    %v1022 = vpack.c.bf16 %v991, %v990
    %v1023 = vpack.c.bf16 %v993, %v992
    %v1024 = vpack.c.bf16 %v995, %v994
    %v1025 = vpack.c.bf16 %v997, %v996
    %v1026 = vpack.c.bf16 %v999, %v998
    %v1027 = vpack.c.bf16 %v1001, %v1000
    %v1028 = vpack.c.bf16 %v1003, %v1002
    %v1029 = vpack.c.bf16 %v1005, %v1004
    %v1030 = vpack.c.bf16 %v1007, %v1006
    %v1031 = vpack.c.bf16 %v1009, %v1008
    %v1032 = vpack.c.bf16 %v1011, %v1010
    %v1033 = vpack.c.bf16 %v1013, %v1012
    %v1034 = vld [vmem:[%s2] sm:$0x1]
    %v1036 = vlaneseq
    %v1037 = vshrl.u32 %v1036, 7
    %v1038 = vsub.s32 0, %v1037
    %v1039 = vrot.slane %v1034, %v1038
    %v1045 = vunpack.c.l.b16 %v1014
    %v1046 = vunpack.c.l.b16 %v1015
    %v1047 = vunpack.c.l.b16 %v1016
    %v1048 = vunpack.c.l.b16 %v1017
    %v1049 = vpack.c.b16 %v1046, %v1045
    %v1050 = vpack.c.b16 %v1048, %v1047
    %vm1053 = vcmask 261120
    %v1055 = vsel %vm1053, %v1018, 0
    %v1058 = vsel %vm1053, %v1019, 0
    %v1061 = vsel %vm1053, %v1020, 0
    %v1064 = vsel %vm1053, %v1021, 0
    %v1067 = vsel %vm1053, %v1022, 0
    %v1070 = vsel %vm1053, %v1023, 0
    %v1073 = vsel %vm1053, %v1024, 0
    %v1076 = vsel %vm1053, %v1025, 0
    %v1079 = vsel %vm1053, %v1026, 0
    %v1082 = vsel %vm1053, %v1027, 0
    %v1085 = vsel %vm1053, %v1028, 0
    %v1088 = vsel %vm1053, %v1029, 0
    %v1091 = vsel %vm1053, %v1030, 0
    %v1094 = vsel %vm1053, %v1031, 0
    %v1097 = vsel %vm1053, %v1032, 0
    %v1100 = vsel %vm1053, %v1033, 0
    %1102 = vmatprep.subr.bf16.mxu0 0
    %1103 = vmatpush1.bf16.msra.mxu0 %v1049
    %1104 = vmatprep.subr.bf16.mxu0 0
    %1105 = vmatpush1.bf16.msra.mxu0 %v1050
    %1106 = vmatprep.subr.bf16.mxu0 0
    %1107 = vmatpush1.bf16.msra.mxu0 0
    %1108 = vmatprep.subr.bf16.mxu0 0
    %1109 = vmatpush1.bf16.msra.mxu0 0
    %1110 = vmatprep.subr.bf16.mxu0 0
    %1111 = vmatpush1.bf16.msra.mxu0 0
    %1112 = vmatprep.subr.bf16.mxu0 0
    %1113 = vmatpush1.bf16.msra.mxu0 0
    %1114 = vmatprep.subr.bf16.mxu0 0
    %1115 = vmatpush1.bf16.msra.mxu0 0
    %1116 = vmatprep.subr.bf16.mxu0 0
    %1117 = vmatpush1.bf16.msra.mxu0 0
    %1118 = vmatprep.subr.bf16.mxu0 0
    %1119 = vmatpush1.bf16.msra.mxu0 0
    %1120 = vmatprep.subr.bf16.mxu0 0
    %1121 = vmatpush1.bf16.msra.mxu0 0
    %1122 = vmatprep.subr.bf16.mxu0 0
    %1123 = vmatpush1.bf16.msra.mxu0 0
    %1124 = vmatprep.subr.bf16.mxu0 0
    %1125 = vmatpush1.bf16.msra.mxu0 0
    %1126 = vmatprep.subr.bf16.mxu0 0
    %1127 = vmatpush1.bf16.msra.mxu0 0
    %1128 = vmatprep.subr.bf16.mxu0 0
    %1129 = vmatpush1.bf16.msra.mxu0 0
    %1130 = vmatprep.subr.bf16.mxu0 0
    %1131 = vmatpush1.bf16.msra.mxu0 0
    %1132 = vmatprep.subr.bf16.mxu0 0
    %1133 = vmatpush1.bf16.msra.mxu0 0
    %1134 = vmatprep.mubr.bf16.mxu0 0
    %1135 = vmatmul.mubr.bf16.gmra.mrb[0].mxu0 %v1055
    %v1136 = vpop.f32.mrb[0].mxu0
    %v1137 = vadd.f32 %v1039, %v1136
    %v1138 = vpop.f32.mrb[0].mxu0
    %v1139 = vpop.f32.mrb[0].mxu0
    %v1140 = vadd.f32 %v1039, %v1139
    %v1141 = vpop.f32.mrb[0].mxu0
    %1142 = vmatprep.mubr.bf16.mxu0 0
    %1143 = vmatmul.mubr.bf16.gmra.mrb[0].mxu0 %v1058
    %v1144 = vpop.f32.mrb[0].mxu0
    %v1145 = vadd.f32 %v1039, %v1144
    %v1146 = vpop.f32.mrb[0].mxu0
    %v1147 = vpop.f32.mrb[0].mxu0
    %v1148 = vadd.f32 %v1039, %v1147
    %v1149 = vpop.f32.mrb[0].mxu0
    %1150 = vmatprep.mubr.bf16.mxu0 0
    %1151 = vmatmul.mubr.bf16.gmra.mrb[0].mxu0 %v1061
    %v1152 = vpop.f32.mrb[0].mxu0
    %v1153 = vadd.f32 %v1039, %v1152
    %v1154 = vpop.f32.mrb[0].mxu0
    %v1155 = vpop.f32.mrb[0].mxu0
    %v1156 = vadd.f32 %v1039, %v1155
    %v1157 = vpop.f32.mrb[0].mxu0
    %1158 = vmatprep.mubr.bf16.mxu0 0
    %1159 = vmatmul.mubr.bf16.gmra.mrb[0].mxu0 %v1064
    %v1160 = vpop.f32.mrb[0].mxu0
    %v1161 = vadd.f32 %v1039, %v1160
    %v1162 = vpop.f32.mrb[0].mxu0
    %v1163 = vpop.f32.mrb[0].mxu0
    %v1164 = vadd.f32 %v1039, %v1163
    %v1165 = vpop.f32.mrb[0].mxu0
    %1166 = vmatprep.mubr.bf16.mxu0 0
    %1167 = vmatmul.mubr.bf16.gmra.mrb[0].mxu0 %v1067
    %v1168 = vpop.f32.mrb[0].mxu0
    %v1169 = vadd.f32 %v1039, %v1168
    %v1170 = vpop.f32.mrb[0].mxu0
    %v1171 = vpop.f32.mrb[0].mxu0
    %v1172 = vadd.f32 %v1039, %v1171
    %v1173 = vpop.f32.mrb[0].mxu0
    %1174 = vmatprep.mubr.bf16.mxu0 0
    %1175 = vmatmul.mubr.bf16.gmra.mrb[0].mxu0 %v1070
    %v1176 = vpop.f32.mrb[0].mxu0
    %v1177 = vadd.f32 %v1039, %v1176
    %v1178 = vpop.f32.mrb[0].mxu0
    %v1179 = vpop.f32.mrb[0].mxu0
    %v1180 = vadd.f32 %v1039, %v1179
    %v1181 = vpop.f32.mrb[0].mxu0
    %1182 = vmatprep.mubr.bf16.mxu0 0
    %1183 = vmatmul.mubr.bf16.gmra.mrb[0].mxu0 %v1073
    %v1184 = vpop.f32.mrb[0].mxu0
    %v1185 = vadd.f32 %v1039, %v1184
    %v1186 = vpop.f32.mrb[0].mxu0
    %v1187 = vpop.f32.mrb[0].mxu0
    %v1188 = vadd.f32 %v1039, %v1187
    %v1189 = vpop.f32.mrb[0].mxu0
    %1190 = vmatprep.mubr.bf16.mxu0 0
    %1191 = vmatmul.mubr.bf16.gmra.mrb[0].mxu0 %v1076
    %v1192 = vpop.f32.mrb[0].mxu0
    %v1193 = vadd.f32 %v1039, %v1192
    %v1194 = vpop.f32.mrb[0].mxu0
    %v1195 = vpop.f32.mrb[0].mxu0
    %v1196 = vadd.f32 %v1039, %v1195
    %v1197 = vpop.f32.mrb[0].mxu0
    %1198 = vmatprep.mubr.bf16.mxu0 0
    %1199 = vmatmul.mubr.bf16.gmra.mrb[0].mxu0 %v1079
    %v1200 = vpop.f32.mrb[0].mxu0
    %v1201 = vadd.f32 %v1039, %v1200
    %v1202 = vpop.f32.mrb[0].mxu0
    %v1203 = vpop.f32.mrb[0].mxu0
    %v1204 = vadd.f32 %v1039, %v1203
    %v1205 = vpop.f32.mrb[0].mxu0
    %1206 = vmatprep.mubr.bf16.mxu0 0
    %1207 = vmatmul.mubr.bf16.gmra.mrb[0].mxu0 %v1082
    %v1208 = vpop.f32.mrb[0].mxu0
    %v1209 = vadd.f32 %v1039, %v1208
    %v1210 = vpop.f32.mrb[0].mxu0
    %v1211 = vpop.f32.mrb[0].mxu0
    %v1212 = vadd.f32 %v1039, %v1211
    %v1213 = vpop.f32.mrb[0].mxu0
    %1214 = vmatprep.mubr.bf16.mxu0 0
    %1215 = vmatmul.mubr.bf16.gmra.mrb[0].mxu0 %v1085
    %v1216 = vpop.f32.mrb[0].mxu0
    %v1217 = vadd.f32 %v1039, %v1216
    %v1218 = vpop.f32.mrb[0].mxu0
    %v1219 = vpop.f32.mrb[0].mxu0
    %v1220 = vadd.f32 %v1039, %v1219
    %v1221 = vpop.f32.mrb[0].mxu0
    %1222 = vmatprep.mubr.bf16.mxu0 0
    %1223 = vmatmul.mubr.bf16.gmra.mrb[0].mxu0 %v1088
    %v1224 = vpop.f32.mrb[0].mxu0
    %v1225 = vadd.f32 %v1039, %v1224
    %v1226 = vpop.f32.mrb[0].mxu0
    %v1227 = vpop.f32.mrb[0].mxu0
    %v1228 = vadd.f32 %v1039, %v1227
    %v1229 = vpop.f32.mrb[0].mxu0
    %1230 = vmatprep.mubr.bf16.mxu0 0
    %1231 = vmatmul.mubr.bf16.gmra.mrb[0].mxu0 %v1091
    %v1232 = vpop.f32.mrb[0].mxu0
    %v1233 = vadd.f32 %v1039, %v1232
    %v1234 = vpop.f32.mrb[0].mxu0
    %v1235 = vpop.f32.mrb[0].mxu0
    %v1236 = vadd.f32 %v1039, %v1235
    %v1237 = vpop.f32.mrb[0].mxu0
    %1238 = vmatprep.mubr.bf16.mxu0 0
    %1239 = vmatmul.mubr.bf16.gmra.mrb[0].mxu0 %v1094
    %v1240 = vpop.f32.mrb[0].mxu0
    %v1241 = vadd.f32 %v1039, %v1240
    %v1242 = vpop.f32.mrb[0].mxu0
    %v1243 = vpop.f32.mrb[0].mxu0
    %v1244 = vadd.f32 %v1039, %v1243
    %v1245 = vpop.f32.mrb[0].mxu0
    %1246 = vmatprep.mubr.bf16.mxu0 0
    %1247 = vmatmul.mubr.bf16.gmra.mrb[0].mxu0 %v1097
    %v1248 = vpop.f32.mrb[0].mxu0
    %v1249 = vadd.f32 %v1039, %v1248
    %v1250 = vpop.f32.mrb[0].mxu0
    %v1251 = vpop.f32.mrb[0].mxu0
    %v1252 = vadd.f32 %v1039, %v1251
    %v1253 = vpop.f32.mrb[0].mxu0
    %1254 = vmatprep.mubr.bf16.mxu0 0
    %1255 = vmatmul.mubr.bf16.gmra.mrb[0].mxu0 %v1100
    %v1256 = vpop.f32.mrb[0].mxu0
    %v1257 = vadd.f32 %v1039, %v1256
    %v1258 = vpop.f32.mrb[0].mxu0
    %v1259 = vpop.f32.mrb[0].mxu0
    %v1260 = vadd.f32 %v1039, %v1259
    %v1261 = vpop.f32.mrb[0].mxu0
    %1262 = vdwg.mxu0
    %v1263 = vmul.f32 %v1137, 0.2
    %v1264 = vmul.f32 %v1140, 0.2
    %v1265 = vmul.f32 %v1145, 0.2
    %v1266 = vmul.f32 %v1148, 0.2
    %v1267 = vmul.f32 %v1153, 0.2
    %v1268 = vmul.f32 %v1156, 0.2
    %v1269 = vmul.f32 %v1161, 0.2
    %v1270 = vmul.f32 %v1164, 0.2
    %v1271 = vmul.f32 %v1169, 0.2
    %v1272 = vmul.f32 %v1172, 0.2
    %v1273 = vmul.f32 %v1177, 0.2
    %v1274 = vmul.f32 %v1180, 0.2
    %v1275 = vmul.f32 %v1185, 0.2
    %v1276 = vmul.f32 %v1188, 0.2
    %v1277 = vmul.f32 %v1193, 0.2
    %v1278 = vmul.f32 %v1196, 0.2
    %v1279 = vmul.f32 %v1201, 0.2
    %v1280 = vmul.f32 %v1204, 0.2
    %v1281 = vmul.f32 %v1209, 0.2
    %v1282 = vmul.f32 %v1212, 0.2
    %v1283 = vmul.f32 %v1217, 0.2
    %v1284 = vmul.f32 %v1220, 0.2
    %v1285 = vmul.f32 %v1225, 0.2
    %v1286 = vmul.f32 %v1228, 0.2
    %v1287 = vmul.f32 %v1233, 0.2
    %v1288 = vmul.f32 %v1236, 0.2
    %v1289 = vmul.f32 %v1241, 0.2
    %v1290 = vmul.f32 %v1244, 0.2
    %v1291 = vmul.f32 %v1249, 0.2
    %v1292 = vmul.f32 %v1252, 0.2
    %v1293 = vmul.f32 %v1257, 0.2
    %v1294 = vmul.f32 %v1260, 0.2
    %v1295 = vmax.f32 %v1137, %v1263
    %v1296 = vmax.f32 %v1140, %v1264
    %v1297 = vmax.f32 %v1145, %v1265
    %v1298 = vmax.f32 %v1148, %v1266
    %v1299 = vmax.f32 %v1153, %v1267
    %v1300 = vmax.f32 %v1156, %v1268
    %v1301 = vmax.f32 %v1161, %v1269
    %v1302 = vmax.f32 %v1164, %v1270
    %v1303 = vmax.f32 %v1169, %v1271
    %v1304 = vmax.f32 %v1172, %v1272
    %v1305 = vmax.f32 %v1177, %v1273
    %v1306 = vmax.f32 %v1180, %v1274
    %v1307 = vmax.f32 %v1185, %v1275
    %v1308 = vmax.f32 %v1188, %v1276
    %v1309 = vmax.f32 %v1193, %v1277
    %v1310 = vmax.f32 %v1196, %v1278
    %v1311 = vmax.f32 %v1201, %v1279
    %v1312 = vmax.f32 %v1204, %v1280
    %v1313 = vmax.f32 %v1209, %v1281
    %v1314 = vmax.f32 %v1212, %v1282
    %v1315 = vmax.f32 %v1217, %v1283
    %v1316 = vmax.f32 %v1220, %v1284
    %v1317 = vmax.f32 %v1225, %v1285
    %v1318 = vmax.f32 %v1228, %v1286
    %v1319 = vmax.f32 %v1233, %v1287
    %v1320 = vmax.f32 %v1236, %v1288
    %v1321 = vmax.f32 %v1241, %v1289
    %v1322 = vmax.f32 %v1244, %v1290
    %v1323 = vmax.f32 %v1249, %v1291
    %v1324 = vmax.f32 %v1252, %v1292
    %v1325 = vmax.f32 %v1257, %v1293
    %v1326 = vmax.f32 %v1260, %v1294
    %s1327 = smul.u32 4, 16
    %s1328 = smul.u32 %s1327, 2
    %s1329 = sshll.u32 %s1328, 4
    %1330 = dma.done [#allocation6], %s1329
    %v1331 = vld [vmem:[#allocation2] sm:$0xff]
    %v1332 = vld [vmem:[#allocation2 + $0x8] sm:$0xff]
    %v1333 = vld [vmem:[#allocation2 + $0x10] sm:$0xff]
    %v1334 = vld [vmem:[#allocation2 + $0x18] sm:$0xff]
    %v1335 = vld [vmem:[#allocation2 + $0x20] sm:$0xff]
    %v1336 = vld [vmem:[#allocation2 + $0x28] sm:$0xff]
    %v1337 = vld [vmem:[#allocation2 + $0x30] sm:$0xff]
    %v1338 = vld [vmem:[#allocation2 + $0x38] sm:$0xff]
    %v1339 = vld [vmem:[#allocation2 + $0x40] sm:$0xff]
    %v1340 = vld [vmem:[#allocation2 + $0x48] sm:$0xff]
    %v1341 = vld [vmem:[#allocation2 + $0x50] sm:$0xff]
    %v1342 = vld [vmem:[#allocation2 + $0x58] sm:$0xff]
    %v1343 = vld [vmem:[#allocation2 + $0x60] sm:$0xff]
    %v1344 = vld [vmem:[#allocation2 + $0x68] sm:$0xff]
    %v1345 = vld [vmem:[#allocation2 + $0x70] sm:$0xff]
    %v1346 = vld [vmem:[#allocation2 + $0x78] sm:$0xff]
    %v1347 = vpack.c.bf16 %v1296, %v1295
    %v1348 = vpack.c.bf16 %v1298, %v1297
    %v1349 = vpack.c.bf16 %v1300, %v1299
    %v1350 = vpack.c.bf16 %v1302, %v1301
    %v1351 = vpack.c.bf16 %v1304, %v1303
    %v1352 = vpack.c.bf16 %v1306, %v1305
    %v1353 = vpack.c.bf16 %v1308, %v1307
    %v1354 = vpack.c.bf16 %v1310, %v1309
    %v1355 = vpack.c.bf16 %v1312, %v1311
    %v1356 = vpack.c.bf16 %v1314, %v1313
    %v1357 = vpack.c.bf16 %v1316, %v1315
    %v1358 = vpack.c.bf16 %v1318, %v1317
    %v1359 = vpack.c.bf16 %v1320, %v1319
    %v1360 = vpack.c.bf16 %v1322, %v1321
    %v1361 = vpack.c.bf16 %v1324, %v1323
    %v1362 = vpack.c.bf16 %v1326, %v1325
    %1363 = vmatprep.subr.bf16.mxu0 %v1332
    %1364 = vmatpush1.bf16.msra.mxu0 %v1331
    %1365 = vmatprep.subr.bf16.mxu0 %v1334
    %1366 = vmatpush1.bf16.msra.mxu0 %v1333
    %1367 = vmatprep.subr.bf16.mxu0 %v1336
    %1368 = vmatpush1.bf16.msra.mxu0 %v1335
    %1369 = vmatprep.subr.bf16.mxu0 %v1338
    %1370 = vmatpush1.bf16.msra.mxu0 %v1337
    %1371 = vmatprep.subr.bf16.mxu0 %v1340
    %1372 = vmatpush1.bf16.msra.mxu0 %v1339
    %1373 = vmatprep.subr.bf16.mxu0 %v1342
    %1374 = vmatpush1.bf16.msra.mxu0 %v1341
    %1375 = vmatprep.subr.bf16.mxu0 %v1344
    %1376 = vmatpush1.bf16.msra.mxu0 %v1343
    %1377 = vmatprep.subr.bf16.mxu0 %v1346
    %1378 = vmatpush1.bf16.msra.mxu0 %v1345
    %1379 = vmatprep.subr.bf16.mxu0 0
    %1380 = vmatpush1.bf16.msra.mxu0 0
    %1381 = vmatprep.subr.bf16.mxu0 0
    %1382 = vmatpush1.bf16.msra.mxu0 0
    %1383 = vmatprep.subr.bf16.mxu0 0
    %1384 = vmatpush1.bf16.msra.mxu0 0
    %1385 = vmatprep.subr.bf16.mxu0 0
    %1386 = vmatpush1.bf16.msra.mxu0 0
    %1387 = vmatprep.subr.bf16.mxu0 0
    %1388 = vmatpush1.bf16.msra.mxu0 0
    %1389 = vmatprep.subr.bf16.mxu0 0
    %1390 = vmatpush1.bf16.msra.mxu0 0
    %1391 = vmatprep.subr.bf16.mxu0 0
    %1392 = vmatpush1.bf16.msra.mxu0 0
    %1393 = vmatprep.subr.bf16.mxu0 0
    %1394 = vmatpush1.bf16.msra.mxu0 0
    %1395 = vmatprep.mubr.bf16.mxu0 0
    %1396 = vmatmul.mubr.bf16.gmra.mrb[0].mxu0 %v1347
    %v1397 = vpop.f32.mrb[0].mxu0
    %v1398 = vadd.f32 0.0, %v1397
    %v1399 = vpop.f32.mrb[0].mxu0
    %v1400 = vadd.f32 0.0, %v1399
    %v1401 = vpop.f32.mrb[0].mxu0
    %v1402 = vadd.f32 0.0, %v1401
    %v1403 = vpop.f32.mrb[0].mxu0
    %v1404 = vadd.f32 0.0, %v1403
    %1405 = vmatprep.mubr.bf16.mxu0 0
    %1406 = vmatmul.mubr.bf16.gmra.mrb[0].mxu0 %v1348
    %v1407 = vpop.f32.mrb[0].mxu0
    %v1408 = vadd.f32 0.0, %v1407
    %v1409 = vpop.f32.mrb[0].mxu0
    %v1410 = vadd.f32 0.0, %v1409
    %v1411 = vpop.f32.mrb[0].mxu0
    %v1412 = vadd.f32 0.0, %v1411
    %v1413 = vpop.f32.mrb[0].mxu0
    %v1414 = vadd.f32 0.0, %v1413
    %1415 = vmatprep.mubr.bf16.mxu0 0
    %1416 = vmatmul.mubr.bf16.gmra.mrb[0].mxu0 %v1349
    %v1417 = vpop.f32.mrb[0].mxu0
    %v1418 = vadd.f32 0.0, %v1417
    %v1419 = vpop.f32.mrb[0].mxu0
    %v1420 = vadd.f32 0.0, %v1419
    %v1421 = vpop.f32.mrb[0].mxu0
    %v1422 = vadd.f32 0.0, %v1421
    %v1423 = vpop.f32.mrb[0].mxu0
    %v1424 = vadd.f32 0.0, %v1423
    %1425 = vmatprep.mubr.bf16.mxu0 0
    %1426 = vmatmul.mubr.bf16.gmra.mrb[0].mxu0 %v1350
    %v1427 = vpop.f32.mrb[0].mxu0
    %v1428 = vadd.f32 0.0, %v1427
    %v1429 = vpop.f32.mrb[0].mxu0
    %v1430 = vadd.f32 0.0, %v1429
    %v1431 = vpop.f32.mrb[0].mxu0
    %v1432 = vadd.f32 0.0, %v1431
    %v1433 = vpop.f32.mrb[0].mxu0
    %v1434 = vadd.f32 0.0, %v1433
    %1435 = vmatprep.mubr.bf16.mxu0 0
    %1436 = vmatmul.mubr.bf16.gmra.mrb[0].mxu0 %v1351
    %v1437 = vpop.f32.mrb[0].mxu0
    %v1438 = vadd.f32 0.0, %v1437
    %v1439 = vpop.f32.mrb[0].mxu0
    %v1440 = vadd.f32 0.0, %v1439
    %v1441 = vpop.f32.mrb[0].mxu0
    %v1442 = vadd.f32 0.0, %v1441
    %v1443 = vpop.f32.mrb[0].mxu0
    %v1444 = vadd.f32 0.0, %v1443
    %1445 = vmatprep.mubr.bf16.mxu0 0
    %1446 = vmatmul.mubr.bf16.gmra.mrb[0].mxu0 %v1352
    %v1447 = vpop.f32.mrb[0].mxu0
    %v1448 = vadd.f32 0.0, %v1447
    %v1449 = vpop.f32.mrb[0].mxu0
    %v1450 = vadd.f32 0.0, %v1449
    %v1451 = vpop.f32.mrb[0].mxu0
    %v1452 = vadd.f32 0.0, %v1451
    %v1453 = vpop.f32.mrb[0].mxu0
    %v1454 = vadd.f32 0.0, %v1453
    %1455 = vmatprep.mubr.bf16.mxu0 0
    %1456 = vmatmul.mubr.bf16.gmra.mrb[0].mxu0 %v1353
    %v1457 = vpop.f32.mrb[0].mxu0
    %v1458 = vadd.f32 0.0, %v1457
    %v1459 = vpop.f32.mrb[0].mxu0
    %v1460 = vadd.f32 0.0, %v1459
    %v1461 = vpop.f32.mrb[0].mxu0
    %v1462 = vadd.f32 0.0, %v1461
    %v1463 = vpop.f32.mrb[0].mxu0
    %v1464 = vadd.f32 0.0, %v1463
    %1465 = vmatprep.mubr.bf16.mxu0 0
    %1466 = vmatmul.mubr.bf16.gmra.mrb[0].mxu0 %v1354
    %v1467 = vpop.f32.mrb[0].mxu0
    %v1468 = vadd.f32 0.0, %v1467
    %v1469 = vpop.f32.mrb[0].mxu0
    %v1470 = vadd.f32 0.0, %v1469
    %v1471 = vpop.f32.mrb[0].mxu0
    %v1472 = vadd.f32 0.0, %v1471
    %v1473 = vpop.f32.mrb[0].mxu0
    %v1474 = vadd.f32 0.0, %v1473
    %1475 = vmatprep.mubr.bf16.mxu0 0
    %1476 = vmatmul.mubr.bf16.gmra.mrb[0].mxu0 %v1355
    %v1477 = vpop.f32.mrb[0].mxu0
    %v1478 = vadd.f32 0.0, %v1477
    %v1479 = vpop.f32.mrb[0].mxu0
    %v1480 = vadd.f32 0.0, %v1479
    %v1481 = vpop.f32.mrb[0].mxu0
    %v1482 = vadd.f32 0.0, %v1481
    %v1483 = vpop.f32.mrb[0].mxu0
    %v1484 = vadd.f32 0.0, %v1483
    %1485 = vmatprep.mubr.bf16.mxu0 0
    %1486 = vmatmul.mubr.bf16.gmra.mrb[0].mxu0 %v1356
    %v1487 = vpop.f32.mrb[0].mxu0
    %v1488 = vadd.f32 0.0, %v1487
    %v1489 = vpop.f32.mrb[0].mxu0
    %v1490 = vadd.f32 0.0, %v1489
    %v1491 = vpop.f32.mrb[0].mxu0
    %v1492 = vadd.f32 0.0, %v1491
    %v1493 = vpop.f32.mrb[0].mxu0
    %v1494 = vadd.f32 0.0, %v1493
    %1495 = vmatprep.mubr.bf16.mxu0 0
    %1496 = vmatmul.mubr.bf16.gmra.mrb[0].mxu0 %v1357
    %v1497 = vpop.f32.mrb[0].mxu0
    %v1498 = vadd.f32 0.0, %v1497
    %v1499 = vpop.f32.mrb[0].mxu0
    %v1500 = vadd.f32 0.0, %v1499
    %v1501 = vpop.f32.mrb[0].mxu0
    %v1502 = vadd.f32 0.0, %v1501
    %v1503 = vpop.f32.mrb[0].mxu0
    %v1504 = vadd.f32 0.0, %v1503
    %1505 = vmatprep.mubr.bf16.mxu0 0
    %1506 = vmatmul.mubr.bf16.gmra.mrb[0].mxu0 %v1358
    %v1507 = vpop.f32.mrb[0].mxu0
    %v1508 = vadd.f32 0.0, %v1507
    %v1509 = vpop.f32.mrb[0].mxu0
    %v1510 = vadd.f32 0.0, %v1509
    %v1511 = vpop.f32.mrb[0].mxu0
    %v1512 = vadd.f32 0.0, %v1511
    %v1513 = vpop.f32.mrb[0].mxu0
    %v1514 = vadd.f32 0.0, %v1513
    %1515 = vmatprep.mubr.bf16.mxu0 0
    %1516 = vmatmul.mubr.bf16.gmra.mrb[0].mxu0 %v1359
    %v1517 = vpop.f32.mrb[0].mxu0
    %v1518 = vadd.f32 0.0, %v1517
    %v1519 = vpop.f32.mrb[0].mxu0
    %v1520 = vadd.f32 0.0, %v1519
    %v1521 = vpop.f32.mrb[0].mxu0
    %v1522 = vadd.f32 0.0, %v1521
    %v1523 = vpop.f32.mrb[0].mxu0
    %v1524 = vadd.f32 0.0, %v1523
    %1525 = vmatprep.mubr.bf16.mxu0 0
    %1526 = vmatmul.mubr.bf16.gmra.mrb[0].mxu0 %v1360
    %v1527 = vpop.f32.mrb[0].mxu0
    %v1528 = vadd.f32 0.0, %v1527
    %v1529 = vpop.f32.mrb[0].mxu0
    %v1530 = vadd.f32 0.0, %v1529
    %v1531 = vpop.f32.mrb[0].mxu0
    %v1532 = vadd.f32 0.0, %v1531
    %v1533 = vpop.f32.mrb[0].mxu0
    %v1534 = vadd.f32 0.0, %v1533
    %1535 = vmatprep.mubr.bf16.mxu0 0
    %1536 = vmatmul.mubr.bf16.gmra.mrb[0].mxu0 %v1361
    %v1537 = vpop.f32.mrb[0].mxu0
    %v1538 = vadd.f32 0.0, %v1537
    %v1539 = vpop.f32.mrb[0].mxu0
    %v1540 = vadd.f32 0.0, %v1539
    %v1541 = vpop.f32.mrb[0].mxu0
    %v1542 = vadd.f32 0.0, %v1541
    %v1543 = vpop.f32.mrb[0].mxu0
    %v1544 = vadd.f32 0.0, %v1543
    %1545 = vmatprep.mubr.bf16.mxu0 0
    %1546 = vmatmul.mubr.bf16.gmra.mrb[0].mxu0 %v1362
    %v1547 = vpop.f32.mrb[0].mxu0
    %v1548 = vadd.f32 0.0, %v1547
    %v1549 = vpop.f32.mrb[0].mxu0
    %v1550 = vadd.f32 0.0, %v1549
    %v1551 = vpop.f32.mrb[0].mxu0
    %v1552 = vadd.f32 0.0, %v1551
    %v1553 = vpop.f32.mrb[0].mxu0
    %v1554 = vadd.f32 0.0, %v1553
    %1555 = vdwg.mxu0
    %v1556 = vadd.f32 %v1398, %v1402
    %v1557 = vadd.f32 %v1556, %v1408
    %v1558 = vadd.f32 %v1557, %v1412
    %v1559 = vadd.f32 %v1558, %v1418
    %v1560 = vadd.f32 %v1559, %v1422
    %v1561 = vadd.f32 %v1560, %v1428
    %v1562 = vadd.f32 %v1561, %v1432
    %v1563 = vadd.f32 %v1562, %v1438
    %v1564 = vadd.f32 %v1563, %v1442
    %v1565 = vadd.f32 %v1564, %v1448
    %v1566 = vadd.f32 %v1565, %v1452
    %v1567 = vadd.f32 %v1566, %v1458
    %v1568 = vadd.f32 %v1567, %v1462
    %v1569 = vadd.f32 %v1568, %v1468
    %v1570 = vadd.f32 %v1569, %v1472
    %v1571 = vadd.f32 %v1570, %v1478
    %v1572 = vadd.f32 %v1571, %v1482
    %v1573 = vadd.f32 %v1572, %v1488
    %v1574 = vadd.f32 %v1573, %v1492
    %v1575 = vadd.f32 %v1574, %v1498
    %v1576 = vadd.f32 %v1575, %v1502
    %v1577 = vadd.f32 %v1576, %v1508
    %v1578 = vadd.f32 %v1577, %v1512
    %v1579 = vadd.f32 %v1578, %v1518
    %v1580 = vadd.f32 %v1579, %v1522
    %v1581 = vadd.f32 %v1580, %v1528
    %v1582 = vadd.f32 %v1581, %v1532
    %v1583 = vadd.f32 %v1582, %v1538
    %v1584 = vadd.f32 %v1583, %v1542
    %v1585 = vadd.f32 %v1584, %v1548
    %v1586 = vadd.f32 %v1585, %v1552
    %v1587 = vrot.slane %v1586, 4
    %v1588 = vadd.f32 %v1586, %v1587
    %v1589 = vrot.slane %v1588, 2
    %v1590 = vadd.f32 %v1588, %v1589
    %v1591 = vrot.slane %v1590, 1
    %v1592 = vadd.f32 %v1590, %v1591
    %v1593 = vadd.f32 %v1400, %v1404
    %v1594 = vadd.f32 %v1593, %v1410
    %v1595 = vadd.f32 %v1594, %v1414
    %v1596 = vadd.f32 %v1595, %v1420
    %v1597 = vadd.f32 %v1596, %v1424
    %v1598 = vadd.f32 %v1597, %v1430
    %v1599 = vadd.f32 %v1598, %v1434
    %v1600 = vadd.f32 %v1599, %v1440
    %v1601 = vadd.f32 %v1600, %v1444
    %v1602 = vadd.f32 %v1601, %v1450
    %v1603 = vadd.f32 %v1602, %v1454
    %v1604 = vadd.f32 %v1603, %v1460
    %v1605 = vadd.f32 %v1604, %v1464
    %v1606 = vadd.f32 %v1605, %v1470
    %v1607 = vadd.f32 %v1606, %v1474
    %v1608 = vadd.f32 %v1607, %v1480
    %v1609 = vadd.f32 %v1608, %v1484
    %v1610 = vadd.f32 %v1609, %v1490
    %v1611 = vadd.f32 %v1610, %v1494
    %v1612 = vadd.f32 %v1611, %v1500
    %v1613 = vadd.f32 %v1612, %v1504
    %v1614 = vadd.f32 %v1613, %v1510
    %v1615 = vadd.f32 %v1614, %v1514
    %v1616 = vadd.f32 %v1615, %v1520
    %v1617 = vadd.f32 %v1616, %v1524
    %v1618 = vadd.f32 %v1617, %v1530
    %v1619 = vadd.f32 %v1618, %v1534
    %v1620 = vadd.f32 %v1619, %v1540
    %v1621 = vadd.f32 %v1620, %v1544
    %v1622 = vadd.f32 %v1621, %v1550
    %v1623 = vadd.f32 %v1622, %v1554
    %v1624 = vrot.slane %v1623, 4
    %v1625 = vadd.f32 %v1623, %v1624
    %v1626 = vrot.slane %v1625, 2
    %v1627 = vadd.f32 %v1625, %v1626
    %v1628 = vrot.slane %v1627, 1
    %v1629 = vadd.f32 %v1627, %v1628
    %v1630 = vmul.f32 %v1592, 0.00390625
    %v1631 = vmul.f32 %v1629, 0.00390625
    %v1632 = vmul.f32 %v1398, %v1398
    %v1633 = vmul.f32 %v1400, %v1400
    %v1634 = vmul.f32 %v1402, %v1402
    %v1635 = vmul.f32 %v1404, %v1404
    %v1636 = vmul.f32 %v1408, %v1408
    %v1637 = vmul.f32 %v1410, %v1410
    %v1638 = vmul.f32 %v1412, %v1412
    %v1639 = vmul.f32 %v1414, %v1414
    %v1640 = vmul.f32 %v1418, %v1418
    %v1641 = vmul.f32 %v1420, %v1420
    %v1642 = vmul.f32 %v1422, %v1422
    %v1643 = vmul.f32 %v1424, %v1424
    %v1644 = vmul.f32 %v1428, %v1428
    %v1645 = vmul.f32 %v1430, %v1430
    %v1646 = vmul.f32 %v1432, %v1432
    %v1647 = vmul.f32 %v1434, %v1434
    %v1648 = vmul.f32 %v1438, %v1438
    %v1649 = vmul.f32 %v1440, %v1440
    %v1650 = vmul.f32 %v1442, %v1442
    %v1651 = vmul.f32 %v1444, %v1444
    %v1652 = vmul.f32 %v1448, %v1448
    %v1653 = vmul.f32 %v1450, %v1450
    %v1654 = vmul.f32 %v1452, %v1452
    %v1655 = vmul.f32 %v1454, %v1454
    %v1656 = vmul.f32 %v1458, %v1458
    %v1657 = vmul.f32 %v1460, %v1460
    %v1658 = vmul.f32 %v1462, %v1462
    %v1659 = vmul.f32 %v1464, %v1464
    %v1660 = vmul.f32 %v1468, %v1468
    %v1661 = vmul.f32 %v1470, %v1470
    %v1662 = vmul.f32 %v1472, %v1472
    %v1663 = vmul.f32 %v1474, %v1474
    %v1664 = vmul.f32 %v1478, %v1478
    %v1665 = vmul.f32 %v1480, %v1480
    %v1666 = vmul.f32 %v1482, %v1482
    %v1667 = vmul.f32 %v1484, %v1484
    %v1668 = vmul.f32 %v1488, %v1488
    %v1669 = vmul.f32 %v1490, %v1490
    %v1670 = vmul.f32 %v1492, %v1492
    %v1671 = vmul.f32 %v1494, %v1494
    %v1672 = vmul.f32 %v1498, %v1498
    %v1673 = vmul.f32 %v1500, %v1500
    %v1674 = vmul.f32 %v1502, %v1502
    %v1675 = vmul.f32 %v1504, %v1504
    %v1676 = vmul.f32 %v1508, %v1508
    %v1677 = vmul.f32 %v1510, %v1510
    %v1678 = vmul.f32 %v1512, %v1512
    %v1679 = vmul.f32 %v1514, %v1514
    %v1680 = vmul.f32 %v1518, %v1518
    %v1681 = vmul.f32 %v1520, %v1520
    %v1682 = vmul.f32 %v1522, %v1522
    %v1683 = vmul.f32 %v1524, %v1524
    %v1684 = vmul.f32 %v1528, %v1528
    %v1685 = vmul.f32 %v1530, %v1530
    %v1686 = vmul.f32 %v1532, %v1532
    %v1687 = vmul.f32 %v1534, %v1534
    %v1688 = vmul.f32 %v1538, %v1538
    %v1689 = vmul.f32 %v1540, %v1540
    %v1690 = vmul.f32 %v1542, %v1542
    %v1691 = vmul.f32 %v1544, %v1544
    %v1692 = vmul.f32 %v1548, %v1548
    %v1693 = vmul.f32 %v1550, %v1550
    %v1694 = vmul.f32 %v1552, %v1552
    %v1695 = vmul.f32 %v1554, %v1554
    %v1696 = vadd.f32 %v1632, %v1634
    %v1697 = vadd.f32 %v1696, %v1636
    %v1698 = vadd.f32 %v1697, %v1638
    %v1699 = vadd.f32 %v1698, %v1640
    %v1700 = vadd.f32 %v1699, %v1642
    %v1701 = vadd.f32 %v1700, %v1644
    %v1702 = vadd.f32 %v1701, %v1646
    %v1703 = vadd.f32 %v1702, %v1648
    %v1704 = vadd.f32 %v1703, %v1650
    %v1705 = vadd.f32 %v1704, %v1652
    %v1706 = vadd.f32 %v1705, %v1654
    %v1707 = vadd.f32 %v1706, %v1656
    %v1708 = vadd.f32 %v1707, %v1658
    %v1709 = vadd.f32 %v1708, %v1660
    %v1710 = vadd.f32 %v1709, %v1662
    %v1711 = vadd.f32 %v1710, %v1664
    %v1712 = vadd.f32 %v1711, %v1666
    %v1713 = vadd.f32 %v1712, %v1668
    %v1714 = vadd.f32 %v1713, %v1670
    %v1715 = vadd.f32 %v1714, %v1672
    %v1716 = vadd.f32 %v1715, %v1674
    %v1717 = vadd.f32 %v1716, %v1676
    %v1718 = vadd.f32 %v1717, %v1678
    %v1719 = vadd.f32 %v1718, %v1680
    %v1720 = vadd.f32 %v1719, %v1682
    %v1721 = vadd.f32 %v1720, %v1684
    %v1722 = vadd.f32 %v1721, %v1686
    %v1723 = vadd.f32 %v1722, %v1688
    %v1724 = vadd.f32 %v1723, %v1690
    %v1725 = vadd.f32 %v1724, %v1692
    %v1726 = vadd.f32 %v1725, %v1694
    %v1727 = vrot.slane %v1726, 4
    %v1728 = vadd.f32 %v1726, %v1727
    %v1729 = vrot.slane %v1728, 2
    %v1730 = vadd.f32 %v1728, %v1729
    %v1731 = vrot.slane %v1730, 1
    %v1732 = vadd.f32 %v1730, %v1731
    %v1733 = vadd.f32 %v1633, %v1635
    %v1734 = vadd.f32 %v1733, %v1637
    %v1735 = vadd.f32 %v1734, %v1639
    %v1736 = vadd.f32 %v1735, %v1641
    %v1737 = vadd.f32 %v1736, %v1643
    %v1738 = vadd.f32 %v1737, %v1645
    %v1739 = vadd.f32 %v1738, %v1647
    %v1740 = vadd.f32 %v1739, %v1649
    %v1741 = vadd.f32 %v1740, %v1651
    %v1742 = vadd.f32 %v1741, %v1653
    %v1743 = vadd.f32 %v1742, %v1655
    %v1744 = vadd.f32 %v1743, %v1657
    %v1745 = vadd.f32 %v1744, %v1659
    %v1746 = vadd.f32 %v1745, %v1661
    %v1747 = vadd.f32 %v1746, %v1663
    %v1748 = vadd.f32 %v1747, %v1665
    %v1749 = vadd.f32 %v1748, %v1667
    %v1750 = vadd.f32 %v1749, %v1669
    %v1751 = vadd.f32 %v1750, %v1671
    %v1752 = vadd.f32 %v1751, %v1673
    %v1753 = vadd.f32 %v1752, %v1675
    %v1754 = vadd.f32 %v1753, %v1677
    %v1755 = vadd.f32 %v1754, %v1679
    %v1756 = vadd.f32 %v1755, %v1681
    %v1757 = vadd.f32 %v1756, %v1683
    %v1758 = vadd.f32 %v1757, %v1685
    %v1759 = vadd.f32 %v1758, %v1687
    %v1760 = vadd.f32 %v1759, %v1689
    %v1761 = vadd.f32 %v1760, %v1691
    %v1762 = vadd.f32 %v1761, %v1693
    %v1763 = vadd.f32 %v1762, %v1695
    %v1764 = vrot.slane %v1763, 4
    %v1765 = vadd.f32 %v1763, %v1764
    %v1766 = vrot.slane %v1765, 2
    %v1767 = vadd.f32 %v1765, %v1766
    %v1768 = vrot.slane %v1767, 1
    %v1769 = vadd.f32 %v1767, %v1768
    %v1770 = vmul.f32 %v1732, 0.00390625
    %v1771 = vmul.f32 %v1769, 0.00390625
    %v1772 = vmul.f32 %v1630, %v1630
    %v1773 = vmul.f32 %v1631, %v1631
    %v1774 = vsub.f32 %v1770, %v1772
    %v1775 = vsub.f32 %v1771, %v1773
    %v1776 = vld [vmem:[%s4] sm:$0x3]
    %v1777 = vadd.f32 %v1774, 0.8
    %v1778 = vadd.f32 %v1775, 0.8
    %v1779 = vrsqrt.pop %v1777
    %v1780 = vrsqrt.pop %v1778
    %v1783 = vcombine.low %v1779, %v1780
    %v1785 = vunpack.c.l.s4 1966171168
    %v1786 = vunpack.c.0.s8 %v1785
    %v1787 = vlaneseq
    %v1788 = vshrl.u32 %v1787, 7
    %v1789 = vsub.s32 %v1786, %v1788
    %v1790 = vrot.slane %v1783, %v1789
    %v1792 = vunpack.c.l.s4 1966171168
    %v1793 = vunpack.c.0.s8 %v1792
    %v1794 = vlaneseq
    %v1795 = vshrl.u32 %v1794, 7
    %v1796 = vsub.s32 %v1793, %v1795
    %v1797 = vrot.slane %v1790, %v1796
    %v1799 = vmul.f32 %v1776, %v1797
    %v1800 = vld [vmem:[%s5] sm:$0x3]
    %v1802 = vlaneseq
    %v1803 = vshrl.u32 %v1802, 7
    %v1804 = vsub.s32 0, %v1803
    %v1805 = vrot.slane %v1799, %v1804
    %v1806 = vlaneseq
    %v1807 = vshrl.u32 %v1806, 7
    %v1808 = vsub.s32 1, %v1807
    %v1809 = vrot.slane %v1799, %v1808
    %v1812 = vmul.f32 %v1630, %v1805
    %v1813 = vmul.f32 %v1631, %v1809
    %v1816 = vcombine.low %v1812, %v1813
    %v1818 = vunpack.c.l.s4 1966171168
    %v1819 = vunpack.c.0.s8 %v1818
    %v1820 = vlaneseq
    %v1821 = vshrl.u32 %v1820, 7
    %v1822 = vsub.s32 %v1819, %v1821
    %v1823 = vrot.slane %v1816, %v1822
    %v1825 = vunpack.c.l.s4 1966171168
    %v1826 = vunpack.c.0.s8 %v1825
    %v1827 = vlaneseq
    %v1828 = vshrl.u32 %v1827, 7
    %v1829 = vsub.s32 %v1826, %v1828
    %v1830 = vrot.slane %v1823, %v1829
    %v1832 = vsub.f32 %v1800, %v1830
    %v1833 = vmul.f32 %v1398, %v1805
    %v1834 = vmul.f32 %v1400, %v1809
    %v1835 = vmul.f32 %v1402, %v1805
    %v1836 = vmul.f32 %v1404, %v1809
    %v1837 = vmul.f32 %v1408, %v1805
    %v1838 = vmul.f32 %v1410, %v1809
    %v1839 = vmul.f32 %v1412, %v1805
    %v1840 = vmul.f32 %v1414, %v1809
    %v1841 = vmul.f32 %v1418, %v1805
    %v1842 = vmul.f32 %v1420, %v1809
    %v1843 = vmul.f32 %v1422, %v1805
    %v1844 = vmul.f32 %v1424, %v1809
    %v1845 = vmul.f32 %v1428, %v1805
    %v1846 = vmul.f32 %v1430, %v1809
    %v1847 = vmul.f32 %v1432, %v1805
    %v1848 = vmul.f32 %v1434, %v1809
    %v1849 = vmul.f32 %v1438, %v1805
    %v1850 = vmul.f32 %v1440, %v1809
    %v1851 = vmul.f32 %v1442, %v1805
    %v1852 = vmul.f32 %v1444, %v1809
    %v1853 = vmul.f32 %v1448, %v1805
    %v1854 = vmul.f32 %v1450, %v1809
    %v1855 = vmul.f32 %v1452, %v1805
    %v1856 = vmul.f32 %v1454, %v1809
    %v1857 = vmul.f32 %v1458, %v1805
    %v1858 = vmul.f32 %v1460, %v1809
    %v1859 = vmul.f32 %v1462, %v1805
    %v1860 = vmul.f32 %v1464, %v1809
    %v1861 = vmul.f32 %v1468, %v1805
    %v1862 = vmul.f32 %v1470, %v1809
    %v1863 = vmul.f32 %v1472, %v1805
    %v1864 = vmul.f32 %v1474, %v1809
    %v1865 = vmul.f32 %v1478, %v1805
    %v1866 = vmul.f32 %v1480, %v1809
    %v1867 = vmul.f32 %v1482, %v1805
    %v1868 = vmul.f32 %v1484, %v1809
    %v1869 = vmul.f32 %v1488, %v1805
    %v1870 = vmul.f32 %v1490, %v1809
    %v1871 = vmul.f32 %v1492, %v1805
    %v1872 = vmul.f32 %v1494, %v1809
    %v1873 = vmul.f32 %v1498, %v1805
    %v1874 = vmul.f32 %v1500, %v1809
    %v1875 = vmul.f32 %v1502, %v1805
    %v1876 = vmul.f32 %v1504, %v1809
    %v1877 = vmul.f32 %v1508, %v1805
    %v1878 = vmul.f32 %v1510, %v1809
    %v1879 = vmul.f32 %v1512, %v1805
    %v1880 = vmul.f32 %v1514, %v1809
    %v1881 = vmul.f32 %v1518, %v1805
    %v1882 = vmul.f32 %v1520, %v1809
    %v1883 = vmul.f32 %v1522, %v1805
    %v1884 = vmul.f32 %v1524, %v1809
    %v1885 = vmul.f32 %v1528, %v1805
    %v1886 = vmul.f32 %v1530, %v1809
    %v1887 = vmul.f32 %v1532, %v1805
    %v1888 = vmul.f32 %v1534, %v1809
    %v1889 = vmul.f32 %v1538, %v1805
    %v1890 = vmul.f32 %v1540, %v1809
    %v1891 = vmul.f32 %v1542, %v1805
    %v1892 = vmul.f32 %v1544, %v1809
    %v1893 = vmul.f32 %v1548, %v1805
    %v1894 = vmul.f32 %v1550, %v1809
    %v1895 = vmul.f32 %v1552, %v1805
    %v1896 = vmul.f32 %v1554, %v1809
    %v1898 = vlaneseq
    %v1899 = vshrl.u32 %v1898, 7
    %v1900 = vsub.s32 0, %v1899
    %v1901 = vrot.slane %v1832, %v1900
    %v1902 = vlaneseq
    %v1903 = vshrl.u32 %v1902, 7
    %v1904 = vsub.s32 1, %v1903
    %v1905 = vrot.slane %v1832, %v1904
    %v1908 = vadd.f32 %v1833, %v1901
    %v1909 = vadd.f32 %v1834, %v1905
    %v1910 = vadd.f32 %v1835, %v1901
    %v1911 = vadd.f32 %v1836, %v1905
    %v1912 = vadd.f32 %v1837, %v1901
    %v1913 = vadd.f32 %v1838, %v1905
    %v1914 = vadd.f32 %v1839, %v1901
    %v1915 = vadd.f32 %v1840, %v1905
    %v1916 = vadd.f32 %v1841, %v1901
    %v1917 = vadd.f32 %v1842, %v1905
    %v1918 = vadd.f32 %v1843, %v1901
    %v1919 = vadd.f32 %v1844, %v1905
    %v1920 = vadd.f32 %v1845, %v1901
    %v1921 = vadd.f32 %v1846, %v1905
    %v1922 = vadd.f32 %v1847, %v1901
    %v1923 = vadd.f32 %v1848, %v1905
    %v1924 = vadd.f32 %v1849, %v1901
    %v1925 = vadd.f32 %v1850, %v1905
    %v1926 = vadd.f32 %v1851, %v1901
    %v1927 = vadd.f32 %v1852, %v1905
    %v1928 = vadd.f32 %v1853, %v1901
    %v1929 = vadd.f32 %v1854, %v1905
    %v1930 = vadd.f32 %v1855, %v1901
    %v1931 = vadd.f32 %v1856, %v1905
    %v1932 = vadd.f32 %v1857, %v1901
    %v1933 = vadd.f32 %v1858, %v1905
    %v1934 = vadd.f32 %v1859, %v1901
    %v1935 = vadd.f32 %v1860, %v1905
    %v1936 = vadd.f32 %v1861, %v1901
    %v1937 = vadd.f32 %v1862, %v1905
    %v1938 = vadd.f32 %v1863, %v1901
    %v1939 = vadd.f32 %v1864, %v1905
    %v1940 = vadd.f32 %v1865, %v1901
    %v1941 = vadd.f32 %v1866, %v1905
    %v1942 = vadd.f32 %v1867, %v1901
    %v1943 = vadd.f32 %v1868, %v1905
    %v1944 = vadd.f32 %v1869, %v1901
    %v1945 = vadd.f32 %v1870, %v1905
    %v1946 = vadd.f32 %v1871, %v1901
    %v1947 = vadd.f32 %v1872, %v1905
    %v1948 = vadd.f32 %v1873, %v1901
    %v1949 = vadd.f32 %v1874, %v1905
    %v1950 = vadd.f32 %v1875, %v1901
    %v1951 = vadd.f32 %v1876, %v1905
    %v1952 = vadd.f32 %v1877, %v1901
    %v1953 = vadd.f32 %v1878, %v1905
    %v1954 = vadd.f32 %v1879, %v1901
    %v1955 = vadd.f32 %v1880, %v1905
    %v1956 = vadd.f32 %v1881, %v1901
    %v1957 = vadd.f32 %v1882, %v1905
    %v1958 = vadd.f32 %v1883, %v1901
    %v1959 = vadd.f32 %v1884, %v1905
    %v1960 = vadd.f32 %v1885, %v1901
    %v1961 = vadd.f32 %v1886, %v1905
    %v1962 = vadd.f32 %v1887, %v1901
    %v1963 = vadd.f32 %v1888, %v1905
    %v1964 = vadd.f32 %v1889, %v1901
    %v1965 = vadd.f32 %v1890, %v1905
    %v1966 = vadd.f32 %v1891, %v1901
    %v1967 = vadd.f32 %v1892, %v1905
    %v1968 = vadd.f32 %v1893, %v1901
    %v1969 = vadd.f32 %v1894, %v1905
    %v1970 = vadd.f32 %v1895, %v1901
    %v1971 = vadd.f32 %v1896, %v1905
    %v1972 = vmul.f32 %v1908, 0.2
    %v1973 = vmul.f32 %v1909, 0.2
    %v1974 = vmul.f32 %v1910, 0.2
    %v1975 = vmul.f32 %v1911, 0.2
    %v1976 = vmul.f32 %v1912, 0.2
    %v1977 = vmul.f32 %v1913, 0.2
    %v1978 = vmul.f32 %v1914, 0.2
    %v1979 = vmul.f32 %v1915, 0.2
    %v1980 = vmul.f32 %v1916, 0.2
    %v1981 = vmul.f32 %v1917, 0.2
    %v1982 = vmul.f32 %v1918, 0.2
    %v1983 = vmul.f32 %v1919, 0.2
    %v1984 = vmul.f32 %v1920, 0.2
    %v1985 = vmul.f32 %v1921, 0.2
    %v1986 = vmul.f32 %v1922, 0.2
    %v1987 = vmul.f32 %v1923, 0.2
    %v1988 = vmul.f32 %v1924, 0.2
    %v1989 = vmul.f32 %v1925, 0.2
    %v1990 = vmul.f32 %v1926, 0.2
    %v1991 = vmul.f32 %v1927, 0.2
    %v1992 = vmul.f32 %v1928, 0.2
    %v1993 = vmul.f32 %v1929, 0.2
    %v1994 = vmul.f32 %v1930, 0.2
    %v1995 = vmul.f32 %v1931, 0.2
    %v1996 = vmul.f32 %v1932, 0.2
    %v1997 = vmul.f32 %v1933, 0.2
    %v1998 = vmul.f32 %v1934, 0.2
    %v1999 = vmul.f32 %v1935, 0.2
    %v2000 = vmul.f32 %v1936, 0.2
    %v2001 = vmul.f32 %v1937, 0.2
    %v2002 = vmul.f32 %v1938, 0.2
    %v2003 = vmul.f32 %v1939, 0.2
    %v2004 = vmul.f32 %v1940, 0.2
    %v2005 = vmul.f32 %v1941, 0.2
    %v2006 = vmul.f32 %v1942, 0.2
    %v2007 = vmul.f32 %v1943, 0.2
    %v2008 = vmul.f32 %v1944, 0.2
    %v2009 = vmul.f32 %v1945, 0.2
    %v2010 = vmul.f32 %v1946, 0.2
    %v2011 = vmul.f32 %v1947, 0.2
    %v2012 = vmul.f32 %v1948, 0.2
    %v2013 = vmul.f32 %v1949, 0.2
    %v2014 = vmul.f32 %v1950, 0.2
    %v2015 = vmul.f32 %v1951, 0.2
    %v2016 = vmul.f32 %v1952, 0.2
    %v2017 = vmul.f32 %v1953, 0.2
    %v2018 = vmul.f32 %v1954, 0.2
    %v2019 = vmul.f32 %v1955, 0.2
    %v2020 = vmul.f32 %v1956, 0.2
    %v2021 = vmul.f32 %v1957, 0.2
    %v2022 = vmul.f32 %v1958, 0.2
    %v2023 = vmul.f32 %v1959, 0.2
    %v2024 = vmul.f32 %v1960, 0.2
    %v2025 = vmul.f32 %v1961, 0.2
    %v2026 = vmul.f32 %v1962, 0.2
    %v2027 = vmul.f32 %v1963, 0.2
    %v2028 = vmul.f32 %v1964, 0.2
    %v2029 = vmul.f32 %v1965, 0.2
    %v2030 = vmul.f32 %v1966, 0.2
    %v2031 = vmul.f32 %v1967, 0.2
    %v2032 = vmul.f32 %v1968, 0.2
    %v2033 = vmul.f32 %v1969, 0.2
    %v2034 = vmul.f32 %v1970, 0.2
    %v2035 = vmul.f32 %v1971, 0.2
    %v2036 = vmax.f32 %v1908, %v1972
    %v2037 = vmax.f32 %v1909, %v1973
    %v2038 = vmax.f32 %v1910, %v1974
    %v2039 = vmax.f32 %v1911, %v1975
    %v2040 = vmax.f32 %v1912, %v1976
    %v2041 = vmax.f32 %v1913, %v1977
    %v2042 = vmax.f32 %v1914, %v1978
    %v2043 = vmax.f32 %v1915, %v1979
    %v2044 = vmax.f32 %v1916, %v1980
    %v2045 = vmax.f32 %v1917, %v1981
    %v2046 = vmax.f32 %v1918, %v1982
    %v2047 = vmax.f32 %v1919, %v1983
    %v2048 = vmax.f32 %v1920, %v1984
    %v2049 = vmax.f32 %v1921, %v1985
    %v2050 = vmax.f32 %v1922, %v1986
    %v2051 = vmax.f32 %v1923, %v1987
    %v2052 = vmax.f32 %v1924, %v1988
    %v2053 = vmax.f32 %v1925, %v1989
    %v2054 = vmax.f32 %v1926, %v1990
    %v2055 = vmax.f32 %v1927, %v1991
    %v2056 = vmax.f32 %v1928, %v1992
    %v2057 = vmax.f32 %v1929, %v1993
    %v2058 = vmax.f32 %v1930, %v1994
    %v2059 = vmax.f32 %v1931, %v1995
    %v2060 = vmax.f32 %v1932, %v1996
    %v2061 = vmax.f32 %v1933, %v1997
    %v2062 = vmax.f32 %v1934, %v1998
    %v2063 = vmax.f32 %v1935, %v1999
    %v2064 = vmax.f32 %v1936, %v2000
    %v2065 = vmax.f32 %v1937, %v2001
    %v2066 = vmax.f32 %v1938, %v2002
    %v2067 = vmax.f32 %v1939, %v2003
    %v2068 = vmax.f32 %v1940, %v2004
    %v2069 = vmax.f32 %v1941, %v2005
    %v2070 = vmax.f32 %v1942, %v2006
    %v2071 = vmax.f32 %v1943, %v2007
    %v2072 = vmax.f32 %v1944, %v2008
    %v2073 = vmax.f32 %v1945, %v2009
    %v2074 = vmax.f32 %v1946, %v2010
    %v2075 = vmax.f32 %v1947, %v2011
    %v2076 = vmax.f32 %v1948, %v2012
    %v2077 = vmax.f32 %v1949, %v2013
    %v2078 = vmax.f32 %v1950, %v2014
    %v2079 = vmax.f32 %v1951, %v2015
    %v2080 = vmax.f32 %v1952, %v2016
    %v2081 = vmax.f32 %v1953, %v2017
    %v2082 = vmax.f32 %v1954, %v2018
    %v2083 = vmax.f32 %v1955, %v2019
    %v2084 = vmax.f32 %v1956, %v2020
    %v2085 = vmax.f32 %v1957, %v2021
    %v2086 = vmax.f32 %v1958, %v2022
    %v2087 = vmax.f32 %v1959, %v2023
    %v2088 = vmax.f32 %v1960, %v2024
    %v2089 = vmax.f32 %v1961, %v2025
    %v2090 = vmax.f32 %v1962, %v2026
    %v2091 = vmax.f32 %v1963, %v2027
    %v2092 = vmax.f32 %v1964, %v2028
    %v2093 = vmax.f32 %v1965, %v2029
    %v2094 = vmax.f32 %v1966, %v2030
    %v2095 = vmax.f32 %v1967, %v2031
    %v2096 = vmax.f32 %v1968, %v2032
    %v2097 = vmax.f32 %v1969, %v2033
    %v2098 = vmax.f32 %v1970, %v2034
    %v2099 = vmax.f32 %v1971, %v2035
    %s2100 = smul.u32 4, 32
    %s2101 = smul.u32 %s2100, 4
    %s2102 = sshll.u32 %s2101, 4
    %2103 = dma.done %s216, %s2102
    %v2104 = vld [vmem:[#allocation3] sm:$0xff]
    %v2105 = vld [vmem:[#allocation3 + $0x8] sm:$0xff]
    %v2106 = vld [vmem:[#allocation3 + $0x10] sm:$0xff]
    %v2107 = vld [vmem:[#allocation3 + $0x18] sm:$0xff]
    %v2108 = vld [vmem:[#allocation3 + $0x20] sm:$0xff]
    %v2109 = vld [vmem:[#allocation3 + $0x28] sm:$0xff]
    %v2110 = vld [vmem:[#allocation3 + $0x30] sm:$0xff]
    %v2111 = vld [vmem:[#allocation3 + $0x38] sm:$0xff]
    %v2112 = vld [vmem:[#allocation3 + $0x40] sm:$0xff]
    %v2113 = vld [vmem:[#allocation3 + $0x48] sm:$0xff]
    %v2114 = vld [vmem:[#allocation3 + $0x50] sm:$0xff]
    %v2115 = vld [vmem:[#allocation3 + $0x58] sm:$0xff]
    %v2116 = vld [vmem:[#allocation3 + $0x60] sm:$0xff]
    %v2117 = vld [vmem:[#allocation3 + $0x68] sm:$0xff]
    %v2118 = vld [vmem:[#allocation3 + $0x70] sm:$0xff]
    %v2119 = vld [vmem:[#allocation3 + $0x78] sm:$0xff]
    %v2120 = vld [vmem:[#allocation3 + $0x80] sm:$0xff]
    %v2121 = vld [vmem:[#allocation3 + $0x88] sm:$0xff]
    %v2122 = vld [vmem:[#allocation3 + $0x90] sm:$0xff]
    %v2123 = vld [vmem:[#allocation3 + $0x98] sm:$0xff]
    %v2124 = vld [vmem:[#allocation3 + $0xa0] sm:$0xff]
    %v2125 = vld [vmem:[#allocation3 + $0xa8] sm:$0xff]
    %v2126 = vld [vmem:[#allocation3 + $0xb0] sm:$0xff]
    %v2127 = vld [vmem:[#allocation3 + $0xb8] sm:$0xff]
    %v2128 = vld [vmem:[#allocation3 + $0xc0] sm:$0xff]
    %v2129 = vld [vmem:[#allocation3 + $0xc8] sm:$0xff]
    %v2130 = vld [vmem:[#allocation3 + $0xd0] sm:$0xff]
    %v2131 = vld [vmem:[#allocation3 + $0xd8] sm:$0xff]
    %v2132 = vld [vmem:[#allocation3 + $0xe0] sm:$0xff]
    %v2133 = vld [vmem:[#allocation3 + $0xe8] sm:$0xff]
    %v2134 = vld [vmem:[#allocation3 + $0xf0] sm:$0xff]
    %v2135 = vld [vmem:[#allocation3 + $0xf8] sm:$0xff]
    %v2136 = vld [vmem:[#allocation3 + $0x100] sm:$0xff]
    %v2137 = vld [vmem:[#allocation3 + $0x108] sm:$0xff]
    %v2138 = vld [vmem:[#allocation3 + $0x110] sm:$0xff]
    %v2139 = vld [vmem:[#allocation3 + $0x118] sm:$0xff]
    %v2140 = vld [vmem:[#allocation3 + $0x120] sm:$0xff]
    %v2141 = vld [vmem:[#allocation3 + $0x128] sm:$0xff]
    %v2142 = vld [vmem:[#allocation3 + $0x130] sm:$0xff]
    %v2143 = vld [vmem:[#allocation3 + $0x138] sm:$0xff]
    %v2144 = vld [vmem:[#allocation3 + $0x140] sm:$0xff]
    %v2145 = vld [vmem:[#allocation3 + $0x148] sm:$0xff]
    %v2146 = vld [vmem:[#allocation3 + $0x150] sm:$0xff]
    %v2147 = vld [vmem:[#allocation3 + $0x158] sm:$0xff]
    %v2148 = vld [vmem:[#allocation3 + $0x160] sm:$0xff]
    %v2149 = vld [vmem:[#allocation3 + $0x168] sm:$0xff]
    %v2150 = vld [vmem:[#allocation3 + $0x170] sm:$0xff]
    %v2151 = vld [vmem:[#allocation3 + $0x178] sm:$0xff]
    %v2152 = vld [vmem:[#allocation3 + $0x180] sm:$0xff]
    %v2153 = vld [vmem:[#allocation3 + $0x188] sm:$0xff]
    %v2154 = vld [vmem:[#allocation3 + $0x190] sm:$0xff]
    %v2155 = vld [vmem:[#allocation3 + $0x198] sm:$0xff]
    %v2156 = vld [vmem:[#allocation3 + $0x1a0] sm:$0xff]
    %v2157 = vld [vmem:[#allocation3 + $0x1a8] sm:$0xff]
    %v2158 = vld [vmem:[#allocation3 + $0x1b0] sm:$0xff]
    %v2159 = vld [vmem:[#allocation3 + $0x1b8] sm:$0xff]
    %v2160 = vld [vmem:[#allocation3 + $0x1c0] sm:$0xff]
    %v2161 = vld [vmem:[#allocation3 + $0x1c8] sm:$0xff]
    %v2162 = vld [vmem:[#allocation3 + $0x1d0] sm:$0xff]
    %v2163 = vld [vmem:[#allocation3 + $0x1d8] sm:$0xff]
    %v2164 = vld [vmem:[#allocation3 + $0x1e0] sm:$0xff]
    %v2165 = vld [vmem:[#allocation3 + $0x1e8] sm:$0xff]
    %v2166 = vld [vmem:[#allocation3 + $0x1f0] sm:$0xff]
    %v2167 = vld [vmem:[#allocation3 + $0x1f8] sm:$0xff]
    %v2168 = vpack.c.bf16 %v2038, %v2036
    %v2169 = vpack.c.bf16 %v2039, %v2037
    %v2170 = vpack.c.bf16 %v2042, %v2040
    %v2171 = vpack.c.bf16 %v2043, %v2041
    %v2172 = vpack.c.bf16 %v2046, %v2044
    %v2173 = vpack.c.bf16 %v2047, %v2045
    %v2174 = vpack.c.bf16 %v2050, %v2048
    %v2175 = vpack.c.bf16 %v2051, %v2049
    %v2176 = vpack.c.bf16 %v2054, %v2052
    %v2177 = vpack.c.bf16 %v2055, %v2053
    %v2178 = vpack.c.bf16 %v2058, %v2056
    %v2179 = vpack.c.bf16 %v2059, %v2057
    %v2180 = vpack.c.bf16 %v2062, %v2060
    %v2181 = vpack.c.bf16 %v2063, %v2061
    %v2182 = vpack.c.bf16 %v2066, %v2064
    %v2183 = vpack.c.bf16 %v2067, %v2065
    %v2184 = vpack.c.bf16 %v2070, %v2068
    %v2185 = vpack.c.bf16 %v2071, %v2069
    %v2186 = vpack.c.bf16 %v2074, %v2072
    %v2187 = vpack.c.bf16 %v2075, %v2073
    %v2188 = vpack.c.bf16 %v2078, %v2076
    %v2189 = vpack.c.bf16 %v2079, %v2077
    %v2190 = vpack.c.bf16 %v2082, %v2080
    %v2191 = vpack.c.bf16 %v2083, %v2081
    %v2192 = vpack.c.bf16 %v2086, %v2084
    %v2193 = vpack.c.bf16 %v2087, %v2085
    %v2194 = vpack.c.bf16 %v2090, %v2088
    %v2195 = vpack.c.bf16 %v2091, %v2089
    %v2196 = vpack.c.bf16 %v2094, %v2092
    %v2197 = vpack.c.bf16 %v2095, %v2093
    %v2198 = vpack.c.bf16 %v2098, %v2096
    %v2199 = vpack.c.bf16 %v2099, %v2097
    %2200 = vmatprep.subr.bf16.mxu0 %v2105
    %2201 = vmatpush1.bf16.msra.mxu0 %v2104
    %2202 = vmatprep.subr.bf16.mxu0 %v2109
    %2203 = vmatpush1.bf16.msra.mxu0 %v2108
    %2204 = vmatprep.subr.bf16.mxu0 %v2113
    %2205 = vmatpush1.bf16.msra.mxu0 %v2112
    %2206 = vmatprep.subr.bf16.mxu0 %v2117
    %2207 = vmatpush1.bf16.msra.mxu0 %v2116
    %2208 = vmatprep.subr.bf16.mxu0 %v2121
    %2209 = vmatpush1.bf16.msra.mxu0 %v2120
    %2210 = vmatprep.subr.bf16.mxu0 %v2125
    %2211 = vmatpush1.bf16.msra.mxu0 %v2124
    %2212 = vmatprep.subr.bf16.mxu0 %v2129
    %2213 = vmatpush1.bf16.msra.mxu0 %v2128
    %2214 = vmatprep.subr.bf16.mxu0 %v2133
    %2215 = vmatpush1.bf16.msra.mxu0 %v2132
    %2216 = vmatprep.subr.bf16.mxu0 %v2137
    %2217 = vmatpush1.bf16.msra.mxu0 %v2136
    %2218 = vmatprep.subr.bf16.mxu0 %v2141
    %2219 = vmatpush1.bf16.msra.mxu0 %v2140
    %2220 = vmatprep.subr.bf16.mxu0 %v2145
    %2221 = vmatpush1.bf16.msra.mxu0 %v2144
    %2222 = vmatprep.subr.bf16.mxu0 %v2149
    %2223 = vmatpush1.bf16.msra.mxu0 %v2148
    %2224 = vmatprep.subr.bf16.mxu0 %v2153
    %2225 = vmatpush1.bf16.msra.mxu0 %v2152
    %2226 = vmatprep.subr.bf16.mxu0 %v2157
    %2227 = vmatpush1.bf16.msra.mxu0 %v2156
    %2228 = vmatprep.subr.bf16.mxu0 %v2161
    %2229 = vmatpush1.bf16.msra.mxu0 %v2160
    %2230 = vmatprep.subr.bf16.mxu0 %v2165
    %2231 = vmatpush1.bf16.msra.mxu0 %v2164
    %2232 = vmatprep.mubr.bf16.mxu0 %v2169
    %2233 = vmatmul.mubr.bf16.gmra.mrb[0].mxu0 %v2168
    %v2234 = vpop.f32.mrb[0].mxu0
    %v2235 = vadd.f32 0.0, %v2234
    %v2236 = vpop.f32.mrb[0].mxu0
    %v2237 = vadd.f32 0.0, %v2236
    %v2238 = vpop.f32.mrb[0].mxu0
    %v2239 = vadd.f32 0.0, %v2238
    %v2240 = vpop.f32.mrb[0].mxu0
    %v2241 = vadd.f32 0.0, %v2240
    %2242 = vmatprep.mubr.bf16.mxu0 %v2171
    %2243 = vmatmul.mubr.bf16.gmra.mrb[0].mxu0 %v2170
    %v2244 = vpop.f32.mrb[0].mxu0
    %v2245 = vadd.f32 0.0, %v2244
    %v2246 = vpop.f32.mrb[0].mxu0
    %v2247 = vadd.f32 0.0, %v2246
    %v2248 = vpop.f32.mrb[0].mxu0
    %v2249 = vadd.f32 0.0, %v2248
    %v2250 = vpop.f32.mrb[0].mxu0
    %v2251 = vadd.f32 0.0, %v2250
    %2252 = vmatprep.mubr.bf16.mxu0 %v2173
    %2253 = vmatmul.mubr.bf16.gmra.mrb[0].mxu0 %v2172
    %v2254 = vpop.f32.mrb[0].mxu0
    %v2255 = vadd.f32 0.0, %v2254
    %v2256 = vpop.f32.mrb[0].mxu0
    %v2257 = vadd.f32 0.0, %v2256
    %v2258 = vpop.f32.mrb[0].mxu0
    %v2259 = vadd.f32 0.0, %v2258
    %v2260 = vpop.f32.mrb[0].mxu0
    %v2261 = vadd.f32 0.0, %v2260
    %2262 = vmatprep.mubr.bf16.mxu0 %v2175
    %2263 = vmatmul.mubr.bf16.gmra.mrb[0].mxu0 %v2174
    %v2264 = vpop.f32.mrb[0].mxu0
    %v2265 = vadd.f32 0.0, %v2264
    %v2266 = vpop.f32.mrb[0].mxu0
    %v2267 = vadd.f32 0.0, %v2266
    %v2268 = vpop.f32.mrb[0].mxu0
    %v2269 = vadd.f32 0.0, %v2268
    %v2270 = vpop.f32.mrb[0].mxu0
    %v2271 = vadd.f32 0.0, %v2270
    %2272 = vmatprep.mubr.bf16.mxu0 %v2177
    %2273 = vmatmul.mubr.bf16.gmra.mrb[0].mxu0 %v2176
    %v2274 = vpop.f32.mrb[0].mxu0
    %v2275 = vadd.f32 0.0, %v2274
    %v2276 = vpop.f32.mrb[0].mxu0
    %v2277 = vadd.f32 0.0, %v2276
    %v2278 = vpop.f32.mrb[0].mxu0
    %v2279 = vadd.f32 0.0, %v2278
    %v2280 = vpop.f32.mrb[0].mxu0
    %v2281 = vadd.f32 0.0, %v2280
    %2282 = vmatprep.mubr.bf16.mxu0 %v2179
    %2283 = vmatmul.mubr.bf16.gmra.mrb[0].mxu0 %v2178
    %v2284 = vpop.f32.mrb[0].mxu0
    %v2285 = vadd.f32 0.0, %v2284
    %v2286 = vpop.f32.mrb[0].mxu0
    %v2287 = vadd.f32 0.0, %v2286
    %v2288 = vpop.f32.mrb[0].mxu0
    %v2289 = vadd.f32 0.0, %v2288
    %v2290 = vpop.f32.mrb[0].mxu0
    %v2291 = vadd.f32 0.0, %v2290
    %2292 = vmatprep.mubr.bf16.mxu0 %v2181
    %2293 = vmatmul.mubr.bf16.gmra.mrb[0].mxu0 %v2180
    %v2294 = vpop.f32.mrb[0].mxu0
    %v2295 = vadd.f32 0.0, %v2294
    %v2296 = vpop.f32.mrb[0].mxu0
    %v2297 = vadd.f32 0.0, %v2296
    %v2298 = vpop.f32.mrb[0].mxu0
    %v2299 = vadd.f32 0.0, %v2298
    %v2300 = vpop.f32.mrb[0].mxu0
    %v2301 = vadd.f32 0.0, %v2300
    %2302 = vmatprep.mubr.bf16.mxu0 %v2183
    %2303 = vmatmul.mubr.bf16.gmra.mrb[0].mxu0 %v2182
    %v2304 = vpop.f32.mrb[0].mxu0
    %v2305 = vadd.f32 0.0, %v2304
    %v2306 = vpop.f32.mrb[0].mxu0
    %v2307 = vadd.f32 0.0, %v2306
    %v2308 = vpop.f32.mrb[0].mxu0
    %v2309 = vadd.f32 0.0, %v2308
    %v2310 = vpop.f32.mrb[0].mxu0
    %v2311 = vadd.f32 0.0, %v2310
    %2312 = vmatprep.mubr.bf16.mxu0 %v2185
    %2313 = vmatmul.mubr.bf16.gmra.mrb[0].mxu0 %v2184
    %v2314 = vpop.f32.mrb[0].mxu0
    %v2315 = vadd.f32 0.0, %v2314
    %v2316 = vpop.f32.mrb[0].mxu0
    %v2317 = vadd.f32 0.0, %v2316
    %v2318 = vpop.f32.mrb[0].mxu0
    %v2319 = vadd.f32 0.0, %v2318
    %v2320 = vpop.f32.mrb[0].mxu0
    %v2321 = vadd.f32 0.0, %v2320
    %2322 = vmatprep.mubr.bf16.mxu0 %v2187
    %2323 = vmatmul.mubr.bf16.gmra.mrb[0].mxu0 %v2186
    %v2324 = vpop.f32.mrb[0].mxu0
    %v2325 = vadd.f32 0.0, %v2324
    %v2326 = vpop.f32.mrb[0].mxu0
    %v2327 = vadd.f32 0.0, %v2326
    %v2328 = vpop.f32.mrb[0].mxu0
    %v2329 = vadd.f32 0.0, %v2328
    %v2330 = vpop.f32.mrb[0].mxu0
    %v2331 = vadd.f32 0.0, %v2330
    %2332 = vmatprep.mubr.bf16.mxu0 %v2189
    %2333 = vmatmul.mubr.bf16.gmra.mrb[0].mxu0 %v2188
    %v2334 = vpop.f32.mrb[0].mxu0
    %v2335 = vadd.f32 0.0, %v2334
    %v2336 = vpop.f32.mrb[0].mxu0
    %v2337 = vadd.f32 0.0, %v2336
    %v2338 = vpop.f32.mrb[0].mxu0
    %v2339 = vadd.f32 0.0, %v2338
    %v2340 = vpop.f32.mrb[0].mxu0
    %v2341 = vadd.f32 0.0, %v2340
    %2342 = vmatprep.mubr.bf16.mxu0 %v2191
    %2343 = vmatmul.mubr.bf16.gmra.mrb[0].mxu0 %v2190
    %v2344 = vpop.f32.mrb[0].mxu0
    %v2345 = vadd.f32 0.0, %v2344
    %v2346 = vpop.f32.mrb[0].mxu0
    %v2347 = vadd.f32 0.0, %v2346
    %v2348 = vpop.f32.mrb[0].mxu0
    %v2349 = vadd.f32 0.0, %v2348
    %v2350 = vpop.f32.mrb[0].mxu0
    %v2351 = vadd.f32 0.0, %v2350
    %2352 = vmatprep.mubr.bf16.mxu0 %v2193
    %2353 = vmatmul.mubr.bf16.gmra.mrb[0].mxu0 %v2192
    %v2354 = vpop.f32.mrb[0].mxu0
    %v2355 = vadd.f32 0.0, %v2354
    %v2356 = vpop.f32.mrb[0].mxu0
    %v2357 = vadd.f32 0.0, %v2356
    %v2358 = vpop.f32.mrb[0].mxu0
    %v2359 = vadd.f32 0.0, %v2358
    %v2360 = vpop.f32.mrb[0].mxu0
    %v2361 = vadd.f32 0.0, %v2360
    %2362 = vmatprep.mubr.bf16.mxu0 %v2195
    %2363 = vmatmul.mubr.bf16.gmra.mrb[0].mxu0 %v2194
    %v2364 = vpop.f32.mrb[0].mxu0
    %v2365 = vadd.f32 0.0, %v2364
    %v2366 = vpop.f32.mrb[0].mxu0
    %v2367 = vadd.f32 0.0, %v2366
    %v2368 = vpop.f32.mrb[0].mxu0
    %v2369 = vadd.f32 0.0, %v2368
    %v2370 = vpop.f32.mrb[0].mxu0
    %v2371 = vadd.f32 0.0, %v2370
    %2372 = vmatprep.mubr.bf16.mxu0 %v2197
    %2373 = vmatmul.mubr.bf16.gmra.mrb[0].mxu0 %v2196
    %v2374 = vpop.f32.mrb[0].mxu0
    %v2375 = vadd.f32 0.0, %v2374
    %v2376 = vpop.f32.mrb[0].mxu0
    %v2377 = vadd.f32 0.0, %v2376
    %v2378 = vpop.f32.mrb[0].mxu0
    %v2379 = vadd.f32 0.0, %v2378
    %v2380 = vpop.f32.mrb[0].mxu0
    %v2381 = vadd.f32 0.0, %v2380
    %2382 = vmatprep.mubr.bf16.mxu0 %v2199
    %2383 = vmatmul.mubr.bf16.gmra.mrb[0].mxu0 %v2198
    %v2384 = vpop.f32.mrb[0].mxu0
    %v2385 = vadd.f32 0.0, %v2384
    %v2386 = vpop.f32.mrb[0].mxu0
    %v2387 = vadd.f32 0.0, %v2386
    %v2388 = vpop.f32.mrb[0].mxu0
    %v2389 = vadd.f32 0.0, %v2388
    %v2390 = vpop.f32.mrb[0].mxu0
    %v2391 = vadd.f32 0.0, %v2390
    %2392 = vdwg.mxu0
    %2393 = vmatprep.subr.bf16.mxu0 %v2107
    %2394 = vmatpush1.bf16.msra.mxu0 %v2106
    %2395 = vmatprep.subr.bf16.mxu0 %v2111
    %2396 = vmatpush1.bf16.msra.mxu0 %v2110
    %2397 = vmatprep.subr.bf16.mxu0 %v2115
    %2398 = vmatpush1.bf16.msra.mxu0 %v2114
    %2399 = vmatprep.subr.bf16.mxu0 %v2119
    %2400 = vmatpush1.bf16.msra.mxu0 %v2118
    %2401 = vmatprep.subr.bf16.mxu0 %v2123
    %2402 = vmatpush1.bf16.msra.mxu0 %v2122
    %2403 = vmatprep.subr.bf16.mxu0 %v2127
    %2404 = vmatpush1.bf16.msra.mxu0 %v2126
    %2405 = vmatprep.subr.bf16.mxu0 %v2131
    %2406 = vmatpush1.bf16.msra.mxu0 %v2130
    %2407 = vmatprep.subr.bf16.mxu0 %v2135
    %2408 = vmatpush1.bf16.msra.mxu0 %v2134
    %2409 = vmatprep.subr.bf16.mxu0 %v2139
    %2410 = vmatpush1.bf16.msra.mxu0 %v2138
    %2411 = vmatprep.subr.bf16.mxu0 %v2143
    %2412 = vmatpush1.bf16.msra.mxu0 %v2142
    %2413 = vmatprep.subr.bf16.mxu0 %v2147
    %2414 = vmatpush1.bf16.msra.mxu0 %v2146
    %2415 = vmatprep.subr.bf16.mxu0 %v2151
    %2416 = vmatpush1.bf16.msra.mxu0 %v2150
    %2417 = vmatprep.subr.bf16.mxu0 %v2155
    %2418 = vmatpush1.bf16.msra.mxu0 %v2154
    %2419 = vmatprep.subr.bf16.mxu0 %v2159
    %2420 = vmatpush1.bf16.msra.mxu0 %v2158
    %2421 = vmatprep.subr.bf16.mxu0 %v2163
    %2422 = vmatpush1.bf16.msra.mxu0 %v2162
    %2423 = vmatprep.subr.bf16.mxu0 %v2167
    %2424 = vmatpush1.bf16.msra.mxu0 %v2166
    %2425 = vmatprep.mubr.bf16.mxu0 %v2169
    %2426 = vmatmul.mubr.bf16.gmra.mrb[0].mxu0 %v2168
    %v2427 = vpop.f32.mrb[0].mxu0
    %v2428 = vadd.f32 0.0, %v2427
    %v2429 = vpop.f32.mrb[0].mxu0
    %v2430 = vadd.f32 0.0, %v2429
    %v2431 = vpop.f32.mrb[0].mxu0
    %v2432 = vadd.f32 0.0, %v2431
    %v2433 = vpop.f32.mrb[0].mxu0
    %v2434 = vadd.f32 0.0, %v2433
    %2435 = vmatprep.mubr.bf16.mxu0 %v2171
    %2436 = vmatmul.mubr.bf16.gmra.mrb[0].mxu0 %v2170
    %v2437 = vpop.f32.mrb[0].mxu0
    %v2438 = vadd.f32 0.0, %v2437
    %v2439 = vpop.f32.mrb[0].mxu0
    %v2440 = vadd.f32 0.0, %v2439
    %v2441 = vpop.f32.mrb[0].mxu0
    %v2442 = vadd.f32 0.0, %v2441
    %v2443 = vpop.f32.mrb[0].mxu0
    %v2444 = vadd.f32 0.0, %v2443
    %2445 = vmatprep.mubr.bf16.mxu0 %v2173
    %2446 = vmatmul.mubr.bf16.gmra.mrb[0].mxu0 %v2172
    %v2447 = vpop.f32.mrb[0].mxu0
    %v2448 = vadd.f32 0.0, %v2447
    %v2449 = vpop.f32.mrb[0].mxu0
    %v2450 = vadd.f32 0.0, %v2449
    %v2451 = vpop.f32.mrb[0].mxu0
    %v2452 = vadd.f32 0.0, %v2451
    %v2453 = vpop.f32.mrb[0].mxu0
    %v2454 = vadd.f32 0.0, %v2453
    %2455 = vmatprep.mubr.bf16.mxu0 %v2175
    %2456 = vmatmul.mubr.bf16.gmra.mrb[0].mxu0 %v2174
    %v2457 = vpop.f32.mrb[0].mxu0
    %v2458 = vadd.f32 0.0, %v2457
    %v2459 = vpop.f32.mrb[0].mxu0
    %v2460 = vadd.f32 0.0, %v2459
    %v2461 = vpop.f32.mrb[0].mxu0
    %v2462 = vadd.f32 0.0, %v2461
    %v2463 = vpop.f32.mrb[0].mxu0
    %v2464 = vadd.f32 0.0, %v2463
    %2465 = vmatprep.mubr.bf16.mxu0 %v2177
    %2466 = vmatmul.mubr.bf16.gmra.mrb[0].mxu0 %v2176
    %v2467 = vpop.f32.mrb[0].mxu0
    %v2468 = vadd.f32 0.0, %v2467
    %v2469 = vpop.f32.mrb[0].mxu0
    %v2470 = vadd.f32 0.0, %v2469
    %v2471 = vpop.f32.mrb[0].mxu0
    %v2472 = vadd.f32 0.0, %v2471
    %v2473 = vpop.f32.mrb[0].mxu0
    %v2474 = vadd.f32 0.0, %v2473
    %2475 = vmatprep.mubr.bf16.mxu0 %v2179
    %2476 = vmatmul.mubr.bf16.gmra.mrb[0].mxu0 %v2178
    %v2477 = vpop.f32.mrb[0].mxu0
    %v2478 = vadd.f32 0.0, %v2477
    %v2479 = vpop.f32.mrb[0].mxu0
    %v2480 = vadd.f32 0.0, %v2479
    %v2481 = vpop.f32.mrb[0].mxu0
    %v2482 = vadd.f32 0.0, %v2481
    %v2483 = vpop.f32.mrb[0].mxu0
    %v2484 = vadd.f32 0.0, %v2483
    %2485 = vmatprep.mubr.bf16.mxu0 %v2181
    %2486 = vmatmul.mubr.bf16.gmra.mrb[0].mxu0 %v2180
    %v2487 = vpop.f32.mrb[0].mxu0
    %v2488 = vadd.f32 0.0, %v2487
    %v2489 = vpop.f32.mrb[0].mxu0
    %v2490 = vadd.f32 0.0, %v2489
    %v2491 = vpop.f32.mrb[0].mxu0
    %v2492 = vadd.f32 0.0, %v2491
    %v2493 = vpop.f32.mrb[0].mxu0
    %v2494 = vadd.f32 0.0, %v2493
    %2495 = vmatprep.mubr.bf16.mxu0 %v2183
    %2496 = vmatmul.mubr.bf16.gmra.mrb[0].mxu0 %v2182
    %v2497 = vpop.f32.mrb[0].mxu0
    %v2498 = vadd.f32 0.0, %v2497
    %v2499 = vpop.f32.mrb[0].mxu0
    %v2500 = vadd.f32 0.0, %v2499
    %v2501 = vpop.f32.mrb[0].mxu0
    %v2502 = vadd.f32 0.0, %v2501
    %v2503 = vpop.f32.mrb[0].mxu0
    %v2504 = vadd.f32 0.0, %v2503
    %2505 = vmatprep.mubr.bf16.mxu0 %v2185
    %2506 = vmatmul.mubr.bf16.gmra.mrb[0].mxu0 %v2184
    %v2507 = vpop.f32.mrb[0].mxu0
    %v2508 = vadd.f32 0.0, %v2507
    %v2509 = vpop.f32.mrb[0].mxu0
    %v2510 = vadd.f32 0.0, %v2509
    %v2511 = vpop.f32.mrb[0].mxu0
    %v2512 = vadd.f32 0.0, %v2511
    %v2513 = vpop.f32.mrb[0].mxu0
    %v2514 = vadd.f32 0.0, %v2513
    %2515 = vmatprep.mubr.bf16.mxu0 %v2187
    %2516 = vmatmul.mubr.bf16.gmra.mrb[0].mxu0 %v2186
    %v2517 = vpop.f32.mrb[0].mxu0
    %v2518 = vadd.f32 0.0, %v2517
    %v2519 = vpop.f32.mrb[0].mxu0
    %v2520 = vadd.f32 0.0, %v2519
    %v2521 = vpop.f32.mrb[0].mxu0
    %v2522 = vadd.f32 0.0, %v2521
    %v2523 = vpop.f32.mrb[0].mxu0
    %v2524 = vadd.f32 0.0, %v2523
    %2525 = vmatprep.mubr.bf16.mxu0 %v2189
    %2526 = vmatmul.mubr.bf16.gmra.mrb[0].mxu0 %v2188
    %v2527 = vpop.f32.mrb[0].mxu0
    %v2528 = vadd.f32 0.0, %v2527
    %v2529 = vpop.f32.mrb[0].mxu0
    %v2530 = vadd.f32 0.0, %v2529
    %v2531 = vpop.f32.mrb[0].mxu0
    %v2532 = vadd.f32 0.0, %v2531
    %v2533 = vpop.f32.mrb[0].mxu0
    %v2534 = vadd.f32 0.0, %v2533
    %2535 = vmatprep.mubr.bf16.mxu0 %v2191
    %2536 = vmatmul.mubr.bf16.gmra.mrb[0].mxu0 %v2190
    %v2537 = vpop.f32.mrb[0].mxu0
    %v2538 = vadd.f32 0.0, %v2537
    %v2539 = vpop.f32.mrb[0].mxu0
    %v2540 = vadd.f32 0.0, %v2539
    %v2541 = vpop.f32.mrb[0].mxu0
    %v2542 = vadd.f32 0.0, %v2541
    %v2543 = vpop.f32.mrb[0].mxu0
    %v2544 = vadd.f32 0.0, %v2543
    %2545 = vmatprep.mubr.bf16.mxu0 %v2193
    %2546 = vmatmul.mubr.bf16.gmra.mrb[0].mxu0 %v2192
    %v2547 = vpop.f32.mrb[0].mxu0
    %v2548 = vadd.f32 0.0, %v2547
    %v2549 = vpop.f32.mrb[0].mxu0
    %v2550 = vadd.f32 0.0, %v2549
    %v2551 = vpop.f32.mrb[0].mxu0
    %v2552 = vadd.f32 0.0, %v2551
    %v2553 = vpop.f32.mrb[0].mxu0
    %v2554 = vadd.f32 0.0, %v2553
    %2555 = vmatprep.mubr.bf16.mxu0 %v2195
    %2556 = vmatmul.mubr.bf16.gmra.mrb[0].mxu0 %v2194
    %v2557 = vpop.f32.mrb[0].mxu0
    %v2558 = vadd.f32 0.0, %v2557
    %v2559 = vpop.f32.mrb[0].mxu0
    %v2560 = vadd.f32 0.0, %v2559
    %v2561 = vpop.f32.mrb[0].mxu0
    %v2562 = vadd.f32 0.0, %v2561
    %v2563 = vpop.f32.mrb[0].mxu0
    %v2564 = vadd.f32 0.0, %v2563
    %2565 = vmatprep.mubr.bf16.mxu0 %v2197
    %2566 = vmatmul.mubr.bf16.gmra.mrb[0].mxu0 %v2196
    %v2567 = vpop.f32.mrb[0].mxu0
    %v2568 = vadd.f32 0.0, %v2567
    %v2569 = vpop.f32.mrb[0].mxu0
    %v2570 = vadd.f32 0.0, %v2569
    %v2571 = vpop.f32.mrb[0].mxu0
    %v2572 = vadd.f32 0.0, %v2571
    %v2573 = vpop.f32.mrb[0].mxu0
    %v2574 = vadd.f32 0.0, %v2573
    %2575 = vmatprep.mubr.bf16.mxu0 %v2199
    %2576 = vmatmul.mubr.bf16.gmra.mrb[0].mxu0 %v2198
    %v2577 = vpop.f32.mrb[0].mxu0
    %v2578 = vadd.f32 0.0, %v2577
    %v2579 = vpop.f32.mrb[0].mxu0
    %v2580 = vadd.f32 0.0, %v2579
    %v2581 = vpop.f32.mrb[0].mxu0
    %v2582 = vadd.f32 0.0, %v2581
    %v2583 = vpop.f32.mrb[0].mxu0
    %v2584 = vadd.f32 0.0, %v2583
    %2585 = vdwg.mxu0
    %v2586 = vadd.f32 %v2235, %v2239
    %v2587 = vadd.f32 %v2586, %v2245
    %v2588 = vadd.f32 %v2587, %v2249
    %v2589 = vadd.f32 %v2588, %v2255
    %v2590 = vadd.f32 %v2589, %v2259
    %v2591 = vadd.f32 %v2590, %v2265
    %v2592 = vadd.f32 %v2591, %v2269
    %v2593 = vadd.f32 %v2592, %v2275
    %v2594 = vadd.f32 %v2593, %v2279
    %v2595 = vadd.f32 %v2594, %v2285
    %v2596 = vadd.f32 %v2595, %v2289
    %v2597 = vadd.f32 %v2596, %v2295
    %v2598 = vadd.f32 %v2597, %v2299
    %v2599 = vadd.f32 %v2598, %v2305
    %v2600 = vadd.f32 %v2599, %v2309
    %v2601 = vadd.f32 %v2600, %v2315
    %v2602 = vadd.f32 %v2601, %v2319
    %v2603 = vadd.f32 %v2602, %v2325
    %v2604 = vadd.f32 %v2603, %v2329
    %v2605 = vadd.f32 %v2604, %v2335
    %v2606 = vadd.f32 %v2605, %v2339
    %v2607 = vadd.f32 %v2606, %v2345
    %v2608 = vadd.f32 %v2607, %v2349
    %v2609 = vadd.f32 %v2608, %v2355
    %v2610 = vadd.f32 %v2609, %v2359
    %v2611 = vadd.f32 %v2610, %v2365
    %v2612 = vadd.f32 %v2611, %v2369
    %v2613 = vadd.f32 %v2612, %v2375
    %v2614 = vadd.f32 %v2613, %v2379
    %v2615 = vadd.f32 %v2614, %v2385
    %v2616 = vadd.f32 %v2615, %v2389
    %v2617 = vrot.slane %v2616, 4
    %v2618 = vadd.f32 %v2616, %v2617
    %v2619 = vrot.slane %v2618, 2
    %v2620 = vadd.f32 %v2618, %v2619
    %v2621 = vrot.slane %v2620, 1
    %v2622 = vadd.f32 %v2620, %v2621
    %v2623 = vadd.f32 %v2237, %v2241
    %v2624 = vadd.f32 %v2623, %v2247
    %v2625 = vadd.f32 %v2624, %v2251
    %v2626 = vadd.f32 %v2625, %v2257
    %v2627 = vadd.f32 %v2626, %v2261
    %v2628 = vadd.f32 %v2627, %v2267
    %v2629 = vadd.f32 %v2628, %v2271
    %v2630 = vadd.f32 %v2629, %v2277
    %v2631 = vadd.f32 %v2630, %v2281
    %v2632 = vadd.f32 %v2631, %v2287
    %v2633 = vadd.f32 %v2632, %v2291
    %v2634 = vadd.f32 %v2633, %v2297
    %v2635 = vadd.f32 %v2634, %v2301
    %v2636 = vadd.f32 %v2635, %v2307
    %v2637 = vadd.f32 %v2636, %v2311
    %v2638 = vadd.f32 %v2637, %v2317
    %v2639 = vadd.f32 %v2638, %v2321
    %v2640 = vadd.f32 %v2639, %v2327
    %v2641 = vadd.f32 %v2640, %v2331
    %v2642 = vadd.f32 %v2641, %v2337
    %v2643 = vadd.f32 %v2642, %v2341
    %v2644 = vadd.f32 %v2643, %v2347
    %v2645 = vadd.f32 %v2644, %v2351
    %v2646 = vadd.f32 %v2645, %v2357
    %v2647 = vadd.f32 %v2646, %v2361
    %v2648 = vadd.f32 %v2647, %v2367
    %v2649 = vadd.f32 %v2648, %v2371
    %v2650 = vadd.f32 %v2649, %v2377
    %v2651 = vadd.f32 %v2650, %v2381
    %v2652 = vadd.f32 %v2651, %v2387
    %v2653 = vadd.f32 %v2652, %v2391
    %v2654 = vrot.slane %v2653, 4
    %v2655 = vadd.f32 %v2653, %v2654
    %v2656 = vrot.slane %v2655, 2
    %v2657 = vadd.f32 %v2655, %v2656
    %v2658 = vrot.slane %v2657, 1
    %v2659 = vadd.f32 %v2657, %v2658
    %v2660 = vadd.f32 %v2428, %v2432
    %v2661 = vadd.f32 %v2660, %v2438
    %v2662 = vadd.f32 %v2661, %v2442
    %v2663 = vadd.f32 %v2662, %v2448
    %v2664 = vadd.f32 %v2663, %v2452
    %v2665 = vadd.f32 %v2664, %v2458
    %v2666 = vadd.f32 %v2665, %v2462
    %v2667 = vadd.f32 %v2666, %v2468
    %v2668 = vadd.f32 %v2667, %v2472
    %v2669 = vadd.f32 %v2668, %v2478
    %v2670 = vadd.f32 %v2669, %v2482
    %v2671 = vadd.f32 %v2670, %v2488
    %v2672 = vadd.f32 %v2671, %v2492
    %v2673 = vadd.f32 %v2672, %v2498
    %v2674 = vadd.f32 %v2673, %v2502
    %v2675 = vadd.f32 %v2674, %v2508
    %v2676 = vadd.f32 %v2675, %v2512
    %v2677 = vadd.f32 %v2676, %v2518
    %v2678 = vadd.f32 %v2677, %v2522
    %v2679 = vadd.f32 %v2678, %v2528
    %v2680 = vadd.f32 %v2679, %v2532
    %v2681 = vadd.f32 %v2680, %v2538
    %v2682 = vadd.f32 %v2681, %v2542
    %v2683 = vadd.f32 %v2682, %v2548
    %v2684 = vadd.f32 %v2683, %v2552
    %v2685 = vadd.f32 %v2684, %v2558
    %v2686 = vadd.f32 %v2685, %v2562
    %v2687 = vadd.f32 %v2686, %v2568
    %v2688 = vadd.f32 %v2687, %v2572
    %v2689 = vadd.f32 %v2688, %v2578
    %v2690 = vadd.f32 %v2689, %v2582
    %v2691 = vrot.slane %v2690, 4
    %v2692 = vadd.f32 %v2690, %v2691
    %v2693 = vrot.slane %v2692, 2
    %v2694 = vadd.f32 %v2692, %v2693
    %v2695 = vrot.slane %v2694, 1
    %v2696 = vadd.f32 %v2694, %v2695
    %v2697 = vadd.f32 %v2430, %v2434
    %v2698 = vadd.f32 %v2697, %v2440
    %v2699 = vadd.f32 %v2698, %v2444
    %v2700 = vadd.f32 %v2699, %v2450
    %v2701 = vadd.f32 %v2700, %v2454
    %v2702 = vadd.f32 %v2701, %v2460
    %v2703 = vadd.f32 %v2702, %v2464
    %v2704 = vadd.f32 %v2703, %v2470
    %v2705 = vadd.f32 %v2704, %v2474
    %v2706 = vadd.f32 %v2705, %v2480
    %v2707 = vadd.f32 %v2706, %v2484
    %v2708 = vadd.f32 %v2707, %v2490
    %v2709 = vadd.f32 %v2708, %v2494
    %v2710 = vadd.f32 %v2709, %v2500
    %v2711 = vadd.f32 %v2710, %v2504
    %v2712 = vadd.f32 %v2711, %v2510
    %v2713 = vadd.f32 %v2712, %v2514
    %v2714 = vadd.f32 %v2713, %v2520
    %v2715 = vadd.f32 %v2714, %v2524
    %v2716 = vadd.f32 %v2715, %v2530
    %v2717 = vadd.f32 %v2716, %v2534
    %v2718 = vadd.f32 %v2717, %v2540
    %v2719 = vadd.f32 %v2718, %v2544
    %v2720 = vadd.f32 %v2719, %v2550
    %v2721 = vadd.f32 %v2720, %v2554
    %v2722 = vadd.f32 %v2721, %v2560
    %v2723 = vadd.f32 %v2722, %v2564
    %v2724 = vadd.f32 %v2723, %v2570
    %v2725 = vadd.f32 %v2724, %v2574
    %v2726 = vadd.f32 %v2725, %v2580
    %v2727 = vadd.f32 %v2726, %v2584
    %v2728 = vrot.slane %v2727, 4
    %v2729 = vadd.f32 %v2727, %v2728
    %v2730 = vrot.slane %v2729, 2
    %v2731 = vadd.f32 %v2729, %v2730
    %v2732 = vrot.slane %v2731, 1
    %v2733 = vadd.f32 %v2731, %v2732
    %v2734 = vmul.f32 %v2622, 0.00390625
    %v2735 = vmul.f32 %v2659, 0.00390625
    %v2736 = vmul.f32 %v2696, 0.00390625
    %v2737 = vmul.f32 %v2733, 0.00390625
    %v2738 = vmul.f32 %v2235, %v2235
    %v2739 = vmul.f32 %v2237, %v2237
    %v2740 = vmul.f32 %v2428, %v2428
    %v2741 = vmul.f32 %v2430, %v2430
    %v2742 = vmul.f32 %v2239, %v2239
    %v2743 = vmul.f32 %v2241, %v2241
    %v2744 = vmul.f32 %v2432, %v2432
    %v2745 = vmul.f32 %v2434, %v2434
    %v2746 = vmul.f32 %v2245, %v2245
    %v2747 = vmul.f32 %v2247, %v2247
    %v2748 = vmul.f32 %v2438, %v2438
    %v2749 = vmul.f32 %v2440, %v2440
    %v2750 = vmul.f32 %v2249, %v2249
    %v2751 = vmul.f32 %v2251, %v2251
    %v2752 = vmul.f32 %v2442, %v2442
    %v2753 = vmul.f32 %v2444, %v2444
    %v2754 = vmul.f32 %v2255, %v2255
    %v2755 = vmul.f32 %v2257, %v2257
    %v2756 = vmul.f32 %v2448, %v2448
    %v2757 = vmul.f32 %v2450, %v2450
    %v2758 = vmul.f32 %v2259, %v2259
    %v2759 = vmul.f32 %v2261, %v2261
    %v2760 = vmul.f32 %v2452, %v2452
    %v2761 = vmul.f32 %v2454, %v2454
    %v2762 = vmul.f32 %v2265, %v2265
    %v2763 = vmul.f32 %v2267, %v2267
    %v2764 = vmul.f32 %v2458, %v2458
    %v2765 = vmul.f32 %v2460, %v2460
    %v2766 = vmul.f32 %v2269, %v2269
    %v2767 = vmul.f32 %v2271, %v2271
    %v2768 = vmul.f32 %v2462, %v2462
    %v2769 = vmul.f32 %v2464, %v2464
    %v2770 = vmul.f32 %v2275, %v2275
    %v2771 = vmul.f32 %v2277, %v2277
    %v2772 = vmul.f32 %v2468, %v2468
    %v2773 = vmul.f32 %v2470, %v2470
    %v2774 = vmul.f32 %v2279, %v2279
    %v2775 = vmul.f32 %v2281, %v2281
    %v2776 = vmul.f32 %v2472, %v2472
    %v2777 = vmul.f32 %v2474, %v2474
    %v2778 = vmul.f32 %v2285, %v2285
    %v2779 = vmul.f32 %v2287, %v2287
    %v2780 = vmul.f32 %v2478, %v2478
    %v2781 = vmul.f32 %v2480, %v2480
    %v2782 = vmul.f32 %v2289, %v2289
    %v2783 = vmul.f32 %v2291, %v2291
    %v2784 = vmul.f32 %v2482, %v2482
    %v2785 = vmul.f32 %v2484, %v2484
    %v2786 = vmul.f32 %v2295, %v2295
    %v2787 = vmul.f32 %v2297, %v2297
    %v2788 = vmul.f32 %v2488, %v2488
    %v2789 = vmul.f32 %v2490, %v2490
    %v2790 = vmul.f32 %v2299, %v2299
    %v2791 = vmul.f32 %v2301, %v2301
    %v2792 = vmul.f32 %v2492, %v2492
    %v2793 = vmul.f32 %v2494, %v2494
    %v2794 = vmul.f32 %v2305, %v2305
    %v2795 = vmul.f32 %v2307, %v2307
    %v2796 = vmul.f32 %v2498, %v2498
    %v2797 = vmul.f32 %v2500, %v2500
    %v2798 = vmul.f32 %v2309, %v2309
    %v2799 = vmul.f32 %v2311, %v2311
    %v2800 = vmul.f32 %v2502, %v2502
    %v2801 = vmul.f32 %v2504, %v2504
    %v2802 = vmul.f32 %v2315, %v2315
    %v2803 = vmul.f32 %v2317, %v2317
    %v2804 = vmul.f32 %v2508, %v2508
    %v2805 = vmul.f32 %v2510, %v2510
    %v2806 = vmul.f32 %v2319, %v2319
    %v2807 = vmul.f32 %v2321, %v2321
    %v2808 = vmul.f32 %v2512, %v2512
    %v2809 = vmul.f32 %v2514, %v2514
    %v2810 = vmul.f32 %v2325, %v2325
    %v2811 = vmul.f32 %v2327, %v2327
    %v2812 = vmul.f32 %v2518, %v2518
    %v2813 = vmul.f32 %v2520, %v2520
    %v2814 = vmul.f32 %v2329, %v2329
    %v2815 = vmul.f32 %v2331, %v2331
    %v2816 = vmul.f32 %v2522, %v2522
    %v2817 = vmul.f32 %v2524, %v2524
    %v2818 = vmul.f32 %v2335, %v2335
    %v2819 = vmul.f32 %v2337, %v2337
    %v2820 = vmul.f32 %v2528, %v2528
    %v2821 = vmul.f32 %v2530, %v2530
    %v2822 = vmul.f32 %v2339, %v2339
    %v2823 = vmul.f32 %v2341, %v2341
    %v2824 = vmul.f32 %v2532, %v2532
    %v2825 = vmul.f32 %v2534, %v2534
    %v2826 = vmul.f32 %v2345, %v2345
    %v2827 = vmul.f32 %v2347, %v2347
    %v2828 = vmul.f32 %v2538, %v2538
    %v2829 = vmul.f32 %v2540, %v2540
    %v2830 = vmul.f32 %v2349, %v2349
    %v2831 = vmul.f32 %v2351, %v2351
    %v2832 = vmul.f32 %v2542, %v2542
    %v2833 = vmul.f32 %v2544, %v2544
    %v2834 = vmul.f32 %v2355, %v2355
    %v2835 = vmul.f32 %v2357, %v2357
    %v2836 = vmul.f32 %v2548, %v2548
    %v2837 = vmul.f32 %v2550, %v2550
    %v2838 = vmul.f32 %v2359, %v2359
    %v2839 = vmul.f32 %v2361, %v2361
    %v2840 = vmul.f32 %v2552, %v2552
    %v2841 = vmul.f32 %v2554, %v2554
    %v2842 = vmul.f32 %v2365, %v2365
    %v2843 = vmul.f32 %v2367, %v2367
    %v2844 = vmul.f32 %v2558, %v2558
    %v2845 = vmul.f32 %v2560, %v2560
    %v2846 = vmul.f32 %v2369, %v2369
    %v2847 = vmul.f32 %v2371, %v2371
    %v2848 = vmul.f32 %v2562, %v2562
    %v2849 = vmul.f32 %v2564, %v2564
    %v2850 = vmul.f32 %v2375, %v2375
    %v2851 = vmul.f32 %v2377, %v2377
    %v2852 = vmul.f32 %v2568, %v2568
    %v2853 = vmul.f32 %v2570, %v2570
    %v2854 = vmul.f32 %v2379, %v2379
    %v2855 = vmul.f32 %v2381, %v2381
    %v2856 = vmul.f32 %v2572, %v2572
    %v2857 = vmul.f32 %v2574, %v2574
    %v2858 = vmul.f32 %v2385, %v2385
    %v2859 = vmul.f32 %v2387, %v2387
    %v2860 = vmul.f32 %v2578, %v2578
    %v2861 = vmul.f32 %v2580, %v2580
    %v2862 = vmul.f32 %v2389, %v2389
    %v2863 = vmul.f32 %v2391, %v2391
    %v2864 = vmul.f32 %v2582, %v2582
    %v2865 = vmul.f32 %v2584, %v2584
    %v2866 = vadd.f32 %v2738, %v2742
    %v2867 = vadd.f32 %v2866, %v2746
    %v2868 = vadd.f32 %v2867, %v2750
    %v2869 = vadd.f32 %v2868, %v2754
    %v2870 = vadd.f32 %v2869, %v2758
    %v2871 = vadd.f32 %v2870, %v2762
    %v2872 = vadd.f32 %v2871, %v2766
    %v2873 = vadd.f32 %v2872, %v2770
    %v2874 = vadd.f32 %v2873, %v2774
    %v2875 = vadd.f32 %v2874, %v2778
    %v2876 = vadd.f32 %v2875, %v2782
    %v2877 = vadd.f32 %v2876, %v2786
    %v2878 = vadd.f32 %v2877, %v2790
    %v2879 = vadd.f32 %v2878, %v2794
    %v2880 = vadd.f32 %v2879, %v2798
    %v2881 = vadd.f32 %v2880, %v2802
    %v2882 = vadd.f32 %v2881, %v2806
    %v2883 = vadd.f32 %v2882, %v2810
    %v2884 = vadd.f32 %v2883, %v2814
    %v2885 = vadd.f32 %v2884, %v2818
    %v2886 = vadd.f32 %v2885, %v2822
    %v2887 = vadd.f32 %v2886, %v2826
    %v2888 = vadd.f32 %v2887, %v2830
    %v2889 = vadd.f32 %v2888, %v2834
    %v2890 = vadd.f32 %v2889, %v2838
    %v2891 = vadd.f32 %v2890, %v2842
    %v2892 = vadd.f32 %v2891, %v2846
    %v2893 = vadd.f32 %v2892, %v2850
    %v2894 = vadd.f32 %v2893, %v2854
    %v2895 = vadd.f32 %v2894, %v2858
    %v2896 = vadd.f32 %v2895, %v2862
    %v2897 = vrot.slane %v2896, 4
    %v2898 = vadd.f32 %v2896, %v2897
    %v2899 = vrot.slane %v2898, 2
    %v2900 = vadd.f32 %v2898, %v2899
    %v2901 = vrot.slane %v2900, 1
    %v2902 = vadd.f32 %v2900, %v2901
    %v2903 = vadd.f32 %v2739, %v2743
    %v2904 = vadd.f32 %v2903, %v2747
    %v2905 = vadd.f32 %v2904, %v2751
    %v2906 = vadd.f32 %v2905, %v2755
    %v2907 = vadd.f32 %v2906, %v2759
    %v2908 = vadd.f32 %v2907, %v2763
    %v2909 = vadd.f32 %v2908, %v2767
    %v2910 = vadd.f32 %v2909, %v2771
    %v2911 = vadd.f32 %v2910, %v2775
    %v2912 = vadd.f32 %v2911, %v2779
    %v2913 = vadd.f32 %v2912, %v2783
    %v2914 = vadd.f32 %v2913, %v2787
    %v2915 = vadd.f32 %v2914, %v2791
    %v2916 = vadd.f32 %v2915, %v2795
    %v2917 = vadd.f32 %v2916, %v2799
    %v2918 = vadd.f32 %v2917, %v2803
    %v2919 = vadd.f32 %v2918, %v2807
    %v2920 = vadd.f32 %v2919, %v2811
    %v2921 = vadd.f32 %v2920, %v2815
    %v2922 = vadd.f32 %v2921, %v2819
    %v2923 = vadd.f32 %v2922, %v2823
    %v2924 = vadd.f32 %v2923, %v2827
    %v2925 = vadd.f32 %v2924, %v2831
    %v2926 = vadd.f32 %v2925, %v2835
    %v2927 = vadd.f32 %v2926, %v2839
    %v2928 = vadd.f32 %v2927, %v2843
    %v2929 = vadd.f32 %v2928, %v2847
    %v2930 = vadd.f32 %v2929, %v2851
    %v2931 = vadd.f32 %v2930, %v2855
    %v2932 = vadd.f32 %v2931, %v2859
    %v2933 = vadd.f32 %v2932, %v2863
    %v2934 = vrot.slane %v2933, 4
    %v2935 = vadd.f32 %v2933, %v2934
    %v2936 = vrot.slane %v2935, 2
    %v2937 = vadd.f32 %v2935, %v2936
    %v2938 = vrot.slane %v2937, 1
    %v2939 = vadd.f32 %v2937, %v2938
    %v2940 = vadd.f32 %v2740, %v2744
    %v2941 = vadd.f32 %v2940, %v2748
    %v2942 = vadd.f32 %v2941, %v2752
    %v2943 = vadd.f32 %v2942, %v2756
    %v2944 = vadd.f32 %v2943, %v2760
    %v2945 = vadd.f32 %v2944, %v2764
    %v2946 = vadd.f32 %v2945, %v2768
    %v2947 = vadd.f32 %v2946, %v2772
    %v2948 = vadd.f32 %v2947, %v2776
    %v2949 = vadd.f32 %v2948, %v2780
    %v2950 = vadd.f32 %v2949, %v2784
    %v2951 = vadd.f32 %v2950, %v2788
    %v2952 = vadd.f32 %v2951, %v2792
    %v2953 = vadd.f32 %v2952, %v2796
    %v2954 = vadd.f32 %v2953, %v2800
    %v2955 = vadd.f32 %v2954, %v2804
    %v2956 = vadd.f32 %v2955, %v2808
    %v2957 = vadd.f32 %v2956, %v2812
    %v2958 = vadd.f32 %v2957, %v2816
    %v2959 = vadd.f32 %v2958, %v2820
    %v2960 = vadd.f32 %v2959, %v2824
    %v2961 = vadd.f32 %v2960, %v2828
    %v2962 = vadd.f32 %v2961, %v2832
    %v2963 = vadd.f32 %v2962, %v2836
    %v2964 = vadd.f32 %v2963, %v2840
    %v2965 = vadd.f32 %v2964, %v2844
    %v2966 = vadd.f32 %v2965, %v2848
    %v2967 = vadd.f32 %v2966, %v2852
    %v2968 = vadd.f32 %v2967, %v2856
    %v2969 = vadd.f32 %v2968, %v2860
    %v2970 = vadd.f32 %v2969, %v2864
    %v2971 = vrot.slane %v2970, 4
    %v2972 = vadd.f32 %v2970, %v2971
    %v2973 = vrot.slane %v2972, 2
    %v2974 = vadd.f32 %v2972, %v2973
    %v2975 = vrot.slane %v2974, 1
    %v2976 = vadd.f32 %v2974, %v2975
    %v2977 = vadd.f32 %v2741, %v2745
    %v2978 = vadd.f32 %v2977, %v2749
    %v2979 = vadd.f32 %v2978, %v2753
    %v2980 = vadd.f32 %v2979, %v2757
    %v2981 = vadd.f32 %v2980, %v2761
    %v2982 = vadd.f32 %v2981, %v2765
    %v2983 = vadd.f32 %v2982, %v2769
    %v2984 = vadd.f32 %v2983, %v2773
    %v2985 = vadd.f32 %v2984, %v2777
    %v2986 = vadd.f32 %v2985, %v2781
    %v2987 = vadd.f32 %v2986, %v2785
    %v2988 = vadd.f32 %v2987, %v2789
    %v2989 = vadd.f32 %v2988, %v2793
    %v2990 = vadd.f32 %v2989, %v2797
    %v2991 = vadd.f32 %v2990, %v2801
    %v2992 = vadd.f32 %v2991, %v2805
    %v2993 = vadd.f32 %v2992, %v2809
    %v2994 = vadd.f32 %v2993, %v2813
    %v2995 = vadd.f32 %v2994, %v2817
    %v2996 = vadd.f32 %v2995, %v2821
    %v2997 = vadd.f32 %v2996, %v2825
    %v2998 = vadd.f32 %v2997, %v2829
    %v2999 = vadd.f32 %v2998, %v2833
    %v3000 = vadd.f32 %v2999, %v2837
    %v3001 = vadd.f32 %v3000, %v2841
    %v3002 = vadd.f32 %v3001, %v2845
    %v3003 = vadd.f32 %v3002, %v2849
    %v3004 = vadd.f32 %v3003, %v2853
    %v3005 = vadd.f32 %v3004, %v2857
    %v3006 = vadd.f32 %v3005, %v2861
    %v3007 = vadd.f32 %v3006, %v2865
    %v3008 = vrot.slane %v3007, 4
    %v3009 = vadd.f32 %v3007, %v3008
    %v3010 = vrot.slane %v3009, 2
    %v3011 = vadd.f32 %v3009, %v3010
    %v3012 = vrot.slane %v3011, 1
    %v3013 = vadd.f32 %v3011, %v3012
    %v3014 = vmul.f32 %v2902, 0.00390625
    %v3015 = vmul.f32 %v2939, 0.00390625
    %v3016 = vmul.f32 %v2976, 0.00390625
    %v3017 = vmul.f32 %v3013, 0.00390625
    %v3018 = vmul.f32 %v2734, %v2734
    %v3019 = vmul.f32 %v2735, %v2735
    %v3020 = vmul.f32 %v2736, %v2736
    %v3021 = vmul.f32 %v2737, %v2737
    %v3022 = vsub.f32 %v3014, %v3018
    %v3023 = vsub.f32 %v3015, %v3019
    %v3024 = vsub.f32 %v3016, %v3020
    %v3025 = vsub.f32 %v3017, %v3021
    %v3026 = vld [vmem:[%s7] sm:$0xf]
    %v3027 = vadd.f32 %v3022, 0.8
    %v3028 = vadd.f32 %v3023, 0.8
    %v3029 = vadd.f32 %v3024, 0.8
    %v3030 = vadd.f32 %v3025, 0.8
    %v3031 = vrsqrt.pop %v3027
    %v3032 = vrsqrt.pop %v3028
    %v3033 = vrsqrt.pop %v3029
    %v3034 = vrsqrt.pop %v3030
    %v3039 = vcombine.low %v3031, %v3032
    %v3040 = vcombine.low %v3033, %v3034
    %v3042 = vunpack.c.l.s4 1966171168
    %v3043 = vunpack.c.0.s8 %v3042
    %v3044 = vlaneseq
    %v3045 = vshrl.u32 %v3044, 7
    %v3046 = vsub.s32 %v3043, %v3045
    %v3047 = vrot.slane %v3039, %v3046
    %v3049 = vunpack.c.l.s4 1966171168
    %v3050 = vunpack.c.0.s8 %v3049
    %v3051 = vlaneseq
    %v3052 = vshrl.u32 %v3051, 7
    %v3053 = vsub.s32 %v3050, %v3052
    %v3054 = vrot.slane %v3040, %v3053
    %v3055 = vcombine.low %v3047, %v3054
    %v3057 = vunpack.c.l.s4 1966171168
    %v3058 = vunpack.c.0.s8 %v3057
    %v3059 = vlaneseq
    %v3060 = vshrl.u32 %v3059, 7
    %v3061 = vsub.s32 %v3058, %v3060
    %v3062 = vrot.slane %v3055, %v3061
    %v3064 = vmul.f32 %v3026, %v3062
    %v3065 = vld [vmem:[%s8] sm:$0xf]
    %v3067 = vlaneseq
    %v3068 = vshrl.u32 %v3067, 7
    %v3069 = vsub.s32 0, %v3068
    %v3070 = vrot.slane %v3064, %v3069
    %v3071 = vlaneseq
    %v3072 = vshrl.u32 %v3071, 7
    %v3073 = vsub.s32 1, %v3072
    %v3074 = vrot.slane %v3064, %v3073
    %v3075 = vlaneseq
    %v3076 = vshrl.u32 %v3075, 7
    %v3077 = vsub.s32 2, %v3076
    %v3078 = vrot.slane %v3064, %v3077
    %v3079 = vlaneseq
    %v3080 = vshrl.u32 %v3079, 7
    %v3081 = vsub.s32 3, %v3080
    %v3082 = vrot.slane %v3064, %v3081
    %v3087 = vmul.f32 %v2734, %v3070
    %v3088 = vmul.f32 %v2735, %v3074
    %v3089 = vmul.f32 %v2736, %v3078
    %v3090 = vmul.f32 %v2737, %v3082
    %v3095 = vcombine.low %v3087, %v3088
    %v3096 = vcombine.low %v3089, %v3090
    %v3098 = vunpack.c.l.s4 1966171168
    %v3099 = vunpack.c.0.s8 %v3098
    %v3100 = vlaneseq
    %v3101 = vshrl.u32 %v3100, 7
    %v3102 = vsub.s32 %v3099, %v3101
    %v3103 = vrot.slane %v3095, %v3102
    %v3105 = vunpack.c.l.s4 1966171168
    %v3106 = vunpack.c.0.s8 %v3105
    %v3107 = vlaneseq
    %v3108 = vshrl.u32 %v3107, 7
    %v3109 = vsub.s32 %v3106, %v3108
    %v3110 = vrot.slane %v3096, %v3109
    %v3111 = vcombine.low %v3103, %v3110
    %v3113 = vunpack.c.l.s4 1966171168
    %v3114 = vunpack.c.0.s8 %v3113
    %v3115 = vlaneseq
    %v3116 = vshrl.u32 %v3115, 7
    %v3117 = vsub.s32 %v3114, %v3116
    %v3118 = vrot.slane %v3111, %v3117
    %v3120 = vsub.f32 %v3065, %v3118
    %v3121 = vmul.f32 %v2235, %v3070
    %v3122 = vmul.f32 %v2237, %v3074
    %v3123 = vmul.f32 %v2428, %v3078
    %v3124 = vmul.f32 %v2430, %v3082
    %v3125 = vmul.f32 %v2239, %v3070
    %v3126 = vmul.f32 %v2241, %v3074
    %v3127 = vmul.f32 %v2432, %v3078
    %v3128 = vmul.f32 %v2434, %v3082
    %v3129 = vmul.f32 %v2245, %v3070
    %v3130 = vmul.f32 %v2247, %v3074
    %v3131 = vmul.f32 %v2438, %v3078
    %v3132 = vmul.f32 %v2440, %v3082
    %v3133 = vmul.f32 %v2249, %v3070
    %v3134 = vmul.f32 %v2251, %v3074
    %v3135 = vmul.f32 %v2442, %v3078
    %v3136 = vmul.f32 %v2444, %v3082
    %v3137 = vmul.f32 %v2255, %v3070
    %v3138 = vmul.f32 %v2257, %v3074
    %v3139 = vmul.f32 %v2448, %v3078
    %v3140 = vmul.f32 %v2450, %v3082
    %v3141 = vmul.f32 %v2259, %v3070
    %v3142 = vmul.f32 %v2261, %v3074
    %v3143 = vmul.f32 %v2452, %v3078
    %v3144 = vmul.f32 %v2454, %v3082
    %v3145 = vmul.f32 %v2265, %v3070
    %v3146 = vmul.f32 %v2267, %v3074
    %v3147 = vmul.f32 %v2458, %v3078
    %v3148 = vmul.f32 %v2460, %v3082
    %v3149 = vmul.f32 %v2269, %v3070
    %v3150 = vmul.f32 %v2271, %v3074
    %v3151 = vmul.f32 %v2462, %v3078
    %v3152 = vmul.f32 %v2464, %v3082
    %v3153 = vmul.f32 %v2275, %v3070
    %v3154 = vmul.f32 %v2277, %v3074
    %v3155 = vmul.f32 %v2468, %v3078
    %v3156 = vmul.f32 %v2470, %v3082
    %v3157 = vmul.f32 %v2279, %v3070
    %v3158 = vmul.f32 %v2281, %v3074
    %v3159 = vmul.f32 %v2472, %v3078
    %v3160 = vmul.f32 %v2474, %v3082
    %v3161 = vmul.f32 %v2285, %v3070
    %v3162 = vmul.f32 %v2287, %v3074
    %v3163 = vmul.f32 %v2478, %v3078
    %v3164 = vmul.f32 %v2480, %v3082
    %v3165 = vmul.f32 %v2289, %v3070
    %v3166 = vmul.f32 %v2291, %v3074
    %v3167 = vmul.f32 %v2482, %v3078
    %v3168 = vmul.f32 %v2484, %v3082
    %v3169 = vmul.f32 %v2295, %v3070
    %v3170 = vmul.f32 %v2297, %v3074
    %v3171 = vmul.f32 %v2488, %v3078
    %v3172 = vmul.f32 %v2490, %v3082
    %v3173 = vmul.f32 %v2299, %v3070
    %v3174 = vmul.f32 %v2301, %v3074
    %v3175 = vmul.f32 %v2492, %v3078
    %v3176 = vmul.f32 %v2494, %v3082
    %v3177 = vmul.f32 %v2305, %v3070
    %v3178 = vmul.f32 %v2307, %v3074
    %v3179 = vmul.f32 %v2498, %v3078
    %v3180 = vmul.f32 %v2500, %v3082
    %v3181 = vmul.f32 %v2309, %v3070
    %v3182 = vmul.f32 %v2311, %v3074
    %v3183 = vmul.f32 %v2502, %v3078
    %v3184 = vmul.f32 %v2504, %v3082
    %v3185 = vmul.f32 %v2315, %v3070
    %v3186 = vmul.f32 %v2317, %v3074
    %v3187 = vmul.f32 %v2508, %v3078
    %v3188 = vmul.f32 %v2510, %v3082
    %v3189 = vmul.f32 %v2319, %v3070
    %v3190 = vmul.f32 %v2321, %v3074
    %v3191 = vmul.f32 %v2512, %v3078
    %v3192 = vmul.f32 %v2514, %v3082
    %v3193 = vmul.f32 %v2325, %v3070
    %v3194 = vmul.f32 %v2327, %v3074
    %v3195 = vmul.f32 %v2518, %v3078
    %v3196 = vmul.f32 %v2520, %v3082
    %v3197 = vmul.f32 %v2329, %v3070
    %v3198 = vmul.f32 %v2331, %v3074
    %v3199 = vmul.f32 %v2522, %v3078
    %v3200 = vmul.f32 %v2524, %v3082
    %v3201 = vmul.f32 %v2335, %v3070
    %v3202 = vmul.f32 %v2337, %v3074
    %v3203 = vmul.f32 %v2528, %v3078
    %v3204 = vmul.f32 %v2530, %v3082
    %v3205 = vmul.f32 %v2339, %v3070
    %v3206 = vmul.f32 %v2341, %v3074
    %v3207 = vmul.f32 %v2532, %v3078
    %v3208 = vmul.f32 %v2534, %v3082
    %v3209 = vmul.f32 %v2345, %v3070
    %v3210 = vmul.f32 %v2347, %v3074
    %v3211 = vmul.f32 %v2538, %v3078
    %v3212 = vmul.f32 %v2540, %v3082
    %v3213 = vmul.f32 %v2349, %v3070
    %v3214 = vmul.f32 %v2351, %v3074
    %v3215 = vmul.f32 %v2542, %v3078
    %v3216 = vmul.f32 %v2544, %v3082
    %v3217 = vmul.f32 %v2355, %v3070
    %v3218 = vmul.f32 %v2357, %v3074
    %v3219 = vmul.f32 %v2548, %v3078
    %v3220 = vmul.f32 %v2550, %v3082
    %v3221 = vmul.f32 %v2359, %v3070
    %v3222 = vmul.f32 %v2361, %v3074
    %v3223 = vmul.f32 %v2552, %v3078
    %v3224 = vmul.f32 %v2554, %v3082
    %v3225 = vmul.f32 %v2365, %v3070
    %v3226 = vmul.f32 %v2367, %v3074
    %v3227 = vmul.f32 %v2558, %v3078
    %v3228 = vmul.f32 %v2560, %v3082
    %v3229 = vmul.f32 %v2369, %v3070
    %v3230 = vmul.f32 %v2371, %v3074
    %v3231 = vmul.f32 %v2562, %v3078
    %v3232 = vmul.f32 %v2564, %v3082
    %v3233 = vmul.f32 %v2375, %v3070
    %v3234 = vmul.f32 %v2377, %v3074
    %v3235 = vmul.f32 %v2568, %v3078
    %v3236 = vmul.f32 %v2570, %v3082
    %v3237 = vmul.f32 %v2379, %v3070
    %v3238 = vmul.f32 %v2381, %v3074
    %v3239 = vmul.f32 %v2572, %v3078
    %v3240 = vmul.f32 %v2574, %v3082
    %v3241 = vmul.f32 %v2385, %v3070
    %v3242 = vmul.f32 %v2387, %v3074
    %v3243 = vmul.f32 %v2578, %v3078
    %v3244 = vmul.f32 %v2580, %v3082
    %v3245 = vmul.f32 %v2389, %v3070
    %v3246 = vmul.f32 %v2391, %v3074
    %v3247 = vmul.f32 %v2582, %v3078
    %v3248 = vmul.f32 %v2584, %v3082
    %v3250 = vlaneseq
    %v3251 = vshrl.u32 %v3250, 7
    %v3252 = vsub.s32 0, %v3251
    %v3253 = vrot.slane %v3120, %v3252
    %v3254 = vlaneseq
    %v3255 = vshrl.u32 %v3254, 7
    %v3256 = vsub.s32 1, %v3255
    %v3257 = vrot.slane %v3120, %v3256
    %v3258 = vlaneseq
    %v3259 = vshrl.u32 %v3258, 7
    %v3260 = vsub.s32 2, %v3259
    %v3261 = vrot.slane %v3120, %v3260
    %v3262 = vlaneseq
    %v3263 = vshrl.u32 %v3262, 7
    %v3264 = vsub.s32 3, %v3263
    %v3265 = vrot.slane %v3120, %v3264
    %v3270 = vadd.f32 %v3121, %v3253
    %v3271 = vadd.f32 %v3122, %v3257
    %v3272 = vadd.f32 %v3123, %v3261
    %v3273 = vadd.f32 %v3124, %v3265
    %v3274 = vadd.f32 %v3125, %v3253
    %v3275 = vadd.f32 %v3126, %v3257
    %v3276 = vadd.f32 %v3127, %v3261
    %v3277 = vadd.f32 %v3128, %v3265
    %v3278 = vadd.f32 %v3129, %v3253
    %v3279 = vadd.f32 %v3130, %v3257
    %v3280 = vadd.f32 %v3131, %v3261
    %v3281 = vadd.f32 %v3132, %v3265
    %v3282 = vadd.f32 %v3133, %v3253
    %v3283 = vadd.f32 %v3134, %v3257
    %v3284 = vadd.f32 %v3135, %v3261
    %v3285 = vadd.f32 %v3136, %v3265
    %v3286 = vadd.f32 %v3137, %v3253
    %v3287 = vadd.f32 %v3138, %v3257
    %v3288 = vadd.f32 %v3139, %v3261
    %v3289 = vadd.f32 %v3140, %v3265
    %v3290 = vadd.f32 %v3141, %v3253
    %v3291 = vadd.f32 %v3142, %v3257
    %v3292 = vadd.f32 %v3143, %v3261
    %v3293 = vadd.f32 %v3144, %v3265
    %v3294 = vadd.f32 %v3145, %v3253
    %v3295 = vadd.f32 %v3146, %v3257
    %v3296 = vadd.f32 %v3147, %v3261
    %v3297 = vadd.f32 %v3148, %v3265
    %v3298 = vadd.f32 %v3149, %v3253
    %v3299 = vadd.f32 %v3150, %v3257
    %v3300 = vadd.f32 %v3151, %v3261
    %v3301 = vadd.f32 %v3152, %v3265
    %v3302 = vadd.f32 %v3153, %v3253
    %v3303 = vadd.f32 %v3154, %v3257
    %v3304 = vadd.f32 %v3155, %v3261
    %v3305 = vadd.f32 %v3156, %v3265
    %v3306 = vadd.f32 %v3157, %v3253
    %v3307 = vadd.f32 %v3158, %v3257
    %v3308 = vadd.f32 %v3159, %v3261
    %v3309 = vadd.f32 %v3160, %v3265
    %v3310 = vadd.f32 %v3161, %v3253
    %v3311 = vadd.f32 %v3162, %v3257
    %v3312 = vadd.f32 %v3163, %v3261
    %v3313 = vadd.f32 %v3164, %v3265
    %v3314 = vadd.f32 %v3165, %v3253
    %v3315 = vadd.f32 %v3166, %v3257
    %v3316 = vadd.f32 %v3167, %v3261
    %v3317 = vadd.f32 %v3168, %v3265
    %v3318 = vadd.f32 %v3169, %v3253
    %v3319 = vadd.f32 %v3170, %v3257
    %v3320 = vadd.f32 %v3171, %v3261
    %v3321 = vadd.f32 %v3172, %v3265
    %v3322 = vadd.f32 %v3173, %v3253
    %v3323 = vadd.f32 %v3174, %v3257
    %v3324 = vadd.f32 %v3175, %v3261
    %v3325 = vadd.f32 %v3176, %v3265
    %v3326 = vadd.f32 %v3177, %v3253
    %v3327 = vadd.f32 %v3178, %v3257
    %v3328 = vadd.f32 %v3179, %v3261
    %v3329 = vadd.f32 %v3180, %v3265
    %v3330 = vadd.f32 %v3181, %v3253
    %v3331 = vadd.f32 %v3182, %v3257
    %v3332 = vadd.f32 %v3183, %v3261
    %v3333 = vadd.f32 %v3184, %v3265
    %v3334 = vadd.f32 %v3185, %v3253
    %v3335 = vadd.f32 %v3186, %v3257
    %v3336 = vadd.f32 %v3187, %v3261
    %v3337 = vadd.f32 %v3188, %v3265
    %v3338 = vadd.f32 %v3189, %v3253
    %v3339 = vadd.f32 %v3190, %v3257
    %v3340 = vadd.f32 %v3191, %v3261
    %v3341 = vadd.f32 %v3192, %v3265
    %v3342 = vadd.f32 %v3193, %v3253
    %v3343 = vadd.f32 %v3194, %v3257
    %v3344 = vadd.f32 %v3195, %v3261
    %v3345 = vadd.f32 %v3196, %v3265
    %v3346 = vadd.f32 %v3197, %v3253
    %v3347 = vadd.f32 %v3198, %v3257
    %v3348 = vadd.f32 %v3199, %v3261
    %v3349 = vadd.f32 %v3200, %v3265
    %v3350 = vadd.f32 %v3201, %v3253
    %v3351 = vadd.f32 %v3202, %v3257
    %v3352 = vadd.f32 %v3203, %v3261
    %v3353 = vadd.f32 %v3204, %v3265
    %v3354 = vadd.f32 %v3205, %v3253
    %v3355 = vadd.f32 %v3206, %v3257
    %v3356 = vadd.f32 %v3207, %v3261
    %v3357 = vadd.f32 %v3208, %v3265
    %v3358 = vadd.f32 %v3209, %v3253
    %v3359 = vadd.f32 %v3210, %v3257
    %v3360 = vadd.f32 %v3211, %v3261
    %v3361 = vadd.f32 %v3212, %v3265
    %v3362 = vadd.f32 %v3213, %v3253
    %v3363 = vadd.f32 %v3214, %v3257
    %v3364 = vadd.f32 %v3215, %v3261
    %v3365 = vadd.f32 %v3216, %v3265
    %v3366 = vadd.f32 %v3217, %v3253
    %v3367 = vadd.f32 %v3218, %v3257
    %v3368 = vadd.f32 %v3219, %v3261
    %v3369 = vadd.f32 %v3220, %v3265
    %v3370 = vadd.f32 %v3221, %v3253
    %v3371 = vadd.f32 %v3222, %v3257
    %v3372 = vadd.f32 %v3223, %v3261
    %v3373 = vadd.f32 %v3224, %v3265
    %v3374 = vadd.f32 %v3225, %v3253
    %v3375 = vadd.f32 %v3226, %v3257
    %v3376 = vadd.f32 %v3227, %v3261
    %v3377 = vadd.f32 %v3228, %v3265
    %v3378 = vadd.f32 %v3229, %v3253
    %v3379 = vadd.f32 %v3230, %v3257
    %v3380 = vadd.f32 %v3231, %v3261
    %v3381 = vadd.f32 %v3232, %v3265
    %v3382 = vadd.f32 %v3233, %v3253
    %v3383 = vadd.f32 %v3234, %v3257
    %v3384 = vadd.f32 %v3235, %v3261
    %v3385 = vadd.f32 %v3236, %v3265
    %v3386 = vadd.f32 %v3237, %v3253
    %v3387 = vadd.f32 %v3238, %v3257
    %v3388 = vadd.f32 %v3239, %v3261
    %v3389 = vadd.f32 %v3240, %v3265
    %v3390 = vadd.f32 %v3241, %v3253
    %v3391 = vadd.f32 %v3242, %v3257
    %v3392 = vadd.f32 %v3243, %v3261
    %v3393 = vadd.f32 %v3244, %v3265
    %v3394 = vadd.f32 %v3245, %v3253
    %v3395 = vadd.f32 %v3246, %v3257
    %v3396 = vadd.f32 %v3247, %v3261
    %v3397 = vadd.f32 %v3248, %v3265
    %v3398 = vmul.f32 %v3270, 0.2
    %v3399 = vmul.f32 %v3271, 0.2
    %v3400 = vmul.f32 %v3272, 0.2
    %v3401 = vmul.f32 %v3273, 0.2
    %v3402 = vmul.f32 %v3274, 0.2
    %v3403 = vmul.f32 %v3275, 0.2
    %v3404 = vmul.f32 %v3276, 0.2
    %v3405 = vmul.f32 %v3277, 0.2
    %v3406 = vmul.f32 %v3278, 0.2
    %v3407 = vmul.f32 %v3279, 0.2
    %v3408 = vmul.f32 %v3280, 0.2
    %v3409 = vmul.f32 %v3281, 0.2
    %v3410 = vmul.f32 %v3282, 0.2
    %v3411 = vmul.f32 %v3283, 0.2
    %v3412 = vmul.f32 %v3284, 0.2
    %v3413 = vmul.f32 %v3285, 0.2
    %v3414 = vmul.f32 %v3286, 0.2
    %v3415 = vmul.f32 %v3287, 0.2
    %v3416 = vmul.f32 %v3288, 0.2
    %v3417 = vmul.f32 %v3289, 0.2
    %v3418 = vmul.f32 %v3290, 0.2
    %v3419 = vmul.f32 %v3291, 0.2
    %v3420 = vmul.f32 %v3292, 0.2
    %v3421 = vmul.f32 %v3293, 0.2
    %v3422 = vmul.f32 %v3294, 0.2
    %v3423 = vmul.f32 %v3295, 0.2
    %v3424 = vmul.f32 %v3296, 0.2
    %v3425 = vmul.f32 %v3297, 0.2
    %v3426 = vmul.f32 %v3298, 0.2
    %v3427 = vmul.f32 %v3299, 0.2
    %v3428 = vmul.f32 %v3300, 0.2
    %v3429 = vmul.f32 %v3301, 0.2
    %v3430 = vmul.f32 %v3302, 0.2
    %v3431 = vmul.f32 %v3303, 0.2
    %v3432 = vmul.f32 %v3304, 0.2
    %v3433 = vmul.f32 %v3305, 0.2
    %v3434 = vmul.f32 %v3306, 0.2
    %v3435 = vmul.f32 %v3307, 0.2
    %v3436 = vmul.f32 %v3308, 0.2
    %v3437 = vmul.f32 %v3309, 0.2
    %v3438 = vmul.f32 %v3310, 0.2
    %v3439 = vmul.f32 %v3311, 0.2
    %v3440 = vmul.f32 %v3312, 0.2
    %v3441 = vmul.f32 %v3313, 0.2
    %v3442 = vmul.f32 %v3314, 0.2
    %v3443 = vmul.f32 %v3315, 0.2
    %v3444 = vmul.f32 %v3316, 0.2
    %v3445 = vmul.f32 %v3317, 0.2
    %v3446 = vmul.f32 %v3318, 0.2
    %v3447 = vmul.f32 %v3319, 0.2
    %v3448 = vmul.f32 %v3320, 0.2
    %v3449 = vmul.f32 %v3321, 0.2
    %v3450 = vmul.f32 %v3322, 0.2
    %v3451 = vmul.f32 %v3323, 0.2
    %v3452 = vmul.f32 %v3324, 0.2
    %v3453 = vmul.f32 %v3325, 0.2
    %v3454 = vmul.f32 %v3326, 0.2
    %v3455 = vmul.f32 %v3327, 0.2
    %v3456 = vmul.f32 %v3328, 0.2
    %v3457 = vmul.f32 %v3329, 0.2
    %v3458 = vmul.f32 %v3330, 0.2
    %v3459 = vmul.f32 %v3331, 0.2
    %v3460 = vmul.f32 %v3332, 0.2
    %v3461 = vmul.f32 %v3333, 0.2
    %v3462 = vmul.f32 %v3334, 0.2
    %v3463 = vmul.f32 %v3335, 0.2
    %v3464 = vmul.f32 %v3336, 0.2
    %v3465 = vmul.f32 %v3337, 0.2
    %v3466 = vmul.f32 %v3338, 0.2
    %v3467 = vmul.f32 %v3339, 0.2
    %v3468 = vmul.f32 %v3340, 0.2
    %v3469 = vmul.f32 %v3341, 0.2
    %v3470 = vmul.f32 %v3342, 0.2
    %v3471 = vmul.f32 %v3343, 0.2
    %v3472 = vmul.f32 %v3344, 0.2
    %v3473 = vmul.f32 %v3345, 0.2
    %v3474 = vmul.f32 %v3346, 0.2
    %v3475 = vmul.f32 %v3347, 0.2
    %v3476 = vmul.f32 %v3348, 0.2
    %v3477 = vmul.f32 %v3349, 0.2
    %v3478 = vmul.f32 %v3350, 0.2
    %v3479 = vmul.f32 %v3351, 0.2
    %v3480 = vmul.f32 %v3352, 0.2
    %v3481 = vmul.f32 %v3353, 0.2
    %v3482 = vmul.f32 %v3354, 0.2
    %v3483 = vmul.f32 %v3355, 0.2
    %v3484 = vmul.f32 %v3356, 0.2
    %v3485 = vmul.f32 %v3357, 0.2
    %v3486 = vmul.f32 %v3358, 0.2
    %v3487 = vmul.f32 %v3359, 0.2
    %v3488 = vmul.f32 %v3360, 0.2
    %v3489 = vmul.f32 %v3361, 0.2
    %v3490 = vmul.f32 %v3362, 0.2
    %v3491 = vmul.f32 %v3363, 0.2
    %v3492 = vmul.f32 %v3364, 0.2
    %v3493 = vmul.f32 %v3365, 0.2
    %v3494 = vmul.f32 %v3366, 0.2
    %v3495 = vmul.f32 %v3367, 0.2
    %v3496 = vmul.f32 %v3368, 0.2
    %v3497 = vmul.f32 %v3369, 0.2
    %v3498 = vmul.f32 %v3370, 0.2
    %v3499 = vmul.f32 %v3371, 0.2
    %v3500 = vmul.f32 %v3372, 0.2
    %v3501 = vmul.f32 %v3373, 0.2
    %v3502 = vmul.f32 %v3374, 0.2
    %v3503 = vmul.f32 %v3375, 0.2
    %v3504 = vmul.f32 %v3376, 0.2
    %v3505 = vmul.f32 %v3377, 0.2
    %v3506 = vmul.f32 %v3378, 0.2
    %v3507 = vmul.f32 %v3379, 0.2
    %v3508 = vmul.f32 %v3380, 0.2
    %v3509 = vmul.f32 %v3381, 0.2
    %v3510 = vmul.f32 %v3382, 0.2
    %v3511 = vmul.f32 %v3383, 0.2
    %v3512 = vmul.f32 %v3384, 0.2
    %v3513 = vmul.f32 %v3385, 0.2
    %v3514 = vmul.f32 %v3386, 0.2
    %v3515 = vmul.f32 %v3387, 0.2
    %v3516 = vmul.f32 %v3388, 0.2
    %v3517 = vmul.f32 %v3389, 0.2
    %v3518 = vmul.f32 %v3390, 0.2
    %v3519 = vmul.f32 %v3391, 0.2
    %v3520 = vmul.f32 %v3392, 0.2
    %v3521 = vmul.f32 %v3393, 0.2
    %v3522 = vmul.f32 %v3394, 0.2
    %v3523 = vmul.f32 %v3395, 0.2
    %v3524 = vmul.f32 %v3396, 0.2
    %v3525 = vmul.f32 %v3397, 0.2
    %v3526 = vmax.f32 %v3270, %v3398
    %v3527 = vmax.f32 %v3271, %v3399
    %v3528 = vmax.f32 %v3272, %v3400
    %v3529 = vmax.f32 %v3273, %v3401
    %v3530 = vmax.f32 %v3274, %v3402
    %v3531 = vmax.f32 %v3275, %v3403
    %v3532 = vmax.f32 %v3276, %v3404
    %v3533 = vmax.f32 %v3277, %v3405
    %v3534 = vmax.f32 %v3278, %v3406
    %v3535 = vmax.f32 %v3279, %v3407
    %v3536 = vmax.f32 %v3280, %v3408
    %v3537 = vmax.f32 %v3281, %v3409
    %v3538 = vmax.f32 %v3282, %v3410
    %v3539 = vmax.f32 %v3283, %v3411
    %v3540 = vmax.f32 %v3284, %v3412
    %v3541 = vmax.f32 %v3285, %v3413
    %v3542 = vmax.f32 %v3286, %v3414
    %v3543 = vmax.f32 %v3287, %v3415
    %v3544 = vmax.f32 %v3288, %v3416
    %v3545 = vmax.f32 %v3289, %v3417
    %v3546 = vmax.f32 %v3290, %v3418
    %v3547 = vmax.f32 %v3291, %v3419
    %v3548 = vmax.f32 %v3292, %v3420
    %v3549 = vmax.f32 %v3293, %v3421
    %v3550 = vmax.f32 %v3294, %v3422
    %v3551 = vmax.f32 %v3295, %v3423
    %v3552 = vmax.f32 %v3296, %v3424
    %v3553 = vmax.f32 %v3297, %v3425
    %v3554 = vmax.f32 %v3298, %v3426
    %v3555 = vmax.f32 %v3299, %v3427
    %v3556 = vmax.f32 %v3300, %v3428
    %v3557 = vmax.f32 %v3301, %v3429
    %v3558 = vmax.f32 %v3302, %v3430
    %v3559 = vmax.f32 %v3303, %v3431
    %v3560 = vmax.f32 %v3304, %v3432
    %v3561 = vmax.f32 %v3305, %v3433
    %v3562 = vmax.f32 %v3306, %v3434
    %v3563 = vmax.f32 %v3307, %v3435
    %v3564 = vmax.f32 %v3308, %v3436
    %v3565 = vmax.f32 %v3309, %v3437
    %v3566 = vmax.f32 %v3310, %v3438
    %v3567 = vmax.f32 %v3311, %v3439
    %v3568 = vmax.f32 %v3312, %v3440
    %v3569 = vmax.f32 %v3313, %v3441
    %v3570 = vmax.f32 %v3314, %v3442
    %v3571 = vmax.f32 %v3315, %v3443
    %v3572 = vmax.f32 %v3316, %v3444
    %v3573 = vmax.f32 %v3317, %v3445
    %v3574 = vmax.f32 %v3318, %v3446
    %v3575 = vmax.f32 %v3319, %v3447
    %v3576 = vmax.f32 %v3320, %v3448
    %v3577 = vmax.f32 %v3321, %v3449
    %v3578 = vmax.f32 %v3322, %v3450
    %v3579 = vmax.f32 %v3323, %v3451
    %v3580 = vmax.f32 %v3324, %v3452
    %v3581 = vmax.f32 %v3325, %v3453
    %v3582 = vmax.f32 %v3326, %v3454
    %v3583 = vmax.f32 %v3327, %v3455
    %v3584 = vmax.f32 %v3328, %v3456
    %v3585 = vmax.f32 %v3329, %v3457
    %v3586 = vmax.f32 %v3330, %v3458
    %v3587 = vmax.f32 %v3331, %v3459
    %v3588 = vmax.f32 %v3332, %v3460
    %v3589 = vmax.f32 %v3333, %v3461
    %v3590 = vmax.f32 %v3334, %v3462
    %v3591 = vmax.f32 %v3335, %v3463
    %v3592 = vmax.f32 %v3336, %v3464
    %v3593 = vmax.f32 %v3337, %v3465
    %v3594 = vmax.f32 %v3338, %v3466
    %v3595 = vmax.f32 %v3339, %v3467
    %v3596 = vmax.f32 %v3340, %v3468
    %v3597 = vmax.f32 %v3341, %v3469
    %v3598 = vmax.f32 %v3342, %v3470
    %v3599 = vmax.f32 %v3343, %v3471
    %v3600 = vmax.f32 %v3344, %v3472
    %v3601 = vmax.f32 %v3345, %v3473
    %v3602 = vmax.f32 %v3346, %v3474
    %v3603 = vmax.f32 %v3347, %v3475
    %v3604 = vmax.f32 %v3348, %v3476
    %v3605 = vmax.f32 %v3349, %v3477
    %v3606 = vmax.f32 %v3350, %v3478
    %v3607 = vmax.f32 %v3351, %v3479
    %v3608 = vmax.f32 %v3352, %v3480
    %v3609 = vmax.f32 %v3353, %v3481
    %v3610 = vmax.f32 %v3354, %v3482
    %v3611 = vmax.f32 %v3355, %v3483
    %v3612 = vmax.f32 %v3356, %v3484
    %v3613 = vmax.f32 %v3357, %v3485
    %v3614 = vmax.f32 %v3358, %v3486
    %v3615 = vmax.f32 %v3359, %v3487
    %v3616 = vmax.f32 %v3360, %v3488
    %v3617 = vmax.f32 %v3361, %v3489
    %v3618 = vmax.f32 %v3362, %v3490
    %v3619 = vmax.f32 %v3363, %v3491
    %v3620 = vmax.f32 %v3364, %v3492
    %v3621 = vmax.f32 %v3365, %v3493
    %v3622 = vmax.f32 %v3366, %v3494
    %v3623 = vmax.f32 %v3367, %v3495
    %v3624 = vmax.f32 %v3368, %v3496
    %v3625 = vmax.f32 %v3369, %v3497
    %v3626 = vmax.f32 %v3370, %v3498
    %v3627 = vmax.f32 %v3371, %v3499
    %v3628 = vmax.f32 %v3372, %v3500
    %v3629 = vmax.f32 %v3373, %v3501
    %v3630 = vmax.f32 %v3374, %v3502
    %v3631 = vmax.f32 %v3375, %v3503
    %v3632 = vmax.f32 %v3376, %v3504
    %v3633 = vmax.f32 %v3377, %v3505
    %v3634 = vmax.f32 %v3378, %v3506
    %v3635 = vmax.f32 %v3379, %v3507
    %v3636 = vmax.f32 %v3380, %v3508
    %v3637 = vmax.f32 %v3381, %v3509
    %v3638 = vmax.f32 %v3382, %v3510
    %v3639 = vmax.f32 %v3383, %v3511
    %v3640 = vmax.f32 %v3384, %v3512
    %v3641 = vmax.f32 %v3385, %v3513
    %v3642 = vmax.f32 %v3386, %v3514
    %v3643 = vmax.f32 %v3387, %v3515
    %v3644 = vmax.f32 %v3388, %v3516
    %v3645 = vmax.f32 %v3389, %v3517
    %v3646 = vmax.f32 %v3390, %v3518
    %v3647 = vmax.f32 %v3391, %v3519
    %v3648 = vmax.f32 %v3392, %v3520
    %v3649 = vmax.f32 %v3393, %v3521
    %v3650 = vmax.f32 %v3394, %v3522
    %v3651 = vmax.f32 %v3395, %v3523
    %v3652 = vmax.f32 %v3396, %v3524
    %v3653 = vmax.f32 %v3397, %v3525
    %s3654 = smul.u32 4, 64
    %s3655 = smul.u32 %s3654, 8
    %s3656 = sshll.u32 %s3655, 4
    %3657 = dma.done %s777, %s3656
    %v3658 = vld [vmem:[#allocation4] sm:$0xff]
    %v3659 = vld [vmem:[#allocation4 + $0x8] sm:$0xff]
    %v3660 = vld [vmem:[#allocation4 + $0x10] sm:$0xff]
    %v3661 = vld [vmem:[#allocation4 + $0x18] sm:$0xff]
    %v3662 = vld [vmem:[#allocation4 + $0x20] sm:$0xff]
    %v3663 = vld [vmem:[#allocation4 + $0x28] sm:$0xff]
    %v3664 = vld [vmem:[#allocation4 + $0x30] sm:$0xff]
    %v3665 = vld [vmem:[#allocation4 + $0x38] sm:$0xff]
    %v3666 = vld [vmem:[#allocation4 + $0x40] sm:$0xff]
    %v3667 = vld [vmem:[#allocation4 + $0x48] sm:$0xff]
    %v3668 = vld [vmem:[#allocation4 + $0x50] sm:$0xff]
    %v3669 = vld [vmem:[#allocation4 + $0x58] sm:$0xff]
    %v3670 = vld [vmem:[#allocation4 + $0x60] sm:$0xff]
    %v3671 = vld [vmem:[#allocation4 + $0x68] sm:$0xff]
    %v3672 = vld [vmem:[#allocation4 + $0x70] sm:$0xff]
    %v3673 = vld [vmem:[#allocation4 + $0x78] sm:$0xff]
    %v3674 = vld [vmem:[#allocation4 + $0x80] sm:$0xff]
    %v3675 = vld [vmem:[#allocation4 + $0x88] sm:$0xff]
    %v3676 = vld [vmem:[#allocation4 + $0x90] sm:$0xff]
    %v3677 = vld [vmem:[#allocation4 + $0x98] sm:$0xff]
    %v3678 = vld [vmem:[#allocation4 + $0xa0] sm:$0xff]
    %v3679 = vld [vmem:[#allocation4 + $0xa8] sm:$0xff]
    %v3680 = vld [vmem:[#allocation4 + $0xb0] sm:$0xff]
    %v3681 = vld [vmem:[#allocation4 + $0xb8] sm:$0xff]
    %v3682 = vld [vmem:[#allocation4 + $0xc0] sm:$0xff]
    %v3683 = vld [vmem:[#allocation4 + $0xc8] sm:$0xff]
    %v3684 = vld [vmem:[#allocation4 + $0xd0] sm:$0xff]
    %v3685 = vld [vmem:[#allocation4 + $0xd8] sm:$0xff]
    %v3686 = vld [vmem:[#allocation4 + $0xe0] sm:$0xff]
    %v3687 = vld [vmem:[#allocation4 + $0xe8] sm:$0xff]
    %v3688 = vld [vmem:[#allocation4 + $0xf0] sm:$0xff]
    %v3689 = vld [vmem:[#allocation4 + $0xf8] sm:$0xff]
    %v3690 = vld [vmem:[#allocation4 + $0x100] sm:$0xff]
    %v3691 = vld [vmem:[#allocation4 + $0x108] sm:$0xff]
    %v3692 = vld [vmem:[#allocation4 + $0x110] sm:$0xff]
    %v3693 = vld [vmem:[#allocation4 + $0x118] sm:$0xff]
    %v3694 = vld [vmem:[#allocation4 + $0x120] sm:$0xff]
    %v3695 = vld [vmem:[#allocation4 + $0x128] sm:$0xff]
    %v3696 = vld [vmem:[#allocation4 + $0x130] sm:$0xff]
    %v3697 = vld [vmem:[#allocation4 + $0x138] sm:$0xff]
    %v3698 = vld [vmem:[#allocation4 + $0x140] sm:$0xff]
    %v3699 = vld [vmem:[#allocation4 + $0x148] sm:$0xff]
    %v3700 = vld [vmem:[#allocation4 + $0x150] sm:$0xff]
    %v3701 = vld [vmem:[#allocation4 + $0x158] sm:$0xff]
    %v3702 = vld [vmem:[#allocation4 + $0x160] sm:$0xff]
    %v3703 = vld [vmem:[#allocation4 + $0x168] sm:$0xff]
    %v3704 = vld [vmem:[#allocation4 + $0x170] sm:$0xff]
    %v3705 = vld [vmem:[#allocation4 + $0x178] sm:$0xff]
    %v3706 = vld [vmem:[#allocation4 + $0x180] sm:$0xff]
    %v3707 = vld [vmem:[#allocation4 + $0x188] sm:$0xff]
    %v3708 = vld [vmem:[#allocation4 + $0x190] sm:$0xff]
    %v3709 = vld [vmem:[#allocation4 + $0x198] sm:$0xff]
    %v3710 = vld [vmem:[#allocation4 + $0x1a0] sm:$0xff]
    %v3711 = vld [vmem:[#allocation4 + $0x1a8] sm:$0xff]
    %v3712 = vld [vmem:[#allocation4 + $0x1b0] sm:$0xff]
    %v3713 = vld [vmem:[#allocation4 + $0x1b8] sm:$0xff]
    %v3714 = vld [vmem:[#allocation4 + $0x1c0] sm:$0xff]
    %v3715 = vld [vmem:[#allocation4 + $0x1c8] sm:$0xff]
    %v3716 = vld [vmem:[#allocation4 + $0x1d0] sm:$0xff]
    %v3717 = vld [vmem:[#allocation4 + $0x1d8] sm:$0xff]
    %v3718 = vld [vmem:[#allocation4 + $0x1e0] sm:$0xff]
    %v3719 = vld [vmem:[#allocation4 + $0x1e8] sm:$0xff]
    %v3720 = vld [vmem:[#allocation4 + $0x1f0] sm:$0xff]
    %v3721 = vld [vmem:[#allocation4 + $0x1f8] sm:$0xff]
    %v3722 = vld [vmem:[#allocation4 + $0x200] sm:$0xff]
    %v3723 = vld [vmem:[#allocation4 + $0x208] sm:$0xff]
    %v3724 = vld [vmem:[#allocation4 + $0x210] sm:$0xff]
    %v3725 = vld [vmem:[#allocation4 + $0x218] sm:$0xff]
    %v3726 = vld [vmem:[#allocation4 + $0x220] sm:$0xff]
    %v3727 = vld [vmem:[#allocation4 + $0x228] sm:$0xff]
    %v3728 = vld [vmem:[#allocation4 + $0x230] sm:$0xff]
    %v3729 = vld [vmem:[#allocation4 + $0x238] sm:$0xff]
    %v3730 = vld [vmem:[#allocation4 + $0x240] sm:$0xff]
    %v3731 = vld [vmem:[#allocation4 + $0x248] sm:$0xff]
    %v3732 = vld [vmem:[#allocation4 + $0x250] sm:$0xff]
    %v3733 = vld [vmem:[#allocation4 + $0x258] sm:$0xff]
    %v3734 = vld [vmem:[#allocation4 + $0x260] sm:$0xff]
    %v3735 = vld [vmem:[#allocation4 + $0x268] sm:$0xff]
    %v3736 = vld [vmem:[#allocation4 + $0x270] sm:$0xff]
    %v3737 = vld [vmem:[#allocation4 + $0x278] sm:$0xff]
    %v3738 = vld [vmem:[#allocation4 + $0x280] sm:$0xff]
    %v3739 = vld [vmem:[#allocation4 + $0x288] sm:$0xff]
    %v3740 = vld [vmem:[#allocation4 + $0x290] sm:$0xff]
    %v3741 = vld [vmem:[#allocation4 + $0x298] sm:$0xff]
    %v3742 = vld [vmem:[#allocation4 + $0x2a0] sm:$0xff]
    %v3743 = vld [vmem:[#allocation4 + $0x2a8] sm:$0xff]
    %v3744 = vld [vmem:[#allocation4 + $0x2b0] sm:$0xff]
    %v3745 = vld [vmem:[#allocation4 + $0x2b8] sm:$0xff]
    %v3746 = vld [vmem:[#allocation4 + $0x2c0] sm:$0xff]
    %v3747 = vld [vmem:[#allocation4 + $0x2c8] sm:$0xff]
    %v3748 = vld [vmem:[#allocation4 + $0x2d0] sm:$0xff]
    %v3749 = vld [vmem:[#allocation4 + $0x2d8] sm:$0xff]
    %v3750 = vld [vmem:[#allocation4 + $0x2e0] sm:$0xff]
    %v3751 = vld [vmem:[#allocation4 + $0x2e8] sm:$0xff]
    %v3752 = vld [vmem:[#allocation4 + $0x2f0] sm:$0xff]
    %v3753 = vld [vmem:[#allocation4 + $0x2f8] sm:$0xff]
    %v3754 = vld [vmem:[#allocation4 + $0x300] sm:$0xff]
    %v3755 = vld [vmem:[#allocation4 + $0x308] sm:$0xff]
    %v3756 = vld [vmem:[#allocation4 + $0x310] sm:$0xff]
    %v3757 = vld [vmem:[#allocation4 + $0x318] sm:$0xff]
    %v3758 = vld [vmem:[#allocation4 + $0x320] sm:$0xff]
    %v3759 = vld [vmem:[#allocation4 + $0x328] sm:$0xff]
    %v3760 = vld [vmem:[#allocation4 + $0x330] sm:$0xff]
    %v3761 = vld [vmem:[#allocation4 + $0x338] sm:$0xff]
    %v3762 = vld [vmem:[#allocation4 + $0x340] sm:$0xff]
    %v3763 = vld [vmem:[#allocation4 + $0x348] sm:$0xff]
    %v3764 = vld [vmem:[#allocation4 + $0x350] sm:$0xff]
    %v3765 = vld [vmem:[#allocation4 + $0x358] sm:$0xff]
    %v3766 = vld [vmem:[#allocation4 + $0x360] sm:$0xff]
    %v3767 = vld [vmem:[#allocation4 + $0x368] sm:$0xff]
    %v3768 = vld [vmem:[#allocation4 + $0x370] sm:$0xff]
    %v3769 = vld [vmem:[#allocation4 + $0x378] sm:$0xff]
    %v3770 = vld [vmem:[#allocation4 + $0x380] sm:$0xff]
    %v3771 = vld [vmem:[#allocation4 + $0x388] sm:$0xff]
    %v3772 = vld [vmem:[#allocation4 + $0x390] sm:$0xff]
    %v3773 = vld [vmem:[#allocation4 + $0x398] sm:$0xff]
    %v3774 = vld [vmem:[#allocation4 + $0x3a0] sm:$0xff]
    %v3775 = vld [vmem:[#allocation4 + $0x3a8] sm:$0xff]
    %v3776 = vld [vmem:[#allocation4 + $0x3b0] sm:$0xff]
    %v3777 = vld [vmem:[#allocation4 + $0x3b8] sm:$0xff]
    %v3778 = vld [vmem:[#allocation4 + $0x3c0] sm:$0xff]
    %v3779 = vld [vmem:[#allocation4 + $0x3c8] sm:$0xff]
    %v3780 = vld [vmem:[#allocation4 + $0x3d0] sm:$0xff]
    %v3781 = vld [vmem:[#allocation4 + $0x3d8] sm:$0xff]
    %v3782 = vld [vmem:[#allocation4 + $0x3e0] sm:$0xff]
    %v3783 = vld [vmem:[#allocation4 + $0x3e8] sm:$0xff]
    %v3784 = vld [vmem:[#allocation4 + $0x3f0] sm:$0xff]
    %v3785 = vld [vmem:[#allocation4 + $0x3f8] sm:$0xff]
    %v3786 = vld [vmem:[#allocation4 + $0x400] sm:$0xff]
    %v3787 = vld [vmem:[#allocation4 + $0x408] sm:$0xff]
    %v3788 = vld [vmem:[#allocation4 + $0x410] sm:$0xff]
    %v3789 = vld [vmem:[#allocation4 + $0x418] sm:$0xff]
    %v3790 = vld [vmem:[#allocation4 + $0x420] sm:$0xff]
    %v3791 = vld [vmem:[#allocation4 + $0x428] sm:$0xff]
    %v3792 = vld [vmem:[#allocation4 + $0x430] sm:$0xff]
    %v3793 = vld [vmem:[#allocation4 + $0x438] sm:$0xff]
    %v3794 = vld [vmem:[#allocation4 + $0x440] sm:$0xff]
    %v3795 = vld [vmem:[#allocation4 + $0x448] sm:$0xff]
    %v3796 = vld [vmem:[#allocation4 + $0x450] sm:$0xff]
    %v3797 = vld [vmem:[#allocation4 + $0x458] sm:$0xff]
    %v3798 = vld [vmem:[#allocation4 + $0x460] sm:$0xff]
    %v3799 = vld [vmem:[#allocation4 + $0x468] sm:$0xff]
    %v3800 = vld [vmem:[#allocation4 + $0x470] sm:$0xff]
    %v3801 = vld [vmem:[#allocation4 + $0x478] sm:$0xff]
    %v3802 = vld [vmem:[#allocation4 + $0x480] sm:$0xff]
    %v3803 = vld [vmem:[#allocation4 + $0x488] sm:$0xff]
    %v3804 = vld [vmem:[#allocation4 + $0x490] sm:$0xff]
    %v3805 = vld [vmem:[#allocation4 + $0x498] sm:$0xff]
    %v3806 = vld [vmem:[#allocation4 + $0x4a0] sm:$0xff]
    %v3807 = vld [vmem:[#allocation4 + $0x4a8] sm:$0xff]
    %v3808 = vld [vmem:[#allocation4 + $0x4b0] sm:$0xff]
    %v3809 = vld [vmem:[#allocation4 + $0x4b8] sm:$0xff]
    %v3810 = vld [vmem:[#allocation4 + $0x4c0] sm:$0xff]
    %v3811 = vld [vmem:[#allocation4 + $0x4c8] sm:$0xff]
    %v3812 = vld [vmem:[#allocation4 + $0x4d0] sm:$0xff]
    %v3813 = vld [vmem:[#allocation4 + $0x4d8] sm:$0xff]
    %v3814 = vld [vmem:[#allocation4 + $0x4e0] sm:$0xff]
    %v3815 = vld [vmem:[#allocation4 + $0x4e8] sm:$0xff]
    %v3816 = vld [vmem:[#allocation4 + $0x4f0] sm:$0xff]
    %v3817 = vld [vmem:[#allocation4 + $0x4f8] sm:$0xff]
    %v3818 = vld [vmem:[#allocation4 + $0x500] sm:$0xff]
    %v3819 = vld [vmem:[#allocation4 + $0x508] sm:$0xff]
    %v3820 = vld [vmem:[#allocation4 + $0x510] sm:$0xff]
    %v3821 = vld [vmem:[#allocation4 + $0x518] sm:$0xff]
    %v3822 = vld [vmem:[#allocation4 + $0x520] sm:$0xff]
    %v3823 = vld [vmem:[#allocation4 + $0x528] sm:$0xff]
    %v3824 = vld [vmem:[#allocation4 + $0x530] sm:$0xff]
    %v3825 = vld [vmem:[#allocation4 + $0x538] sm:$0xff]
    %v3826 = vld [vmem:[#allocation4 + $0x540] sm:$0xff]
    %v3827 = vld [vmem:[#allocation4 + $0x548] sm:$0xff]
    %v3828 = vld [vmem:[#allocation4 + $0x550] sm:$0xff]
    %v3829 = vld [vmem:[#allocation4 + $0x558] sm:$0xff]
    %v3830 = vld [vmem:[#allocation4 + $0x560] sm:$0xff]
    %v3831 = vld [vmem:[#allocation4 + $0x568] sm:$0xff]
    %v3832 = vld [vmem:[#allocation4 + $0x570] sm:$0xff]
    %v3833 = vld [vmem:[#allocation4 + $0x578] sm:$0xff]
    %v3834 = vld [vmem:[#allocation4 + $0x580] sm:$0xff]
    %v3835 = vld [vmem:[#allocation4 + $0x588] sm:$0xff]
    %v3836 = vld [vmem:[#allocation4 + $0x590] sm:$0xff]
    %v3837 = vld [vmem:[#allocation4 + $0x598] sm:$0xff]
    %v3838 = vld [vmem:[#allocation4 + $0x5a0] sm:$0xff]
    %v3839 = vld [vmem:[#allocation4 + $0x5a8] sm:$0xff]
    %v3840 = vld [vmem:[#allocation4 + $0x5b0] sm:$0xff]
    %v3841 = vld [vmem:[#allocation4 + $0x5b8] sm:$0xff]
    %v3842 = vld [vmem:[#allocation4 + $0x5c0] sm:$0xff]
    %v3843 = vld [vmem:[#allocation4 + $0x5c8] sm:$0xff]
    %v3844 = vld [vmem:[#allocation4 + $0x5d0] sm:$0xff]
    %v3845 = vld [vmem:[#allocation4 + $0x5d8] sm:$0xff]
    %v3846 = vld [vmem:[#allocation4 + $0x5e0] sm:$0xff]
    %v3847 = vld [vmem:[#allocation4 + $0x5e8] sm:$0xff]
    %v3848 = vld [vmem:[#allocation4 + $0x5f0] sm:$0xff]
    %v3849 = vld [vmem:[#allocation4 + $0x5f8] sm:$0xff]
    %v3850 = vld [vmem:[#allocation4 + $0x600] sm:$0xff]
    %v3851 = vld [vmem:[#allocation4 + $0x608] sm:$0xff]
    %v3852 = vld [vmem:[#allocation4 + $0x610] sm:$0xff]
    %v3853 = vld [vmem:[#allocation4 + $0x618] sm:$0xff]
    %v3854 = vld [vmem:[#allocation4 + $0x620] sm:$0xff]
    %v3855 = vld [vmem:[#allocation4 + $0x628] sm:$0xff]
    %v3856 = vld [vmem:[#allocation4 + $0x630] sm:$0xff]
    %v3857 = vld [vmem:[#allocation4 + $0x638] sm:$0xff]
    %v3858 = vld [vmem:[#allocation4 + $0x640] sm:$0xff]
    %v3859 = vld [vmem:[#allocation4 + $0x648] sm:$0xff]
    %v3860 = vld [vmem:[#allocation4 + $0x650] sm:$0xff]
    %v3861 = vld [vmem:[#allocation4 + $0x658] sm:$0xff]
    %v3862 = vld [vmem:[#allocation4 + $0x660] sm:$0xff]
    %v3863 = vld [vmem:[#allocation4 + $0x668] sm:$0xff]
    %v3864 = vld [vmem:[#allocation4 + $0x670] sm:$0xff]
    %v3865 = vld [vmem:[#allocation4 + $0x678] sm:$0xff]
    %v3866 = vld [vmem:[#allocation4 + $0x680] sm:$0xff]
    %v3867 = vld [vmem:[#allocation4 + $0x688] sm:$0xff]
    %v3868 = vld [vmem:[#allocation4 + $0x690] sm:$0xff]
    %v3869 = vld [vmem:[#allocation4 + $0x698] sm:$0xff]
    %v3870 = vld [vmem:[#allocation4 + $0x6a0] sm:$0xff]
    %v3871 = vld [vmem:[#allocation4 + $0x6a8] sm:$0xff]
    %v3872 = vld [vmem:[#allocation4 + $0x6b0] sm:$0xff]
    %v3873 = vld [vmem:[#allocation4 + $0x6b8] sm:$0xff]
    %v3874 = vld [vmem:[#allocation4 + $0x6c0] sm:$0xff]
    %v3875 = vld [vmem:[#allocation4 + $0x6c8] sm:$0xff]
    %v3876 = vld [vmem:[#allocation4 + $0x6d0] sm:$0xff]
    %v3877 = vld [vmem:[#allocation4 + $0x6d8] sm:$0xff]
    %v3878 = vld [vmem:[#allocation4 + $0x6e0] sm:$0xff]
    %v3879 = vld [vmem:[#allocation4 + $0x6e8] sm:$0xff]
    %v3880 = vld [vmem:[#allocation4 + $0x6f0] sm:$0xff]
    %v3881 = vld [vmem:[#allocation4 + $0x6f8] sm:$0xff]
    %v3882 = vld [vmem:[#allocation4 + $0x700] sm:$0xff]
    %v3883 = vld [vmem:[#allocation4 + $0x708] sm:$0xff]
    %v3884 = vld [vmem:[#allocation4 + $0x710] sm:$0xff]
    %v3885 = vld [vmem:[#allocation4 + $0x718] sm:$0xff]
    %v3886 = vld [vmem:[#allocation4 + $0x720] sm:$0xff]
    %v3887 = vld [vmem:[#allocation4 + $0x728] sm:$0xff]
    %v3888 = vld [vmem:[#allocation4 + $0x730] sm:$0xff]
    %v3889 = vld [vmem:[#allocation4 + $0x738] sm:$0xff]
    %v3890 = vld [vmem:[#allocation4 + $0x740] sm:$0xff]
    %v3891 = vld [vmem:[#allocation4 + $0x748] sm:$0xff]
    %v3892 = vld [vmem:[#allocation4 + $0x750] sm:$0xff]
    %v3893 = vld [vmem:[#allocation4 + $0x758] sm:$0xff]
    %v3894 = vld [vmem:[#allocation4 + $0x760] sm:$0xff]
    %v3895 = vld [vmem:[#allocation4 + $0x768] sm:$0xff]
    %v3896 = vld [vmem:[#allocation4 + $0x770] sm:$0xff]
    %v3897 = vld [vmem:[#allocation4 + $0x778] sm:$0xff]
    %v3898 = vld [vmem:[#allocation4 + $0x780] sm:$0xff]
    %v3899 = vld [vmem:[#allocation4 + $0x788] sm:$0xff]
    %v3900 = vld [vmem:[#allocation4 + $0x790] sm:$0xff]
    %v3901 = vld [vmem:[#allocation4 + $0x798] sm:$0xff]
    %v3902 = vld [vmem:[#allocation4 + $0x7a0] sm:$0xff]
    %v3903 = vld [vmem:[#allocation4 + $0x7a8] sm:$0xff]
    %v3904 = vld [vmem:[#allocation4 + $0x7b0] sm:$0xff]
    %v3905 = vld [vmem:[#allocation4 + $0x7b8] sm:$0xff]
    %v3906 = vld [vmem:[#allocation4 + $0x7c0] sm:$0xff]
    %v3907 = vld [vmem:[#allocation4 + $0x7c8] sm:$0xff]
    %v3908 = vld [vmem:[#allocation4 + $0x7d0] sm:$0xff]
    %v3909 = vld [vmem:[#allocation4 + $0x7d8] sm:$0xff]
    %v3910 = vld [vmem:[#allocation4 + $0x7e0] sm:$0xff]
    %v3911 = vld [vmem:[#allocation4 + $0x7e8] sm:$0xff]
    %v3912 = vld [vmem:[#allocation4 + $0x7f0] sm:$0xff]
    %v3913 = vld [vmem:[#allocation4 + $0x7f8] sm:$0xff]
    %v3914 = vpack.c.bf16 %v3530, %v3526
    %v3915 = vpack.c.bf16 %v3531, %v3527
    %v3916 = vpack.c.bf16 %v3532, %v3528
    %v3917 = vpack.c.bf16 %v3533, %v3529
    %v3918 = vpack.c.bf16 %v3538, %v3534
    %v3919 = vpack.c.bf16 %v3539, %v3535
    %v3920 = vpack.c.bf16 %v3540, %v3536
    %v3921 = vpack.c.bf16 %v3541, %v3537
    %v3922 = vpack.c.bf16 %v3546, %v3542
    %v3923 = vpack.c.bf16 %v3547, %v3543
    %v3924 = vpack.c.bf16 %v3548, %v3544
    %v3925 = vpack.c.bf16 %v3549, %v3545
    %v3926 = vpack.c.bf16 %v3554, %v3550
    %v3927 = vpack.c.bf16 %v3555, %v3551
    %v3928 = vpack.c.bf16 %v3556, %v3552
    %v3929 = vpack.c.bf16 %v3557, %v3553
    %v3930 = vpack.c.bf16 %v3562, %v3558
    %v3931 = vpack.c.bf16 %v3563, %v3559
    %v3932 = vpack.c.bf16 %v3564, %v3560
    %v3933 = vpack.c.bf16 %v3565, %v3561
    %v3934 = vpack.c.bf16 %v3570, %v3566
    %v3935 = vpack.c.bf16 %v3571, %v3567
    %v3936 = vpack.c.bf16 %v3572, %v3568
    %v3937 = vpack.c.bf16 %v3573, %v3569
    %v3938 = vpack.c.bf16 %v3578, %v3574
    %v3939 = vpack.c.bf16 %v3579, %v3575
    %v3940 = vpack.c.bf16 %v3580, %v3576
    %v3941 = vpack.c.bf16 %v3581, %v3577
    %v3942 = vpack.c.bf16 %v3586, %v3582
    %v3943 = vpack.c.bf16 %v3587, %v3583
    %v3944 = vpack.c.bf16 %v3588, %v3584
    %v3945 = vpack.c.bf16 %v3589, %v3585
    %v3946 = vpack.c.bf16 %v3594, %v3590
    %v3947 = vpack.c.bf16 %v3595, %v3591
    %v3948 = vpack.c.bf16 %v3596, %v3592
    %v3949 = vpack.c.bf16 %v3597, %v3593
    %v3950 = vpack.c.bf16 %v3602, %v3598
    %v3951 = vpack.c.bf16 %v3603, %v3599
    %v3952 = vpack.c.bf16 %v3604, %v3600
    %v3953 = vpack.c.bf16 %v3605, %v3601
    %v3954 = vpack.c.bf16 %v3610, %v3606
    %v3955 = vpack.c.bf16 %v3611, %v3607
    %v3956 = vpack.c.bf16 %v3612, %v3608
    %v3957 = vpack.c.bf16 %v3613, %v3609
    %v3958 = vpack.c.bf16 %v3618, %v3614
    %v3959 = vpack.c.bf16 %v3619, %v3615
    %v3960 = vpack.c.bf16 %v3620, %v3616
    %v3961 = vpack.c.bf16 %v3621, %v3617
    %v3962 = vpack.c.bf16 %v3626, %v3622
    %v3963 = vpack.c.bf16 %v3627, %v3623
    %v3964 = vpack.c.bf16 %v3628, %v3624
    %v3965 = vpack.c.bf16 %v3629, %v3625
    %v3966 = vpack.c.bf16 %v3634, %v3630
    %v3967 = vpack.c.bf16 %v3635, %v3631
    %v3968 = vpack.c.bf16 %v3636, %v3632
    %v3969 = vpack.c.bf16 %v3637, %v3633
    %v3970 = vpack.c.bf16 %v3642, %v3638
    %v3971 = vpack.c.bf16 %v3643, %v3639
    %v3972 = vpack.c.bf16 %v3644, %v3640
    %v3973 = vpack.c.bf16 %v3645, %v3641
    %v3974 = vpack.c.bf16 %v3650, %v3646
    %v3975 = vpack.c.bf16 %v3651, %v3647
    %v3976 = vpack.c.bf16 %v3652, %v3648
    %v3977 = vpack.c.bf16 %v3653, %v3649
    %3978 = vmatprep.subr.bf16.mxu0 %v3659
    %3979 = vmatpush1.bf16.msra.mxu0 %v3658
    %3980 = vmatprep.subr.bf16.mxu0 %v3667
    %3981 = vmatpush1.bf16.msra.mxu0 %v3666
    %3982 = vmatprep.subr.bf16.mxu0 %v3675
    %3983 = vmatpush1.bf16.msra.mxu0 %v3674
    %3984 = vmatprep.subr.bf16.mxu0 %v3683
    %3985 = vmatpush1.bf16.msra.mxu0 %v3682
    %3986 = vmatprep.subr.bf16.mxu0 %v3691
    %3987 = vmatpush1.bf16.msra.mxu0 %v3690
    %3988 = vmatprep.subr.bf16.mxu0 %v3699
    %3989 = vmatpush1.bf16.msra.mxu0 %v3698
    %3990 = vmatprep.subr.bf16.mxu0 %v3707
    %3991 = vmatpush1.bf16.msra.mxu0 %v3706
    %3992 = vmatprep.subr.bf16.mxu0 %v3715
    %3993 = vmatpush1.bf16.msra.mxu0 %v3714
    %3994 = vmatprep.subr.bf16.mxu0 %v3723
    %3995 = vmatpush1.bf16.msra.mxu0 %v3722
    %3996 = vmatprep.subr.bf16.mxu0 %v3731
    %3997 = vmatpush1.bf16.msra.mxu0 %v3730
    %3998 = vmatprep.subr.bf16.mxu0 %v3739
    %3999 = vmatpush1.bf16.msra.mxu0 %v3738
    %4000 = vmatprep.subr.bf16.mxu0 %v3747
    %4001 = vmatpush1.bf16.msra.mxu0 %v3746
    %4002 = vmatprep.subr.bf16.mxu0 %v3755
    %4003 = vmatpush1.bf16.msra.mxu0 %v3754
    %4004 = vmatprep.subr.bf16.mxu0 %v3763
    %4005 = vmatpush1.bf16.msra.mxu0 %v3762
    %4006 = vmatprep.subr.bf16.mxu0 %v3771
    %4007 = vmatpush1.bf16.msra.mxu0 %v3770
    %4008 = vmatprep.subr.bf16.mxu0 %v3779
    %4009 = vmatpush1.bf16.msra.mxu0 %v3778
    %4010 = vmatprep.mubr.bf16.mxu0 %v3915
    %4011 = vmatmul.mubr.bf16.gmra.mrb[0].mxu0 %v3914
    %v4012 = vpop.f32.mrb[0].mxu0
    %v4013 = vadd.f32 0.0, %v4012
    %v4014 = vpop.f32.mrb[0].mxu0
    %v4015 = vadd.f32 0.0, %v4014
    %v4016 = vpop.f32.mrb[0].mxu0
    %v4017 = vadd.f32 0.0, %v4016
    %v4018 = vpop.f32.mrb[0].mxu0
    %v4019 = vadd.f32 0.0, %v4018
    %4020 = vmatprep.mubr.bf16.mxu0 %v3919
    %4021 = vmatmul.mubr.bf16.gmra.mrb[0].mxu0 %v3918
    %v4022 = vpop.f32.mrb[0].mxu0
    %v4023 = vadd.f32 0.0, %v4022
    %v4024 = vpop.f32.mrb[0].mxu0
    %v4025 = vadd.f32 0.0, %v4024
    %v4026 = vpop.f32.mrb[0].mxu0
    %v4027 = vadd.f32 0.0, %v4026
    %v4028 = vpop.f32.mrb[0].mxu0
    %v4029 = vadd.f32 0.0, %v4028
    %4030 = vmatprep.mubr.bf16.mxu0 %v3923
    %4031 = vmatmul.mubr.bf16.gmra.mrb[0].mxu0 %v3922
    %v4032 = vpop.f32.mrb[0].mxu0
    %v4033 = vadd.f32 0.0, %v4032
    %v4034 = vpop.f32.mrb[0].mxu0
    %v4035 = vadd.f32 0.0, %v4034
    %v4036 = vpop.f32.mrb[0].mxu0
    %v4037 = vadd.f32 0.0, %v4036
    %v4038 = vpop.f32.mrb[0].mxu0
    %v4039 = vadd.f32 0.0, %v4038
    %4040 = vmatprep.mubr.bf16.mxu0 %v3927
    %4041 = vmatmul.mubr.bf16.gmra.mrb[0].mxu0 %v3926
    %v4042 = vpop.f32.mrb[0].mxu0
    %v4043 = vadd.f32 0.0, %v4042
    %v4044 = vpop.f32.mrb[0].mxu0
    %v4045 = vadd.f32 0.0, %v4044
    %v4046 = vpop.f32.mrb[0].mxu0
    %v4047 = vadd.f32 0.0, %v4046
    %v4048 = vpop.f32.mrb[0].mxu0
    %v4049 = vadd.f32 0.0, %v4048
    %4050 = vmatprep.mubr.bf16.mxu0 %v3931
    %4051 = vmatmul.mubr.bf16.gmra.mrb[0].mxu0 %v3930
    %v4052 = vpop.f32.mrb[0].mxu0
    %v4053 = vadd.f32 0.0, %v4052
    %v4054 = vpop.f32.mrb[0].mxu0
    %v4055 = vadd.f32 0.0, %v4054
    %v4056 = vpop.f32.mrb[0].mxu0
    %v4057 = vadd.f32 0.0, %v4056
    %v4058 = vpop.f32.mrb[0].mxu0
    %v4059 = vadd.f32 0.0, %v4058
    %4060 = vmatprep.mubr.bf16.mxu0 %v3935
    %4061 = vmatmul.mubr.bf16.gmra.mrb[0].mxu0 %v3934
    %v4062 = vpop.f32.mrb[0].mxu0
    %v4063 = vadd.f32 0.0, %v4062
    %v4064 = vpop.f32.mrb[0].mxu0
    %v4065 = vadd.f32 0.0, %v4064
    %v4066 = vpop.f32.mrb[0].mxu0
    %v4067 = vadd.f32 0.0, %v4066
    %v4068 = vpop.f32.mrb[0].mxu0
    %v4069 = vadd.f32 0.0, %v4068
    %4070 = vmatprep.mubr.bf16.mxu0 %v3939
    %4071 = vmatmul.mubr.bf16.gmra.mrb[0].mxu0 %v3938
    %v4072 = vpop.f32.mrb[0].mxu0
    %v4073 = vadd.f32 0.0, %v4072
    %v4074 = vpop.f32.mrb[0].mxu0
    %v4075 = vadd.f32 0.0, %v4074
    %v4076 = vpop.f32.mrb[0].mxu0
    %v4077 = vadd.f32 0.0, %v4076
    %v4078 = vpop.f32.mrb[0].mxu0
    %v4079 = vadd.f32 0.0, %v4078
    %4080 = vmatprep.mubr.bf16.mxu0 %v3943
    %4081 = vmatmul.mubr.bf16.gmra.mrb[0].mxu0 %v3942
    %v4082 = vpop.f32.mrb[0].mxu0
    %v4083 = vadd.f32 0.0, %v4082
    %v4084 = vpop.f32.mrb[0].mxu0
    %v4085 = vadd.f32 0.0, %v4084
    %v4086 = vpop.f32.mrb[0].mxu0
    %v4087 = vadd.f32 0.0, %v4086
    %v4088 = vpop.f32.mrb[0].mxu0
    %v4089 = vadd.f32 0.0, %v4088
    %4090 = vmatprep.mubr.bf16.mxu0 %v3947
    %4091 = vmatmul.mubr.bf16.gmra.mrb[0].mxu0 %v3946
    %v4092 = vpop.f32.mrb[0].mxu0
    %v4093 = vadd.f32 0.0, %v4092
    %v4094 = vpop.f32.mrb[0].mxu0
    %v4095 = vadd.f32 0.0, %v4094
    %v4096 = vpop.f32.mrb[0].mxu0
    %v4097 = vadd.f32 0.0, %v4096
    %v4098 = vpop.f32.mrb[0].mxu0
    %v4099 = vadd.f32 0.0, %v4098
    %4100 = vmatprep.mubr.bf16.mxu0 %v3951
    %4101 = vmatmul.mubr.bf16.gmra.mrb[0].mxu0 %v3950
    %v4102 = vpop.f32.mrb[0].mxu0
    %v4103 = vadd.f32 0.0, %v4102
    %v4104 = vpop.f32.mrb[0].mxu0
    %v4105 = vadd.f32 0.0, %v4104
    %v4106 = vpop.f32.mrb[0].mxu0
    %v4107 = vadd.f32 0.0, %v4106
    %v4108 = vpop.f32.mrb[0].mxu0
    %v4109 = vadd.f32 0.0, %v4108
    %4110 = vmatprep.mubr.bf16.mxu0 %v3955
    %4111 = vmatmul.mubr.bf16.gmra.mrb[0].mxu0 %v3954
    %v4112 = vpop.f32.mrb[0].mxu0
    %v4113 = vadd.f32 0.0, %v4112
    %v4114 = vpop.f32.mrb[0].mxu0
    %v4115 = vadd.f32 0.0, %v4114
    %v4116 = vpop.f32.mrb[0].mxu0
    %v4117 = vadd.f32 0.0, %v4116
    %v4118 = vpop.f32.mrb[0].mxu0
    %v4119 = vadd.f32 0.0, %v4118
    %4120 = vmatprep.mubr.bf16.mxu0 %v3959
    %4121 = vmatmul.mubr.bf16.gmra.mrb[0].mxu0 %v3958
    %v4122 = vpop.f32.mrb[0].mxu0
    %v4123 = vadd.f32 0.0, %v4122
    %v4124 = vpop.f32.mrb[0].mxu0
    %v4125 = vadd.f32 0.0, %v4124
    %v4126 = vpop.f32.mrb[0].mxu0
    %v4127 = vadd.f32 0.0, %v4126
    %v4128 = vpop.f32.mrb[0].mxu0
    %v4129 = vadd.f32 0.0, %v4128
    %4130 = vmatprep.mubr.bf16.mxu0 %v3963
    %4131 = vmatmul.mubr.bf16.gmra.mrb[0].mxu0 %v3962
    %v4132 = vpop.f32.mrb[0].mxu0
    %v4133 = vadd.f32 0.0, %v4132
    %v4134 = vpop.f32.mrb[0].mxu0
    %v4135 = vadd.f32 0.0, %v4134
    %v4136 = vpop.f32.mrb[0].mxu0
    %v4137 = vadd.f32 0.0, %v4136
    %v4138 = vpop.f32.mrb[0].mxu0
    %v4139 = vadd.f32 0.0, %v4138
    %4140 = vmatprep.mubr.bf16.mxu0 %v3967
    %4141 = vmatmul.mubr.bf16.gmra.mrb[0].mxu0 %v3966
    %v4142 = vpop.f32.mrb[0].mxu0
    %v4143 = vadd.f32 0.0, %v4142
    %v4144 = vpop.f32.mrb[0].mxu0
    %v4145 = vadd.f32 0.0, %v4144
    %v4146 = vpop.f32.mrb[0].mxu0
    %v4147 = vadd.f32 0.0, %v4146
    %v4148 = vpop.f32.mrb[0].mxu0
    %v4149 = vadd.f32 0.0, %v4148
    %4150 = vmatprep.mubr.bf16.mxu0 %v3971
    %4151 = vmatmul.mubr.bf16.gmra.mrb[0].mxu0 %v3970
    %v4152 = vpop.f32.mrb[0].mxu0
    %v4153 = vadd.f32 0.0, %v4152
    %v4154 = vpop.f32.mrb[0].mxu0
    %v4155 = vadd.f32 0.0, %v4154
    %v4156 = vpop.f32.mrb[0].mxu0
    %v4157 = vadd.f32 0.0, %v4156
    %v4158 = vpop.f32.mrb[0].mxu0
    %v4159 = vadd.f32 0.0, %v4158
    %4160 = vmatprep.mubr.bf16.mxu0 %v3975
    %4161 = vmatmul.mubr.bf16.gmra.mrb[0].mxu0 %v3974
    %v4162 = vpop.f32.mrb[0].mxu0
    %v4163 = vadd.f32 0.0, %v4162
    %v4164 = vpop.f32.mrb[0].mxu0
    %v4165 = vadd.f32 0.0, %v4164
    %v4166 = vpop.f32.mrb[0].mxu0
    %v4167 = vadd.f32 0.0, %v4166
    %v4168 = vpop.f32.mrb[0].mxu0
    %v4169 = vadd.f32 0.0, %v4168
    %4170 = vdwg.mxu0
    %4171 = vmatprep.subr.bf16.mxu0 %v3787
    %4172 = vmatpush1.bf16.msra.mxu0 %v3786
    %4173 = vmatprep.subr.bf16.mxu0 %v3795
    %4174 = vmatpush1.bf16.msra.mxu0 %v3794
    %4175 = vmatprep.subr.bf16.mxu0 %v3803
    %4176 = vmatpush1.bf16.msra.mxu0 %v3802
    %4177 = vmatprep.subr.bf16.mxu0 %v3811
    %4178 = vmatpush1.bf16.msra.mxu0 %v3810
    %4179 = vmatprep.subr.bf16.mxu0 %v3819
    %4180 = vmatpush1.bf16.msra.mxu0 %v3818
    %4181 = vmatprep.subr.bf16.mxu0 %v3827
    %4182 = vmatpush1.bf16.msra.mxu0 %v3826
    %4183 = vmatprep.subr.bf16.mxu0 %v3835
    %4184 = vmatpush1.bf16.msra.mxu0 %v3834
    %4185 = vmatprep.subr.bf16.mxu0 %v3843
    %4186 = vmatpush1.bf16.msra.mxu0 %v3842
    %4187 = vmatprep.subr.bf16.mxu0 %v3851
    %4188 = vmatpush1.bf16.msra.mxu0 %v3850
    %4189 = vmatprep.subr.bf16.mxu0 %v3859
    %4190 = vmatpush1.bf16.msra.mxu0 %v3858
    %4191 = vmatprep.subr.bf16.mxu0 %v3867
    %4192 = vmatpush1.bf16.msra.mxu0 %v3866
    %4193 = vmatprep.subr.bf16.mxu0 %v3875
    %4194 = vmatpush1.bf16.msra.mxu0 %v3874
    %4195 = vmatprep.subr.bf16.mxu0 %v3883
    %4196 = vmatpush1.bf16.msra.mxu0 %v3882
    %4197 = vmatprep.subr.bf16.mxu0 %v3891
    %4198 = vmatpush1.bf16.msra.mxu0 %v3890
    %4199 = vmatprep.subr.bf16.mxu0 %v3899
    %4200 = vmatpush1.bf16.msra.mxu0 %v3898
    %4201 = vmatprep.subr.bf16.mxu0 %v3907
    %4202 = vmatpush1.bf16.msra.mxu0 %v3906
    %4203 = vmatprep.mubr.bf16.mxu0 %v3917
    %4204 = vmatmul.mubr.bf16.gmra.mrb[0].mxu0 %v3916
    %v4205 = vpop.f32.mrb[0].mxu0
    %v4206 = vadd.f32 %v4013, %v4205
    %v4207 = vpop.f32.mrb[0].mxu0
    %v4208 = vadd.f32 %v4015, %v4207
    %v4209 = vpop.f32.mrb[0].mxu0
    %v4210 = vadd.f32 %v4017, %v4209
    %v4211 = vpop.f32.mrb[0].mxu0
    %v4212 = vadd.f32 %v4019, %v4211
    %4213 = vmatprep.mubr.bf16.mxu0 %v3921
    %4214 = vmatmul.mubr.bf16.gmra.mrb[0].mxu0 %v3920
    %v4215 = vpop.f32.mrb[0].mxu0
    %v4216 = vadd.f32 %v4023, %v4215
    %v4217 = vpop.f32.mrb[0].mxu0
    %v4218 = vadd.f32 %v4025, %v4217
    %v4219 = vpop.f32.mrb[0].mxu0
    %v4220 = vadd.f32 %v4027, %v4219
    %v4221 = vpop.f32.mrb[0].mxu0
    %v4222 = vadd.f32 %v4029, %v4221
    %4223 = vmatprep.mubr.bf16.mxu0 %v3925
    %4224 = vmatmul.mubr.bf16.gmra.mrb[0].mxu0 %v3924
    %v4225 = vpop.f32.mrb[0].mxu0
    %v4226 = vadd.f32 %v4033, %v4225
    %v4227 = vpop.f32.mrb[0].mxu0
    %v4228 = vadd.f32 %v4035, %v4227
    %v4229 = vpop.f32.mrb[0].mxu0
    %v4230 = vadd.f32 %v4037, %v4229
    %v4231 = vpop.f32.mrb[0].mxu0
    %v4232 = vadd.f32 %v4039, %v4231
    %4233 = vmatprep.mubr.bf16.mxu0 %v3929
    %4234 = vmatmul.mubr.bf16.gmra.mrb[0].mxu0 %v3928
    %v4235 = vpop.f32.mrb[0].mxu0
    %v4236 = vadd.f32 %v4043, %v4235
    %v4237 = vpop.f32.mrb[0].mxu0
    %v4238 = vadd.f32 %v4045, %v4237
    %v4239 = vpop.f32.mrb[0].mxu0
    %v4240 = vadd.f32 %v4047, %v4239
    %v4241 = vpop.f32.mrb[0].mxu0
    %v4242 = vadd.f32 %v4049, %v4241
    %4243 = vmatprep.mubr.bf16.mxu0 %v3933
    %4244 = vmatmul.mubr.bf16.gmra.mrb[0].mxu0 %v3932
    %v4245 = vpop.f32.mrb[0].mxu0
    %v4246 = vadd.f32 %v4053, %v4245
    %v4247 = vpop.f32.mrb[0].mxu0
    %v4248 = vadd.f32 %v4055, %v4247
    %v4249 = vpop.f32.mrb[0].mxu0
    %v4250 = vadd.f32 %v4057, %v4249
    %v4251 = vpop.f32.mrb[0].mxu0
    %v4252 = vadd.f32 %v4059, %v4251
    %4253 = vmatprep.mubr.bf16.mxu0 %v3937
    %4254 = vmatmul.mubr.bf16.gmra.mrb[0].mxu0 %v3936
    %v4255 = vpop.f32.mrb[0].mxu0
    %v4256 = vadd.f32 %v4063, %v4255
    %v4257 = vpop.f32.mrb[0].mxu0
    %v4258 = vadd.f32 %v4065, %v4257
    %v4259 = vpop.f32.mrb[0].mxu0
    %v4260 = vadd.f32 %v4067, %v4259
    %v4261 = vpop.f32.mrb[0].mxu0
    %v4262 = vadd.f32 %v4069, %v4261
    %4263 = vmatprep.mubr.bf16.mxu0 %v3941
    %4264 = vmatmul.mubr.bf16.gmra.mrb[0].mxu0 %v3940
    %v4265 = vpop.f32.mrb[0].mxu0
    %v4266 = vadd.f32 %v4073, %v4265
    %v4267 = vpop.f32.mrb[0].mxu0
    %v4268 = vadd.f32 %v4075, %v4267
    %v4269 = vpop.f32.mrb[0].mxu0
    %v4270 = vadd.f32 %v4077, %v4269
    %v4271 = vpop.f32.mrb[0].mxu0
    %v4272 = vadd.f32 %v4079, %v4271
    %4273 = vmatprep.mubr.bf16.mxu0 %v3945
    %4274 = vmatmul.mubr.bf16.gmra.mrb[0].mxu0 %v3944
    %v4275 = vpop.f32.mrb[0].mxu0
    %v4276 = vadd.f32 %v4083, %v4275
    %v4277 = vpop.f32.mrb[0].mxu0
    %v4278 = vadd.f32 %v4085, %v4277
    %v4279 = vpop.f32.mrb[0].mxu0
    %v4280 = vadd.f32 %v4087, %v4279
    %v4281 = vpop.f32.mrb[0].mxu0
    %v4282 = vadd.f32 %v4089, %v4281
    %4283 = vmatprep.mubr.bf16.mxu0 %v3949
    %4284 = vmatmul.mubr.bf16.gmra.mrb[0].mxu0 %v3948
    %v4285 = vpop.f32.mrb[0].mxu0
    %v4286 = vadd.f32 %v4093, %v4285
    %v4287 = vpop.f32.mrb[0].mxu0
    %v4288 = vadd.f32 %v4095, %v4287
    %v4289 = vpop.f32.mrb[0].mxu0
    %v4290 = vadd.f32 %v4097, %v4289
    %v4291 = vpop.f32.mrb[0].mxu0
    %v4292 = vadd.f32 %v4099, %v4291
    %4293 = vmatprep.mubr.bf16.mxu0 %v3953
    %4294 = vmatmul.mubr.bf16.gmra.mrb[0].mxu0 %v3952
    %v4295 = vpop.f32.mrb[0].mxu0
    %v4296 = vadd.f32 %v4103, %v4295
    %v4297 = vpop.f32.mrb[0].mxu0
    %v4298 = vadd.f32 %v4105, %v4297
    %v4299 = vpop.f32.mrb[0].mxu0
    %v4300 = vadd.f32 %v4107, %v4299
    %v4301 = vpop.f32.mrb[0].mxu0
    %v4302 = vadd.f32 %v4109, %v4301
    %4303 = vmatprep.mubr.bf16.mxu0 %v3957
    %4304 = vmatmul.mubr.bf16.gmra.mrb[0].mxu0 %v3956
    %v4305 = vpop.f32.mrb[0].mxu0
    %v4306 = vadd.f32 %v4113, %v4305
    %v4307 = vpop.f32.mrb[0].mxu0
    %v4308 = vadd.f32 %v4115, %v4307
    %v4309 = vpop.f32.mrb[0].mxu0
    %v4310 = vadd.f32 %v4117, %v4309
    %v4311 = vpop.f32.mrb[0].mxu0
    %v4312 = vadd.f32 %v4119, %v4311
    %4313 = vmatprep.mubr.bf16.mxu0 %v3961
    %4314 = vmatmul.mubr.bf16.gmra.mrb[0].mxu0 %v3960
    %v4315 = vpop.f32.mrb[0].mxu0
    %v4316 = vadd.f32 %v4123, %v4315
    %v4317 = vpop.f32.mrb[0].mxu0
    %v4318 = vadd.f32 %v4125, %v4317
    %v4319 = vpop.f32.mrb[0].mxu0
    %v4320 = vadd.f32 %v4127, %v4319
    %v4321 = vpop.f32.mrb[0].mxu0
    %v4322 = vadd.f32 %v4129, %v4321
    %4323 = vmatprep.mubr.bf16.mxu0 %v3965
    %4324 = vmatmul.mubr.bf16.gmra.mrb[0].mxu0 %v3964
    %v4325 = vpop.f32.mrb[0].mxu0
    %v4326 = vadd.f32 %v4133, %v4325
    %v4327 = vpop.f32.mrb[0].mxu0
    %v4328 = vadd.f32 %v4135, %v4327
    %v4329 = vpop.f32.mrb[0].mxu0
    %v4330 = vadd.f32 %v4137, %v4329
    %v4331 = vpop.f32.mrb[0].mxu0
    %v4332 = vadd.f32 %v4139, %v4331
    %4333 = vmatprep.mubr.bf16.mxu0 %v3969
    %4334 = vmatmul.mubr.bf16.gmra.mrb[0].mxu0 %v3968
    %v4335 = vpop.f32.mrb[0].mxu0
    %v4336 = vadd.f32 %v4143, %v4335
    %v4337 = vpop.f32.mrb[0].mxu0
    %v4338 = vadd.f32 %v4145, %v4337
    %v4339 = vpop.f32.mrb[0].mxu0
    %v4340 = vadd.f32 %v4147, %v4339
    %v4341 = vpop.f32.mrb[0].mxu0
    %v4342 = vadd.f32 %v4149, %v4341
    %4343 = vmatprep.mubr.bf16.mxu0 %v3973
    %4344 = vmatmul.mubr.bf16.gmra.mrb[0].mxu0 %v3972
    %v4345 = vpop.f32.mrb[0].mxu0
    %v4346 = vadd.f32 %v4153, %v4345
    %v4347 = vpop.f32.mrb[0].mxu0
    %v4348 = vadd.f32 %v4155, %v4347
    %v4349 = vpop.f32.mrb[0].mxu0
    %v4350 = vadd.f32 %v4157, %v4349
    %v4351 = vpop.f32.mrb[0].mxu0
    %v4352 = vadd.f32 %v4159, %v4351
    %4353 = vmatprep.mubr.bf16.mxu0 %v3977
    %4354 = vmatmul.mubr.bf16.gmra.mrb[0].mxu0 %v3976
    %v4355 = vpop.f32.mrb[0].mxu0
    %v4356 = vadd.f32 %v4163, %v4355
    %v4357 = vpop.f32.mrb[0].mxu0
    %v4358 = vadd.f32 %v4165, %v4357
    %v4359 = vpop.f32.mrb[0].mxu0
    %v4360 = vadd.f32 %v4167, %v4359
    %v4361 = vpop.f32.mrb[0].mxu0
    %v4362 = vadd.f32 %v4169, %v4361
    %4363 = vdwg.mxu0
    %4364 = vmatprep.subr.bf16.mxu0 %v3661
    %4365 = vmatpush1.bf16.msra.mxu0 %v3660
    %4366 = vmatprep.subr.bf16.mxu0 %v3669
    %4367 = vmatpush1.bf16.msra.mxu0 %v3668
    %4368 = vmatprep.subr.bf16.mxu0 %v3677
    %4369 = vmatpush1.bf16.msra.mxu0 %v3676
    %4370 = vmatprep.subr.bf16.mxu0 %v3685
    %4371 = vmatpush1.bf16.msra.mxu0 %v3684
    %4372 = vmatprep.subr.bf16.mxu0 %v3693
    %4373 = vmatpush1.bf16.msra.mxu0 %v3692
    %4374 = vmatprep.subr.bf16.mxu0 %v3701
    %4375 = vmatpush1.bf16.msra.mxu0 %v3700
    %4376 = vmatprep.subr.bf16.mxu0 %v3709
    %4377 = vmatpush1.bf16.msra.mxu0 %v3708
    %4378 = vmatprep.subr.bf16.mxu0 %v3717
    %4379 = vmatpush1.bf16.msra.mxu0 %v3716
    %4380 = vmatprep.subr.bf16.mxu0 %v3725
    %4381 = vmatpush1.bf16.msra.mxu0 %v3724
    %4382 = vmatprep.subr.bf16.mxu0 %v3733
    %4383 = vmatpush1.bf16.msra.mxu0 %v3732
    %4384 = vmatprep.subr.bf16.mxu0 %v3741
    %4385 = vmatpush1.bf16.msra.mxu0 %v3740
    %4386 = vmatprep.subr.bf16.mxu0 %v3749
    %4387 = vmatpush1.bf16.msra.mxu0 %v3748
    %4388 = vmatprep.subr.bf16.mxu0 %v3757
    %4389 = vmatpush1.bf16.msra.mxu0 %v3756
    %4390 = vmatprep.subr.bf16.mxu0 %v3765
    %4391 = vmatpush1.bf16.msra.mxu0 %v3764
    %4392 = vmatprep.subr.bf16.mxu0 %v3773
    %4393 = vmatpush1.bf16.msra.mxu0 %v3772
    %4394 = vmatprep.subr.bf16.mxu0 %v3781
    %4395 = vmatpush1.bf16.msra.mxu0 %v3780
    %4396 = vmatprep.mubr.bf16.mxu0 %v3915
    %4397 = vmatmul.mubr.bf16.gmra.mrb[0].mxu0 %v3914
    %v4398 = vpop.f32.mrb[0].mxu0
    %v4399 = vadd.f32 0.0, %v4398
    %v4400 = vpop.f32.mrb[0].mxu0
    %v4401 = vadd.f32 0.0, %v4400
    %v4402 = vpop.f32.mrb[0].mxu0
    %v4403 = vadd.f32 0.0, %v4402
    %v4404 = vpop.f32.mrb[0].mxu0
    %v4405 = vadd.f32 0.0, %v4404
    %4406 = vmatprep.mubr.bf16.mxu0 %v3919
    %4407 = vmatmul.mubr.bf16.gmra.mrb[0].mxu0 %v3918
    %v4408 = vpop.f32.mrb[0].mxu0
    %v4409 = vadd.f32 0.0, %v4408
    %v4410 = vpop.f32.mrb[0].mxu0
    %v4411 = vadd.f32 0.0, %v4410
    %v4412 = vpop.f32.mrb[0].mxu0
    %v4413 = vadd.f32 0.0, %v4412
    %v4414 = vpop.f32.mrb[0].mxu0
    %v4415 = vadd.f32 0.0, %v4414
    %4416 = vmatprep.mubr.bf16.mxu0 %v3923
    %4417 = vmatmul.mubr.bf16.gmra.mrb[0].mxu0 %v3922
    %v4418 = vpop.f32.mrb[0].mxu0
    %v4419 = vadd.f32 0.0, %v4418
    %v4420 = vpop.f32.mrb[0].mxu0
    %v4421 = vadd.f32 0.0, %v4420
    %v4422 = vpop.f32.mrb[0].mxu0
    %v4423 = vadd.f32 0.0, %v4422
    %v4424 = vpop.f32.mrb[0].mxu0
    %v4425 = vadd.f32 0.0, %v4424
    %4426 = vmatprep.mubr.bf16.mxu0 %v3927
    %4427 = vmatmul.mubr.bf16.gmra.mrb[0].mxu0 %v3926
    %v4428 = vpop.f32.mrb[0].mxu0
    %v4429 = vadd.f32 0.0, %v4428
    %v4430 = vpop.f32.mrb[0].mxu0
    %v4431 = vadd.f32 0.0, %v4430
    %v4432 = vpop.f32.mrb[0].mxu0
    %v4433 = vadd.f32 0.0, %v4432
    %v4434 = vpop.f32.mrb[0].mxu0
    %v4435 = vadd.f32 0.0, %v4434
    %4436 = vmatprep.mubr.bf16.mxu0 %v3931
    %4437 = vmatmul.mubr.bf16.gmra.mrb[0].mxu0 %v3930
    %v4438 = vpop.f32.mrb[0].mxu0
    %v4439 = vadd.f32 0.0, %v4438
    %v4440 = vpop.f32.mrb[0].mxu0
    %v4441 = vadd.f32 0.0, %v4440
    %v4442 = vpop.f32.mrb[0].mxu0
    %v4443 = vadd.f32 0.0, %v4442
    %v4444 = vpop.f32.mrb[0].mxu0
    %v4445 = vadd.f32 0.0, %v4444
    %4446 = vmatprep.mubr.bf16.mxu0 %v3935
    %4447 = vmatmul.mubr.bf16.gmra.mrb[0].mxu0 %v3934
    %v4448 = vpop.f32.mrb[0].mxu0
    %v4449 = vadd.f32 0.0, %v4448
    %v4450 = vpop.f32.mrb[0].mxu0
    %v4451 = vadd.f32 0.0, %v4450
    %v4452 = vpop.f32.mrb[0].mxu0
    %v4453 = vadd.f32 0.0, %v4452
    %v4454 = vpop.f32.mrb[0].mxu0
    %v4455 = vadd.f32 0.0, %v4454
    %4456 = vmatprep.mubr.bf16.mxu0 %v3939
    %4457 = vmatmul.mubr.bf16.gmra.mrb[0].mxu0 %v3938
    %v4458 = vpop.f32.mrb[0].mxu0
    %v4459 = vadd.f32 0.0, %v4458
    %v4460 = vpop.f32.mrb[0].mxu0
    %v4461 = vadd.f32 0.0, %v4460
    %v4462 = vpop.f32.mrb[0].mxu0
    %v4463 = vadd.f32 0.0, %v4462
    %v4464 = vpop.f32.mrb[0].mxu0
    %v4465 = vadd.f32 0.0, %v4464
    %4466 = vmatprep.mubr.bf16.mxu0 %v3943
    %4467 = vmatmul.mubr.bf16.gmra.mrb[0].mxu0 %v3942
    %v4468 = vpop.f32.mrb[0].mxu0
    %v4469 = vadd.f32 0.0, %v4468
    %v4470 = vpop.f32.mrb[0].mxu0
    %v4471 = vadd.f32 0.0, %v4470
    %v4472 = vpop.f32.mrb[0].mxu0
    %v4473 = vadd.f32 0.0, %v4472
    %v4474 = vpop.f32.mrb[0].mxu0
    %v4475 = vadd.f32 0.0, %v4474
    %4476 = vmatprep.mubr.bf16.mxu0 %v3947
    %4477 = vmatmul.mubr.bf16.gmra.mrb[0].mxu0 %v3946
    %v4478 = vpop.f32.mrb[0].mxu0
    %v4479 = vadd.f32 0.0, %v4478
    %v4480 = vpop.f32.mrb[0].mxu0
    %v4481 = vadd.f32 0.0, %v4480
    %v4482 = vpop.f32.mrb[0].mxu0
    %v4483 = vadd.f32 0.0, %v4482
    %v4484 = vpop.f32.mrb[0].mxu0
    %v4485 = vadd.f32 0.0, %v4484
    %4486 = vmatprep.mubr.bf16.mxu0 %v3951
    %4487 = vmatmul.mubr.bf16.gmra.mrb[0].mxu0 %v3950
    %v4488 = vpop.f32.mrb[0].mxu0
    %v4489 = vadd.f32 0.0, %v4488
    %v4490 = vpop.f32.mrb[0].mxu0
    %v4491 = vadd.f32 0.0, %v4490
    %v4492 = vpop.f32.mrb[0].mxu0
    %v4493 = vadd.f32 0.0, %v4492
    %v4494 = vpop.f32.mrb[0].mxu0
    %v4495 = vadd.f32 0.0, %v4494
    %4496 = vmatprep.mubr.bf16.mxu0 %v3955
    %4497 = vmatmul.mubr.bf16.gmra.mrb[0].mxu0 %v3954
    %v4498 = vpop.f32.mrb[0].mxu0
    %v4499 = vadd.f32 0.0, %v4498
    %v4500 = vpop.f32.mrb[0].mxu0
    %v4501 = vadd.f32 0.0, %v4500
    %v4502 = vpop.f32.mrb[0].mxu0
    %v4503 = vadd.f32 0.0, %v4502
    %v4504 = vpop.f32.mrb[0].mxu0
    %v4505 = vadd.f32 0.0, %v4504
    %4506 = vmatprep.mubr.bf16.mxu0 %v3959
    %4507 = vmatmul.mubr.bf16.gmra.mrb[0].mxu0 %v3958
    %v4508 = vpop.f32.mrb[0].mxu0
    %v4509 = vadd.f32 0.0, %v4508
    %v4510 = vpop.f32.mrb[0].mxu0
    %v4511 = vadd.f32 0.0, %v4510
    %v4512 = vpop.f32.mrb[0].mxu0
    %v4513 = vadd.f32 0.0, %v4512
    %v4514 = vpop.f32.mrb[0].mxu0
    %v4515 = vadd.f32 0.0, %v4514
    %4516 = vmatprep.mubr.bf16.mxu0 %v3963
    %4517 = vmatmul.mubr.bf16.gmra.mrb[0].mxu0 %v3962
    %v4518 = vpop.f32.mrb[0].mxu0
    %v4519 = vadd.f32 0.0, %v4518
    %v4520 = vpop.f32.mrb[0].mxu0
    %v4521 = vadd.f32 0.0, %v4520
    %v4522 = vpop.f32.mrb[0].mxu0
    %v4523 = vadd.f32 0.0, %v4522
    %v4524 = vpop.f32.mrb[0].mxu0
    %v4525 = vadd.f32 0.0, %v4524
    %4526 = vmatprep.mubr.bf16.mxu0 %v3967
    %4527 = vmatmul.mubr.bf16.gmra.mrb[0].mxu0 %v3966
    %v4528 = vpop.f32.mrb[0].mxu0
    %v4529 = vadd.f32 0.0, %v4528
    %v4530 = vpop.f32.mrb[0].mxu0
    %v4531 = vadd.f32 0.0, %v4530
    %v4532 = vpop.f32.mrb[0].mxu0
    %v4533 = vadd.f32 0.0, %v4532
    %v4534 = vpop.f32.mrb[0].mxu0
    %v4535 = vadd.f32 0.0, %v4534
    %4536 = vmatprep.mubr.bf16.mxu0 %v3971
    %4537 = vmatmul.mubr.bf16.gmra.mrb[0].mxu0 %v3970
    %v4538 = vpop.f32.mrb[0].mxu0
    %v4539 = vadd.f32 0.0, %v4538
    %v4540 = vpop.f32.mrb[0].mxu0
    %v4541 = vadd.f32 0.0, %v4540
    %v4542 = vpop.f32.mrb[0].mxu0
    %v4543 = vadd.f32 0.0, %v4542
    %v4544 = vpop.f32.mrb[0].mxu0
    %v4545 = vadd.f32 0.0, %v4544
    %4546 = vmatprep.mubr.bf16.mxu0 %v3975
    %4547 = vmatmul.mubr.bf16.gmra.mrb[0].mxu0 %v3974
    %v4548 = vpop.f32.mrb[0].mxu0
    %v4549 = vadd.f32 0.0, %v4548
    %v4550 = vpop.f32.mrb[0].mxu0
    %v4551 = vadd.f32 0.0, %v4550
    %v4552 = vpop.f32.mrb[0].mxu0
    %v4553 = vadd.f32 0.0, %v4552
    %v4554 = vpop.f32.mrb[0].mxu0
    %v4555 = vadd.f32 0.0, %v4554
    %4556 = vdwg.mxu0
    %4557 = vmatprep.subr.bf16.mxu0 %v3789
    %4558 = vmatpush1.bf16.msra.mxu0 %v3788
    %4559 = vmatprep.subr.bf16.mxu0 %v3797
    %4560 = vmatpush1.bf16.msra.mxu0 %v3796
    %4561 = vmatprep.subr.bf16.mxu0 %v3805
    %4562 = vmatpush1.bf16.msra.mxu0 %v3804
    %4563 = vmatprep.subr.bf16.mxu0 %v3813
    %4564 = vmatpush1.bf16.msra.mxu0 %v3812
    %4565 = vmatprep.subr.bf16.mxu0 %v3821
    %4566 = vmatpush1.bf16.msra.mxu0 %v3820
    %4567 = vmatprep.subr.bf16.mxu0 %v3829
    %4568 = vmatpush1.bf16.msra.mxu0 %v3828
    %4569 = vmatprep.subr.bf16.mxu0 %v3837
    %4570 = vmatpush1.bf16.msra.mxu0 %v3836
    %4571 = vmatprep.subr.bf16.mxu0 %v3845
    %4572 = vmatpush1.bf16.msra.mxu0 %v3844
    %4573 = vmatprep.subr.bf16.mxu0 %v3853
    %4574 = vmatpush1.bf16.msra.mxu0 %v3852
    %4575 = vmatprep.subr.bf16.mxu0 %v3861
    %4576 = vmatpush1.bf16.msra.mxu0 %v3860
    %4577 = vmatprep.subr.bf16.mxu0 %v3869
    %4578 = vmatpush1.bf16.msra.mxu0 %v3868
    %4579 = vmatprep.subr.bf16.mxu0 %v3877
    %4580 = vmatpush1.bf16.msra.mxu0 %v3876
    %4581 = vmatprep.subr.bf16.mxu0 %v3885
    %4582 = vmatpush1.bf16.msra.mxu0 %v3884
    %4583 = vmatprep.subr.bf16.mxu0 %v3893
    %4584 = vmatpush1.bf16.msra.mxu0 %v3892
    %4585 = vmatprep.subr.bf16.mxu0 %v3901
    %4586 = vmatpush1.bf16.msra.mxu0 %v3900
    %4587 = vmatprep.subr.bf16.mxu0 %v3909
    %4588 = vmatpush1.bf16.msra.mxu0 %v3908
    %4589 = vmatprep.mubr.bf16.mxu0 %v3917
    %4590 = vmatmul.mubr.bf16.gmra.mrb[0].mxu0 %v3916
    %v4591 = vpop.f32.mrb[0].mxu0
    %v4592 = vadd.f32 %v4399, %v4591
    %v4593 = vpop.f32.mrb[0].mxu0
    %v4594 = vadd.f32 %v4401, %v4593
    %v4595 = vpop.f32.mrb[0].mxu0
    %v4596 = vadd.f32 %v4403, %v4595
    %v4597 = vpop.f32.mrb[0].mxu0
    %v4598 = vadd.f32 %v4405, %v4597
    %4599 = vmatprep.mubr.bf16.mxu0 %v3921
    %4600 = vmatmul.mubr.bf16.gmra.mrb[0].mxu0 %v3920
    %v4601 = vpop.f32.mrb[0].mxu0
    %v4602 = vadd.f32 %v4409, %v4601
    %v4603 = vpop.f32.mrb[0].mxu0
    %v4604 = vadd.f32 %v4411, %v4603
    %v4605 = vpop.f32.mrb[0].mxu0
    %v4606 = vadd.f32 %v4413, %v4605
    %v4607 = vpop.f32.mrb[0].mxu0
    %v4608 = vadd.f32 %v4415, %v4607
    %4609 = vmatprep.mubr.bf16.mxu0 %v3925
    %4610 = vmatmul.mubr.bf16.gmra.mrb[0].mxu0 %v3924
    %v4611 = vpop.f32.mrb[0].mxu0
    %v4612 = vadd.f32 %v4419, %v4611
    %v4613 = vpop.f32.mrb[0].mxu0
    %v4614 = vadd.f32 %v4421, %v4613
    %v4615 = vpop.f32.mrb[0].mxu0
    %v4616 = vadd.f32 %v4423, %v4615
    %v4617 = vpop.f32.mrb[0].mxu0
    %v4618 = vadd.f32 %v4425, %v4617
    %4619 = vmatprep.mubr.bf16.mxu0 %v3929
    %4620 = vmatmul.mubr.bf16.gmra.mrb[0].mxu0 %v3928
    %v4621 = vpop.f32.mrb[0].mxu0
    %v4622 = vadd.f32 %v4429, %v4621
    %v4623 = vpop.f32.mrb[0].mxu0
    %v4624 = vadd.f32 %v4431, %v4623
    %v4625 = vpop.f32.mrb[0].mxu0
    %v4626 = vadd.f32 %v4433, %v4625
    %v4627 = vpop.f32.mrb[0].mxu0
    %v4628 = vadd.f32 %v4435, %v4627
    %4629 = vmatprep.mubr.bf16.mxu0 %v3933
    %4630 = vmatmul.mubr.bf16.gmra.mrb[0].mxu0 %v3932
    %v4631 = vpop.f32.mrb[0].mxu0
    %v4632 = vadd.f32 %v4439, %v4631
    %v4633 = vpop.f32.mrb[0].mxu0
    %v4634 = vadd.f32 %v4441, %v4633
    %v4635 = vpop.f32.mrb[0].mxu0
    %v4636 = vadd.f32 %v4443, %v4635
    %v4637 = vpop.f32.mrb[0].mxu0
    %v4638 = vadd.f32 %v4445, %v4637
    %4639 = vmatprep.mubr.bf16.mxu0 %v3937
    %4640 = vmatmul.mubr.bf16.gmra.mrb[0].mxu0 %v3936
    %v4641 = vpop.f32.mrb[0].mxu0
    %v4642 = vadd.f32 %v4449, %v4641
    %v4643 = vpop.f32.mrb[0].mxu0
    %v4644 = vadd.f32 %v4451, %v4643
    %v4645 = vpop.f32.mrb[0].mxu0
    %v4646 = vadd.f32 %v4453, %v4645
    %v4647 = vpop.f32.mrb[0].mxu0
    %v4648 = vadd.f32 %v4455, %v4647
    %4649 = vmatprep.mubr.bf16.mxu0 %v3941
    %4650 = vmatmul.mubr.bf16.gmra.mrb[0].mxu0 %v3940
    %v4651 = vpop.f32.mrb[0].mxu0
    %v4652 = vadd.f32 %v4459, %v4651
    %v4653 = vpop.f32.mrb[0].mxu0
    %v4654 = vadd.f32 %v4461, %v4653
    %v4655 = vpop.f32.mrb[0].mxu0
    %v4656 = vadd.f32 %v4463, %v4655
    %v4657 = vpop.f32.mrb[0].mxu0
    %v4658 = vadd.f32 %v4465, %v4657
    %4659 = vmatprep.mubr.bf16.mxu0 %v3945
    %4660 = vmatmul.mubr.bf16.gmra.mrb[0].mxu0 %v3944
    %v4661 = vpop.f32.mrb[0].mxu0
    %v4662 = vadd.f32 %v4469, %v4661
    %v4663 = vpop.f32.mrb[0].mxu0
    %v4664 = vadd.f32 %v4471, %v4663
    %v4665 = vpop.f32.mrb[0].mxu0
    %v4666 = vadd.f32 %v4473, %v4665
    %v4667 = vpop.f32.mrb[0].mxu0
    %v4668 = vadd.f32 %v4475, %v4667
    %4669 = vmatprep.mubr.bf16.mxu0 %v3949
    %4670 = vmatmul.mubr.bf16.gmra.mrb[0].mxu0 %v3948
    %v4671 = vpop.f32.mrb[0].mxu0
    %v4672 = vadd.f32 %v4479, %v4671
    %v4673 = vpop.f32.mrb[0].mxu0
    %v4674 = vadd.f32 %v4481, %v4673
    %v4675 = vpop.f32.mrb[0].mxu0
    %v4676 = vadd.f32 %v4483, %v4675
    %v4677 = vpop.f32.mrb[0].mxu0
    %v4678 = vadd.f32 %v4485, %v4677
    %4679 = vmatprep.mubr.bf16.mxu0 %v3953
    %4680 = vmatmul.mubr.bf16.gmra.mrb[0].mxu0 %v3952
    %v4681 = vpop.f32.mrb[0].mxu0
    %v4682 = vadd.f32 %v4489, %v4681
    %v4683 = vpop.f32.mrb[0].mxu0
    %v4684 = vadd.f32 %v4491, %v4683
    %v4685 = vpop.f32.mrb[0].mxu0
    %v4686 = vadd.f32 %v4493, %v4685
    %v4687 = vpop.f32.mrb[0].mxu0
    %v4688 = vadd.f32 %v4495, %v4687
    %4689 = vmatprep.mubr.bf16.mxu0 %v3957
    %4690 = vmatmul.mubr.bf16.gmra.mrb[0].mxu0 %v3956
    %v4691 = vpop.f32.mrb[0].mxu0
    %v4692 = vadd.f32 %v4499, %v4691
    %v4693 = vpop.f32.mrb[0].mxu0
    %v4694 = vadd.f32 %v4501, %v4693
    %v4695 = vpop.f32.mrb[0].mxu0
    %v4696 = vadd.f32 %v4503, %v4695
    %v4697 = vpop.f32.mrb[0].mxu0
    %v4698 = vadd.f32 %v4505, %v4697
    %4699 = vmatprep.mubr.bf16.mxu0 %v3961
    %4700 = vmatmul.mubr.bf16.gmra.mrb[0].mxu0 %v3960
    %v4701 = vpop.f32.mrb[0].mxu0
    %v4702 = vadd.f32 %v4509, %v4701
    %v4703 = vpop.f32.mrb[0].mxu0
    %v4704 = vadd.f32 %v4511, %v4703
    %v4705 = vpop.f32.mrb[0].mxu0
    %v4706 = vadd.f32 %v4513, %v4705
    %v4707 = vpop.f32.mrb[0].mxu0
    %v4708 = vadd.f32 %v4515, %v4707
    %4709 = vmatprep.mubr.bf16.mxu0 %v3965
    %4710 = vmatmul.mubr.bf16.gmra.mrb[0].mxu0 %v3964
    %v4711 = vpop.f32.mrb[0].mxu0
    %v4712 = vadd.f32 %v4519, %v4711
    %v4713 = vpop.f32.mrb[0].mxu0
    %v4714 = vadd.f32 %v4521, %v4713
    %v4715 = vpop.f32.mrb[0].mxu0
    %v4716 = vadd.f32 %v4523, %v4715
    %v4717 = vpop.f32.mrb[0].mxu0
    %v4718 = vadd.f32 %v4525, %v4717
    %4719 = vmatprep.mubr.bf16.mxu0 %v3969
    %4720 = vmatmul.mubr.bf16.gmra.mrb[0].mxu0 %v3968
    %v4721 = vpop.f32.mrb[0].mxu0
    %v4722 = vadd.f32 %v4529, %v4721
    %v4723 = vpop.f32.mrb[0].mxu0
    %v4724 = vadd.f32 %v4531, %v4723
    %v4725 = vpop.f32.mrb[0].mxu0
    %v4726 = vadd.f32 %v4533, %v4725
    %v4727 = vpop.f32.mrb[0].mxu0
    %v4728 = vadd.f32 %v4535, %v4727
    %4729 = vmatprep.mubr.bf16.mxu0 %v3973
    %4730 = vmatmul.mubr.bf16.gmra.mrb[0].mxu0 %v3972
    %v4731 = vpop.f32.mrb[0].mxu0
    %v4732 = vadd.f32 %v4539, %v4731
    %v4733 = vpop.f32.mrb[0].mxu0
    %v4734 = vadd.f32 %v4541, %v4733
    %v4735 = vpop.f32.mrb[0].mxu0
    %v4736 = vadd.f32 %v4543, %v4735
    %v4737 = vpop.f32.mrb[0].mxu0
    %v4738 = vadd.f32 %v4545, %v4737
    %4739 = vmatprep.mubr.bf16.mxu0 %v3977
    %4740 = vmatmul.mubr.bf16.gmra.mrb[0].mxu0 %v3976
    %v4741 = vpop.f32.mrb[0].mxu0
    %v4742 = vadd.f32 %v4549, %v4741
    %v4743 = vpop.f32.mrb[0].mxu0
    %v4744 = vadd.f32 %v4551, %v4743
    %v4745 = vpop.f32.mrb[0].mxu0
    %v4746 = vadd.f32 %v4553, %v4745
    %v4747 = vpop.f32.mrb[0].mxu0
    %v4748 = vadd.f32 %v4555, %v4747
    %4749 = vdwg.mxu0
    %4750 = vmatprep.subr.bf16.mxu0 %v3663
    %4751 = vmatpush1.bf16.msra.mxu0 %v3662
    %4752 = vmatprep.subr.bf16.mxu0 %v3671
    %4753 = vmatpush1.bf16.msra.mxu0 %v3670
    %4754 = vmatprep.subr.bf16.mxu0 %v3679
    %4755 = vmatpush1.bf16.msra.mxu0 %v3678
    %4756 = vmatprep.subr.bf16.mxu0 %v3687
    %4757 = vmatpush1.bf16.msra.mxu0 %v3686
    %4758 = vmatprep.subr.bf16.mxu0 %v3695
    %4759 = vmatpush1.bf16.msra.mxu0 %v3694
    %4760 = vmatprep.subr.bf16.mxu0 %v3703
    %4761 = vmatpush1.bf16.msra.mxu0 %v3702
    %4762 = vmatprep.subr.bf16.mxu0 %v3711
    %4763 = vmatpush1.bf16.msra.mxu0 %v3710
    %4764 = vmatprep.subr.bf16.mxu0 %v3719
    %4765 = vmatpush1.bf16.msra.mxu0 %v3718
    %4766 = vmatprep.subr.bf16.mxu0 %v3727
    %4767 = vmatpush1.bf16.msra.mxu0 %v3726
    %4768 = vmatprep.subr.bf16.mxu0 %v3735
    %4769 = vmatpush1.bf16.msra.mxu0 %v3734
    %4770 = vmatprep.subr.bf16.mxu0 %v3743
    %4771 = vmatpush1.bf16.msra.mxu0 %v3742
    %4772 = vmatprep.subr.bf16.mxu0 %v3751
    %4773 = vmatpush1.bf16.msra.mxu0 %v3750
    %4774 = vmatprep.subr.bf16.mxu0 %v3759
    %4775 = vmatpush1.bf16.msra.mxu0 %v3758
    %4776 = vmatprep.subr.bf16.mxu0 %v3767
    %4777 = vmatpush1.bf16.msra.mxu0 %v3766
    %4778 = vmatprep.subr.bf16.mxu0 %v3775
    %4779 = vmatpush1.bf16.msra.mxu0 %v3774
    %4780 = vmatprep.subr.bf16.mxu0 %v3783
    %4781 = vmatpush1.bf16.msra.mxu0 %v3782
    %4782 = vmatprep.mubr.bf16.mxu0 %v3915
    %4783 = vmatmul.mubr.bf16.gmra.mrb[0].mxu0 %v3914
    %v4784 = vpop.f32.mrb[0].mxu0
    %v4785 = vadd.f32 0.0, %v4784
    %v4786 = vpop.f32.mrb[0].mxu0
    %v4787 = vadd.f32 0.0, %v4786
    %v4788 = vpop.f32.mrb[0].mxu0
    %v4789 = vadd.f32 0.0, %v4788
    %v4790 = vpop.f32.mrb[0].mxu0
    %v4791 = vadd.f32 0.0, %v4790
    %4792 = vmatprep.mubr.bf16.mxu0 %v3919
    %4793 = vmatmul.mubr.bf16.gmra.mrb[0].mxu0 %v3918
    %v4794 = vpop.f32.mrb[0].mxu0
    %v4795 = vadd.f32 0.0, %v4794
    %v4796 = vpop.f32.mrb[0].mxu0
    %v4797 = vadd.f32 0.0, %v4796
    %v4798 = vpop.f32.mrb[0].mxu0
    %v4799 = vadd.f32 0.0, %v4798
    %v4800 = vpop.f32.mrb[0].mxu0
    %v4801 = vadd.f32 0.0, %v4800
    %4802 = vmatprep.mubr.bf16.mxu0 %v3923
    %4803 = vmatmul.mubr.bf16.gmra.mrb[0].mxu0 %v3922
    %v4804 = vpop.f32.mrb[0].mxu0
    %v4805 = vadd.f32 0.0, %v4804
    %v4806 = vpop.f32.mrb[0].mxu0
    %v4807 = vadd.f32 0.0, %v4806
    %v4808 = vpop.f32.mrb[0].mxu0
    %v4809 = vadd.f32 0.0, %v4808
    %v4810 = vpop.f32.mrb[0].mxu0
    %v4811 = vadd.f32 0.0, %v4810
    %4812 = vmatprep.mubr.bf16.mxu0 %v3927
    %4813 = vmatmul.mubr.bf16.gmra.mrb[0].mxu0 %v3926
    %v4814 = vpop.f32.mrb[0].mxu0
    %v4815 = vadd.f32 0.0, %v4814
    %v4816 = vpop.f32.mrb[0].mxu0
    %v4817 = vadd.f32 0.0, %v4816
    %v4818 = vpop.f32.mrb[0].mxu0
    %v4819 = vadd.f32 0.0, %v4818
    %v4820 = vpop.f32.mrb[0].mxu0
    %v4821 = vadd.f32 0.0, %v4820
    %4822 = vmatprep.mubr.bf16.mxu0 %v3931
    %4823 = vmatmul.mubr.bf16.gmra.mrb[0].mxu0 %v3930
    %v4824 = vpop.f32.mrb[0].mxu0
    %v4825 = vadd.f32 0.0, %v4824
    %v4826 = vpop.f32.mrb[0].mxu0
    %v4827 = vadd.f32 0.0, %v4826
    %v4828 = vpop.f32.mrb[0].mxu0
    %v4829 = vadd.f32 0.0, %v4828
    %v4830 = vpop.f32.mrb[0].mxu0
    %v4831 = vadd.f32 0.0, %v4830
    %4832 = vmatprep.mubr.bf16.mxu0 %v3935
    %4833 = vmatmul.mubr.bf16.gmra.mrb[0].mxu0 %v3934
    %v4834 = vpop.f32.mrb[0].mxu0
    %v4835 = vadd.f32 0.0, %v4834
    %v4836 = vpop.f32.mrb[0].mxu0
    %v4837 = vadd.f32 0.0, %v4836
    %v4838 = vpop.f32.mrb[0].mxu0
    %v4839 = vadd.f32 0.0, %v4838
    %v4840 = vpop.f32.mrb[0].mxu0
    %v4841 = vadd.f32 0.0, %v4840
    %4842 = vmatprep.mubr.bf16.mxu0 %v3939
    %4843 = vmatmul.mubr.bf16.gmra.mrb[0].mxu0 %v3938
    %v4844 = vpop.f32.mrb[0].mxu0
    %v4845 = vadd.f32 0.0, %v4844
    %v4846 = vpop.f32.mrb[0].mxu0
    %v4847 = vadd.f32 0.0, %v4846
    %v4848 = vpop.f32.mrb[0].mxu0
    %v4849 = vadd.f32 0.0, %v4848
    %v4850 = vpop.f32.mrb[0].mxu0
    %v4851 = vadd.f32 0.0, %v4850
    %4852 = vmatprep.mubr.bf16.mxu0 %v3943
    %4853 = vmatmul.mubr.bf16.gmra.mrb[0].mxu0 %v3942
    %v4854 = vpop.f32.mrb[0].mxu0
    %v4855 = vadd.f32 0.0, %v4854
    %v4856 = vpop.f32.mrb[0].mxu0
    %v4857 = vadd.f32 0.0, %v4856
    %v4858 = vpop.f32.mrb[0].mxu0
    %v4859 = vadd.f32 0.0, %v4858
    %v4860 = vpop.f32.mrb[0].mxu0
    %v4861 = vadd.f32 0.0, %v4860
    %4862 = vmatprep.mubr.bf16.mxu0 %v3947
    %4863 = vmatmul.mubr.bf16.gmra.mrb[0].mxu0 %v3946
    %v4864 = vpop.f32.mrb[0].mxu0
    %v4865 = vadd.f32 0.0, %v4864
    %v4866 = vpop.f32.mrb[0].mxu0
    %v4867 = vadd.f32 0.0, %v4866
    %v4868 = vpop.f32.mrb[0].mxu0
    %v4869 = vadd.f32 0.0, %v4868
    %v4870 = vpop.f32.mrb[0].mxu0
    %v4871 = vadd.f32 0.0, %v4870
    %4872 = vmatprep.mubr.bf16.mxu0 %v3951
    %4873 = vmatmul.mubr.bf16.gmra.mrb[0].mxu0 %v3950
    %v4874 = vpop.f32.mrb[0].mxu0
    %v4875 = vadd.f32 0.0, %v4874
    %v4876 = vpop.f32.mrb[0].mxu0
    %v4877 = vadd.f32 0.0, %v4876
    %v4878 = vpop.f32.mrb[0].mxu0
    %v4879 = vadd.f32 0.0, %v4878
    %v4880 = vpop.f32.mrb[0].mxu0
    %v4881 = vadd.f32 0.0, %v4880
    %4882 = vmatprep.mubr.bf16.mxu0 %v3955
    %4883 = vmatmul.mubr.bf16.gmra.mrb[0].mxu0 %v3954
    %v4884 = vpop.f32.mrb[0].mxu0
    %v4885 = vadd.f32 0.0, %v4884
    %v4886 = vpop.f32.mrb[0].mxu0
    %v4887 = vadd.f32 0.0, %v4886
    %v4888 = vpop.f32.mrb[0].mxu0
    %v4889 = vadd.f32 0.0, %v4888
    %v4890 = vpop.f32.mrb[0].mxu0
    %v4891 = vadd.f32 0.0, %v4890
    %4892 = vmatprep.mubr.bf16.mxu0 %v3959
    %4893 = vmatmul.mubr.bf16.gmra.mrb[0].mxu0 %v3958
    %v4894 = vpop.f32.mrb[0].mxu0
    %v4895 = vadd.f32 0.0, %v4894
    %v4896 = vpop.f32.mrb[0].mxu0
    %v4897 = vadd.f32 0.0, %v4896
    %v4898 = vpop.f32.mrb[0].mxu0
    %v4899 = vadd.f32 0.0, %v4898
    %v4900 = vpop.f32.mrb[0].mxu0
    %v4901 = vadd.f32 0.0, %v4900
    %4902 = vmatprep.mubr.bf16.mxu0 %v3963
    %4903 = vmatmul.mubr.bf16.gmra.mrb[0].mxu0 %v3962
    %v4904 = vpop.f32.mrb[0].mxu0
    %v4905 = vadd.f32 0.0, %v4904
    %v4906 = vpop.f32.mrb[0].mxu0
    %v4907 = vadd.f32 0.0, %v4906
    %v4908 = vpop.f32.mrb[0].mxu0
    %v4909 = vadd.f32 0.0, %v4908
    %v4910 = vpop.f32.mrb[0].mxu0
    %v4911 = vadd.f32 0.0, %v4910
    %4912 = vmatprep.mubr.bf16.mxu0 %v3967
    %4913 = vmatmul.mubr.bf16.gmra.mrb[0].mxu0 %v3966
    %v4914 = vpop.f32.mrb[0].mxu0
    %v4915 = vadd.f32 0.0, %v4914
    %v4916 = vpop.f32.mrb[0].mxu0
    %v4917 = vadd.f32 0.0, %v4916
    %v4918 = vpop.f32.mrb[0].mxu0
    %v4919 = vadd.f32 0.0, %v4918
    %v4920 = vpop.f32.mrb[0].mxu0
    %v4921 = vadd.f32 0.0, %v4920
    %4922 = vmatprep.mubr.bf16.mxu0 %v3971
    %4923 = vmatmul.mubr.bf16.gmra.mrb[0].mxu0 %v3970
    %v4924 = vpop.f32.mrb[0].mxu0
    %v4925 = vadd.f32 0.0, %v4924
    %v4926 = vpop.f32.mrb[0].mxu0
    %v4927 = vadd.f32 0.0, %v4926
    %v4928 = vpop.f32.mrb[0].mxu0
    %v4929 = vadd.f32 0.0, %v4928
    %v4930 = vpop.f32.mrb[0].mxu0
    %v4931 = vadd.f32 0.0, %v4930
    %4932 = vmatprep.mubr.bf16.mxu0 %v3975
    %4933 = vmatmul.mubr.bf16.gmra.mrb[0].mxu0 %v3974
    %v4934 = vpop.f32.mrb[0].mxu0
    %v4935 = vadd.f32 0.0, %v4934
    %v4936 = vpop.f32.mrb[0].mxu0
    %v4937 = vadd.f32 0.0, %v4936
    %v4938 = vpop.f32.mrb[0].mxu0
    %v4939 = vadd.f32 0.0, %v4938
    %v4940 = vpop.f32.mrb[0].mxu0
    %v4941 = vadd.f32 0.0, %v4940
    %4942 = vdwg.mxu0
    %4943 = vmatprep.subr.bf16.mxu0 %v3791
    %4944 = vmatpush1.bf16.msra.mxu0 %v3790
    %4945 = vmatprep.subr.bf16.mxu0 %v3799
    %4946 = vmatpush1.bf16.msra.mxu0 %v3798
    %4947 = vmatprep.subr.bf16.mxu0 %v3807
    %4948 = vmatpush1.bf16.msra.mxu0 %v3806
    %4949 = vmatprep.subr.bf16.mxu0 %v3815
    %4950 = vmatpush1.bf16.msra.mxu0 %v3814
    %4951 = vmatprep.subr.bf16.mxu0 %v3823
    %4952 = vmatpush1.bf16.msra.mxu0 %v3822
    %4953 = vmatprep.subr.bf16.mxu0 %v3831
    %4954 = vmatpush1.bf16.msra.mxu0 %v3830
    %4955 = vmatprep.subr.bf16.mxu0 %v3839
    %4956 = vmatpush1.bf16.msra.mxu0 %v3838
    %4957 = vmatprep.subr.bf16.mxu0 %v3847
    %4958 = vmatpush1.bf16.msra.mxu0 %v3846
    %4959 = vmatprep.subr.bf16.mxu0 %v3855
    %4960 = vmatpush1.bf16.msra.mxu0 %v3854
    %4961 = vmatprep.subr.bf16.mxu0 %v3863
    %4962 = vmatpush1.bf16.msra.mxu0 %v3862
    %4963 = vmatprep.subr.bf16.mxu0 %v3871
    %4964 = vmatpush1.bf16.msra.mxu0 %v3870
    %4965 = vmatprep.subr.bf16.mxu0 %v3879
    %4966 = vmatpush1.bf16.msra.mxu0 %v3878
    %4967 = vmatprep.subr.bf16.mxu0 %v3887
    %4968 = vmatpush1.bf16.msra.mxu0 %v3886
    %4969 = vmatprep.subr.bf16.mxu0 %v3895
    %4970 = vmatpush1.bf16.msra.mxu0 %v3894
    %4971 = vmatprep.subr.bf16.mxu0 %v3903
    %4972 = vmatpush1.bf16.msra.mxu0 %v3902
    %4973 = vmatprep.subr.bf16.mxu0 %v3911
    %4974 = vmatpush1.bf16.msra.mxu0 %v3910
    %4975 = vmatprep.mubr.bf16.mxu0 %v3917
    %4976 = vmatmul.mubr.bf16.gmra.mrb[0].mxu0 %v3916
    %v4977 = vpop.f32.mrb[0].mxu0
    %v4978 = vadd.f32 %v4785, %v4977
    %v4979 = vpop.f32.mrb[0].mxu0
    %v4980 = vadd.f32 %v4787, %v4979
    %v4981 = vpop.f32.mrb[0].mxu0
    %v4982 = vadd.f32 %v4789, %v4981
    %v4983 = vpop.f32.mrb[0].mxu0
    %v4984 = vadd.f32 %v4791, %v4983
    %4985 = vmatprep.mubr.bf16.mxu0 %v3921
    %4986 = vmatmul.mubr.bf16.gmra.mrb[0].mxu0 %v3920
    %v4987 = vpop.f32.mrb[0].mxu0
    %v4988 = vadd.f32 %v4795, %v4987
    %v4989 = vpop.f32.mrb[0].mxu0
    %v4990 = vadd.f32 %v4797, %v4989
    %v4991 = vpop.f32.mrb[0].mxu0
    %v4992 = vadd.f32 %v4799, %v4991
    %v4993 = vpop.f32.mrb[0].mxu0
    %v4994 = vadd.f32 %v4801, %v4993
    %4995 = vmatprep.mubr.bf16.mxu0 %v3925
    %4996 = vmatmul.mubr.bf16.gmra.mrb[0].mxu0 %v3924
    %v4997 = vpop.f32.mrb[0].mxu0
    %v4998 = vadd.f32 %v4805, %v4997
    %v4999 = vpop.f32.mrb[0].mxu0
    %v5000 = vadd.f32 %v4807, %v4999
    %v5001 = vpop.f32.mrb[0].mxu0
    %v5002 = vadd.f32 %v4809, %v5001
    %v5003 = vpop.f32.mrb[0].mxu0
    %v5004 = vadd.f32 %v4811, %v5003
    %5005 = vmatprep.mubr.bf16.mxu0 %v3929
    %5006 = vmatmul.mubr.bf16.gmra.mrb[0].mxu0 %v3928
    %v5007 = vpop.f32.mrb[0].mxu0
    %v5008 = vadd.f32 %v4815, %v5007
    %v5009 = vpop.f32.mrb[0].mxu0
    %v5010 = vadd.f32 %v4817, %v5009
    %v5011 = vpop.f32.mrb[0].mxu0
    %v5012 = vadd.f32 %v4819, %v5011
    %v5013 = vpop.f32.mrb[0].mxu0
    %v5014 = vadd.f32 %v4821, %v5013
    %5015 = vmatprep.mubr.bf16.mxu0 %v3933
    %5016 = vmatmul.mubr.bf16.gmra.mrb[0].mxu0 %v3932
    %v5017 = vpop.f32.mrb[0].mxu0
    %v5018 = vadd.f32 %v4825, %v5017
    %v5019 = vpop.f32.mrb[0].mxu0
    %v5020 = vadd.f32 %v4827, %v5019
    %v5021 = vpop.f32.mrb[0].mxu0
    %v5022 = vadd.f32 %v4829, %v5021
    %v5023 = vpop.f32.mrb[0].mxu0
    %v5024 = vadd.f32 %v4831, %v5023
    %5025 = vmatprep.mubr.bf16.mxu0 %v3937
    %5026 = vmatmul.mubr.bf16.gmra.mrb[0].mxu0 %v3936
    %v5027 = vpop.f32.mrb[0].mxu0
    %v5028 = vadd.f32 %v4835, %v5027
    %v5029 = vpop.f32.mrb[0].mxu0
    %v5030 = vadd.f32 %v4837, %v5029
    %v5031 = vpop.f32.mrb[0].mxu0
    %v5032 = vadd.f32 %v4839, %v5031
    %v5033 = vpop.f32.mrb[0].mxu0
    %v5034 = vadd.f32 %v4841, %v5033
    %5035 = vmatprep.mubr.bf16.mxu0 %v3941
    %5036 = vmatmul.mubr.bf16.gmra.mrb[0].mxu0 %v3940
    %v5037 = vpop.f32.mrb[0].mxu0
    %v5038 = vadd.f32 %v4845, %v5037
    %v5039 = vpop.f32.mrb[0].mxu0
    %v5040 = vadd.f32 %v4847, %v5039
    %v5041 = vpop.f32.mrb[0].mxu0
    %v5042 = vadd.f32 %v4849, %v5041
    %v5043 = vpop.f32.mrb[0].mxu0
    %v5044 = vadd.f32 %v4851, %v5043
    %5045 = vmatprep.mubr.bf16.mxu0 %v3945
    %5046 = vmatmul.mubr.bf16.gmra.mrb[0].mxu0 %v3944
    %v5047 = vpop.f32.mrb[0].mxu0
    %v5048 = vadd.f32 %v4855, %v5047
    %v5049 = vpop.f32.mrb[0].mxu0
    %v5050 = vadd.f32 %v4857, %v5049
    %v5051 = vpop.f32.mrb[0].mxu0
    %v5052 = vadd.f32 %v4859, %v5051
    %v5053 = vpop.f32.mrb[0].mxu0
    %v5054 = vadd.f32 %v4861, %v5053
    %5055 = vmatprep.mubr.bf16.mxu0 %v3949
    %5056 = vmatmul.mubr.bf16.gmra.mrb[0].mxu0 %v3948
    %v5057 = vpop.f32.mrb[0].mxu0
    %v5058 = vadd.f32 %v4865, %v5057
    %v5059 = vpop.f32.mrb[0].mxu0
    %v5060 = vadd.f32 %v4867, %v5059
    %v5061 = vpop.f32.mrb[0].mxu0
    %v5062 = vadd.f32 %v4869, %v5061
    %v5063 = vpop.f32.mrb[0].mxu0
    %v5064 = vadd.f32 %v4871, %v5063
    %5065 = vmatprep.mubr.bf16.mxu0 %v3953
    %5066 = vmatmul.mubr.bf16.gmra.mrb[0].mxu0 %v3952
    %v5067 = vpop.f32.mrb[0].mxu0
    %v5068 = vadd.f32 %v4875, %v5067
    %v5069 = vpop.f32.mrb[0].mxu0
    %v5070 = vadd.f32 %v4877, %v5069
    %v5071 = vpop.f32.mrb[0].mxu0
    %v5072 = vadd.f32 %v4879, %v5071
    %v5073 = vpop.f32.mrb[0].mxu0
    %v5074 = vadd.f32 %v4881, %v5073
    %5075 = vmatprep.mubr.bf16.mxu0 %v3957
    %5076 = vmatmul.mubr.bf16.gmra.mrb[0].mxu0 %v3956
    %v5077 = vpop.f32.mrb[0].mxu0
    %v5078 = vadd.f32 %v4885, %v5077
    %v5079 = vpop.f32.mrb[0].mxu0
    %v5080 = vadd.f32 %v4887, %v5079
    %v5081 = vpop.f32.mrb[0].mxu0
    %v5082 = vadd.f32 %v4889, %v5081
    %v5083 = vpop.f32.mrb[0].mxu0
    %v5084 = vadd.f32 %v4891, %v5083
    %5085 = vmatprep.mubr.bf16.mxu0 %v3961
    %5086 = vmatmul.mubr.bf16.gmra.mrb[0].mxu0 %v3960
    %v5087 = vpop.f32.mrb[0].mxu0
    %v5088 = vadd.f32 %v4895, %v5087
    %v5089 = vpop.f32.mrb[0].mxu0
    %v5090 = vadd.f32 %v4897, %v5089
    %v5091 = vpop.f32.mrb[0].mxu0
    %v5092 = vadd.f32 %v4899, %v5091
    %v5093 = vpop.f32.mrb[0].mxu0
    %v5094 = vadd.f32 %v4901, %v5093
    %5095 = vmatprep.mubr.bf16.mxu0 %v3965
    %5096 = vmatmul.mubr.bf16.gmra.mrb[0].mxu0 %v3964
    %v5097 = vpop.f32.mrb[0].mxu0
    %v5098 = vadd.f32 %v4905, %v5097
    %v5099 = vpop.f32.mrb[0].mxu0
    %v5100 = vadd.f32 %v4907, %v5099
    %v5101 = vpop.f32.mrb[0].mxu0
    %v5102 = vadd.f32 %v4909, %v5101
    %v5103 = vpop.f32.mrb[0].mxu0
    %v5104 = vadd.f32 %v4911, %v5103
    %5105 = vmatprep.mubr.bf16.mxu0 %v3969
    %5106 = vmatmul.mubr.bf16.gmra.mrb[0].mxu0 %v3968
    %v5107 = vpop.f32.mrb[0].mxu0
    %v5108 = vadd.f32 %v4915, %v5107
    %v5109 = vpop.f32.mrb[0].mxu0
    %v5110 = vadd.f32 %v4917, %v5109
    %v5111 = vpop.f32.mrb[0].mxu0
    %v5112 = vadd.f32 %v4919, %v5111
    %v5113 = vpop.f32.mrb[0].mxu0
    %v5114 = vadd.f32 %v4921, %v5113
    %5115 = vmatprep.mubr.bf16.mxu0 %v3973
    %5116 = vmatmul.mubr.bf16.gmra.mrb[0].mxu0 %v3972
    %v5117 = vpop.f32.mrb[0].mxu0
    %v5118 = vadd.f32 %v4925, %v5117
    %v5119 = vpop.f32.mrb[0].mxu0
    %v5120 = vadd.f32 %v4927, %v5119
    %v5121 = vpop.f32.mrb[0].mxu0
    %v5122 = vadd.f32 %v4929, %v5121
    %v5123 = vpop.f32.mrb[0].mxu0
    %v5124 = vadd.f32 %v4931, %v5123
    %5125 = vmatprep.mubr.bf16.mxu0 %v3977
    %5126 = vmatmul.mubr.bf16.gmra.mrb[0].mxu0 %v3976
    %v5127 = vpop.f32.mrb[0].mxu0
    %v5128 = vadd.f32 %v4935, %v5127
    %v5129 = vpop.f32.mrb[0].mxu0
    %v5130 = vadd.f32 %v4937, %v5129
    %v5131 = vpop.f32.mrb[0].mxu0
    %v5132 = vadd.f32 %v4939, %v5131
    %v5133 = vpop.f32.mrb[0].mxu0
    %v5134 = vadd.f32 %v4941, %v5133
    %5135 = vdwg.mxu0
    %5136 = vmatprep.subr.bf16.mxu0 %v3665
    %5137 = vmatpush1.bf16.msra.mxu0 %v3664
    %5138 = vmatprep.subr.bf16.mxu0 %v3673
    %5139 = vmatpush1.bf16.msra.mxu0 %v3672
    %5140 = vmatprep.subr.bf16.mxu0 %v3681
    %5141 = vmatpush1.bf16.msra.mxu0 %v3680
    %5142 = vmatprep.subr.bf16.mxu0 %v3689
    %5143 = vmatpush1.bf16.msra.mxu0 %v3688
    %5144 = vmatprep.subr.bf16.mxu0 %v3697
    %5145 = vmatpush1.bf16.msra.mxu0 %v3696
    %5146 = vmatprep.subr.bf16.mxu0 %v3705
    %5147 = vmatpush1.bf16.msra.mxu0 %v3704
    %5148 = vmatprep.subr.bf16.mxu0 %v3713
    %5149 = vmatpush1.bf16.msra.mxu0 %v3712
    %5150 = vmatprep.subr.bf16.mxu0 %v3721
    %5151 = vmatpush1.bf16.msra.mxu0 %v3720
    %5152 = vmatprep.subr.bf16.mxu0 %v3729
    %5153 = vmatpush1.bf16.msra.mxu0 %v3728
    %5154 = vmatprep.subr.bf16.mxu0 %v3737
    %5155 = vmatpush1.bf16.msra.mxu0 %v3736
    %5156 = vmatprep.subr.bf16.mxu0 %v3745
    %5157 = vmatpush1.bf16.msra.mxu0 %v3744
    %5158 = vmatprep.subr.bf16.mxu0 %v3753
    %5159 = vmatpush1.bf16.msra.mxu0 %v3752
    %5160 = vmatprep.subr.bf16.mxu0 %v3761
    %5161 = vmatpush1.bf16.msra.mxu0 %v3760
    %5162 = vmatprep.subr.bf16.mxu0 %v3769
    %5163 = vmatpush1.bf16.msra.mxu0 %v3768
    %5164 = vmatprep.subr.bf16.mxu0 %v3777
    %5165 = vmatpush1.bf16.msra.mxu0 %v3776
    %5166 = vmatprep.subr.bf16.mxu0 %v3785
    %5167 = vmatpush1.bf16.msra.mxu0 %v3784
    %5168 = vmatprep.mubr.bf16.mxu0 %v3915
    %5169 = vmatmul.mubr.bf16.gmra.mrb[0].mxu0 %v3914
    %v5170 = vpop.f32.mrb[0].mxu0
    %v5171 = vadd.f32 0.0, %v5170
    %v5172 = vpop.f32.mrb[0].mxu0
    %v5173 = vadd.f32 0.0, %v5172
    %v5174 = vpop.f32.mrb[0].mxu0
    %v5175 = vadd.f32 0.0, %v5174
    %v5176 = vpop.f32.mrb[0].mxu0
    %v5177 = vadd.f32 0.0, %v5176
    %5178 = vmatprep.mubr.bf16.mxu0 %v3919
    %5179 = vmatmul.mubr.bf16.gmra.mrb[0].mxu0 %v3918
    %v5180 = vpop.f32.mrb[0].mxu0
    %v5181 = vadd.f32 0.0, %v5180
    %v5182 = vpop.f32.mrb[0].mxu0
    %v5183 = vadd.f32 0.0, %v5182
    %v5184 = vpop.f32.mrb[0].mxu0
    %v5185 = vadd.f32 0.0, %v5184
    %v5186 = vpop.f32.mrb[0].mxu0
    %v5187 = vadd.f32 0.0, %v5186
    %5188 = vmatprep.mubr.bf16.mxu0 %v3923
    %5189 = vmatmul.mubr.bf16.gmra.mrb[0].mxu0 %v3922
    %v5190 = vpop.f32.mrb[0].mxu0
    %v5191 = vadd.f32 0.0, %v5190
    %v5192 = vpop.f32.mrb[0].mxu0
    %v5193 = vadd.f32 0.0, %v5192
    %v5194 = vpop.f32.mrb[0].mxu0
    %v5195 = vadd.f32 0.0, %v5194
    %v5196 = vpop.f32.mrb[0].mxu0
    %v5197 = vadd.f32 0.0, %v5196
    %5198 = vmatprep.mubr.bf16.mxu0 %v3927
    %5199 = vmatmul.mubr.bf16.gmra.mrb[0].mxu0 %v3926
    %v5200 = vpop.f32.mrb[0].mxu0
    %v5201 = vadd.f32 0.0, %v5200
    %v5202 = vpop.f32.mrb[0].mxu0
    %v5203 = vadd.f32 0.0, %v5202
    %v5204 = vpop.f32.mrb[0].mxu0
    %v5205 = vadd.f32 0.0, %v5204
    %v5206 = vpop.f32.mrb[0].mxu0
    %v5207 = vadd.f32 0.0, %v5206
    %5208 = vmatprep.mubr.bf16.mxu0 %v3931
    %5209 = vmatmul.mubr.bf16.gmra.mrb[0].mxu0 %v3930
    %v5210 = vpop.f32.mrb[0].mxu0
    %v5211 = vadd.f32 0.0, %v5210
    %v5212 = vpop.f32.mrb[0].mxu0
    %v5213 = vadd.f32 0.0, %v5212
    %v5214 = vpop.f32.mrb[0].mxu0
    %v5215 = vadd.f32 0.0, %v5214
    %v5216 = vpop.f32.mrb[0].mxu0
    %v5217 = vadd.f32 0.0, %v5216
    %5218 = vmatprep.mubr.bf16.mxu0 %v3935
    %5219 = vmatmul.mubr.bf16.gmra.mrb[0].mxu0 %v3934
    %v5220 = vpop.f32.mrb[0].mxu0
    %v5221 = vadd.f32 0.0, %v5220
    %v5222 = vpop.f32.mrb[0].mxu0
    %v5223 = vadd.f32 0.0, %v5222
    %v5224 = vpop.f32.mrb[0].mxu0
    %v5225 = vadd.f32 0.0, %v5224
    %v5226 = vpop.f32.mrb[0].mxu0
    %v5227 = vadd.f32 0.0, %v5226
    %5228 = vmatprep.mubr.bf16.mxu0 %v3939
    %5229 = vmatmul.mubr.bf16.gmra.mrb[0].mxu0 %v3938
    %v5230 = vpop.f32.mrb[0].mxu0
    %v5231 = vadd.f32 0.0, %v5230
    %v5232 = vpop.f32.mrb[0].mxu0
    %v5233 = vadd.f32 0.0, %v5232
    %v5234 = vpop.f32.mrb[0].mxu0
    %v5235 = vadd.f32 0.0, %v5234
    %v5236 = vpop.f32.mrb[0].mxu0
    %v5237 = vadd.f32 0.0, %v5236
    %5238 = vmatprep.mubr.bf16.mxu0 %v3943
    %5239 = vmatmul.mubr.bf16.gmra.mrb[0].mxu0 %v3942
    %v5240 = vpop.f32.mrb[0].mxu0
    %v5241 = vadd.f32 0.0, %v5240
    %v5242 = vpop.f32.mrb[0].mxu0
    %v5243 = vadd.f32 0.0, %v5242
    %v5244 = vpop.f32.mrb[0].mxu0
    %v5245 = vadd.f32 0.0, %v5244
    %v5246 = vpop.f32.mrb[0].mxu0
    %v5247 = vadd.f32 0.0, %v5246
    %5248 = vmatprep.mubr.bf16.mxu0 %v3947
    %5249 = vmatmul.mubr.bf16.gmra.mrb[0].mxu0 %v3946
    %v5250 = vpop.f32.mrb[0].mxu0
    %v5251 = vadd.f32 0.0, %v5250
    %v5252 = vpop.f32.mrb[0].mxu0
    %v5253 = vadd.f32 0.0, %v5252
    %v5254 = vpop.f32.mrb[0].mxu0
    %v5255 = vadd.f32 0.0, %v5254
    %v5256 = vpop.f32.mrb[0].mxu0
    %v5257 = vadd.f32 0.0, %v5256
    %5258 = vmatprep.mubr.bf16.mxu0 %v3951
    %5259 = vmatmul.mubr.bf16.gmra.mrb[0].mxu0 %v3950
    %v5260 = vpop.f32.mrb[0].mxu0
    %v5261 = vadd.f32 0.0, %v5260
    %v5262 = vpop.f32.mrb[0].mxu0
    %v5263 = vadd.f32 0.0, %v5262
    %v5264 = vpop.f32.mrb[0].mxu0
    %v5265 = vadd.f32 0.0, %v5264
    %v5266 = vpop.f32.mrb[0].mxu0
    %v5267 = vadd.f32 0.0, %v5266
    %5268 = vmatprep.mubr.bf16.mxu0 %v3955
    %5269 = vmatmul.mubr.bf16.gmra.mrb[0].mxu0 %v3954
    %v5270 = vpop.f32.mrb[0].mxu0
    %v5271 = vadd.f32 0.0, %v5270
    %v5272 = vpop.f32.mrb[0].mxu0
    %v5273 = vadd.f32 0.0, %v5272
    %v5274 = vpop.f32.mrb[0].mxu0
    %v5275 = vadd.f32 0.0, %v5274
    %v5276 = vpop.f32.mrb[0].mxu0
    %v5277 = vadd.f32 0.0, %v5276
    %5278 = vmatprep.mubr.bf16.mxu0 %v3959
    %5279 = vmatmul.mubr.bf16.gmra.mrb[0].mxu0 %v3958
    %v5280 = vpop.f32.mrb[0].mxu0
    %v5281 = vadd.f32 0.0, %v5280
    %v5282 = vpop.f32.mrb[0].mxu0
    %v5283 = vadd.f32 0.0, %v5282
    %v5284 = vpop.f32.mrb[0].mxu0
    %v5285 = vadd.f32 0.0, %v5284
    %v5286 = vpop.f32.mrb[0].mxu0
    %v5287 = vadd.f32 0.0, %v5286
    %5288 = vmatprep.mubr.bf16.mxu0 %v3963
    %5289 = vmatmul.mubr.bf16.gmra.mrb[0].mxu0 %v3962
    %v5290 = vpop.f32.mrb[0].mxu0
    %v5291 = vadd.f32 0.0, %v5290
    %v5292 = vpop.f32.mrb[0].mxu0
    %v5293 = vadd.f32 0.0, %v5292
    %v5294 = vpop.f32.mrb[0].mxu0
    %v5295 = vadd.f32 0.0, %v5294
    %v5296 = vpop.f32.mrb[0].mxu0
    %v5297 = vadd.f32 0.0, %v5296
    %5298 = vmatprep.mubr.bf16.mxu0 %v3967
    %5299 = vmatmul.mubr.bf16.gmra.mrb[0].mxu0 %v3966
    %v5300 = vpop.f32.mrb[0].mxu0
    %v5301 = vadd.f32 0.0, %v5300
    %v5302 = vpop.f32.mrb[0].mxu0
    %v5303 = vadd.f32 0.0, %v5302
    %v5304 = vpop.f32.mrb[0].mxu0
    %v5305 = vadd.f32 0.0, %v5304
    %v5306 = vpop.f32.mrb[0].mxu0
    %v5307 = vadd.f32 0.0, %v5306
    %5308 = vmatprep.mubr.bf16.mxu0 %v3971
    %5309 = vmatmul.mubr.bf16.gmra.mrb[0].mxu0 %v3970
    %v5310 = vpop.f32.mrb[0].mxu0
    %v5311 = vadd.f32 0.0, %v5310
    %v5312 = vpop.f32.mrb[0].mxu0
    %v5313 = vadd.f32 0.0, %v5312
    %v5314 = vpop.f32.mrb[0].mxu0
    %v5315 = vadd.f32 0.0, %v5314
    %v5316 = vpop.f32.mrb[0].mxu0
    %v5317 = vadd.f32 0.0, %v5316
    %5318 = vmatprep.mubr.bf16.mxu0 %v3975
    %5319 = vmatmul.mubr.bf16.gmra.mrb[0].mxu0 %v3974
    %v5320 = vpop.f32.mrb[0].mxu0
    %v5321 = vadd.f32 0.0, %v5320
    %v5322 = vpop.f32.mrb[0].mxu0
    %v5323 = vadd.f32 0.0, %v5322
    %v5324 = vpop.f32.mrb[0].mxu0
    %v5325 = vadd.f32 0.0, %v5324
    %v5326 = vpop.f32.mrb[0].mxu0
    %v5327 = vadd.f32 0.0, %v5326
    %5328 = vdwg.mxu0
    %5329 = vmatprep.subr.bf16.mxu0 %v3793
    %5330 = vmatpush1.bf16.msra.mxu0 %v3792
    %5331 = vmatprep.subr.bf16.mxu0 %v3801
    %5332 = vmatpush1.bf16.msra.mxu0 %v3800
    %5333 = vmatprep.subr.bf16.mxu0 %v3809
    %5334 = vmatpush1.bf16.msra.mxu0 %v3808
    %5335 = vmatprep.subr.bf16.mxu0 %v3817
    %5336 = vmatpush1.bf16.msra.mxu0 %v3816
    %5337 = vmatprep.subr.bf16.mxu0 %v3825
    %5338 = vmatpush1.bf16.msra.mxu0 %v3824
    %5339 = vmatprep.subr.bf16.mxu0 %v3833
    %5340 = vmatpush1.bf16.msra.mxu0 %v3832
    %5341 = vmatprep.subr.bf16.mxu0 %v3841
    %5342 = vmatpush1.bf16.msra.mxu0 %v3840
    %5343 = vmatprep.subr.bf16.mxu0 %v3849
    %5344 = vmatpush1.bf16.msra.mxu0 %v3848
    %5345 = vmatprep.subr.bf16.mxu0 %v3857
    %5346 = vmatpush1.bf16.msra.mxu0 %v3856
    %5347 = vmatprep.subr.bf16.mxu0 %v3865
    %5348 = vmatpush1.bf16.msra.mxu0 %v3864
    %5349 = vmatprep.subr.bf16.mxu0 %v3873
    %5350 = vmatpush1.bf16.msra.mxu0 %v3872
    %5351 = vmatprep.subr.bf16.mxu0 %v3881
    %5352 = vmatpush1.bf16.msra.mxu0 %v3880
    %5353 = vmatprep.subr.bf16.mxu0 %v3889
    %5354 = vmatpush1.bf16.msra.mxu0 %v3888
    %5355 = vmatprep.subr.bf16.mxu0 %v3897
    %5356 = vmatpush1.bf16.msra.mxu0 %v3896
    %5357 = vmatprep.subr.bf16.mxu0 %v3905
    %5358 = vmatpush1.bf16.msra.mxu0 %v3904
    %5359 = vmatprep.subr.bf16.mxu0 %v3913
    %5360 = vmatpush1.bf16.msra.mxu0 %v3912
    %5361 = vmatprep.mubr.bf16.mxu0 %v3917
    %5362 = vmatmul.mubr.bf16.gmra.mrb[0].mxu0 %v3916
    %v5363 = vpop.f32.mrb[0].mxu0
    %v5364 = vadd.f32 %v5171, %v5363
    %v5365 = vpop.f32.mrb[0].mxu0
    %v5366 = vadd.f32 %v5173, %v5365
    %v5367 = vpop.f32.mrb[0].mxu0
    %v5368 = vadd.f32 %v5175, %v5367
    %v5369 = vpop.f32.mrb[0].mxu0
    %v5370 = vadd.f32 %v5177, %v5369
    %5371 = vmatprep.mubr.bf16.mxu0 %v3921
    %5372 = vmatmul.mubr.bf16.gmra.mrb[0].mxu0 %v3920
    %v5373 = vpop.f32.mrb[0].mxu0
    %v5374 = vadd.f32 %v5181, %v5373
    %v5375 = vpop.f32.mrb[0].mxu0
    %v5376 = vadd.f32 %v5183, %v5375
    %v5377 = vpop.f32.mrb[0].mxu0
    %v5378 = vadd.f32 %v5185, %v5377
    %v5379 = vpop.f32.mrb[0].mxu0
    %v5380 = vadd.f32 %v5187, %v5379
    %5381 = vmatprep.mubr.bf16.mxu0 %v3925
    %5382 = vmatmul.mubr.bf16.gmra.mrb[0].mxu0 %v3924
    %v5383 = vpop.f32.mrb[0].mxu0
    %v5384 = vadd.f32 %v5191, %v5383
    %v5385 = vpop.f32.mrb[0].mxu0
    %v5386 = vadd.f32 %v5193, %v5385
    %v5387 = vpop.f32.mrb[0].mxu0
    %v5388 = vadd.f32 %v5195, %v5387
    %v5389 = vpop.f32.mrb[0].mxu0
    %v5390 = vadd.f32 %v5197, %v5389
    %5391 = vmatprep.mubr.bf16.mxu0 %v3929
    %5392 = vmatmul.mubr.bf16.gmra.mrb[0].mxu0 %v3928
    %v5393 = vpop.f32.mrb[0].mxu0
    %v5394 = vadd.f32 %v5201, %v5393
    %v5395 = vpop.f32.mrb[0].mxu0
    %v5396 = vadd.f32 %v5203, %v5395
    %v5397 = vpop.f32.mrb[0].mxu0
    %v5398 = vadd.f32 %v5205, %v5397
    %v5399 = vpop.f32.mrb[0].mxu0
    %v5400 = vadd.f32 %v5207, %v5399
    %5401 = vmatprep.mubr.bf16.mxu0 %v3933
    %5402 = vmatmul.mubr.bf16.gmra.mrb[0].mxu0 %v3932
    %v5403 = vpop.f32.mrb[0].mxu0
    %v5404 = vadd.f32 %v5211, %v5403
    %v5405 = vpop.f32.mrb[0].mxu0
    %v5406 = vadd.f32 %v5213, %v5405
    %v5407 = vpop.f32.mrb[0].mxu0
    %v5408 = vadd.f32 %v5215, %v5407
    %v5409 = vpop.f32.mrb[0].mxu0
    %v5410 = vadd.f32 %v5217, %v5409
    %5411 = vmatprep.mubr.bf16.mxu0 %v3937
    %5412 = vmatmul.mubr.bf16.gmra.mrb[0].mxu0 %v3936
    %v5413 = vpop.f32.mrb[0].mxu0
    %v5414 = vadd.f32 %v5221, %v5413
    %v5415 = vpop.f32.mrb[0].mxu0
    %v5416 = vadd.f32 %v5223, %v5415
    %v5417 = vpop.f32.mrb[0].mxu0
    %v5418 = vadd.f32 %v5225, %v5417
    %v5419 = vpop.f32.mrb[0].mxu0
    %v5420 = vadd.f32 %v5227, %v5419
    %5421 = vmatprep.mubr.bf16.mxu0 %v3941
    %5422 = vmatmul.mubr.bf16.gmra.mrb[0].mxu0 %v3940
    %v5423 = vpop.f32.mrb[0].mxu0
    %v5424 = vadd.f32 %v5231, %v5423
    %v5425 = vpop.f32.mrb[0].mxu0
    %v5426 = vadd.f32 %v5233, %v5425
    %v5427 = vpop.f32.mrb[0].mxu0
    %v5428 = vadd.f32 %v5235, %v5427
    %v5429 = vpop.f32.mrb[0].mxu0
    %v5430 = vadd.f32 %v5237, %v5429
    %5431 = vmatprep.mubr.bf16.mxu0 %v3945
    %5432 = vmatmul.mubr.bf16.gmra.mrb[0].mxu0 %v3944
    %v5433 = vpop.f32.mrb[0].mxu0
    %v5434 = vadd.f32 %v5241, %v5433
    %v5435 = vpop.f32.mrb[0].mxu0
    %v5436 = vadd.f32 %v5243, %v5435
    %v5437 = vpop.f32.mrb[0].mxu0
    %v5438 = vadd.f32 %v5245, %v5437
    %v5439 = vpop.f32.mrb[0].mxu0
    %v5440 = vadd.f32 %v5247, %v5439
    %5441 = vmatprep.mubr.bf16.mxu0 %v3949
    %5442 = vmatmul.mubr.bf16.gmra.mrb[0].mxu0 %v3948
    %v5443 = vpop.f32.mrb[0].mxu0
    %v5444 = vadd.f32 %v5251, %v5443
    %v5445 = vpop.f32.mrb[0].mxu0
    %v5446 = vadd.f32 %v5253, %v5445
    %v5447 = vpop.f32.mrb[0].mxu0
    %v5448 = vadd.f32 %v5255, %v5447
    %v5449 = vpop.f32.mrb[0].mxu0
    %v5450 = vadd.f32 %v5257, %v5449
    %5451 = vmatprep.mubr.bf16.mxu0 %v3953
    %5452 = vmatmul.mubr.bf16.gmra.mrb[0].mxu0 %v3952
    %v5453 = vpop.f32.mrb[0].mxu0
    %v5454 = vadd.f32 %v5261, %v5453
    %v5455 = vpop.f32.mrb[0].mxu0
    %v5456 = vadd.f32 %v5263, %v5455
    %v5457 = vpop.f32.mrb[0].mxu0
    %v5458 = vadd.f32 %v5265, %v5457
    %v5459 = vpop.f32.mrb[0].mxu0
    %v5460 = vadd.f32 %v5267, %v5459
    %5461 = vmatprep.mubr.bf16.mxu0 %v3957
    %5462 = vmatmul.mubr.bf16.gmra.mrb[0].mxu0 %v3956
    %v5463 = vpop.f32.mrb[0].mxu0
    %v5464 = vadd.f32 %v5271, %v5463
    %v5465 = vpop.f32.mrb[0].mxu0
    %v5466 = vadd.f32 %v5273, %v5465
    %v5467 = vpop.f32.mrb[0].mxu0
    %v5468 = vadd.f32 %v5275, %v5467
    %v5469 = vpop.f32.mrb[0].mxu0
    %v5470 = vadd.f32 %v5277, %v5469
    %5471 = vmatprep.mubr.bf16.mxu0 %v3961
    %5472 = vmatmul.mubr.bf16.gmra.mrb[0].mxu0 %v3960
    %v5473 = vpop.f32.mrb[0].mxu0
    %v5474 = vadd.f32 %v5281, %v5473
    %v5475 = vpop.f32.mrb[0].mxu0
    %v5476 = vadd.f32 %v5283, %v5475
    %v5477 = vpop.f32.mrb[0].mxu0
    %v5478 = vadd.f32 %v5285, %v5477
    %v5479 = vpop.f32.mrb[0].mxu0
    %v5480 = vadd.f32 %v5287, %v5479
    %5481 = vmatprep.mubr.bf16.mxu0 %v3965
    %5482 = vmatmul.mubr.bf16.gmra.mrb[0].mxu0 %v3964
    %v5483 = vpop.f32.mrb[0].mxu0
    %v5484 = vadd.f32 %v5291, %v5483
    %v5485 = vpop.f32.mrb[0].mxu0
    %v5486 = vadd.f32 %v5293, %v5485
    %v5487 = vpop.f32.mrb[0].mxu0
    %v5488 = vadd.f32 %v5295, %v5487
    %v5489 = vpop.f32.mrb[0].mxu0
    %v5490 = vadd.f32 %v5297, %v5489
    %5491 = vmatprep.mubr.bf16.mxu0 %v3969
    %5492 = vmatmul.mubr.bf16.gmra.mrb[0].mxu0 %v3968
    %v5493 = vpop.f32.mrb[0].mxu0
    %v5494 = vadd.f32 %v5301, %v5493
    %v5495 = vpop.f32.mrb[0].mxu0
    %v5496 = vadd.f32 %v5303, %v5495
    %v5497 = vpop.f32.mrb[0].mxu0
    %v5498 = vadd.f32 %v5305, %v5497
    %v5499 = vpop.f32.mrb[0].mxu0
    %v5500 = vadd.f32 %v5307, %v5499
    %5501 = vmatprep.mubr.bf16.mxu0 %v3973
    %5502 = vmatmul.mubr.bf16.gmra.mrb[0].mxu0 %v3972
    %v5503 = vpop.f32.mrb[0].mxu0
    %v5504 = vadd.f32 %v5311, %v5503
    %v5505 = vpop.f32.mrb[0].mxu0
    %v5506 = vadd.f32 %v5313, %v5505
    %v5507 = vpop.f32.mrb[0].mxu0
    %v5508 = vadd.f32 %v5315, %v5507
    %v5509 = vpop.f32.mrb[0].mxu0
    %v5510 = vadd.f32 %v5317, %v5509
    %5511 = vmatprep.mubr.bf16.mxu0 %v3977
    %5512 = vmatmul.mubr.bf16.gmra.mrb[0].mxu0 %v3976
    %v5513 = vpop.f32.mrb[0].mxu0
    %v5514 = vadd.f32 %v5321, %v5513
    %v5515 = vpop.f32.mrb[0].mxu0
    %v5516 = vadd.f32 %v5323, %v5515
    %v5517 = vpop.f32.mrb[0].mxu0
    %v5518 = vadd.f32 %v5325, %v5517
    %v5519 = vpop.f32.mrb[0].mxu0
    %v5520 = vadd.f32 %v5327, %v5519
    %5521 = vdwg.mxu0
    %v5522 = vadd.f32 %v4206, %v4210
    %v5523 = vadd.f32 %v5522, %v4216
    %v5524 = vadd.f32 %v5523, %v4220
    %v5525 = vadd.f32 %v5524, %v4226
    %v5526 = vadd.f32 %v5525, %v4230
    %v5527 = vadd.f32 %v5526, %v4236
    %v5528 = vadd.f32 %v5527, %v4240
    %v5529 = vadd.f32 %v5528, %v4246
    %v5530 = vadd.f32 %v5529, %v4250
    %v5531 = vadd.f32 %v5530, %v4256
    %v5532 = vadd.f32 %v5531, %v4260
    %v5533 = vadd.f32 %v5532, %v4266
    %v5534 = vadd.f32 %v5533, %v4270
    %v5535 = vadd.f32 %v5534, %v4276
    %v5536 = vadd.f32 %v5535, %v4280
    %v5537 = vadd.f32 %v5536, %v4286
    %v5538 = vadd.f32 %v5537, %v4290
    %v5539 = vadd.f32 %v5538, %v4296
    %v5540 = vadd.f32 %v5539, %v4300
    %v5541 = vadd.f32 %v5540, %v4306
    %v5542 = vadd.f32 %v5541, %v4310
    %v5543 = vadd.f32 %v5542, %v4316
    %v5544 = vadd.f32 %v5543, %v4320
    %v5545 = vadd.f32 %v5544, %v4326
    %v5546 = vadd.f32 %v5545, %v4330
    %v5547 = vadd.f32 %v5546, %v4336
    %v5548 = vadd.f32 %v5547, %v4340
    %v5549 = vadd.f32 %v5548, %v4346
    %v5550 = vadd.f32 %v5549, %v4350
    %v5551 = vadd.f32 %v5550, %v4356
    %v5552 = vadd.f32 %v5551, %v4360
    %v5553 = vrot.slane %v5552, 4
    %v5554 = vadd.f32 %v5552, %v5553
    %v5555 = vrot.slane %v5554, 2
    %v5556 = vadd.f32 %v5554, %v5555
    %v5557 = vrot.slane %v5556, 1
    %v5558 = vadd.f32 %v5556, %v5557
    %v5559 = vadd.f32 %v4208, %v4212
    %v5560 = vadd.f32 %v5559, %v4218
    %v5561 = vadd.f32 %v5560, %v4222
    %v5562 = vadd.f32 %v5561, %v4228
    %v5563 = vadd.f32 %v5562, %v4232
    %v5564 = vadd.f32 %v5563, %v4238
    %v5565 = vadd.f32 %v5564, %v4242
    %v5566 = vadd.f32 %v5565, %v4248
    %v5567 = vadd.f32 %v5566, %v4252
    %v5568 = vadd.f32 %v5567, %v4258
    %v5569 = vadd.f32 %v5568, %v4262
    %v5570 = vadd.f32 %v5569, %v4268
    %v5571 = vadd.f32 %v5570, %v4272
    %v5572 = vadd.f32 %v5571, %v4278
    %v5573 = vadd.f32 %v5572, %v4282
    %v5574 = vadd.f32 %v5573, %v4288
    %v5575 = vadd.f32 %v5574, %v4292
    %v5576 = vadd.f32 %v5575, %v4298
    %v5577 = vadd.f32 %v5576, %v4302
    %v5578 = vadd.f32 %v5577, %v4308
    %v5579 = vadd.f32 %v5578, %v4312
    %v5580 = vadd.f32 %v5579, %v4318
    %v5581 = vadd.f32 %v5580, %v4322
    %v5582 = vadd.f32 %v5581, %v4328
    %v5583 = vadd.f32 %v5582, %v4332
    %v5584 = vadd.f32 %v5583, %v4338
    %v5585 = vadd.f32 %v5584, %v4342
    %v5586 = vadd.f32 %v5585, %v4348
    %v5587 = vadd.f32 %v5586, %v4352
    %v5588 = vadd.f32 %v5587, %v4358
    %v5589 = vadd.f32 %v5588, %v4362
    %v5590 = vrot.slane %v5589, 4
    %v5591 = vadd.f32 %v5589, %v5590
    %v5592 = vrot.slane %v5591, 2
    %v5593 = vadd.f32 %v5591, %v5592
    %v5594 = vrot.slane %v5593, 1
    %v5595 = vadd.f32 %v5593, %v5594
    %v5596 = vadd.f32 %v4592, %v4596
    %v5597 = vadd.f32 %v5596, %v4602
    %v5598 = vadd.f32 %v5597, %v4606
    %v5599 = vadd.f32 %v5598, %v4612
    %v5600 = vadd.f32 %v5599, %v4616
    %v5601 = vadd.f32 %v5600, %v4622
    %v5602 = vadd.f32 %v5601, %v4626
    %v5603 = vadd.f32 %v5602, %v4632
    %v5604 = vadd.f32 %v5603, %v4636
    %v5605 = vadd.f32 %v5604, %v4642
    %v5606 = vadd.f32 %v5605, %v4646
    %v5607 = vadd.f32 %v5606, %v4652
    %v5608 = vadd.f32 %v5607, %v4656
    %v5609 = vadd.f32 %v5608, %v4662
    %v5610 = vadd.f32 %v5609, %v4666
    %v5611 = vadd.f32 %v5610, %v4672
    %v5612 = vadd.f32 %v5611, %v4676
    %v5613 = vadd.f32 %v5612, %v4682
    %v5614 = vadd.f32 %v5613, %v4686
    %v5615 = vadd.f32 %v5614, %v4692
    %v5616 = vadd.f32 %v5615, %v4696
    %v5617 = vadd.f32 %v5616, %v4702
    %v5618 = vadd.f32 %v5617, %v4706
    %v5619 = vadd.f32 %v5618, %v4712
    %v5620 = vadd.f32 %v5619, %v4716
    %v5621 = vadd.f32 %v5620, %v4722
    %v5622 = vadd.f32 %v5621, %v4726
    %v5623 = vadd.f32 %v5622, %v4732
    %v5624 = vadd.f32 %v5623, %v4736
    %v5625 = vadd.f32 %v5624, %v4742
    %v5626 = vadd.f32 %v5625, %v4746
    %v5627 = vrot.slane %v5626, 4
    %v5628 = vadd.f32 %v5626, %v5627
    %v5629 = vrot.slane %v5628, 2
    %v5630 = vadd.f32 %v5628, %v5629
    %v5631 = vrot.slane %v5630, 1
    %v5632 = vadd.f32 %v5630, %v5631
    %v5633 = vadd.f32 %v4594, %v4598
    %v5634 = vadd.f32 %v5633, %v4604
    %v5635 = vadd.f32 %v5634, %v4608
    %v5636 = vadd.f32 %v5635, %v4614
    %v5637 = vadd.f32 %v5636, %v4618
    %v5638 = vadd.f32 %v5637, %v4624
    %v5639 = vadd.f32 %v5638, %v4628
    %v5640 = vadd.f32 %v5639, %v4634
    %v5641 = vadd.f32 %v5640, %v4638
    %v5642 = vadd.f32 %v5641, %v4644
    %v5643 = vadd.f32 %v5642, %v4648
    %v5644 = vadd.f32 %v5643, %v4654
    %v5645 = vadd.f32 %v5644, %v4658
    %v5646 = vadd.f32 %v5645, %v4664
    %v5647 = vadd.f32 %v5646, %v4668
    %v5648 = vadd.f32 %v5647, %v4674
    %v5649 = vadd.f32 %v5648, %v4678
    %v5650 = vadd.f32 %v5649, %v4684
    %v5651 = vadd.f32 %v5650, %v4688
    %v5652 = vadd.f32 %v5651, %v4694
    %v5653 = vadd.f32 %v5652, %v4698
    %v5654 = vadd.f32 %v5653, %v4704
    %v5655 = vadd.f32 %v5654, %v4708
    %v5656 = vadd.f32 %v5655, %v4714
    %v5657 = vadd.f32 %v5656, %v4718
    %v5658 = vadd.f32 %v5657, %v4724
    %v5659 = vadd.f32 %v5658, %v4728
    %v5660 = vadd.f32 %v5659, %v4734
    %v5661 = vadd.f32 %v5660, %v4738
    %v5662 = vadd.f32 %v5661, %v4744
    %v5663 = vadd.f32 %v5662, %v4748
    %v5664 = vrot.slane %v5663, 4
    %v5665 = vadd.f32 %v5663, %v5664
    %v5666 = vrot.slane %v5665, 2
    %v5667 = vadd.f32 %v5665, %v5666
    %v5668 = vrot.slane %v5667, 1
    %v5669 = vadd.f32 %v5667, %v5668
    %v5670 = vadd.f32 %v4978, %v4982
    %v5671 = vadd.f32 %v5670, %v4988
    %v5672 = vadd.f32 %v5671, %v4992
    %v5673 = vadd.f32 %v5672, %v4998
    %v5674 = vadd.f32 %v5673, %v5002
    %v5675 = vadd.f32 %v5674, %v5008
    %v5676 = vadd.f32 %v5675, %v5012
    %v5677 = vadd.f32 %v5676, %v5018
    %v5678 = vadd.f32 %v5677, %v5022
    %v5679 = vadd.f32 %v5678, %v5028
    %v5680 = vadd.f32 %v5679, %v5032
    %v5681 = vadd.f32 %v5680, %v5038
    %v5682 = vadd.f32 %v5681, %v5042
    %v5683 = vadd.f32 %v5682, %v5048
    %v5684 = vadd.f32 %v5683, %v5052
    %v5685 = vadd.f32 %v5684, %v5058
    %v5686 = vadd.f32 %v5685, %v5062
    %v5687 = vadd.f32 %v5686, %v5068
    %v5688 = vadd.f32 %v5687, %v5072
    %v5689 = vadd.f32 %v5688, %v5078
    %v5690 = vadd.f32 %v5689, %v5082
    %v5691 = vadd.f32 %v5690, %v5088
    %v5692 = vadd.f32 %v5691, %v5092
    %v5693 = vadd.f32 %v5692, %v5098
    %v5694 = vadd.f32 %v5693, %v5102
    %v5695 = vadd.f32 %v5694, %v5108
    %v5696 = vadd.f32 %v5695, %v5112
    %v5697 = vadd.f32 %v5696, %v5118
    %v5698 = vadd.f32 %v5697, %v5122
    %v5699 = vadd.f32 %v5698, %v5128
    %v5700 = vadd.f32 %v5699, %v5132
    %v5701 = vrot.slane %v5700, 4
    %v5702 = vadd.f32 %v5700, %v5701
    %v5703 = vrot.slane %v5702, 2
    %v5704 = vadd.f32 %v5702, %v5703
    %v5705 = vrot.slane %v5704, 1
    %v5706 = vadd.f32 %v5704, %v5705
    %v5707 = vadd.f32 %v4980, %v4984
    %v5708 = vadd.f32 %v5707, %v4990
    %v5709 = vadd.f32 %v5708, %v4994
    %v5710 = vadd.f32 %v5709, %v5000
    %v5711 = vadd.f32 %v5710, %v5004
    %v5712 = vadd.f32 %v5711, %v5010
    %v5713 = vadd.f32 %v5712, %v5014
    %v5714 = vadd.f32 %v5713, %v5020
    %v5715 = vadd.f32 %v5714, %v5024
    %v5716 = vadd.f32 %v5715, %v5030
    %v5717 = vadd.f32 %v5716, %v5034
    %v5718 = vadd.f32 %v5717, %v5040
    %v5719 = vadd.f32 %v5718, %v5044
    %v5720 = vadd.f32 %v5719, %v5050
    %v5721 = vadd.f32 %v5720, %v5054
    %v5722 = vadd.f32 %v5721, %v5060
    %v5723 = vadd.f32 %v5722, %v5064
    %v5724 = vadd.f32 %v5723, %v5070
    %v5725 = vadd.f32 %v5724, %v5074
    %v5726 = vadd.f32 %v5725, %v5080
    %v5727 = vadd.f32 %v5726, %v5084
    %v5728 = vadd.f32 %v5727, %v5090
    %v5729 = vadd.f32 %v5728, %v5094
    %v5730 = vadd.f32 %v5729, %v5100
    %v5731 = vadd.f32 %v5730, %v5104
    %v5732 = vadd.f32 %v5731, %v5110
    %v5733 = vadd.f32 %v5732, %v5114
    %v5734 = vadd.f32 %v5733, %v5120
    %v5735 = vadd.f32 %v5734, %v5124
    %v5736 = vadd.f32 %v5735, %v5130
    %v5737 = vadd.f32 %v5736, %v5134
    %v5738 = vrot.slane %v5737, 4
    %v5739 = vadd.f32 %v5737, %v5738
    %v5740 = vrot.slane %v5739, 2
    %v5741 = vadd.f32 %v5739, %v5740
    %v5742 = vrot.slane %v5741, 1
    %v5743 = vadd.f32 %v5741, %v5742
    %v5744 = vadd.f32 %v5364, %v5368
    %v5745 = vadd.f32 %v5744, %v5374
    %v5746 = vadd.f32 %v5745, %v5378
    %v5747 = vadd.f32 %v5746, %v5384
    %v5748 = vadd.f32 %v5747, %v5388
    %v5749 = vadd.f32 %v5748, %v5394
    %v5750 = vadd.f32 %v5749, %v5398
    %v5751 = vadd.f32 %v5750, %v5404
    %v5752 = vadd.f32 %v5751, %v5408
    %v5753 = vadd.f32 %v5752, %v5414
    %v5754 = vadd.f32 %v5753, %v5418
    %v5755 = vadd.f32 %v5754, %v5424
    %v5756 = vadd.f32 %v5755, %v5428
    %v5757 = vadd.f32 %v5756, %v5434
    %v5758 = vadd.f32 %v5757, %v5438
    %v5759 = vadd.f32 %v5758, %v5444
    %v5760 = vadd.f32 %v5759, %v5448
    %v5761 = vadd.f32 %v5760, %v5454
    %v5762 = vadd.f32 %v5761, %v5458
    %v5763 = vadd.f32 %v5762, %v5464
    %v5764 = vadd.f32 %v5763, %v5468
    %v5765 = vadd.f32 %v5764, %v5474
    %v5766 = vadd.f32 %v5765, %v5478
    %v5767 = vadd.f32 %v5766, %v5484
    %v5768 = vadd.f32 %v5767, %v5488
    %v5769 = vadd.f32 %v5768, %v5494
    %v5770 = vadd.f32 %v5769, %v5498
    %v5771 = vadd.f32 %v5770, %v5504
    %v5772 = vadd.f32 %v5771, %v5508
    %v5773 = vadd.f32 %v5772, %v5514
    %v5774 = vadd.f32 %v5773, %v5518
    %v5775 = vrot.slane %v5774, 4
    %v5776 = vadd.f32 %v5774, %v5775
    %v5777 = vrot.slane %v5776, 2
    %v5778 = vadd.f32 %v5776, %v5777
    %v5779 = vrot.slane %v5778, 1
    %v5780 = vadd.f32 %v5778, %v5779
    %v5781 = vadd.f32 %v5366, %v5370
    %v5782 = vadd.f32 %v5781, %v5376
    %v5783 = vadd.f32 %v5782, %v5380
    %v5784 = vadd.f32 %v5783, %v5386
    %v5785 = vadd.f32 %v5784, %v5390
    %v5786 = vadd.f32 %v5785, %v5396
    %v5787 = vadd.f32 %v5786, %v5400
    %v5788 = vadd.f32 %v5787, %v5406
    %v5789 = vadd.f32 %v5788, %v5410
    %v5790 = vadd.f32 %v5789, %v5416
    %v5791 = vadd.f32 %v5790, %v5420
    %v5792 = vadd.f32 %v5791, %v5426
    %v5793 = vadd.f32 %v5792, %v5430
    %v5794 = vadd.f32 %v5793, %v5436
    %v5795 = vadd.f32 %v5794, %v5440
    %v5796 = vadd.f32 %v5795, %v5446
    %v5797 = vadd.f32 %v5796, %v5450
    %v5798 = vadd.f32 %v5797, %v5456
    %v5799 = vadd.f32 %v5798, %v5460
    %v5800 = vadd.f32 %v5799, %v5466
    %v5801 = vadd.f32 %v5800, %v5470
    %v5802 = vadd.f32 %v5801, %v5476
    %v5803 = vadd.f32 %v5802, %v5480
    %v5804 = vadd.f32 %v5803, %v5486
    %v5805 = vadd.f32 %v5804, %v5490
    %v5806 = vadd.f32 %v5805, %v5496
    %v5807 = vadd.f32 %v5806, %v5500
    %v5808 = vadd.f32 %v5807, %v5506
    %v5809 = vadd.f32 %v5808, %v5510
    %v5810 = vadd.f32 %v5809, %v5516
    %v5811 = vadd.f32 %v5810, %v5520
    %v5812 = vrot.slane %v5811, 4
    %v5813 = vadd.f32 %v5811, %v5812
    %v5814 = vrot.slane %v5813, 2
    %v5815 = vadd.f32 %v5813, %v5814
    %v5816 = vrot.slane %v5815, 1
    %v5817 = vadd.f32 %v5815, %v5816
    %v5818 = vmul.f32 %v5558, 0.00390625
    %v5819 = vmul.f32 %v5595, 0.00390625
    %v5820 = vmul.f32 %v5632, 0.00390625
    %v5821 = vmul.f32 %v5669, 0.00390625
    %v5822 = vmul.f32 %v5706, 0.00390625
    %v5823 = vmul.f32 %v5743, 0.00390625
    %v5824 = vmul.f32 %v5780, 0.00390625
    %v5825 = vmul.f32 %v5817, 0.00390625
    %v5826 = vmul.f32 %v4206, %v4206
    %v5827 = vmul.f32 %v4208, %v4208
    %v5828 = vmul.f32 %v4592, %v4592
    %v5829 = vmul.f32 %v4594, %v4594
    %v5830 = vmul.f32 %v4978, %v4978
    %v5831 = vmul.f32 %v4980, %v4980
    %v5832 = vmul.f32 %v5364, %v5364
    %v5833 = vmul.f32 %v5366, %v5366
    %v5834 = vmul.f32 %v4210, %v4210
    %v5835 = vmul.f32 %v4212, %v4212
    %v5836 = vmul.f32 %v4596, %v4596
    %v5837 = vmul.f32 %v4598, %v4598
    %v5838 = vmul.f32 %v4982, %v4982
    %v5839 = vmul.f32 %v4984, %v4984
    %v5840 = vmul.f32 %v5368, %v5368
    %v5841 = vmul.f32 %v5370, %v5370
    %v5842 = vmul.f32 %v4216, %v4216
    %v5843 = vmul.f32 %v4218, %v4218
    %v5844 = vmul.f32 %v4602, %v4602
    %v5845 = vmul.f32 %v4604, %v4604
    %v5846 = vmul.f32 %v4988, %v4988
    %v5847 = vmul.f32 %v4990, %v4990
    %v5848 = vmul.f32 %v5374, %v5374
    %v5849 = vmul.f32 %v5376, %v5376
    %v5850 = vmul.f32 %v4220, %v4220
    %v5851 = vmul.f32 %v4222, %v4222
    %v5852 = vmul.f32 %v4606, %v4606
    %v5853 = vmul.f32 %v4608, %v4608
    %v5854 = vmul.f32 %v4992, %v4992
    %v5855 = vmul.f32 %v4994, %v4994
    %v5856 = vmul.f32 %v5378, %v5378
    %v5857 = vmul.f32 %v5380, %v5380
    %v5858 = vmul.f32 %v4226, %v4226
    %v5859 = vmul.f32 %v4228, %v4228
    %v5860 = vmul.f32 %v4612, %v4612
    %v5861 = vmul.f32 %v4614, %v4614
    %v5862 = vmul.f32 %v4998, %v4998
    %v5863 = vmul.f32 %v5000, %v5000
    %v5864 = vmul.f32 %v5384, %v5384
    %v5865 = vmul.f32 %v5386, %v5386
    %v5866 = vmul.f32 %v4230, %v4230
    %v5867 = vmul.f32 %v4232, %v4232
    %v5868 = vmul.f32 %v4616, %v4616
    %v5869 = vmul.f32 %v4618, %v4618
    %v5870 = vmul.f32 %v5002, %v5002
    %v5871 = vmul.f32 %v5004, %v5004
    %v5872 = vmul.f32 %v5388, %v5388
    %v5873 = vmul.f32 %v5390, %v5390
    %v5874 = vmul.f32 %v4236, %v4236
    %v5875 = vmul.f32 %v4238, %v4238
    %v5876 = vmul.f32 %v4622, %v4622
    %v5877 = vmul.f32 %v4624, %v4624
    %v5878 = vmul.f32 %v5008, %v5008
    %v5879 = vmul.f32 %v5010, %v5010
    %v5880 = vmul.f32 %v5394, %v5394
    %v5881 = vmul.f32 %v5396, %v5396
    %v5882 = vmul.f32 %v4240, %v4240
    %v5883 = vmul.f32 %v4242, %v4242
    %v5884 = vmul.f32 %v4626, %v4626
    %v5885 = vmul.f32 %v4628, %v4628
    %v5886 = vmul.f32 %v5012, %v5012
    %v5887 = vmul.f32 %v5014, %v5014
    %v5888 = vmul.f32 %v5398, %v5398
    %v5889 = vmul.f32 %v5400, %v5400
    %v5890 = vmul.f32 %v4246, %v4246
    %v5891 = vmul.f32 %v4248, %v4248
    %v5892 = vmul.f32 %v4632, %v4632
    %v5893 = vmul.f32 %v4634, %v4634
    %v5894 = vmul.f32 %v5018, %v5018
    %v5895 = vmul.f32 %v5020, %v5020
    %v5896 = vmul.f32 %v5404, %v5404
    %v5897 = vmul.f32 %v5406, %v5406
    %v5898 = vmul.f32 %v4250, %v4250
    %v5899 = vmul.f32 %v4252, %v4252
    %v5900 = vmul.f32 %v4636, %v4636
    %v5901 = vmul.f32 %v4638, %v4638
    %v5902 = vmul.f32 %v5022, %v5022
    %v5903 = vmul.f32 %v5024, %v5024
    %v5904 = vmul.f32 %v5408, %v5408
    %v5905 = vmul.f32 %v5410, %v5410
    %v5906 = vmul.f32 %v4256, %v4256
    %v5907 = vmul.f32 %v4258, %v4258
    %v5908 = vmul.f32 %v4642, %v4642
    %v5909 = vmul.f32 %v4644, %v4644
    %v5910 = vmul.f32 %v5028, %v5028
    %v5911 = vmul.f32 %v5030, %v5030
    %v5912 = vmul.f32 %v5414, %v5414
    %v5913 = vmul.f32 %v5416, %v5416
    %v5914 = vmul.f32 %v4260, %v4260
    %v5915 = vmul.f32 %v4262, %v4262
    %v5916 = vmul.f32 %v4646, %v4646
    %v5917 = vmul.f32 %v4648, %v4648
    %v5918 = vmul.f32 %v5032, %v5032
    %v5919 = vmul.f32 %v5034, %v5034
    %v5920 = vmul.f32 %v5418, %v5418
    %v5921 = vmul.f32 %v5420, %v5420
    %v5922 = vmul.f32 %v4266, %v4266
    %v5923 = vmul.f32 %v4268, %v4268
    %v5924 = vmul.f32 %v4652, %v4652
    %v5925 = vmul.f32 %v4654, %v4654
    %v5926 = vmul.f32 %v5038, %v5038
    %v5927 = vmul.f32 %v5040, %v5040
    %v5928 = vmul.f32 %v5424, %v5424
    %v5929 = vmul.f32 %v5426, %v5426
    %v5930 = vmul.f32 %v4270, %v4270
    %v5931 = vmul.f32 %v4272, %v4272
    %v5932 = vmul.f32 %v4656, %v4656
    %v5933 = vmul.f32 %v4658, %v4658
    %v5934 = vmul.f32 %v5042, %v5042
    %v5935 = vmul.f32 %v5044, %v5044
    %v5936 = vmul.f32 %v5428, %v5428
    %v5937 = vmul.f32 %v5430, %v5430
    %v5938 = vmul.f32 %v4276, %v4276
    %v5939 = vmul.f32 %v4278, %v4278
    %v5940 = vmul.f32 %v4662, %v4662
    %v5941 = vmul.f32 %v4664, %v4664
    %v5942 = vmul.f32 %v5048, %v5048
    %v5943 = vmul.f32 %v5050, %v5050
    %v5944 = vmul.f32 %v5434, %v5434
    %v5945 = vmul.f32 %v5436, %v5436
    %v5946 = vmul.f32 %v4280, %v4280
    %v5947 = vmul.f32 %v4282, %v4282
    %v5948 = vmul.f32 %v4666, %v4666
    %v5949 = vmul.f32 %v4668, %v4668
    %v5950 = vmul.f32 %v5052, %v5052
    %v5951 = vmul.f32 %v5054, %v5054
    %v5952 = vmul.f32 %v5438, %v5438
    %v5953 = vmul.f32 %v5440, %v5440
    %v5954 = vmul.f32 %v4286, %v4286
    %v5955 = vmul.f32 %v4288, %v4288
    %v5956 = vmul.f32 %v4672, %v4672
    %v5957 = vmul.f32 %v4674, %v4674
    %v5958 = vmul.f32 %v5058, %v5058
    %v5959 = vmul.f32 %v5060, %v5060
    %v5960 = vmul.f32 %v5444, %v5444
    %v5961 = vmul.f32 %v5446, %v5446
    %v5962 = vmul.f32 %v4290, %v4290
    %v5963 = vmul.f32 %v4292, %v4292
    %v5964 = vmul.f32 %v4676, %v4676
    %v5965 = vmul.f32 %v4678, %v4678
    %v5966 = vmul.f32 %v5062, %v5062
    %v5967 = vmul.f32 %v5064, %v5064
    %v5968 = vmul.f32 %v5448, %v5448
    %v5969 = vmul.f32 %v5450, %v5450
    %v5970 = vmul.f32 %v4296, %v4296
    %v5971 = vmul.f32 %v4298, %v4298
    %v5972 = vmul.f32 %v4682, %v4682
    %v5973 = vmul.f32 %v4684, %v4684
    %v5974 = vmul.f32 %v5068, %v5068
    %v5975 = vmul.f32 %v5070, %v5070
    %v5976 = vmul.f32 %v5454, %v5454
    %v5977 = vmul.f32 %v5456, %v5456
    %v5978 = vmul.f32 %v4300, %v4300
    %v5979 = vmul.f32 %v4302, %v4302
    %v5980 = vmul.f32 %v4686, %v4686
    %v5981 = vmul.f32 %v4688, %v4688
    %v5982 = vmul.f32 %v5072, %v5072
    %v5983 = vmul.f32 %v5074, %v5074
    %v5984 = vmul.f32 %v5458, %v5458
    %v5985 = vmul.f32 %v5460, %v5460
    %v5986 = vmul.f32 %v4306, %v4306
    %v5987 = vmul.f32 %v4308, %v4308
    %v5988 = vmul.f32 %v4692, %v4692
    %v5989 = vmul.f32 %v4694, %v4694
    %v5990 = vmul.f32 %v5078, %v5078
    %v5991 = vmul.f32 %v5080, %v5080
    %v5992 = vmul.f32 %v5464, %v5464
    %v5993 = vmul.f32 %v5466, %v5466
    %v5994 = vmul.f32 %v4310, %v4310
    %v5995 = vmul.f32 %v4312, %v4312
    %v5996 = vmul.f32 %v4696, %v4696
    %v5997 = vmul.f32 %v4698, %v4698
    %v5998 = vmul.f32 %v5082, %v5082
    %v5999 = vmul.f32 %v5084, %v5084
    %v6000 = vmul.f32 %v5468, %v5468
    %v6001 = vmul.f32 %v5470, %v5470
    %v6002 = vmul.f32 %v4316, %v4316
    %v6003 = vmul.f32 %v4318, %v4318
    %v6004 = vmul.f32 %v4702, %v4702
    %v6005 = vmul.f32 %v4704, %v4704
    %v6006 = vmul.f32 %v5088, %v5088
    %v6007 = vmul.f32 %v5090, %v5090
    %v6008 = vmul.f32 %v5474, %v5474
    %v6009 = vmul.f32 %v5476, %v5476
    %v6010 = vmul.f32 %v4320, %v4320
    %v6011 = vmul.f32 %v4322, %v4322
    %v6012 = vmul.f32 %v4706, %v4706
    %v6013 = vmul.f32 %v4708, %v4708
    %v6014 = vmul.f32 %v5092, %v5092
    %v6015 = vmul.f32 %v5094, %v5094
    %v6016 = vmul.f32 %v5478, %v5478
    %v6017 = vmul.f32 %v5480, %v5480
    %v6018 = vmul.f32 %v4326, %v4326
    %v6019 = vmul.f32 %v4328, %v4328
    %v6020 = vmul.f32 %v4712, %v4712
    %v6021 = vmul.f32 %v4714, %v4714
    %v6022 = vmul.f32 %v5098, %v5098
    %v6023 = vmul.f32 %v5100, %v5100
    %v6024 = vmul.f32 %v5484, %v5484
    %v6025 = vmul.f32 %v5486, %v5486
    %v6026 = vmul.f32 %v4330, %v4330
    %v6027 = vmul.f32 %v4332, %v4332
    %v6028 = vmul.f32 %v4716, %v4716
    %v6029 = vmul.f32 %v4718, %v4718
    %v6030 = vmul.f32 %v5102, %v5102
    %v6031 = vmul.f32 %v5104, %v5104
    %v6032 = vmul.f32 %v5488, %v5488
    %v6033 = vmul.f32 %v5490, %v5490
    %v6034 = vmul.f32 %v4336, %v4336
    %v6035 = vmul.f32 %v4338, %v4338
    %v6036 = vmul.f32 %v4722, %v4722
    %v6037 = vmul.f32 %v4724, %v4724
    %v6038 = vmul.f32 %v5108, %v5108
    %v6039 = vmul.f32 %v5110, %v5110
    %v6040 = vmul.f32 %v5494, %v5494
    %v6041 = vmul.f32 %v5496, %v5496
    %v6042 = vmul.f32 %v4340, %v4340
    %v6043 = vmul.f32 %v4342, %v4342
    %v6044 = vmul.f32 %v4726, %v4726
    %v6045 = vmul.f32 %v4728, %v4728
    %v6046 = vmul.f32 %v5112, %v5112
    %v6047 = vmul.f32 %v5114, %v5114
    %v6048 = vmul.f32 %v5498, %v5498
    %v6049 = vmul.f32 %v5500, %v5500
    %v6050 = vmul.f32 %v4346, %v4346
    %v6051 = vmul.f32 %v4348, %v4348
    %v6052 = vmul.f32 %v4732, %v4732
    %v6053 = vmul.f32 %v4734, %v4734
    %v6054 = vmul.f32 %v5118, %v5118
    %v6055 = vmul.f32 %v5120, %v5120
    %v6056 = vmul.f32 %v5504, %v5504
    %v6057 = vmul.f32 %v5506, %v5506
    %v6058 = vmul.f32 %v4350, %v4350
    %v6059 = vmul.f32 %v4352, %v4352
    %v6060 = vmul.f32 %v4736, %v4736
    %v6061 = vmul.f32 %v4738, %v4738
    %v6062 = vmul.f32 %v5122, %v5122
    %v6063 = vmul.f32 %v5124, %v5124
    %v6064 = vmul.f32 %v5508, %v5508
    %v6065 = vmul.f32 %v5510, %v5510
    %v6066 = vmul.f32 %v4356, %v4356
    %v6067 = vmul.f32 %v4358, %v4358
    %v6068 = vmul.f32 %v4742, %v4742
    %v6069 = vmul.f32 %v4744, %v4744
    %v6070 = vmul.f32 %v5128, %v5128
    %v6071 = vmul.f32 %v5130, %v5130
    %v6072 = vmul.f32 %v5514, %v5514
    %v6073 = vmul.f32 %v5516, %v5516
    %v6074 = vmul.f32 %v4360, %v4360
    %v6075 = vmul.f32 %v4362, %v4362
    %v6076 = vmul.f32 %v4746, %v4746
    %v6077 = vmul.f32 %v4748, %v4748
    %v6078 = vmul.f32 %v5132, %v5132
    %v6079 = vmul.f32 %v5134, %v5134
    %v6080 = vmul.f32 %v5518, %v5518
    %v6081 = vmul.f32 %v5520, %v5520
    %v6082 = vadd.f32 %v5826, %v5834
    %v6083 = vadd.f32 %v6082, %v5842
    %v6084 = vadd.f32 %v6083, %v5850
    %v6085 = vadd.f32 %v6084, %v5858
    %v6086 = vadd.f32 %v6085, %v5866
    %v6087 = vadd.f32 %v6086, %v5874
    %v6088 = vadd.f32 %v6087, %v5882
    %v6089 = vadd.f32 %v6088, %v5890
    %v6090 = vadd.f32 %v6089, %v5898
    %v6091 = vadd.f32 %v6090, %v5906
    %v6092 = vadd.f32 %v6091, %v5914
    %v6093 = vadd.f32 %v6092, %v5922
    %v6094 = vadd.f32 %v6093, %v5930
    %v6095 = vadd.f32 %v6094, %v5938
    %v6096 = vadd.f32 %v6095, %v5946
    %v6097 = vadd.f32 %v6096, %v5954
    %v6098 = vadd.f32 %v6097, %v5962
    %v6099 = vadd.f32 %v6098, %v5970
    %v6100 = vadd.f32 %v6099, %v5978
    %v6101 = vadd.f32 %v6100, %v5986
    %v6102 = vadd.f32 %v6101, %v5994
    %v6103 = vadd.f32 %v6102, %v6002
    %v6104 = vadd.f32 %v6103, %v6010
    %v6105 = vadd.f32 %v6104, %v6018
    %v6106 = vadd.f32 %v6105, %v6026
    %v6107 = vadd.f32 %v6106, %v6034
    %v6108 = vadd.f32 %v6107, %v6042
    %v6109 = vadd.f32 %v6108, %v6050
    %v6110 = vadd.f32 %v6109, %v6058
    %v6111 = vadd.f32 %v6110, %v6066
    %v6112 = vadd.f32 %v6111, %v6074
    %v6113 = vrot.slane %v6112, 4
    %v6114 = vadd.f32 %v6112, %v6113
    %v6115 = vrot.slane %v6114, 2
    %v6116 = vadd.f32 %v6114, %v6115
    %v6117 = vrot.slane %v6116, 1
    %v6118 = vadd.f32 %v6116, %v6117
    %v6119 = vadd.f32 %v5827, %v5835
    %v6120 = vadd.f32 %v6119, %v5843
    %v6121 = vadd.f32 %v6120, %v5851
    %v6122 = vadd.f32 %v6121, %v5859
    %v6123 = vadd.f32 %v6122, %v5867
    %v6124 = vadd.f32 %v6123, %v5875
    %v6125 = vadd.f32 %v6124, %v5883
    %v6126 = vadd.f32 %v6125, %v5891
    %v6127 = vadd.f32 %v6126, %v5899
    %v6128 = vadd.f32 %v6127, %v5907
    %v6129 = vadd.f32 %v6128, %v5915
    %v6130 = vadd.f32 %v6129, %v5923
    %v6131 = vadd.f32 %v6130, %v5931
    %v6132 = vadd.f32 %v6131, %v5939
    %v6133 = vadd.f32 %v6132, %v5947
    %v6134 = vadd.f32 %v6133, %v5955
    %v6135 = vadd.f32 %v6134, %v5963
    %v6136 = vadd.f32 %v6135, %v5971
    %v6137 = vadd.f32 %v6136, %v5979
    %v6138 = vadd.f32 %v6137, %v5987
    %v6139 = vadd.f32 %v6138, %v5995
    %v6140 = vadd.f32 %v6139, %v6003
    %v6141 = vadd.f32 %v6140, %v6011
    %v6142 = vadd.f32 %v6141, %v6019
    %v6143 = vadd.f32 %v6142, %v6027
    %v6144 = vadd.f32 %v6143, %v6035
    %v6145 = vadd.f32 %v6144, %v6043
    %v6146 = vadd.f32 %v6145, %v6051
    %v6147 = vadd.f32 %v6146, %v6059
    %v6148 = vadd.f32 %v6147, %v6067
    %v6149 = vadd.f32 %v6148, %v6075
    %v6150 = vrot.slane %v6149, 4
    %v6151 = vadd.f32 %v6149, %v6150
    %v6152 = vrot.slane %v6151, 2
    %v6153 = vadd.f32 %v6151, %v6152
    %v6154 = vrot.slane %v6153, 1
    %v6155 = vadd.f32 %v6153, %v6154
    %v6156 = vadd.f32 %v5828, %v5836
    %v6157 = vadd.f32 %v6156, %v5844
    %v6158 = vadd.f32 %v6157, %v5852
    %v6159 = vadd.f32 %v6158, %v5860
    %v6160 = vadd.f32 %v6159, %v5868
    %v6161 = vadd.f32 %v6160, %v5876
    %v6162 = vadd.f32 %v6161, %v5884
    %v6163 = vadd.f32 %v6162, %v5892
    %v6164 = vadd.f32 %v6163, %v5900
    %v6165 = vadd.f32 %v6164, %v5908
    %v6166 = vadd.f32 %v6165, %v5916
    %v6167 = vadd.f32 %v6166, %v5924
    %v6168 = vadd.f32 %v6167, %v5932
    %v6169 = vadd.f32 %v6168, %v5940
    %v6170 = vadd.f32 %v6169, %v5948
    %v6171 = vadd.f32 %v6170, %v5956
    %v6172 = vadd.f32 %v6171, %v5964
    %v6173 = vadd.f32 %v6172, %v5972
    %v6174 = vadd.f32 %v6173, %v5980
    %v6175 = vadd.f32 %v6174, %v5988
    %v6176 = vadd.f32 %v6175, %v5996
    %v6177 = vadd.f32 %v6176, %v6004
    %v6178 = vadd.f32 %v6177, %v6012
    %v6179 = vadd.f32 %v6178, %v6020
    %v6180 = vadd.f32 %v6179, %v6028
    %v6181 = vadd.f32 %v6180, %v6036
    %v6182 = vadd.f32 %v6181, %v6044
    %v6183 = vadd.f32 %v6182, %v6052
    %v6184 = vadd.f32 %v6183, %v6060
    %v6185 = vadd.f32 %v6184, %v6068
    %v6186 = vadd.f32 %v6185, %v6076
    %v6187 = vrot.slane %v6186, 4
    %v6188 = vadd.f32 %v6186, %v6187
    %v6189 = vrot.slane %v6188, 2
    %v6190 = vadd.f32 %v6188, %v6189
    %v6191 = vrot.slane %v6190, 1
    %v6192 = vadd.f32 %v6190, %v6191
    %v6193 = vadd.f32 %v5829, %v5837
    %v6194 = vadd.f32 %v6193, %v5845
    %v6195 = vadd.f32 %v6194, %v5853
    %v6196 = vadd.f32 %v6195, %v5861
    %v6197 = vadd.f32 %v6196, %v5869
    %v6198 = vadd.f32 %v6197, %v5877
    %v6199 = vadd.f32 %v6198, %v5885
    %v6200 = vadd.f32 %v6199, %v5893
    %v6201 = vadd.f32 %v6200, %v5901
    %v6202 = vadd.f32 %v6201, %v5909
    %v6203 = vadd.f32 %v6202, %v5917
    %v6204 = vadd.f32 %v6203, %v5925
    %v6205 = vadd.f32 %v6204, %v5933
    %v6206 = vadd.f32 %v6205, %v5941
    %v6207 = vadd.f32 %v6206, %v5949
    %v6208 = vadd.f32 %v6207, %v5957
    %v6209 = vadd.f32 %v6208, %v5965
    %v6210 = vadd.f32 %v6209, %v5973
    %v6211 = vadd.f32 %v6210, %v5981
    %v6212 = vadd.f32 %v6211, %v5989
    %v6213 = vadd.f32 %v6212, %v5997
    %v6214 = vadd.f32 %v6213, %v6005
    %v6215 = vadd.f32 %v6214, %v6013
    %v6216 = vadd.f32 %v6215, %v6021
    %v6217 = vadd.f32 %v6216, %v6029
    %v6218 = vadd.f32 %v6217, %v6037
    %v6219 = vadd.f32 %v6218, %v6045
    %v6220 = vadd.f32 %v6219, %v6053
    %v6221 = vadd.f32 %v6220, %v6061
    %v6222 = vadd.f32 %v6221, %v6069
    %v6223 = vadd.f32 %v6222, %v6077
    %v6224 = vrot.slane %v6223, 4
    %v6225 = vadd.f32 %v6223, %v6224
    %v6226 = vrot.slane %v6225, 2
    %v6227 = vadd.f32 %v6225, %v6226
    %v6228 = vrot.slane %v6227, 1
    %v6229 = vadd.f32 %v6227, %v6228
    %v6230 = vadd.f32 %v5830, %v5838
    %v6231 = vadd.f32 %v6230, %v5846
    %v6232 = vadd.f32 %v6231, %v5854
    %v6233 = vadd.f32 %v6232, %v5862
    %v6234 = vadd.f32 %v6233, %v5870
    %v6235 = vadd.f32 %v6234, %v5878
    %v6236 = vadd.f32 %v6235, %v5886
    %v6237 = vadd.f32 %v6236, %v5894
    %v6238 = vadd.f32 %v6237, %v5902
    %v6239 = vadd.f32 %v6238, %v5910
    %v6240 = vadd.f32 %v6239, %v5918
    %v6241 = vadd.f32 %v6240, %v5926
    %v6242 = vadd.f32 %v6241, %v5934
    %v6243 = vadd.f32 %v6242, %v5942
    %v6244 = vadd.f32 %v6243, %v5950
    %v6245 = vadd.f32 %v6244, %v5958
    %v6246 = vadd.f32 %v6245, %v5966
    %v6247 = vadd.f32 %v6246, %v5974
    %v6248 = vadd.f32 %v6247, %v5982
    %v6249 = vadd.f32 %v6248, %v5990
    %v6250 = vadd.f32 %v6249, %v5998
    %v6251 = vadd.f32 %v6250, %v6006
    %v6252 = vadd.f32 %v6251, %v6014
    %v6253 = vadd.f32 %v6252, %v6022
    %v6254 = vadd.f32 %v6253, %v6030
    %v6255 = vadd.f32 %v6254, %v6038
    %v6256 = vadd.f32 %v6255, %v6046
    %v6257 = vadd.f32 %v6256, %v6054
    %v6258 = vadd.f32 %v6257, %v6062
    %v6259 = vadd.f32 %v6258, %v6070
    %v6260 = vadd.f32 %v6259, %v6078
    %v6261 = vrot.slane %v6260, 4
    %v6262 = vadd.f32 %v6260, %v6261
    %v6263 = vrot.slane %v6262, 2
    %v6264 = vadd.f32 %v6262, %v6263
    %v6265 = vrot.slane %v6264, 1
    %v6266 = vadd.f32 %v6264, %v6265
    %v6267 = vadd.f32 %v5831, %v5839
    %v6268 = vadd.f32 %v6267, %v5847
    %v6269 = vadd.f32 %v6268, %v5855
    %v6270 = vadd.f32 %v6269, %v5863
    %v6271 = vadd.f32 %v6270, %v5871
    %v6272 = vadd.f32 %v6271, %v5879
    %v6273 = vadd.f32 %v6272, %v5887
    %v6274 = vadd.f32 %v6273, %v5895
    %v6275 = vadd.f32 %v6274, %v5903
    %v6276 = vadd.f32 %v6275, %v5911
    %v6277 = vadd.f32 %v6276, %v5919
    %v6278 = vadd.f32 %v6277, %v5927
    %v6279 = vadd.f32 %v6278, %v5935
    %v6280 = vadd.f32 %v6279, %v5943
    %v6281 = vadd.f32 %v6280, %v5951
    %v6282 = vadd.f32 %v6281, %v5959
    %v6283 = vadd.f32 %v6282, %v5967
    %v6284 = vadd.f32 %v6283, %v5975
    %v6285 = vadd.f32 %v6284, %v5983
    %v6286 = vadd.f32 %v6285, %v5991
    %v6287 = vadd.f32 %v6286, %v5999
    %v6288 = vadd.f32 %v6287, %v6007
    %v6289 = vadd.f32 %v6288, %v6015
    %v6290 = vadd.f32 %v6289, %v6023
    %v6291 = vadd.f32 %v6290, %v6031
    %v6292 = vadd.f32 %v6291, %v6039
    %v6293 = vadd.f32 %v6292, %v6047
    %v6294 = vadd.f32 %v6293, %v6055
    %v6295 = vadd.f32 %v6294, %v6063
    %v6296 = vadd.f32 %v6295, %v6071
    %v6297 = vadd.f32 %v6296, %v6079
    %v6298 = vrot.slane %v6297, 4
    %v6299 = vadd.f32 %v6297, %v6298
    %v6300 = vrot.slane %v6299, 2
    %v6301 = vadd.f32 %v6299, %v6300
    %v6302 = vrot.slane %v6301, 1
    %v6303 = vadd.f32 %v6301, %v6302
    %v6304 = vadd.f32 %v5832, %v5840
    %v6305 = vadd.f32 %v6304, %v5848
    %v6306 = vadd.f32 %v6305, %v5856
    %v6307 = vadd.f32 %v6306, %v5864
    %v6308 = vadd.f32 %v6307, %v5872
    %v6309 = vadd.f32 %v6308, %v5880
    %v6310 = vadd.f32 %v6309, %v5888
    %v6311 = vadd.f32 %v6310, %v5896
    %v6312 = vadd.f32 %v6311, %v5904
    %v6313 = vadd.f32 %v6312, %v5912
    %v6314 = vadd.f32 %v6313, %v5920
    %v6315 = vadd.f32 %v6314, %v5928
    %v6316 = vadd.f32 %v6315, %v5936
    %v6317 = vadd.f32 %v6316, %v5944
    %v6318 = vadd.f32 %v6317, %v5952
    %v6319 = vadd.f32 %v6318, %v5960
    %v6320 = vadd.f32 %v6319, %v5968
    %v6321 = vadd.f32 %v6320, %v5976
    %v6322 = vadd.f32 %v6321, %v5984
    %v6323 = vadd.f32 %v6322, %v5992
    %v6324 = vadd.f32 %v6323, %v6000
    %v6325 = vadd.f32 %v6324, %v6008
    %v6326 = vadd.f32 %v6325, %v6016
    %v6327 = vadd.f32 %v6326, %v6024
    %v6328 = vadd.f32 %v6327, %v6032
    %v6329 = vadd.f32 %v6328, %v6040
    %v6330 = vadd.f32 %v6329, %v6048
    %v6331 = vadd.f32 %v6330, %v6056
    %v6332 = vadd.f32 %v6331, %v6064
    %v6333 = vadd.f32 %v6332, %v6072
    %v6334 = vadd.f32 %v6333, %v6080
    %v6335 = vrot.slane %v6334, 4
    %v6336 = vadd.f32 %v6334, %v6335
    %v6337 = vrot.slane %v6336, 2
    %v6338 = vadd.f32 %v6336, %v6337
    %v6339 = vrot.slane %v6338, 1
    %v6340 = vadd.f32 %v6338, %v6339
    %v6341 = vadd.f32 %v5833, %v5841
    %v6342 = vadd.f32 %v6341, %v5849
    %v6343 = vadd.f32 %v6342, %v5857
    %v6344 = vadd.f32 %v6343, %v5865
    %v6345 = vadd.f32 %v6344, %v5873
    %v6346 = vadd.f32 %v6345, %v5881
    %v6347 = vadd.f32 %v6346, %v5889
    %v6348 = vadd.f32 %v6347, %v5897
    %v6349 = vadd.f32 %v6348, %v5905
    %v6350 = vadd.f32 %v6349, %v5913
    %v6351 = vadd.f32 %v6350, %v5921
    %v6352 = vadd.f32 %v6351, %v5929
    %v6353 = vadd.f32 %v6352, %v5937
    %v6354 = vadd.f32 %v6353, %v5945
    %v6355 = vadd.f32 %v6354, %v5953
    %v6356 = vadd.f32 %v6355, %v5961
    %v6357 = vadd.f32 %v6356, %v5969
    %v6358 = vadd.f32 %v6357, %v5977
    %v6359 = vadd.f32 %v6358, %v5985
    %v6360 = vadd.f32 %v6359, %v5993
    %v6361 = vadd.f32 %v6360, %v6001
    %v6362 = vadd.f32 %v6361, %v6009
    %v6363 = vadd.f32 %v6362, %v6017
    %v6364 = vadd.f32 %v6363, %v6025
    %v6365 = vadd.f32 %v6364, %v6033
    %v6366 = vadd.f32 %v6365, %v6041
    %v6367 = vadd.f32 %v6366, %v6049
    %v6368 = vadd.f32 %v6367, %v6057
    %v6369 = vadd.f32 %v6368, %v6065
    %v6370 = vadd.f32 %v6369, %v6073
    %v6371 = vadd.f32 %v6370, %v6081
    %v6372 = vrot.slane %v6371, 4
    %v6373 = vadd.f32 %v6371, %v6372
    %v6374 = vrot.slane %v6373, 2
    %v6375 = vadd.f32 %v6373, %v6374
    %v6376 = vrot.slane %v6375, 1
    %v6377 = vadd.f32 %v6375, %v6376
    %v6378 = vmul.f32 %v6118, 0.00390625
    %v6379 = vmul.f32 %v6155, 0.00390625
    %v6380 = vmul.f32 %v6192, 0.00390625
    %v6381 = vmul.f32 %v6229, 0.00390625
    %v6382 = vmul.f32 %v6266, 0.00390625
    %v6383 = vmul.f32 %v6303, 0.00390625
    %v6384 = vmul.f32 %v6340, 0.00390625
    %v6385 = vmul.f32 %v6377, 0.00390625
    %v6386 = vmul.f32 %v5818, %v5818
    %v6387 = vmul.f32 %v5819, %v5819
    %v6388 = vmul.f32 %v5820, %v5820
    %v6389 = vmul.f32 %v5821, %v5821
    %v6390 = vmul.f32 %v5822, %v5822
    %v6391 = vmul.f32 %v5823, %v5823
    %v6392 = vmul.f32 %v5824, %v5824
    %v6393 = vmul.f32 %v5825, %v5825
    %v6394 = vsub.f32 %v6378, %v6386
    %v6395 = vsub.f32 %v6379, %v6387
    %v6396 = vsub.f32 %v6380, %v6388
    %v6397 = vsub.f32 %v6381, %v6389
    %v6398 = vsub.f32 %v6382, %v6390
    %v6399 = vsub.f32 %v6383, %v6391
    %v6400 = vsub.f32 %v6384, %v6392
    %v6401 = vsub.f32 %v6385, %v6393
    %v6402 = vld [vmem:[%s10] sm:$0xff]
    %v6403 = vadd.f32 %v6394, 0.8
    %v6404 = vadd.f32 %v6395, 0.8
    %v6405 = vadd.f32 %v6396, 0.8
    %v6406 = vadd.f32 %v6397, 0.8
    %v6407 = vadd.f32 %v6398, 0.8
    %v6408 = vadd.f32 %v6399, 0.8
    %v6409 = vadd.f32 %v6400, 0.8
    %v6410 = vadd.f32 %v6401, 0.8
    %v6411 = vrsqrt.pop %v6403
    %v6412 = vrsqrt.pop %v6404
    %v6413 = vrsqrt.pop %v6405
    %v6414 = vrsqrt.pop %v6406
    %v6415 = vrsqrt.pop %v6407
    %v6416 = vrsqrt.pop %v6408
    %v6417 = vrsqrt.pop %v6409
    %v6418 = vrsqrt.pop %v6410
    %v6427 = vcombine.low %v6411, %v6412
    %v6428 = vcombine.low %v6413, %v6414
    %v6429 = vcombine.low %v6415, %v6416
    %v6430 = vcombine.low %v6417, %v6418
    %v6432 = vunpack.c.l.s4 1966171168
    %v6433 = vunpack.c.0.s8 %v6432
    %v6434 = vlaneseq
    %v6435 = vshrl.u32 %v6434, 7
    %v6436 = vsub.s32 %v6433, %v6435
    %v6437 = vrot.slane %v6427, %v6436
    %v6439 = vunpack.c.l.s4 1966171168
    %v6440 = vunpack.c.0.s8 %v6439
    %v6441 = vlaneseq
    %v6442 = vshrl.u32 %v6441, 7
    %v6443 = vsub.s32 %v6440, %v6442
    %v6444 = vrot.slane %v6428, %v6443
    %v6446 = vunpack.c.l.s4 1966171168
    %v6447 = vunpack.c.0.s8 %v6446
    %v6448 = vlaneseq
    %v6449 = vshrl.u32 %v6448, 7
    %v6450 = vsub.s32 %v6447, %v6449
    %v6451 = vrot.slane %v6429, %v6450
    %v6453 = vunpack.c.l.s4 1966171168
    %v6454 = vunpack.c.0.s8 %v6453
    %v6455 = vlaneseq
    %v6456 = vshrl.u32 %v6455, 7
    %v6457 = vsub.s32 %v6454, %v6456
    %v6458 = vrot.slane %v6430, %v6457
    %v6459 = vcombine.low %v6437, %v6444
    %v6460 = vcombine.low %v6451, %v6458
    %v6462 = vunpack.c.l.s4 1966171168
    %v6463 = vunpack.c.0.s8 %v6462
    %v6464 = vlaneseq
    %v6465 = vshrl.u32 %v6464, 7
    %v6466 = vsub.s32 %v6463, %v6465
    %v6467 = vrot.slane %v6459, %v6466
    %v6469 = vunpack.c.l.s4 1966171168
    %v6470 = vunpack.c.0.s8 %v6469
    %v6471 = vlaneseq
    %v6472 = vshrl.u32 %v6471, 7
    %v6473 = vsub.s32 %v6470, %v6472
    %v6474 = vrot.slane %v6460, %v6473
    %v6475 = vcombine.low %v6467, %v6474
    %v6477 = vmul.f32 %v6402, %v6475
    %v6478 = vld [vmem:[%s11] sm:$0xff]
    %v6480 = vlaneseq
    %v6481 = vshrl.u32 %v6480, 7
    %v6482 = vsub.s32 0, %v6481
    %v6483 = vrot.slane %v6477, %v6482
    %v6484 = vlaneseq
    %v6485 = vshrl.u32 %v6484, 7
    %v6486 = vsub.s32 1, %v6485
    %v6487 = vrot.slane %v6477, %v6486
    %v6488 = vlaneseq
    %v6489 = vshrl.u32 %v6488, 7
    %v6490 = vsub.s32 2, %v6489
    %v6491 = vrot.slane %v6477, %v6490
    %v6492 = vlaneseq
    %v6493 = vshrl.u32 %v6492, 7
    %v6494 = vsub.s32 3, %v6493
    %v6495 = vrot.slane %v6477, %v6494
    %v6496 = vlaneseq
    %v6497 = vshrl.u32 %v6496, 7
    %v6498 = vsub.s32 4, %v6497
    %v6499 = vrot.slane %v6477, %v6498
    %v6500 = vlaneseq
    %v6501 = vshrl.u32 %v6500, 7
    %v6502 = vsub.s32 5, %v6501
    %v6503 = vrot.slane %v6477, %v6502
    %v6504 = vlaneseq
    %v6505 = vshrl.u32 %v6504, 7
    %v6506 = vsub.s32 6, %v6505
    %v6507 = vrot.slane %v6477, %v6506
    %v6508 = vlaneseq
    %v6509 = vshrl.u32 %v6508, 7
    %v6510 = vsub.s32 7, %v6509
    %v6511 = vrot.slane %v6477, %v6510
    %v6520 = vmul.f32 %v5818, %v6483
    %v6521 = vmul.f32 %v5819, %v6487
    %v6522 = vmul.f32 %v5820, %v6491
    %v6523 = vmul.f32 %v5821, %v6495
    %v6524 = vmul.f32 %v5822, %v6499
    %v6525 = vmul.f32 %v5823, %v6503
    %v6526 = vmul.f32 %v5824, %v6507
    %v6527 = vmul.f32 %v5825, %v6511
    %v6536 = vcombine.low %v6520, %v6521
    %v6537 = vcombine.low %v6522, %v6523
    %v6538 = vcombine.low %v6524, %v6525
    %v6539 = vcombine.low %v6526, %v6527
    %v6541 = vunpack.c.l.s4 1966171168
    %v6542 = vunpack.c.0.s8 %v6541
    %v6543 = vlaneseq
    %v6544 = vshrl.u32 %v6543, 7
    %v6545 = vsub.s32 %v6542, %v6544
    %v6546 = vrot.slane %v6536, %v6545
    %v6548 = vunpack.c.l.s4 1966171168
    %v6549 = vunpack.c.0.s8 %v6548
    %v6550 = vlaneseq
    %v6551 = vshrl.u32 %v6550, 7
    %v6552 = vsub.s32 %v6549, %v6551
    %v6553 = vrot.slane %v6537, %v6552
    %v6555 = vunpack.c.l.s4 1966171168
    %v6556 = vunpack.c.0.s8 %v6555
    %v6557 = vlaneseq
    %v6558 = vshrl.u32 %v6557, 7
    %v6559 = vsub.s32 %v6556, %v6558
    %v6560 = vrot.slane %v6538, %v6559
    %v6562 = vunpack.c.l.s4 1966171168
    %v6563 = vunpack.c.0.s8 %v6562
    %v6564 = vlaneseq
    %v6565 = vshrl.u32 %v6564, 7
    %v6566 = vsub.s32 %v6563, %v6565
    %v6567 = vrot.slane %v6539, %v6566
    %v6568 = vcombine.low %v6546, %v6553
    %v6569 = vcombine.low %v6560, %v6567
    %v6571 = vunpack.c.l.s4 1966171168
    %v6572 = vunpack.c.0.s8 %v6571
    %v6573 = vlaneseq
    %v6574 = vshrl.u32 %v6573, 7
    %v6575 = vsub.s32 %v6572, %v6574
    %v6576 = vrot.slane %v6568, %v6575
    %v6578 = vunpack.c.l.s4 1966171168
    %v6579 = vunpack.c.0.s8 %v6578
    %v6580 = vlaneseq
    %v6581 = vshrl.u32 %v6580, 7
    %v6582 = vsub.s32 %v6579, %v6581
    %v6583 = vrot.slane %v6569, %v6582
    %v6584 = vcombine.low %v6576, %v6583
    %v6586 = vsub.f32 %v6478, %v6584
    %v6587 = vmul.f32 %v4206, %v6483
    %v6588 = vmul.f32 %v4208, %v6487
    %v6589 = vmul.f32 %v4592, %v6491
    %v6590 = vmul.f32 %v4594, %v6495
    %v6591 = vmul.f32 %v4978, %v6499
    %v6592 = vmul.f32 %v4980, %v6503
    %v6593 = vmul.f32 %v5364, %v6507
    %v6594 = vmul.f32 %v5366, %v6511
    %v6595 = vmul.f32 %v4210, %v6483
    %v6596 = vmul.f32 %v4212, %v6487
    %v6597 = vmul.f32 %v4596, %v6491
    %v6598 = vmul.f32 %v4598, %v6495
    %v6599 = vmul.f32 %v4982, %v6499
    %v6600 = vmul.f32 %v4984, %v6503
    %v6601 = vmul.f32 %v5368, %v6507
    %v6602 = vmul.f32 %v5370, %v6511
    %v6603 = vmul.f32 %v4216, %v6483
    %v6604 = vmul.f32 %v4218, %v6487
    %v6605 = vmul.f32 %v4602, %v6491
    %v6606 = vmul.f32 %v4604, %v6495
    %v6607 = vmul.f32 %v4988, %v6499
    %v6608 = vmul.f32 %v4990, %v6503
    %v6609 = vmul.f32 %v5374, %v6507
    %v6610 = vmul.f32 %v5376, %v6511
    %v6611 = vmul.f32 %v4220, %v6483
    %v6612 = vmul.f32 %v4222, %v6487
    %v6613 = vmul.f32 %v4606, %v6491
    %v6614 = vmul.f32 %v4608, %v6495
    %v6615 = vmul.f32 %v4992, %v6499
    %v6616 = vmul.f32 %v4994, %v6503
    %v6617 = vmul.f32 %v5378, %v6507
    %v6618 = vmul.f32 %v5380, %v6511
    %v6619 = vmul.f32 %v4226, %v6483
    %v6620 = vmul.f32 %v4228, %v6487
    %v6621 = vmul.f32 %v4612, %v6491
    %v6622 = vmul.f32 %v4614, %v6495
    %v6623 = vmul.f32 %v4998, %v6499
    %v6624 = vmul.f32 %v5000, %v6503
    %v6625 = vmul.f32 %v5384, %v6507
    %v6626 = vmul.f32 %v5386, %v6511
    %v6627 = vmul.f32 %v4230, %v6483
    %v6628 = vmul.f32 %v4232, %v6487
    %v6629 = vmul.f32 %v4616, %v6491
    %v6630 = vmul.f32 %v4618, %v6495
    %v6631 = vmul.f32 %v5002, %v6499
    %v6632 = vmul.f32 %v5004, %v6503
    %v6633 = vmul.f32 %v5388, %v6507
    %v6634 = vmul.f32 %v5390, %v6511
    %v6635 = vmul.f32 %v4236, %v6483
    %v6636 = vmul.f32 %v4238, %v6487
    %v6637 = vmul.f32 %v4622, %v6491
    %v6638 = vmul.f32 %v4624, %v6495
    %v6639 = vmul.f32 %v5008, %v6499
    %v6640 = vmul.f32 %v5010, %v6503
    %v6641 = vmul.f32 %v5394, %v6507
    %v6642 = vmul.f32 %v5396, %v6511
    %v6643 = vmul.f32 %v4240, %v6483
    %v6644 = vmul.f32 %v4242, %v6487
    %v6645 = vmul.f32 %v4626, %v6491
    %v6646 = vmul.f32 %v4628, %v6495
    %v6647 = vmul.f32 %v5012, %v6499
    %v6648 = vmul.f32 %v5014, %v6503
    %v6649 = vmul.f32 %v5398, %v6507
    %v6650 = vmul.f32 %v5400, %v6511
    %v6651 = vmul.f32 %v4246, %v6483
    %v6652 = vmul.f32 %v4248, %v6487
    %v6653 = vmul.f32 %v4632, %v6491
    %v6654 = vmul.f32 %v4634, %v6495
    %v6655 = vmul.f32 %v5018, %v6499
    %v6656 = vmul.f32 %v5020, %v6503
    %v6657 = vmul.f32 %v5404, %v6507
    %v6658 = vmul.f32 %v5406, %v6511
    %v6659 = vmul.f32 %v4250, %v6483
    %v6660 = vmul.f32 %v4252, %v6487
    %v6661 = vmul.f32 %v4636, %v6491
    %v6662 = vmul.f32 %v4638, %v6495
    %v6663 = vmul.f32 %v5022, %v6499
    %v6664 = vmul.f32 %v5024, %v6503
    %v6665 = vmul.f32 %v5408, %v6507
    %v6666 = vmul.f32 %v5410, %v6511
    %v6667 = vmul.f32 %v4256, %v6483
    %v6668 = vmul.f32 %v4258, %v6487
    %v6669 = vmul.f32 %v4642, %v6491
    %v6670 = vmul.f32 %v4644, %v6495
    %v6671 = vmul.f32 %v5028, %v6499
    %v6672 = vmul.f32 %v5030, %v6503
    %v6673 = vmul.f32 %v5414, %v6507
    %v6674 = vmul.f32 %v5416, %v6511
    %v6675 = vmul.f32 %v4260, %v6483
    %v6676 = vmul.f32 %v4262, %v6487
    %v6677 = vmul.f32 %v4646, %v6491
    %v6678 = vmul.f32 %v4648, %v6495
    %v6679 = vmul.f32 %v5032, %v6499
    %v6680 = vmul.f32 %v5034, %v6503
    %v6681 = vmul.f32 %v5418, %v6507
    %v6682 = vmul.f32 %v5420, %v6511
    %v6683 = vmul.f32 %v4266, %v6483
    %v6684 = vmul.f32 %v4268, %v6487
    %v6685 = vmul.f32 %v4652, %v6491
    %v6686 = vmul.f32 %v4654, %v6495
    %v6687 = vmul.f32 %v5038, %v6499
    %v6688 = vmul.f32 %v5040, %v6503
    %v6689 = vmul.f32 %v5424, %v6507
    %v6690 = vmul.f32 %v5426, %v6511
    %v6691 = vmul.f32 %v4270, %v6483
    %v6692 = vmul.f32 %v4272, %v6487
    %v6693 = vmul.f32 %v4656, %v6491
    %v6694 = vmul.f32 %v4658, %v6495
    %v6695 = vmul.f32 %v5042, %v6499
    %v6696 = vmul.f32 %v5044, %v6503
    %v6697 = vmul.f32 %v5428, %v6507
    %v6698 = vmul.f32 %v5430, %v6511
    %v6699 = vmul.f32 %v4276, %v6483
    %v6700 = vmul.f32 %v4278, %v6487
    %v6701 = vmul.f32 %v4662, %v6491
    %v6702 = vmul.f32 %v4664, %v6495
    %v6703 = vmul.f32 %v5048, %v6499
    %v6704 = vmul.f32 %v5050, %v6503
    %v6705 = vmul.f32 %v5434, %v6507
    %v6706 = vmul.f32 %v5436, %v6511
    %v6707 = vmul.f32 %v4280, %v6483
    %v6708 = vmul.f32 %v4282, %v6487
    %v6709 = vmul.f32 %v4666, %v6491
    %v6710 = vmul.f32 %v4668, %v6495
    %v6711 = vmul.f32 %v5052, %v6499
    %v6712 = vmul.f32 %v5054, %v6503
    %v6713 = vmul.f32 %v5438, %v6507
    %v6714 = vmul.f32 %v5440, %v6511
    %v6715 = vmul.f32 %v4286, %v6483
    %v6716 = vmul.f32 %v4288, %v6487
    %v6717 = vmul.f32 %v4672, %v6491
    %v6718 = vmul.f32 %v4674, %v6495
    %v6719 = vmul.f32 %v5058, %v6499
    %v6720 = vmul.f32 %v5060, %v6503
    %v6721 = vmul.f32 %v5444, %v6507
    %v6722 = vmul.f32 %v5446, %v6511
    %v6723 = vmul.f32 %v4290, %v6483
    %v6724 = vmul.f32 %v4292, %v6487
    %v6725 = vmul.f32 %v4676, %v6491
    %v6726 = vmul.f32 %v4678, %v6495
    %v6727 = vmul.f32 %v5062, %v6499
    %v6728 = vmul.f32 %v5064, %v6503
    %v6729 = vmul.f32 %v5448, %v6507
    %v6730 = vmul.f32 %v5450, %v6511
    %v6731 = vmul.f32 %v4296, %v6483
    %v6732 = vmul.f32 %v4298, %v6487
    %v6733 = vmul.f32 %v4682, %v6491
    %v6734 = vmul.f32 %v4684, %v6495
    %v6735 = vmul.f32 %v5068, %v6499
    %v6736 = vmul.f32 %v5070, %v6503
    %v6737 = vmul.f32 %v5454, %v6507
    %v6738 = vmul.f32 %v5456, %v6511
    %v6739 = vmul.f32 %v4300, %v6483
    %v6740 = vmul.f32 %v4302, %v6487
    %v6741 = vmul.f32 %v4686, %v6491
    %v6742 = vmul.f32 %v4688, %v6495
    %v6743 = vmul.f32 %v5072, %v6499
    %v6744 = vmul.f32 %v5074, %v6503
    %v6745 = vmul.f32 %v5458, %v6507
    %v6746 = vmul.f32 %v5460, %v6511
    %v6747 = vmul.f32 %v4306, %v6483
    %v6748 = vmul.f32 %v4308, %v6487
    %v6749 = vmul.f32 %v4692, %v6491
    %v6750 = vmul.f32 %v4694, %v6495
    %v6751 = vmul.f32 %v5078, %v6499
    %v6752 = vmul.f32 %v5080, %v6503
    %v6753 = vmul.f32 %v5464, %v6507
    %v6754 = vmul.f32 %v5466, %v6511
    %v6755 = vmul.f32 %v4310, %v6483
    %v6756 = vmul.f32 %v4312, %v6487
    %v6757 = vmul.f32 %v4696, %v6491
    %v6758 = vmul.f32 %v4698, %v6495
    %v6759 = vmul.f32 %v5082, %v6499
    %v6760 = vmul.f32 %v5084, %v6503
    %v6761 = vmul.f32 %v5468, %v6507
    %v6762 = vmul.f32 %v5470, %v6511
    %v6763 = vmul.f32 %v4316, %v6483
    %v6764 = vmul.f32 %v4318, %v6487
    %v6765 = vmul.f32 %v4702, %v6491
    %v6766 = vmul.f32 %v4704, %v6495
    %v6767 = vmul.f32 %v5088, %v6499
    %v6768 = vmul.f32 %v5090, %v6503
    %v6769 = vmul.f32 %v5474, %v6507
    %v6770 = vmul.f32 %v5476, %v6511
    %v6771 = vmul.f32 %v4320, %v6483
    %v6772 = vmul.f32 %v4322, %v6487
    %v6773 = vmul.f32 %v4706, %v6491
    %v6774 = vmul.f32 %v4708, %v6495
    %v6775 = vmul.f32 %v5092, %v6499
    %v6776 = vmul.f32 %v5094, %v6503
    %v6777 = vmul.f32 %v5478, %v6507
    %v6778 = vmul.f32 %v5480, %v6511
    %v6779 = vmul.f32 %v4326, %v6483
    %v6780 = vmul.f32 %v4328, %v6487
    %v6781 = vmul.f32 %v4712, %v6491
    %v6782 = vmul.f32 %v4714, %v6495
    %v6783 = vmul.f32 %v5098, %v6499
    %v6784 = vmul.f32 %v5100, %v6503
    %v6785 = vmul.f32 %v5484, %v6507
    %v6786 = vmul.f32 %v5486, %v6511
    %v6787 = vmul.f32 %v4330, %v6483
    %v6788 = vmul.f32 %v4332, %v6487
    %v6789 = vmul.f32 %v4716, %v6491
    %v6790 = vmul.f32 %v4718, %v6495
    %v6791 = vmul.f32 %v5102, %v6499
    %v6792 = vmul.f32 %v5104, %v6503
    %v6793 = vmul.f32 %v5488, %v6507
    %v6794 = vmul.f32 %v5490, %v6511
    %v6795 = vmul.f32 %v4336, %v6483
    %v6796 = vmul.f32 %v4338, %v6487
    %v6797 = vmul.f32 %v4722, %v6491
    %v6798 = vmul.f32 %v4724, %v6495
    %v6799 = vmul.f32 %v5108, %v6499
    %v6800 = vmul.f32 %v5110, %v6503
    %v6801 = vmul.f32 %v5494, %v6507
    %v6802 = vmul.f32 %v5496, %v6511
    %v6803 = vmul.f32 %v4340, %v6483
    %v6804 = vmul.f32 %v4342, %v6487
    %v6805 = vmul.f32 %v4726, %v6491
    %v6806 = vmul.f32 %v4728, %v6495
    %v6807 = vmul.f32 %v5112, %v6499
    %v6808 = vmul.f32 %v5114, %v6503
    %v6809 = vmul.f32 %v5498, %v6507
    %v6810 = vmul.f32 %v5500, %v6511
    %v6811 = vmul.f32 %v4346, %v6483
    %v6812 = vmul.f32 %v4348, %v6487
    %v6813 = vmul.f32 %v4732, %v6491
    %v6814 = vmul.f32 %v4734, %v6495
    %v6815 = vmul.f32 %v5118, %v6499
    %v6816 = vmul.f32 %v5120, %v6503
    %v6817 = vmul.f32 %v5504, %v6507
    %v6818 = vmul.f32 %v5506, %v6511
    %v6819 = vmul.f32 %v4350, %v6483
    %v6820 = vmul.f32 %v4352, %v6487
    %v6821 = vmul.f32 %v4736, %v6491
    %v6822 = vmul.f32 %v4738, %v6495
    %v6823 = vmul.f32 %v5122, %v6499
    %v6824 = vmul.f32 %v5124, %v6503
    %v6825 = vmul.f32 %v5508, %v6507
    %v6826 = vmul.f32 %v5510, %v6511
    %v6827 = vmul.f32 %v4356, %v6483
    %v6828 = vmul.f32 %v4358, %v6487
    %v6829 = vmul.f32 %v4742, %v6491
    %v6830 = vmul.f32 %v4744, %v6495
    %v6831 = vmul.f32 %v5128, %v6499
    %v6832 = vmul.f32 %v5130, %v6503
    %v6833 = vmul.f32 %v5514, %v6507
    %v6834 = vmul.f32 %v5516, %v6511
    %v6835 = vmul.f32 %v4360, %v6483
    %v6836 = vmul.f32 %v4362, %v6487
    %v6837 = vmul.f32 %v4746, %v6491
    %v6838 = vmul.f32 %v4748, %v6495
    %v6839 = vmul.f32 %v5132, %v6499
    %v6840 = vmul.f32 %v5134, %v6503
    %v6841 = vmul.f32 %v5518, %v6507
    %v6842 = vmul.f32 %v5520, %v6511
    %v6844 = vlaneseq
    %v6845 = vshrl.u32 %v6844, 7
    %v6846 = vsub.s32 0, %v6845
    %v6847 = vrot.slane %v6586, %v6846
    %v6848 = vlaneseq
    %v6849 = vshrl.u32 %v6848, 7
    %v6850 = vsub.s32 1, %v6849
    %v6851 = vrot.slane %v6586, %v6850
    %v6852 = vlaneseq
    %v6853 = vshrl.u32 %v6852, 7
    %v6854 = vsub.s32 2, %v6853
    %v6855 = vrot.slane %v6586, %v6854
    %v6856 = vlaneseq
    %v6857 = vshrl.u32 %v6856, 7
    %v6858 = vsub.s32 3, %v6857
    %v6859 = vrot.slane %v6586, %v6858
    %v6860 = vlaneseq
    %v6861 = vshrl.u32 %v6860, 7
    %v6862 = vsub.s32 4, %v6861
    %v6863 = vrot.slane %v6586, %v6862
    %v6864 = vlaneseq
    %v6865 = vshrl.u32 %v6864, 7
    %v6866 = vsub.s32 5, %v6865
    %v6867 = vrot.slane %v6586, %v6866
    %v6868 = vlaneseq
    %v6869 = vshrl.u32 %v6868, 7
    %v6870 = vsub.s32 6, %v6869
    %v6871 = vrot.slane %v6586, %v6870
    %v6872 = vlaneseq
    %v6873 = vshrl.u32 %v6872, 7
    %v6874 = vsub.s32 7, %v6873
    %v6875 = vrot.slane %v6586, %v6874
    %v6884 = vadd.f32 %v6587, %v6847
    %v6885 = vadd.f32 %v6588, %v6851
    %v6886 = vadd.f32 %v6589, %v6855
    %v6887 = vadd.f32 %v6590, %v6859
    %v6888 = vadd.f32 %v6591, %v6863
    %v6889 = vadd.f32 %v6592, %v6867
    %v6890 = vadd.f32 %v6593, %v6871
    %v6891 = vadd.f32 %v6594, %v6875
    %v6892 = vadd.f32 %v6595, %v6847
    %v6893 = vadd.f32 %v6596, %v6851
    %v6894 = vadd.f32 %v6597, %v6855
    %v6895 = vadd.f32 %v6598, %v6859
    %v6896 = vadd.f32 %v6599, %v6863
    %v6897 = vadd.f32 %v6600, %v6867
    %v6898 = vadd.f32 %v6601, %v6871
    %v6899 = vadd.f32 %v6602, %v6875
    %v6900 = vadd.f32 %v6603, %v6847
    %v6901 = vadd.f32 %v6604, %v6851
    %v6902 = vadd.f32 %v6605, %v6855
    %v6903 = vadd.f32 %v6606, %v6859
    %v6904 = vadd.f32 %v6607, %v6863
    %v6905 = vadd.f32 %v6608, %v6867
    %v6906 = vadd.f32 %v6609, %v6871
    %v6907 = vadd.f32 %v6610, %v6875
    %v6908 = vadd.f32 %v6611, %v6847
    %v6909 = vadd.f32 %v6612, %v6851
    %v6910 = vadd.f32 %v6613, %v6855
    %v6911 = vadd.f32 %v6614, %v6859
    %v6912 = vadd.f32 %v6615, %v6863
    %v6913 = vadd.f32 %v6616, %v6867
    %v6914 = vadd.f32 %v6617, %v6871
    %v6915 = vadd.f32 %v6618, %v6875
    %v6916 = vadd.f32 %v6619, %v6847
    %v6917 = vadd.f32 %v6620, %v6851
    %v6918 = vadd.f32 %v6621, %v6855
    %v6919 = vadd.f32 %v6622, %v6859
    %v6920 = vadd.f32 %v6623, %v6863
    %v6921 = vadd.f32 %v6624, %v6867
    %v6922 = vadd.f32 %v6625, %v6871
    %v6923 = vadd.f32 %v6626, %v6875
    %v6924 = vadd.f32 %v6627, %v6847
    %v6925 = vadd.f32 %v6628, %v6851
    %v6926 = vadd.f32 %v6629, %v6855
    %v6927 = vadd.f32 %v6630, %v6859
    %v6928 = vadd.f32 %v6631, %v6863
    %v6929 = vadd.f32 %v6632, %v6867
    %v6930 = vadd.f32 %v6633, %v6871
    %v6931 = vadd.f32 %v6634, %v6875
    %v6932 = vadd.f32 %v6635, %v6847
    %v6933 = vadd.f32 %v6636, %v6851
    %v6934 = vadd.f32 %v6637, %v6855
    %v6935 = vadd.f32 %v6638, %v6859
    %v6936 = vadd.f32 %v6639, %v6863
    %v6937 = vadd.f32 %v6640, %v6867
    %v6938 = vadd.f32 %v6641, %v6871
    %v6939 = vadd.f32 %v6642, %v6875
    %v6940 = vadd.f32 %v6643, %v6847
    %v6941 = vadd.f32 %v6644, %v6851
    %v6942 = vadd.f32 %v6645, %v6855
    %v6943 = vadd.f32 %v6646, %v6859
    %v6944 = vadd.f32 %v6647, %v6863
    %v6945 = vadd.f32 %v6648, %v6867
    %v6946 = vadd.f32 %v6649, %v6871
    %v6947 = vadd.f32 %v6650, %v6875
    %v6948 = vadd.f32 %v6651, %v6847
    %v6949 = vadd.f32 %v6652, %v6851
    %v6950 = vadd.f32 %v6653, %v6855
    %v6951 = vadd.f32 %v6654, %v6859
    %v6952 = vadd.f32 %v6655, %v6863
    %v6953 = vadd.f32 %v6656, %v6867
    %v6954 = vadd.f32 %v6657, %v6871
    %v6955 = vadd.f32 %v6658, %v6875
    %v6956 = vadd.f32 %v6659, %v6847
    %v6957 = vadd.f32 %v6660, %v6851
    %v6958 = vadd.f32 %v6661, %v6855
    %v6959 = vadd.f32 %v6662, %v6859
    %v6960 = vadd.f32 %v6663, %v6863
    %v6961 = vadd.f32 %v6664, %v6867
    %v6962 = vadd.f32 %v6665, %v6871
    %v6963 = vadd.f32 %v6666, %v6875
    %v6964 = vadd.f32 %v6667, %v6847
    %v6965 = vadd.f32 %v6668, %v6851
    %v6966 = vadd.f32 %v6669, %v6855
    %v6967 = vadd.f32 %v6670, %v6859
    %v6968 = vadd.f32 %v6671, %v6863
    %v6969 = vadd.f32 %v6672, %v6867
    %v6970 = vadd.f32 %v6673, %v6871
    %v6971 = vadd.f32 %v6674, %v6875
    %v6972 = vadd.f32 %v6675, %v6847
    %v6973 = vadd.f32 %v6676, %v6851
    %v6974 = vadd.f32 %v6677, %v6855
    %v6975 = vadd.f32 %v6678, %v6859
    %v6976 = vadd.f32 %v6679, %v6863
    %v6977 = vadd.f32 %v6680, %v6867
    %v6978 = vadd.f32 %v6681, %v6871
    %v6979 = vadd.f32 %v6682, %v6875
    %v6980 = vadd.f32 %v6683, %v6847
    %v6981 = vadd.f32 %v6684, %v6851
    %v6982 = vadd.f32 %v6685, %v6855
    %v6983 = vadd.f32 %v6686, %v6859
    %v6984 = vadd.f32 %v6687, %v6863
    %v6985 = vadd.f32 %v6688, %v6867
    %v6986 = vadd.f32 %v6689, %v6871
    %v6987 = vadd.f32 %v6690, %v6875
    %v6988 = vadd.f32 %v6691, %v6847
    %v6989 = vadd.f32 %v6692, %v6851
    %v6990 = vadd.f32 %v6693, %v6855
    %v6991 = vadd.f32 %v6694, %v6859
    %v6992 = vadd.f32 %v6695, %v6863
    %v6993 = vadd.f32 %v6696, %v6867
    %v6994 = vadd.f32 %v6697, %v6871
    %v6995 = vadd.f32 %v6698, %v6875
    %v6996 = vadd.f32 %v6699, %v6847
    %v6997 = vadd.f32 %v6700, %v6851
    %v6998 = vadd.f32 %v6701, %v6855
    %v6999 = vadd.f32 %v6702, %v6859
    %v7000 = vadd.f32 %v6703, %v6863
    %v7001 = vadd.f32 %v6704, %v6867
    %v7002 = vadd.f32 %v6705, %v6871
    %v7003 = vadd.f32 %v6706, %v6875
    %v7004 = vadd.f32 %v6707, %v6847
    %v7005 = vadd.f32 %v6708, %v6851
    %v7006 = vadd.f32 %v6709, %v6855
    %v7007 = vadd.f32 %v6710, %v6859
    %v7008 = vadd.f32 %v6711, %v6863
    %v7009 = vadd.f32 %v6712, %v6867
    %v7010 = vadd.f32 %v6713, %v6871
    %v7011 = vadd.f32 %v6714, %v6875
    %v7012 = vadd.f32 %v6715, %v6847
    %v7013 = vadd.f32 %v6716, %v6851
    %v7014 = vadd.f32 %v6717, %v6855
    %v7015 = vadd.f32 %v6718, %v6859
    %v7016 = vadd.f32 %v6719, %v6863
    %v7017 = vadd.f32 %v6720, %v6867
    %v7018 = vadd.f32 %v6721, %v6871
    %v7019 = vadd.f32 %v6722, %v6875
    %v7020 = vadd.f32 %v6723, %v6847
    %v7021 = vadd.f32 %v6724, %v6851
    %v7022 = vadd.f32 %v6725, %v6855
    %v7023 = vadd.f32 %v6726, %v6859
    %v7024 = vadd.f32 %v6727, %v6863
    %v7025 = vadd.f32 %v6728, %v6867
    %v7026 = vadd.f32 %v6729, %v6871
    %v7027 = vadd.f32 %v6730, %v6875
    %v7028 = vadd.f32 %v6731, %v6847
    %v7029 = vadd.f32 %v6732, %v6851
    %v7030 = vadd.f32 %v6733, %v6855
    %v7031 = vadd.f32 %v6734, %v6859
    %v7032 = vadd.f32 %v6735, %v6863
    %v7033 = vadd.f32 %v6736, %v6867
    %v7034 = vadd.f32 %v6737, %v6871
    %v7035 = vadd.f32 %v6738, %v6875
    %v7036 = vadd.f32 %v6739, %v6847
    %v7037 = vadd.f32 %v6740, %v6851
    %v7038 = vadd.f32 %v6741, %v6855
    %v7039 = vadd.f32 %v6742, %v6859
    %v7040 = vadd.f32 %v6743, %v6863
    %v7041 = vadd.f32 %v6744, %v6867
    %v7042 = vadd.f32 %v6745, %v6871
    %v7043 = vadd.f32 %v6746, %v6875
    %v7044 = vadd.f32 %v6747, %v6847
    %v7045 = vadd.f32 %v6748, %v6851
    %v7046 = vadd.f32 %v6749, %v6855
    %v7047 = vadd.f32 %v6750, %v6859
    %v7048 = vadd.f32 %v6751, %v6863
    %v7049 = vadd.f32 %v6752, %v6867
    %v7050 = vadd.f32 %v6753, %v6871
    %v7051 = vadd.f32 %v6754, %v6875
    %v7052 = vadd.f32 %v6755, %v6847
    %v7053 = vadd.f32 %v6756, %v6851
    %v7054 = vadd.f32 %v6757, %v6855
    %v7055 = vadd.f32 %v6758, %v6859
    %v7056 = vadd.f32 %v6759, %v6863
    %v7057 = vadd.f32 %v6760, %v6867
    %v7058 = vadd.f32 %v6761, %v6871
    %v7059 = vadd.f32 %v6762, %v6875
    %v7060 = vadd.f32 %v6763, %v6847
    %v7061 = vadd.f32 %v6764, %v6851
    %v7062 = vadd.f32 %v6765, %v6855
    %v7063 = vadd.f32 %v6766, %v6859
    %v7064 = vadd.f32 %v6767, %v6863
    %v7065 = vadd.f32 %v6768, %v6867
    %v7066 = vadd.f32 %v6769, %v6871
    %v7067 = vadd.f32 %v6770, %v6875
    %v7068 = vadd.f32 %v6771, %v6847
    %v7069 = vadd.f32 %v6772, %v6851
    %v7070 = vadd.f32 %v6773, %v6855
    %v7071 = vadd.f32 %v6774, %v6859
    %v7072 = vadd.f32 %v6775, %v6863
    %v7073 = vadd.f32 %v6776, %v6867
    %v7074 = vadd.f32 %v6777, %v6871
    %v7075 = vadd.f32 %v6778, %v6875
    %v7076 = vadd.f32 %v6779, %v6847
    %v7077 = vadd.f32 %v6780, %v6851
    %v7078 = vadd.f32 %v6781, %v6855
    %v7079 = vadd.f32 %v6782, %v6859
    %v7080 = vadd.f32 %v6783, %v6863
    %v7081 = vadd.f32 %v6784, %v6867
    %v7082 = vadd.f32 %v6785, %v6871
    %v7083 = vadd.f32 %v6786, %v6875
    %v7084 = vadd.f32 %v6787, %v6847
    %v7085 = vadd.f32 %v6788, %v6851
    %v7086 = vadd.f32 %v6789, %v6855
    %v7087 = vadd.f32 %v6790, %v6859
    %v7088 = vadd.f32 %v6791, %v6863
    %v7089 = vadd.f32 %v6792, %v6867
    %v7090 = vadd.f32 %v6793, %v6871
    %v7091 = vadd.f32 %v6794, %v6875
    %v7092 = vadd.f32 %v6795, %v6847
    %v7093 = vadd.f32 %v6796, %v6851
    %v7094 = vadd.f32 %v6797, %v6855
    %v7095 = vadd.f32 %v6798, %v6859
    %v7096 = vadd.f32 %v6799, %v6863
    %v7097 = vadd.f32 %v6800, %v6867
    %v7098 = vadd.f32 %v6801, %v6871
    %v7099 = vadd.f32 %v6802, %v6875
    %v7100 = vadd.f32 %v6803, %v6847
    %v7101 = vadd.f32 %v6804, %v6851
    %v7102 = vadd.f32 %v6805, %v6855
    %v7103 = vadd.f32 %v6806, %v6859
    %v7104 = vadd.f32 %v6807, %v6863
    %v7105 = vadd.f32 %v6808, %v6867
    %v7106 = vadd.f32 %v6809, %v6871
    %v7107 = vadd.f32 %v6810, %v6875
    %v7108 = vadd.f32 %v6811, %v6847
    %v7109 = vadd.f32 %v6812, %v6851
    %v7110 = vadd.f32 %v6813, %v6855
    %v7111 = vadd.f32 %v6814, %v6859
    %v7112 = vadd.f32 %v6815, %v6863
    %v7113 = vadd.f32 %v6816, %v6867
    %v7114 = vadd.f32 %v6817, %v6871
    %v7115 = vadd.f32 %v6818, %v6875
    %v7116 = vadd.f32 %v6819, %v6847
    %v7117 = vadd.f32 %v6820, %v6851
    %v7118 = vadd.f32 %v6821, %v6855
    %v7119 = vadd.f32 %v6822, %v6859
    %v7120 = vadd.f32 %v6823, %v6863
    %v7121 = vadd.f32 %v6824, %v6867
    %v7122 = vadd.f32 %v6825, %v6871
    %v7123 = vadd.f32 %v6826, %v6875
    %v7124 = vadd.f32 %v6827, %v6847
    %v7125 = vadd.f32 %v6828, %v6851
    %v7126 = vadd.f32 %v6829, %v6855
    %v7127 = vadd.f32 %v6830, %v6859
    %v7128 = vadd.f32 %v6831, %v6863
    %v7129 = vadd.f32 %v6832, %v6867
    %v7130 = vadd.f32 %v6833, %v6871
    %v7131 = vadd.f32 %v6834, %v6875
    %v7132 = vadd.f32 %v6835, %v6847
    %v7133 = vadd.f32 %v6836, %v6851
    %v7134 = vadd.f32 %v6837, %v6855
    %v7135 = vadd.f32 %v6838, %v6859
    %v7136 = vadd.f32 %v6839, %v6863
    %v7137 = vadd.f32 %v6840, %v6867
    %v7138 = vadd.f32 %v6841, %v6871
    %v7139 = vadd.f32 %v6842, %v6875
    %v7140 = vmul.f32 %v6884, 0.2
    %v7141 = vmul.f32 %v6885, 0.2
    %v7142 = vmul.f32 %v6886, 0.2
    %v7143 = vmul.f32 %v6887, 0.2
    %v7144 = vmul.f32 %v6888, 0.2
    %v7145 = vmul.f32 %v6889, 0.2
    %v7146 = vmul.f32 %v6890, 0.2
    %v7147 = vmul.f32 %v6891, 0.2
    %v7148 = vmul.f32 %v6892, 0.2
    %v7149 = vmul.f32 %v6893, 0.2
    %v7150 = vmul.f32 %v6894, 0.2
    %v7151 = vmul.f32 %v6895, 0.2
    %v7152 = vmul.f32 %v6896, 0.2
    %v7153 = vmul.f32 %v6897, 0.2
    %v7154 = vmul.f32 %v6898, 0.2
    %v7155 = vmul.f32 %v6899, 0.2
    %v7156 = vmul.f32 %v6900, 0.2
    %v7157 = vmul.f32 %v6901, 0.2
    %v7158 = vmul.f32 %v6902, 0.2
    %v7159 = vmul.f32 %v6903, 0.2
    %v7160 = vmul.f32 %v6904, 0.2
    %v7161 = vmul.f32 %v6905, 0.2
    %v7162 = vmul.f32 %v6906, 0.2
    %v7163 = vmul.f32 %v6907, 0.2
    %v7164 = vmul.f32 %v6908, 0.2
    %v7165 = vmul.f32 %v6909, 0.2
    %v7166 = vmul.f32 %v6910, 0.2
    %v7167 = vmul.f32 %v6911, 0.2
    %v7168 = vmul.f32 %v6912, 0.2
    %v7169 = vmul.f32 %v6913, 0.2
    %v7170 = vmul.f32 %v6914, 0.2
    %v7171 = vmul.f32 %v6915, 0.2
    %v7172 = vmul.f32 %v6916, 0.2
    %v7173 = vmul.f32 %v6917, 0.2
    %v7174 = vmul.f32 %v6918, 0.2
    %v7175 = vmul.f32 %v6919, 0.2
    %v7176 = vmul.f32 %v6920, 0.2
    %v7177 = vmul.f32 %v6921, 0.2
    %v7178 = vmul.f32 %v6922, 0.2
    %v7179 = vmul.f32 %v6923, 0.2
    %v7180 = vmul.f32 %v6924, 0.2
    %v7181 = vmul.f32 %v6925, 0.2
    %v7182 = vmul.f32 %v6926, 0.2
    %v7183 = vmul.f32 %v6927, 0.2
    %v7184 = vmul.f32 %v6928, 0.2
    %v7185 = vmul.f32 %v6929, 0.2
    %v7186 = vmul.f32 %v6930, 0.2
    %v7187 = vmul.f32 %v6931, 0.2
    %v7188 = vmul.f32 %v6932, 0.2
    %v7189 = vmul.f32 %v6933, 0.2
    %v7190 = vmul.f32 %v6934, 0.2
    %v7191 = vmul.f32 %v6935, 0.2
    %v7192 = vmul.f32 %v6936, 0.2
    %v7193 = vmul.f32 %v6937, 0.2
    %v7194 = vmul.f32 %v6938, 0.2
    %v7195 = vmul.f32 %v6939, 0.2
    %v7196 = vmul.f32 %v6940, 0.2
    %v7197 = vmul.f32 %v6941, 0.2
    %v7198 = vmul.f32 %v6942, 0.2
    %v7199 = vmul.f32 %v6943, 0.2
    %v7200 = vmul.f32 %v6944, 0.2
    %v7201 = vmul.f32 %v6945, 0.2
    %v7202 = vmul.f32 %v6946, 0.2
    %v7203 = vmul.f32 %v6947, 0.2
    %v7204 = vmul.f32 %v6948, 0.2
    %v7205 = vmul.f32 %v6949, 0.2
    %v7206 = vmul.f32 %v6950, 0.2
    %v7207 = vmul.f32 %v6951, 0.2
    %v7208 = vmul.f32 %v6952, 0.2
    %v7209 = vmul.f32 %v6953, 0.2
    %v7210 = vmul.f32 %v6954, 0.2
    %v7211 = vmul.f32 %v6955, 0.2
    %v7212 = vmul.f32 %v6956, 0.2
    %v7213 = vmul.f32 %v6957, 0.2
    %v7214 = vmul.f32 %v6958, 0.2
    %v7215 = vmul.f32 %v6959, 0.2
    %v7216 = vmul.f32 %v6960, 0.2
    %v7217 = vmul.f32 %v6961, 0.2
    %v7218 = vmul.f32 %v6962, 0.2
    %v7219 = vmul.f32 %v6963, 0.2
    %v7220 = vmul.f32 %v6964, 0.2
    %v7221 = vmul.f32 %v6965, 0.2
    %v7222 = vmul.f32 %v6966, 0.2
    %v7223 = vmul.f32 %v6967, 0.2
    %v7224 = vmul.f32 %v6968, 0.2
    %v7225 = vmul.f32 %v6969, 0.2
    %v7226 = vmul.f32 %v6970, 0.2
    %v7227 = vmul.f32 %v6971, 0.2
    %v7228 = vmul.f32 %v6972, 0.2
    %v7229 = vmul.f32 %v6973, 0.2
    %v7230 = vmul.f32 %v6974, 0.2
    %v7231 = vmul.f32 %v6975, 0.2
    %v7232 = vmul.f32 %v6976, 0.2
    %v7233 = vmul.f32 %v6977, 0.2
    %v7234 = vmul.f32 %v6978, 0.2
    %v7235 = vmul.f32 %v6979, 0.2
    %v7236 = vmul.f32 %v6980, 0.2
    %v7237 = vmul.f32 %v6981, 0.2
    %v7238 = vmul.f32 %v6982, 0.2
    %v7239 = vmul.f32 %v6983, 0.2
    %v7240 = vmul.f32 %v6984, 0.2
    %v7241 = vmul.f32 %v6985, 0.2
    %v7242 = vmul.f32 %v6986, 0.2
    %v7243 = vmul.f32 %v6987, 0.2
    %v7244 = vmul.f32 %v6988, 0.2
    %v7245 = vmul.f32 %v6989, 0.2
    %v7246 = vmul.f32 %v6990, 0.2
    %v7247 = vmul.f32 %v6991, 0.2
    %v7248 = vmul.f32 %v6992, 0.2
    %v7249 = vmul.f32 %v6993, 0.2
    %v7250 = vmul.f32 %v6994, 0.2
    %v7251 = vmul.f32 %v6995, 0.2
    %v7252 = vmul.f32 %v6996, 0.2
    %v7253 = vmul.f32 %v6997, 0.2
    %v7254 = vmul.f32 %v6998, 0.2
    %v7255 = vmul.f32 %v6999, 0.2
    %v7256 = vmul.f32 %v7000, 0.2
    %v7257 = vmul.f32 %v7001, 0.2
    %v7258 = vmul.f32 %v7002, 0.2
    %v7259 = vmul.f32 %v7003, 0.2
    %v7260 = vmul.f32 %v7004, 0.2
    %v7261 = vmul.f32 %v7005, 0.2
    %v7262 = vmul.f32 %v7006, 0.2
    %v7263 = vmul.f32 %v7007, 0.2
    %v7264 = vmul.f32 %v7008, 0.2
    %v7265 = vmul.f32 %v7009, 0.2
    %v7266 = vmul.f32 %v7010, 0.2
    %v7267 = vmul.f32 %v7011, 0.2
    %v7268 = vmul.f32 %v7012, 0.2
    %v7269 = vmul.f32 %v7013, 0.2
    %v7270 = vmul.f32 %v7014, 0.2
    %v7271 = vmul.f32 %v7015, 0.2
    %v7272 = vmul.f32 %v7016, 0.2
    %v7273 = vmul.f32 %v7017, 0.2
    %v7274 = vmul.f32 %v7018, 0.2
    %v7275 = vmul.f32 %v7019, 0.2
    %v7276 = vmul.f32 %v7020, 0.2
    %v7277 = vmul.f32 %v7021, 0.2
    %v7278 = vmul.f32 %v7022, 0.2
    %v7279 = vmul.f32 %v7023, 0.2
    %v7280 = vmul.f32 %v7024, 0.2
    %v7281 = vmul.f32 %v7025, 0.2
    %v7282 = vmul.f32 %v7026, 0.2
    %v7283 = vmul.f32 %v7027, 0.2
    %v7284 = vmul.f32 %v7028, 0.2
    %v7285 = vmul.f32 %v7029, 0.2
    %v7286 = vmul.f32 %v7030, 0.2
    %v7287 = vmul.f32 %v7031, 0.2
    %v7288 = vmul.f32 %v7032, 0.2
    %v7289 = vmul.f32 %v7033, 0.2
    %v7290 = vmul.f32 %v7034, 0.2
    %v7291 = vmul.f32 %v7035, 0.2
    %v7292 = vmul.f32 %v7036, 0.2
    %v7293 = vmul.f32 %v7037, 0.2
    %v7294 = vmul.f32 %v7038, 0.2
    %v7295 = vmul.f32 %v7039, 0.2
    %v7296 = vmul.f32 %v7040, 0.2
    %v7297 = vmul.f32 %v7041, 0.2
    %v7298 = vmul.f32 %v7042, 0.2
    %v7299 = vmul.f32 %v7043, 0.2
    %v7300 = vmul.f32 %v7044, 0.2
    %v7301 = vmul.f32 %v7045, 0.2
    %v7302 = vmul.f32 %v7046, 0.2
    %v7303 = vmul.f32 %v7047, 0.2
    %v7304 = vmul.f32 %v7048, 0.2
    %v7305 = vmul.f32 %v7049, 0.2
    %v7306 = vmul.f32 %v7050, 0.2
    %v7307 = vmul.f32 %v7051, 0.2
    %v7308 = vmul.f32 %v7052, 0.2
    %v7309 = vmul.f32 %v7053, 0.2
    %v7310 = vmul.f32 %v7054, 0.2
    %v7311 = vmul.f32 %v7055, 0.2
    %v7312 = vmul.f32 %v7056, 0.2
    %v7313 = vmul.f32 %v7057, 0.2
    %v7314 = vmul.f32 %v7058, 0.2
    %v7315 = vmul.f32 %v7059, 0.2
    %v7316 = vmul.f32 %v7060, 0.2
    %v7317 = vmul.f32 %v7061, 0.2
    %v7318 = vmul.f32 %v7062, 0.2
    %v7319 = vmul.f32 %v7063, 0.2
    %v7320 = vmul.f32 %v7064, 0.2
    %v7321 = vmul.f32 %v7065, 0.2
    %v7322 = vmul.f32 %v7066, 0.2
    %v7323 = vmul.f32 %v7067, 0.2
    %v7324 = vmul.f32 %v7068, 0.2
    %v7325 = vmul.f32 %v7069, 0.2
    %v7326 = vmul.f32 %v7070, 0.2
    %v7327 = vmul.f32 %v7071, 0.2
    %v7328 = vmul.f32 %v7072, 0.2
    %v7329 = vmul.f32 %v7073, 0.2
    %v7330 = vmul.f32 %v7074, 0.2
    %v7331 = vmul.f32 %v7075, 0.2
    %v7332 = vmul.f32 %v7076, 0.2
    %v7333 = vmul.f32 %v7077, 0.2
    %v7334 = vmul.f32 %v7078, 0.2
    %v7335 = vmul.f32 %v7079, 0.2
    %v7336 = vmul.f32 %v7080, 0.2
    %v7337 = vmul.f32 %v7081, 0.2
    %v7338 = vmul.f32 %v7082, 0.2
    %v7339 = vmul.f32 %v7083, 0.2
    %v7340 = vmul.f32 %v7084, 0.2
    %v7341 = vmul.f32 %v7085, 0.2
    %v7342 = vmul.f32 %v7086, 0.2
    %v7343 = vmul.f32 %v7087, 0.2
    %v7344 = vmul.f32 %v7088, 0.2
    %v7345 = vmul.f32 %v7089, 0.2
    %v7346 = vmul.f32 %v7090, 0.2
    %v7347 = vmul.f32 %v7091, 0.2
    %v7348 = vmul.f32 %v7092, 0.2
    %v7349 = vmul.f32 %v7093, 0.2
    %v7350 = vmul.f32 %v7094, 0.2
    %v7351 = vmul.f32 %v7095, 0.2
    %v7352 = vmul.f32 %v7096, 0.2
    %v7353 = vmul.f32 %v7097, 0.2
    %v7354 = vmul.f32 %v7098, 0.2
    %v7355 = vmul.f32 %v7099, 0.2
    %v7356 = vmul.f32 %v7100, 0.2
    %v7357 = vmul.f32 %v7101, 0.2
    %v7358 = vmul.f32 %v7102, 0.2
    %v7359 = vmul.f32 %v7103, 0.2
    %v7360 = vmul.f32 %v7104, 0.2
    %v7361 = vmul.f32 %v7105, 0.2
    %v7362 = vmul.f32 %v7106, 0.2
    %v7363 = vmul.f32 %v7107, 0.2
    %v7364 = vmul.f32 %v7108, 0.2
    %v7365 = vmul.f32 %v7109, 0.2
    %v7366 = vmul.f32 %v7110, 0.2
    %v7367 = vmul.f32 %v7111, 0.2
    %v7368 = vmul.f32 %v7112, 0.2
    %v7369 = vmul.f32 %v7113, 0.2
    %v7370 = vmul.f32 %v7114, 0.2
    %v7371 = vmul.f32 %v7115, 0.2
    %v7372 = vmul.f32 %v7116, 0.2
    %v7373 = vmul.f32 %v7117, 0.2
    %v7374 = vmul.f32 %v7118, 0.2
    %v7375 = vmul.f32 %v7119, 0.2
    %v7376 = vmul.f32 %v7120, 0.2
    %v7377 = vmul.f32 %v7121, 0.2
    %v7378 = vmul.f32 %v7122, 0.2
    %v7379 = vmul.f32 %v7123, 0.2
    %v7380 = vmul.f32 %v7124, 0.2
    %v7381 = vmul.f32 %v7125, 0.2
    %v7382 = vmul.f32 %v7126, 0.2
    %v7383 = vmul.f32 %v7127, 0.2
    %v7384 = vmul.f32 %v7128, 0.2
    %v7385 = vmul.f32 %v7129, 0.2
    %v7386 = vmul.f32 %v7130, 0.2
    %v7387 = vmul.f32 %v7131, 0.2
    %v7388 = vmul.f32 %v7132, 0.2
    %v7389 = vmul.f32 %v7133, 0.2
    %v7390 = vmul.f32 %v7134, 0.2
    %v7391 = vmul.f32 %v7135, 0.2
    %v7392 = vmul.f32 %v7136, 0.2
    %v7393 = vmul.f32 %v7137, 0.2
    %v7394 = vmul.f32 %v7138, 0.2
    %v7395 = vmul.f32 %v7139, 0.2
    %v7396 = vmax.f32 %v6884, %v7140
    %v7397 = vmax.f32 %v6885, %v7141
    %v7398 = vmax.f32 %v6886, %v7142
    %v7399 = vmax.f32 %v6887, %v7143
    %v7400 = vmax.f32 %v6888, %v7144
    %v7401 = vmax.f32 %v6889, %v7145
    %v7402 = vmax.f32 %v6890, %v7146
    %v7403 = vmax.f32 %v6891, %v7147
    %v7404 = vmax.f32 %v6892, %v7148
    %v7405 = vmax.f32 %v6893, %v7149
    %v7406 = vmax.f32 %v6894, %v7150
    %v7407 = vmax.f32 %v6895, %v7151
    %v7408 = vmax.f32 %v6896, %v7152
    %v7409 = vmax.f32 %v6897, %v7153
    %v7410 = vmax.f32 %v6898, %v7154
    %v7411 = vmax.f32 %v6899, %v7155
    %v7412 = vmax.f32 %v6900, %v7156
    %v7413 = vmax.f32 %v6901, %v7157
    %v7414 = vmax.f32 %v6902, %v7158
    %v7415 = vmax.f32 %v6903, %v7159
    %v7416 = vmax.f32 %v6904, %v7160
    %v7417 = vmax.f32 %v6905, %v7161
    %v7418 = vmax.f32 %v6906, %v7162
    %v7419 = vmax.f32 %v6907, %v7163
    %v7420 = vmax.f32 %v6908, %v7164
    %v7421 = vmax.f32 %v6909, %v7165
    %v7422 = vmax.f32 %v6910, %v7166
    %v7423 = vmax.f32 %v6911, %v7167
    %v7424 = vmax.f32 %v6912, %v7168
    %v7425 = vmax.f32 %v6913, %v7169
    %v7426 = vmax.f32 %v6914, %v7170
    %v7427 = vmax.f32 %v6915, %v7171
    %v7428 = vmax.f32 %v6916, %v7172
    %v7429 = vmax.f32 %v6917, %v7173
    %v7430 = vmax.f32 %v6918, %v7174
    %v7431 = vmax.f32 %v6919, %v7175
    %v7432 = vmax.f32 %v6920, %v7176
    %v7433 = vmax.f32 %v6921, %v7177
    %v7434 = vmax.f32 %v6922, %v7178
    %v7435 = vmax.f32 %v6923, %v7179
    %v7436 = vmax.f32 %v6924, %v7180
    %v7437 = vmax.f32 %v6925, %v7181
    %v7438 = vmax.f32 %v6926, %v7182
    %v7439 = vmax.f32 %v6927, %v7183
    %v7440 = vmax.f32 %v6928, %v7184
    %v7441 = vmax.f32 %v6929, %v7185
    %v7442 = vmax.f32 %v6930, %v7186
    %v7443 = vmax.f32 %v6931, %v7187
    %v7444 = vmax.f32 %v6932, %v7188
    %v7445 = vmax.f32 %v6933, %v7189
    %v7446 = vmax.f32 %v6934, %v7190
    %v7447 = vmax.f32 %v6935, %v7191
    %v7448 = vmax.f32 %v6936, %v7192
    %v7449 = vmax.f32 %v6937, %v7193
    %v7450 = vmax.f32 %v6938, %v7194
    %v7451 = vmax.f32 %v6939, %v7195
    %v7452 = vmax.f32 %v6940, %v7196
    %v7453 = vmax.f32 %v6941, %v7197
    %v7454 = vmax.f32 %v6942, %v7198
    %v7455 = vmax.f32 %v6943, %v7199
    %v7456 = vmax.f32 %v6944, %v7200
    %v7457 = vmax.f32 %v6945, %v7201
    %v7458 = vmax.f32 %v6946, %v7202
    %v7459 = vmax.f32 %v6947, %v7203
    %v7460 = vmax.f32 %v6948, %v7204
    %v7461 = vmax.f32 %v6949, %v7205
    %v7462 = vmax.f32 %v6950, %v7206
    %v7463 = vmax.f32 %v6951, %v7207
    %v7464 = vmax.f32 %v6952, %v7208
    %v7465 = vmax.f32 %v6953, %v7209
    %v7466 = vmax.f32 %v6954, %v7210
    %v7467 = vmax.f32 %v6955, %v7211
    %v7468 = vmax.f32 %v6956, %v7212
    %v7469 = vmax.f32 %v6957, %v7213
    %v7470 = vmax.f32 %v6958, %v7214
    %v7471 = vmax.f32 %v6959, %v7215
    %v7472 = vmax.f32 %v6960, %v7216
    %v7473 = vmax.f32 %v6961, %v7217
    %v7474 = vmax.f32 %v6962, %v7218
    %v7475 = vmax.f32 %v6963, %v7219
    %v7476 = vmax.f32 %v6964, %v7220
    %v7477 = vmax.f32 %v6965, %v7221
    %v7478 = vmax.f32 %v6966, %v7222
    %v7479 = vmax.f32 %v6967, %v7223
    %v7480 = vmax.f32 %v6968, %v7224
    %v7481 = vmax.f32 %v6969, %v7225
    %v7482 = vmax.f32 %v6970, %v7226
    %v7483 = vmax.f32 %v6971, %v7227
    %v7484 = vmax.f32 %v6972, %v7228
    %v7485 = vmax.f32 %v6973, %v7229
    %v7486 = vmax.f32 %v6974, %v7230
    %v7487 = vmax.f32 %v6975, %v7231
    %v7488 = vmax.f32 %v6976, %v7232
    %v7489 = vmax.f32 %v6977, %v7233
    %v7490 = vmax.f32 %v6978, %v7234
    %v7491 = vmax.f32 %v6979, %v7235
    %v7492 = vmax.f32 %v6980, %v7236
    %v7493 = vmax.f32 %v6981, %v7237
    %v7494 = vmax.f32 %v6982, %v7238
    %v7495 = vmax.f32 %v6983, %v7239
    %v7496 = vmax.f32 %v6984, %v7240
    %v7497 = vmax.f32 %v6985, %v7241
    %v7498 = vmax.f32 %v6986, %v7242
    %v7499 = vmax.f32 %v6987, %v7243
    %v7500 = vmax.f32 %v6988, %v7244
    %v7501 = vmax.f32 %v6989, %v7245
    %v7502 = vmax.f32 %v6990, %v7246
    %v7503 = vmax.f32 %v6991, %v7247
    %v7504 = vmax.f32 %v6992, %v7248
    %v7505 = vmax.f32 %v6993, %v7249
    %v7506 = vmax.f32 %v6994, %v7250
    %v7507 = vmax.f32 %v6995, %v7251
    %v7508 = vmax.f32 %v6996, %v7252
    %v7509 = vmax.f32 %v6997, %v7253
    %v7510 = vmax.f32 %v6998, %v7254
    %v7511 = vmax.f32 %v6999, %v7255
    %v7512 = vmax.f32 %v7000, %v7256
    %v7513 = vmax.f32 %v7001, %v7257
    %v7514 = vmax.f32 %v7002, %v7258
    %v7515 = vmax.f32 %v7003, %v7259
    %v7516 = vmax.f32 %v7004, %v7260
    %v7517 = vmax.f32 %v7005, %v7261
    %v7518 = vmax.f32 %v7006, %v7262
    %v7519 = vmax.f32 %v7007, %v7263
    %v7520 = vmax.f32 %v7008, %v7264
    %v7521 = vmax.f32 %v7009, %v7265
    %v7522 = vmax.f32 %v7010, %v7266
    %v7523 = vmax.f32 %v7011, %v7267
    %v7524 = vmax.f32 %v7012, %v7268
    %v7525 = vmax.f32 %v7013, %v7269
    %v7526 = vmax.f32 %v7014, %v7270
    %v7527 = vmax.f32 %v7015, %v7271
    %v7528 = vmax.f32 %v7016, %v7272
    %v7529 = vmax.f32 %v7017, %v7273
    %v7530 = vmax.f32 %v7018, %v7274
    %v7531 = vmax.f32 %v7019, %v7275
    %v7532 = vmax.f32 %v7020, %v7276
    %v7533 = vmax.f32 %v7021, %v7277
    %v7534 = vmax.f32 %v7022, %v7278
    %v7535 = vmax.f32 %v7023, %v7279
    %v7536 = vmax.f32 %v7024, %v7280
    %v7537 = vmax.f32 %v7025, %v7281
    %v7538 = vmax.f32 %v7026, %v7282
    %v7539 = vmax.f32 %v7027, %v7283
    %v7540 = vmax.f32 %v7028, %v7284
    %v7541 = vmax.f32 %v7029, %v7285
    %v7542 = vmax.f32 %v7030, %v7286
    %v7543 = vmax.f32 %v7031, %v7287
    %v7544 = vmax.f32 %v7032, %v7288
    %v7545 = vmax.f32 %v7033, %v7289
    %v7546 = vmax.f32 %v7034, %v7290
    %v7547 = vmax.f32 %v7035, %v7291
    %v7548 = vmax.f32 %v7036, %v7292
    %v7549 = vmax.f32 %v7037, %v7293
    %v7550 = vmax.f32 %v7038, %v7294
    %v7551 = vmax.f32 %v7039, %v7295
    %v7552 = vmax.f32 %v7040, %v7296
    %v7553 = vmax.f32 %v7041, %v7297
    %v7554 = vmax.f32 %v7042, %v7298
    %v7555 = vmax.f32 %v7043, %v7299
    %v7556 = vmax.f32 %v7044, %v7300
    %v7557 = vmax.f32 %v7045, %v7301
    %v7558 = vmax.f32 %v7046, %v7302
    %v7559 = vmax.f32 %v7047, %v7303
    %v7560 = vmax.f32 %v7048, %v7304
    %v7561 = vmax.f32 %v7049, %v7305
    %v7562 = vmax.f32 %v7050, %v7306
    %v7563 = vmax.f32 %v7051, %v7307
    %v7564 = vmax.f32 %v7052, %v7308
    %v7565 = vmax.f32 %v7053, %v7309
    %v7566 = vmax.f32 %v7054, %v7310
    %v7567 = vmax.f32 %v7055, %v7311
    %v7568 = vmax.f32 %v7056, %v7312
    %v7569 = vmax.f32 %v7057, %v7313
    %v7570 = vmax.f32 %v7058, %v7314
    %v7571 = vmax.f32 %v7059, %v7315
    %v7572 = vmax.f32 %v7060, %v7316
    %v7573 = vmax.f32 %v7061, %v7317
    %v7574 = vmax.f32 %v7062, %v7318
    %v7575 = vmax.f32 %v7063, %v7319
    %v7576 = vmax.f32 %v7064, %v7320
    %v7577 = vmax.f32 %v7065, %v7321
    %v7578 = vmax.f32 %v7066, %v7322
    %v7579 = vmax.f32 %v7067, %v7323
    %v7580 = vmax.f32 %v7068, %v7324
    %v7581 = vmax.f32 %v7069, %v7325
    %v7582 = vmax.f32 %v7070, %v7326
    %v7583 = vmax.f32 %v7071, %v7327
    %v7584 = vmax.f32 %v7072, %v7328
    %v7585 = vmax.f32 %v7073, %v7329
    %v7586 = vmax.f32 %v7074, %v7330
    %v7587 = vmax.f32 %v7075, %v7331
    %v7588 = vmax.f32 %v7076, %v7332
    %v7589 = vmax.f32 %v7077, %v7333
    %v7590 = vmax.f32 %v7078, %v7334
    %v7591 = vmax.f32 %v7079, %v7335
    %v7592 = vmax.f32 %v7080, %v7336
    %v7593 = vmax.f32 %v7081, %v7337
    %v7594 = vmax.f32 %v7082, %v7338
    %v7595 = vmax.f32 %v7083, %v7339
    %v7596 = vmax.f32 %v7084, %v7340
    %v7597 = vmax.f32 %v7085, %v7341
    %v7598 = vmax.f32 %v7086, %v7342
    %v7599 = vmax.f32 %v7087, %v7343
    %v7600 = vmax.f32 %v7088, %v7344
    %v7601 = vmax.f32 %v7089, %v7345
    %v7602 = vmax.f32 %v7090, %v7346
    %v7603 = vmax.f32 %v7091, %v7347
    %v7604 = vmax.f32 %v7092, %v7348
    %v7605 = vmax.f32 %v7093, %v7349
    %v7606 = vmax.f32 %v7094, %v7350
    %v7607 = vmax.f32 %v7095, %v7351
    %v7608 = vmax.f32 %v7096, %v7352
    %v7609 = vmax.f32 %v7097, %v7353
    %v7610 = vmax.f32 %v7098, %v7354
    %v7611 = vmax.f32 %v7099, %v7355
    %v7612 = vmax.f32 %v7100, %v7356
    %v7613 = vmax.f32 %v7101, %v7357
    %v7614 = vmax.f32 %v7102, %v7358
    %v7615 = vmax.f32 %v7103, %v7359
    %v7616 = vmax.f32 %v7104, %v7360
    %v7617 = vmax.f32 %v7105, %v7361
    %v7618 = vmax.f32 %v7106, %v7362
    %v7619 = vmax.f32 %v7107, %v7363
    %v7620 = vmax.f32 %v7108, %v7364
    %v7621 = vmax.f32 %v7109, %v7365
    %v7622 = vmax.f32 %v7110, %v7366
    %v7623 = vmax.f32 %v7111, %v7367
    %v7624 = vmax.f32 %v7112, %v7368
    %v7625 = vmax.f32 %v7113, %v7369
    %v7626 = vmax.f32 %v7114, %v7370
    %v7627 = vmax.f32 %v7115, %v7371
    %v7628 = vmax.f32 %v7116, %v7372
    %v7629 = vmax.f32 %v7117, %v7373
    %v7630 = vmax.f32 %v7118, %v7374
    %v7631 = vmax.f32 %v7119, %v7375
    %v7632 = vmax.f32 %v7120, %v7376
    %v7633 = vmax.f32 %v7121, %v7377
    %v7634 = vmax.f32 %v7122, %v7378
    %v7635 = vmax.f32 %v7123, %v7379
    %v7636 = vmax.f32 %v7124, %v7380
    %v7637 = vmax.f32 %v7125, %v7381
    %v7638 = vmax.f32 %v7126, %v7382
    %v7639 = vmax.f32 %v7127, %v7383
    %v7640 = vmax.f32 %v7128, %v7384
    %v7641 = vmax.f32 %v7129, %v7385
    %v7642 = vmax.f32 %v7130, %v7386
    %v7643 = vmax.f32 %v7131, %v7387
    %v7644 = vmax.f32 %v7132, %v7388
    %v7645 = vmax.f32 %v7133, %v7389
    %v7646 = vmax.f32 %v7134, %v7390
    %v7647 = vmax.f32 %v7135, %v7391
    %v7648 = vmax.f32 %v7136, %v7392
    %v7649 = vmax.f32 %v7137, %v7393
    %v7650 = vmax.f32 %v7138, %v7394
    %v7651 = vmax.f32 %v7139, %v7395
    %s7652 = smul.u32 4, 128
    %s7653 = smul.u32 %s7652, 1
    %s7654 = sshll.u32 %s7653, 4
    %7655 = dma.done %s813, %s7654
    %v7656 = vld [vmem:[#allocation5] sm:$0xff]
    %v7657 = vld [vmem:[#allocation5 + $0x8] sm:$0xff]
    %v7658 = vld [vmem:[#allocation5 + $0x10] sm:$0xff]
    %v7659 = vld [vmem:[#allocation5 + $0x18] sm:$0xff]
    %v7660 = vld [vmem:[#allocation5 + $0x20] sm:$0xff]
    %v7661 = vld [vmem:[#allocation5 + $0x28] sm:$0xff]
    %v7662 = vld [vmem:[#allocation5 + $0x30] sm:$0xff]
    %v7663 = vld [vmem:[#allocation5 + $0x38] sm:$0xff]
    %v7664 = vld [vmem:[#allocation5 + $0x40] sm:$0xff]
    %v7665 = vld [vmem:[#allocation5 + $0x48] sm:$0xff]
    %v7666 = vld [vmem:[#allocation5 + $0x50] sm:$0xff]
    %v7667 = vld [vmem:[#allocation5 + $0x58] sm:$0xff]
    %v7668 = vld [vmem:[#allocation5 + $0x60] sm:$0xff]
    %v7669 = vld [vmem:[#allocation5 + $0x68] sm:$0xff]
    %v7670 = vld [vmem:[#allocation5 + $0x70] sm:$0xff]
    %v7671 = vld [vmem:[#allocation5 + $0x78] sm:$0xff]
    %v7672 = vld [vmem:[#allocation5 + $0x80] sm:$0xff]
    %v7673 = vld [vmem:[#allocation5 + $0x88] sm:$0xff]
    %v7674 = vld [vmem:[#allocation5 + $0x90] sm:$0xff]
    %v7675 = vld [vmem:[#allocation5 + $0x98] sm:$0xff]
    %v7676 = vld [vmem:[#allocation5 + $0xa0] sm:$0xff]
    %v7677 = vld [vmem:[#allocation5 + $0xa8] sm:$0xff]
    %v7678 = vld [vmem:[#allocation5 + $0xb0] sm:$0xff]
    %v7679 = vld [vmem:[#allocation5 + $0xb8] sm:$0xff]
    %v7680 = vld [vmem:[#allocation5 + $0xc0] sm:$0xff]
    %v7681 = vld [vmem:[#allocation5 + $0xc8] sm:$0xff]
    %v7682 = vld [vmem:[#allocation5 + $0xd0] sm:$0xff]
    %v7683 = vld [vmem:[#allocation5 + $0xd8] sm:$0xff]
    %v7684 = vld [vmem:[#allocation5 + $0xe0] sm:$0xff]
    %v7685 = vld [vmem:[#allocation5 + $0xe8] sm:$0xff]
    %v7686 = vld [vmem:[#allocation5 + $0xf0] sm:$0xff]
    %v7687 = vld [vmem:[#allocation5 + $0xf8] sm:$0xff]
    %v7688 = vld [vmem:[#allocation5 + $0x100] sm:$0xff]
    %v7689 = vld [vmem:[#allocation5 + $0x108] sm:$0xff]
    %v7690 = vld [vmem:[#allocation5 + $0x110] sm:$0xff]
    %v7691 = vld [vmem:[#allocation5 + $0x118] sm:$0xff]
    %v7692 = vld [vmem:[#allocation5 + $0x120] sm:$0xff]
    %v7693 = vld [vmem:[#allocation5 + $0x128] sm:$0xff]
    %v7694 = vld [vmem:[#allocation5 + $0x130] sm:$0xff]
    %v7695 = vld [vmem:[#allocation5 + $0x138] sm:$0xff]
    %v7696 = vld [vmem:[#allocation5 + $0x140] sm:$0xff]
    %v7697 = vld [vmem:[#allocation5 + $0x148] sm:$0xff]
    %v7698 = vld [vmem:[#allocation5 + $0x150] sm:$0xff]
    %v7699 = vld [vmem:[#allocation5 + $0x158] sm:$0xff]
    %v7700 = vld [vmem:[#allocation5 + $0x160] sm:$0xff]
    %v7701 = vld [vmem:[#allocation5 + $0x168] sm:$0xff]
    %v7702 = vld [vmem:[#allocation5 + $0x170] sm:$0xff]
    %v7703 = vld [vmem:[#allocation5 + $0x178] sm:$0xff]
    %v7704 = vld [vmem:[#allocation5 + $0x180] sm:$0xff]
    %v7705 = vld [vmem:[#allocation5 + $0x188] sm:$0xff]
    %v7706 = vld [vmem:[#allocation5 + $0x190] sm:$0xff]
    %v7707 = vld [vmem:[#allocation5 + $0x198] sm:$0xff]
    %v7708 = vld [vmem:[#allocation5 + $0x1a0] sm:$0xff]
    %v7709 = vld [vmem:[#allocation5 + $0x1a8] sm:$0xff]
    %v7710 = vld [vmem:[#allocation5 + $0x1b0] sm:$0xff]
    %v7711 = vld [vmem:[#allocation5 + $0x1b8] sm:$0xff]
    %v7712 = vld [vmem:[#allocation5 + $0x1c0] sm:$0xff]
    %v7713 = vld [vmem:[#allocation5 + $0x1c8] sm:$0xff]
    %v7714 = vld [vmem:[#allocation5 + $0x1d0] sm:$0xff]
    %v7715 = vld [vmem:[#allocation5 + $0x1d8] sm:$0xff]
    %v7716 = vld [vmem:[#allocation5 + $0x1e0] sm:$0xff]
    %v7717 = vld [vmem:[#allocation5 + $0x1e8] sm:$0xff]
    %v7718 = vld [vmem:[#allocation5 + $0x1f0] sm:$0xff]
    %v7719 = vld [vmem:[#allocation5 + $0x1f8] sm:$0xff]
    %v7720 = vpack.c.bf16 %v7404, %v7396
    %v7721 = vpack.c.bf16 %v7405, %v7397
    %v7722 = vpack.c.bf16 %v7406, %v7398
    %v7723 = vpack.c.bf16 %v7407, %v7399
    %v7724 = vpack.c.bf16 %v7408, %v7400
    %v7725 = vpack.c.bf16 %v7409, %v7401
    %v7726 = vpack.c.bf16 %v7410, %v7402
    %v7727 = vpack.c.bf16 %v7411, %v7403
    %v7728 = vpack.c.bf16 %v7420, %v7412
    %v7729 = vpack.c.bf16 %v7421, %v7413
    %v7730 = vpack.c.bf16 %v7422, %v7414
    %v7731 = vpack.c.bf16 %v7423, %v7415
    %v7732 = vpack.c.bf16 %v7424, %v7416
    %v7733 = vpack.c.bf16 %v7425, %v7417
    %v7734 = vpack.c.bf16 %v7426, %v7418
    %v7735 = vpack.c.bf16 %v7427, %v7419
    %v7736 = vpack.c.bf16 %v7436, %v7428
    %v7737 = vpack.c.bf16 %v7437, %v7429
    %v7738 = vpack.c.bf16 %v7438, %v7430
    %v7739 = vpack.c.bf16 %v7439, %v7431
    %v7740 = vpack.c.bf16 %v7440, %v7432
    %v7741 = vpack.c.bf16 %v7441, %v7433
    %v7742 = vpack.c.bf16 %v7442, %v7434
    %v7743 = vpack.c.bf16 %v7443, %v7435
    %v7744 = vpack.c.bf16 %v7452, %v7444
    %v7745 = vpack.c.bf16 %v7453, %v7445
    %v7746 = vpack.c.bf16 %v7454, %v7446
    %v7747 = vpack.c.bf16 %v7455, %v7447
    %v7748 = vpack.c.bf16 %v7456, %v7448
    %v7749 = vpack.c.bf16 %v7457, %v7449
    %v7750 = vpack.c.bf16 %v7458, %v7450
    %v7751 = vpack.c.bf16 %v7459, %v7451
    %v7752 = vpack.c.bf16 %v7468, %v7460
    %v7753 = vpack.c.bf16 %v7469, %v7461
    %v7754 = vpack.c.bf16 %v7470, %v7462
    %v7755 = vpack.c.bf16 %v7471, %v7463
    %v7756 = vpack.c.bf16 %v7472, %v7464
    %v7757 = vpack.c.bf16 %v7473, %v7465
    %v7758 = vpack.c.bf16 %v7474, %v7466
    %v7759 = vpack.c.bf16 %v7475, %v7467
    %v7760 = vpack.c.bf16 %v7484, %v7476
    %v7761 = vpack.c.bf16 %v7485, %v7477
    %v7762 = vpack.c.bf16 %v7486, %v7478
    %v7763 = vpack.c.bf16 %v7487, %v7479
    %v7764 = vpack.c.bf16 %v7488, %v7480
    %v7765 = vpack.c.bf16 %v7489, %v7481
    %v7766 = vpack.c.bf16 %v7490, %v7482
    %v7767 = vpack.c.bf16 %v7491, %v7483
    %v7768 = vpack.c.bf16 %v7500, %v7492
    %v7769 = vpack.c.bf16 %v7501, %v7493
    %v7770 = vpack.c.bf16 %v7502, %v7494
    %v7771 = vpack.c.bf16 %v7503, %v7495
    %v7772 = vpack.c.bf16 %v7504, %v7496
    %v7773 = vpack.c.bf16 %v7505, %v7497
    %v7774 = vpack.c.bf16 %v7506, %v7498
    %v7775 = vpack.c.bf16 %v7507, %v7499
    %v7776 = vpack.c.bf16 %v7516, %v7508
    %v7777 = vpack.c.bf16 %v7517, %v7509
    %v7778 = vpack.c.bf16 %v7518, %v7510
    %v7779 = vpack.c.bf16 %v7519, %v7511
    %v7780 = vpack.c.bf16 %v7520, %v7512
    %v7781 = vpack.c.bf16 %v7521, %v7513
    %v7782 = vpack.c.bf16 %v7522, %v7514
    %v7783 = vpack.c.bf16 %v7523, %v7515
    %v7784 = vpack.c.bf16 %v7532, %v7524
    %v7785 = vpack.c.bf16 %v7533, %v7525
    %v7786 = vpack.c.bf16 %v7534, %v7526
    %v7787 = vpack.c.bf16 %v7535, %v7527
    %v7788 = vpack.c.bf16 %v7536, %v7528
    %v7789 = vpack.c.bf16 %v7537, %v7529
    %v7790 = vpack.c.bf16 %v7538, %v7530
    %v7791 = vpack.c.bf16 %v7539, %v7531
    %v7792 = vpack.c.bf16 %v7548, %v7540
    %v7793 = vpack.c.bf16 %v7549, %v7541
    %v7794 = vpack.c.bf16 %v7550, %v7542
    %v7795 = vpack.c.bf16 %v7551, %v7543
    %v7796 = vpack.c.bf16 %v7552, %v7544
    %v7797 = vpack.c.bf16 %v7553, %v7545
    %v7798 = vpack.c.bf16 %v7554, %v7546
    %v7799 = vpack.c.bf16 %v7555, %v7547
    %v7800 = vpack.c.bf16 %v7564, %v7556
    %v7801 = vpack.c.bf16 %v7565, %v7557
    %v7802 = vpack.c.bf16 %v7566, %v7558
    %v7803 = vpack.c.bf16 %v7567, %v7559
    %v7804 = vpack.c.bf16 %v7568, %v7560
    %v7805 = vpack.c.bf16 %v7569, %v7561
    %v7806 = vpack.c.bf16 %v7570, %v7562
    %v7807 = vpack.c.bf16 %v7571, %v7563
    %v7808 = vpack.c.bf16 %v7580, %v7572
    %v7809 = vpack.c.bf16 %v7581, %v7573
    %v7810 = vpack.c.bf16 %v7582, %v7574
    %v7811 = vpack.c.bf16 %v7583, %v7575
    %v7812 = vpack.c.bf16 %v7584, %v7576
    %v7813 = vpack.c.bf16 %v7585, %v7577
    %v7814 = vpack.c.bf16 %v7586, %v7578
    %v7815 = vpack.c.bf16 %v7587, %v7579
    %v7816 = vpack.c.bf16 %v7596, %v7588
    %v7817 = vpack.c.bf16 %v7597, %v7589
    %v7818 = vpack.c.bf16 %v7598, %v7590
    %v7819 = vpack.c.bf16 %v7599, %v7591
    %v7820 = vpack.c.bf16 %v7600, %v7592
    %v7821 = vpack.c.bf16 %v7601, %v7593
    %v7822 = vpack.c.bf16 %v7602, %v7594
    %v7823 = vpack.c.bf16 %v7603, %v7595
    %v7824 = vpack.c.bf16 %v7612, %v7604
    %v7825 = vpack.c.bf16 %v7613, %v7605
    %v7826 = vpack.c.bf16 %v7614, %v7606
    %v7827 = vpack.c.bf16 %v7615, %v7607
    %v7828 = vpack.c.bf16 %v7616, %v7608
    %v7829 = vpack.c.bf16 %v7617, %v7609
    %v7830 = vpack.c.bf16 %v7618, %v7610
    %v7831 = vpack.c.bf16 %v7619, %v7611
    %v7832 = vpack.c.bf16 %v7628, %v7620
    %v7833 = vpack.c.bf16 %v7629, %v7621
    %v7834 = vpack.c.bf16 %v7630, %v7622
    %v7835 = vpack.c.bf16 %v7631, %v7623
    %v7836 = vpack.c.bf16 %v7632, %v7624
    %v7837 = vpack.c.bf16 %v7633, %v7625
    %v7838 = vpack.c.bf16 %v7634, %v7626
    %v7839 = vpack.c.bf16 %v7635, %v7627
    %v7840 = vpack.c.bf16 %v7644, %v7636
    %v7841 = vpack.c.bf16 %v7645, %v7637
    %v7842 = vpack.c.bf16 %v7646, %v7638
    %v7843 = vpack.c.bf16 %v7647, %v7639
    %v7844 = vpack.c.bf16 %v7648, %v7640
    %v7845 = vpack.c.bf16 %v7649, %v7641
    %v7846 = vpack.c.bf16 %v7650, %v7642
    %v7847 = vpack.c.bf16 %v7651, %v7643
    %v7848 = vld [vmem:[%s13] sm:$0x1]
    %v7850 = vlaneseq
    %v7851 = vshrl.u32 %v7850, 7
    %v7852 = vsub.s32 0, %v7851
    %v7853 = vrot.slane %v7848, %v7852
    %7855 = vmatprep.subr.bf16.mxu0 0
    %7856 = vmatpush1.bf16.msra.mxu0 %v7656
    %7857 = vmatprep.subr.bf16.mxu0 0
    %7858 = vmatpush1.bf16.msra.mxu0 %v7657
    %7859 = vmatprep.subr.bf16.mxu0 0
    %7860 = vmatpush1.bf16.msra.mxu0 %v7658
    %7861 = vmatprep.subr.bf16.mxu0 0
    %7862 = vmatpush1.bf16.msra.mxu0 %v7659
    %7863 = vmatprep.subr.bf16.mxu0 0
    %7864 = vmatpush1.bf16.msra.mxu0 %v7660
    %7865 = vmatprep.subr.bf16.mxu0 0
    %7866 = vmatpush1.bf16.msra.mxu0 %v7661
    %7867 = vmatprep.subr.bf16.mxu0 0
    %7868 = vmatpush1.bf16.msra.mxu0 %v7662
    %7869 = vmatprep.subr.bf16.mxu0 0
    %7870 = vmatpush1.bf16.msra.mxu0 %v7663
    %7871 = vmatprep.subr.bf16.mxu0 0
    %7872 = vmatpush1.bf16.msra.mxu0 %v7664
    %7873 = vmatprep.subr.bf16.mxu0 0
    %7874 = vmatpush1.bf16.msra.mxu0 %v7665
    %7875 = vmatprep.subr.bf16.mxu0 0
    %7876 = vmatpush1.bf16.msra.mxu0 %v7666
    %7877 = vmatprep.subr.bf16.mxu0 0
    %7878 = vmatpush1.bf16.msra.mxu0 %v7667
    %7879 = vmatprep.subr.bf16.mxu0 0
    %7880 = vmatpush1.bf16.msra.mxu0 %v7668
    %7881 = vmatprep.subr.bf16.mxu0 0
    %7882 = vmatpush1.bf16.msra.mxu0 %v7669
    %7883 = vmatprep.subr.bf16.mxu0 0
    %7884 = vmatpush1.bf16.msra.mxu0 %v7670
    %7885 = vmatprep.subr.bf16.mxu0 0
    %7886 = vmatpush1.bf16.msra.mxu0 %v7671
    %7887 = vmatprep.mubr.bf16.mxu0 %v7721
    %7888 = vmatmul.mubr.bf16.gmra.mrb[0].mxu0 %v7720
    %v7889 = vpop.f32.mrb[0].mxu0
    %v7890 = vadd.f32 %v7853, %v7889
    %v7891 = vpop.f32.mrb[0].mxu0
    %v7892 = vpop.f32.mrb[0].mxu0
    %v7893 = vadd.f32 %v7853, %v7892
    %v7894 = vpop.f32.mrb[0].mxu0
    %7895 = vmatprep.mubr.bf16.mxu0 %v7729
    %7896 = vmatmul.mubr.bf16.gmra.mrb[0].mxu0 %v7728
    %v7897 = vpop.f32.mrb[0].mxu0
    %v7898 = vadd.f32 %v7853, %v7897
    %v7899 = vpop.f32.mrb[0].mxu0
    %v7900 = vpop.f32.mrb[0].mxu0
    %v7901 = vadd.f32 %v7853, %v7900
    %v7902 = vpop.f32.mrb[0].mxu0
    %7903 = vmatprep.mubr.bf16.mxu0 %v7737
    %7904 = vmatmul.mubr.bf16.gmra.mrb[0].mxu0 %v7736
    %v7905 = vpop.f32.mrb[0].mxu0
    %v7906 = vadd.f32 %v7853, %v7905
    %v7907 = vpop.f32.mrb[0].mxu0
    %v7908 = vpop.f32.mrb[0].mxu0
    %v7909 = vadd.f32 %v7853, %v7908
    %v7910 = vpop.f32.mrb[0].mxu0
    %7911 = vmatprep.mubr.bf16.mxu0 %v7745
    %7912 = vmatmul.mubr.bf16.gmra.mrb[0].mxu0 %v7744
    %v7913 = vpop.f32.mrb[0].mxu0
    %v7914 = vadd.f32 %v7853, %v7913
    %v7915 = vpop.f32.mrb[0].mxu0
    %v7916 = vpop.f32.mrb[0].mxu0
    %v7917 = vadd.f32 %v7853, %v7916
    %v7918 = vpop.f32.mrb[0].mxu0
    %7919 = vmatprep.mubr.bf16.mxu0 %v7753
    %7920 = vmatmul.mubr.bf16.gmra.mrb[0].mxu0 %v7752
    %v7921 = vpop.f32.mrb[0].mxu0
    %v7922 = vadd.f32 %v7853, %v7921
    %v7923 = vpop.f32.mrb[0].mxu0
    %v7924 = vpop.f32.mrb[0].mxu0
    %v7925 = vadd.f32 %v7853, %v7924
    %v7926 = vpop.f32.mrb[0].mxu0
    %7927 = vmatprep.mubr.bf16.mxu0 %v7761
    %7928 = vmatmul.mubr.bf16.gmra.mrb[0].mxu0 %v7760
    %v7929 = vpop.f32.mrb[0].mxu0
    %v7930 = vadd.f32 %v7853, %v7929
    %v7931 = vpop.f32.mrb[0].mxu0
    %v7932 = vpop.f32.mrb[0].mxu0
    %v7933 = vadd.f32 %v7853, %v7932
    %v7934 = vpop.f32.mrb[0].mxu0
    %7935 = vmatprep.mubr.bf16.mxu0 %v7769
    %7936 = vmatmul.mubr.bf16.gmra.mrb[0].mxu0 %v7768
    %v7937 = vpop.f32.mrb[0].mxu0
    %v7938 = vadd.f32 %v7853, %v7937
    %v7939 = vpop.f32.mrb[0].mxu0
    %v7940 = vpop.f32.mrb[0].mxu0
    %v7941 = vadd.f32 %v7853, %v7940
    %v7942 = vpop.f32.mrb[0].mxu0
    %7943 = vmatprep.mubr.bf16.mxu0 %v7777
    %7944 = vmatmul.mubr.bf16.gmra.mrb[0].mxu0 %v7776
    %v7945 = vpop.f32.mrb[0].mxu0
    %v7946 = vadd.f32 %v7853, %v7945
    %v7947 = vpop.f32.mrb[0].mxu0
    %v7948 = vpop.f32.mrb[0].mxu0
    %v7949 = vadd.f32 %v7853, %v7948
    %v7950 = vpop.f32.mrb[0].mxu0
    %7951 = vmatprep.mubr.bf16.mxu0 %v7785
    %7952 = vmatmul.mubr.bf16.gmra.mrb[0].mxu0 %v7784
    %v7953 = vpop.f32.mrb[0].mxu0
    %v7954 = vadd.f32 %v7853, %v7953
    %v7955 = vpop.f32.mrb[0].mxu0
    %v7956 = vpop.f32.mrb[0].mxu0
    %v7957 = vadd.f32 %v7853, %v7956
    %v7958 = vpop.f32.mrb[0].mxu0
    %7959 = vmatprep.mubr.bf16.mxu0 %v7793
    %7960 = vmatmul.mubr.bf16.gmra.mrb[0].mxu0 %v7792
    %v7961 = vpop.f32.mrb[0].mxu0
    %v7962 = vadd.f32 %v7853, %v7961
    %v7963 = vpop.f32.mrb[0].mxu0
    %v7964 = vpop.f32.mrb[0].mxu0
    %v7965 = vadd.f32 %v7853, %v7964
    %v7966 = vpop.f32.mrb[0].mxu0
    %7967 = vmatprep.mubr.bf16.mxu0 %v7801
    %7968 = vmatmul.mubr.bf16.gmra.mrb[0].mxu0 %v7800
    %v7969 = vpop.f32.mrb[0].mxu0
    %v7970 = vadd.f32 %v7853, %v7969
    %v7971 = vpop.f32.mrb[0].mxu0
    %v7972 = vpop.f32.mrb[0].mxu0
    %v7973 = vadd.f32 %v7853, %v7972
    %v7974 = vpop.f32.mrb[0].mxu0
    %7975 = vmatprep.mubr.bf16.mxu0 %v7809
    %7976 = vmatmul.mubr.bf16.gmra.mrb[0].mxu0 %v7808
    %v7977 = vpop.f32.mrb[0].mxu0
    %v7978 = vadd.f32 %v7853, %v7977
    %v7979 = vpop.f32.mrb[0].mxu0
    %v7980 = vpop.f32.mrb[0].mxu0
    %v7981 = vadd.f32 %v7853, %v7980
    %v7982 = vpop.f32.mrb[0].mxu0
    %7983 = vmatprep.mubr.bf16.mxu0 %v7817
    %7984 = vmatmul.mubr.bf16.gmra.mrb[0].mxu0 %v7816
    %v7985 = vpop.f32.mrb[0].mxu0
    %v7986 = vadd.f32 %v7853, %v7985
    %v7987 = vpop.f32.mrb[0].mxu0
    %v7988 = vpop.f32.mrb[0].mxu0
    %v7989 = vadd.f32 %v7853, %v7988
    %v7990 = vpop.f32.mrb[0].mxu0
    %7991 = vmatprep.mubr.bf16.mxu0 %v7825
    %7992 = vmatmul.mubr.bf16.gmra.mrb[0].mxu0 %v7824
    %v7993 = vpop.f32.mrb[0].mxu0
    %v7994 = vadd.f32 %v7853, %v7993
    %v7995 = vpop.f32.mrb[0].mxu0
    %v7996 = vpop.f32.mrb[0].mxu0
    %v7997 = vadd.f32 %v7853, %v7996
    %v7998 = vpop.f32.mrb[0].mxu0
    %7999 = vmatprep.mubr.bf16.mxu0 %v7833
    %8000 = vmatmul.mubr.bf16.gmra.mrb[0].mxu0 %v7832
    %v8001 = vpop.f32.mrb[0].mxu0
    %v8002 = vadd.f32 %v7853, %v8001
    %v8003 = vpop.f32.mrb[0].mxu0
    %v8004 = vpop.f32.mrb[0].mxu0
    %v8005 = vadd.f32 %v7853, %v8004
    %v8006 = vpop.f32.mrb[0].mxu0
    %8007 = vmatprep.mubr.bf16.mxu0 %v7841
    %8008 = vmatmul.mubr.bf16.gmra.mrb[0].mxu0 %v7840
    %v8009 = vpop.f32.mrb[0].mxu0
    %v8010 = vadd.f32 %v7853, %v8009
    %v8011 = vpop.f32.mrb[0].mxu0
    %v8012 = vpop.f32.mrb[0].mxu0
    %v8013 = vadd.f32 %v7853, %v8012
    %v8014 = vpop.f32.mrb[0].mxu0
    %8015 = vdwg.mxu0
    %8016 = vmatprep.subr.bf16.mxu0 0
    %8017 = vmatpush1.bf16.msra.mxu0 %v7672
    %8018 = vmatprep.subr.bf16.mxu0 0
    %8019 = vmatpush1.bf16.msra.mxu0 %v7673
    %8020 = vmatprep.subr.bf16.mxu0 0
    %8021 = vmatpush1.bf16.msra.mxu0 %v7674
    %8022 = vmatprep.subr.bf16.mxu0 0
    %8023 = vmatpush1.bf16.msra.mxu0 %v7675
    %8024 = vmatprep.subr.bf16.mxu0 0
    %8025 = vmatpush1.bf16.msra.mxu0 %v7676
    %8026 = vmatprep.subr.bf16.mxu0 0
    %8027 = vmatpush1.bf16.msra.mxu0 %v7677
    %8028 = vmatprep.subr.bf16.mxu0 0
    %8029 = vmatpush1.bf16.msra.mxu0 %v7678
    %8030 = vmatprep.subr.bf16.mxu0 0
    %8031 = vmatpush1.bf16.msra.mxu0 %v7679
    %8032 = vmatprep.subr.bf16.mxu0 0
    %8033 = vmatpush1.bf16.msra.mxu0 %v7680
    %8034 = vmatprep.subr.bf16.mxu0 0
    %8035 = vmatpush1.bf16.msra.mxu0 %v7681
    %8036 = vmatprep.subr.bf16.mxu0 0
    %8037 = vmatpush1.bf16.msra.mxu0 %v7682
    %8038 = vmatprep.subr.bf16.mxu0 0
    %8039 = vmatpush1.bf16.msra.mxu0 %v7683
    %8040 = vmatprep.subr.bf16.mxu0 0
    %8041 = vmatpush1.bf16.msra.mxu0 %v7684
    %8042 = vmatprep.subr.bf16.mxu0 0
    %8043 = vmatpush1.bf16.msra.mxu0 %v7685
    %8044 = vmatprep.subr.bf16.mxu0 0
    %8045 = vmatpush1.bf16.msra.mxu0 %v7686
    %8046 = vmatprep.subr.bf16.mxu0 0
    %8047 = vmatpush1.bf16.msra.mxu0 %v7687
    %8048 = vmatprep.mubr.bf16.mxu0 %v7723
    %8049 = vmatmul.mubr.bf16.gmra.mrb[0].mxu0 %v7722
    %v8050 = vpop.f32.mrb[0].mxu0
    %v8051 = vadd.f32 %v7890, %v8050
    %v8052 = vpop.f32.mrb[0].mxu0
    %v8053 = vpop.f32.mrb[0].mxu0
    %v8054 = vadd.f32 %v7893, %v8053
    %v8055 = vpop.f32.mrb[0].mxu0
    %8056 = vmatprep.mubr.bf16.mxu0 %v7731
    %8057 = vmatmul.mubr.bf16.gmra.mrb[0].mxu0 %v7730
    %v8058 = vpop.f32.mrb[0].mxu0
    %v8059 = vadd.f32 %v7898, %v8058
    %v8060 = vpop.f32.mrb[0].mxu0
    %v8061 = vpop.f32.mrb[0].mxu0
    %v8062 = vadd.f32 %v7901, %v8061
    %v8063 = vpop.f32.mrb[0].mxu0
    %8064 = vmatprep.mubr.bf16.mxu0 %v7739
    %8065 = vmatmul.mubr.bf16.gmra.mrb[0].mxu0 %v7738
    %v8066 = vpop.f32.mrb[0].mxu0
    %v8067 = vadd.f32 %v7906, %v8066
    %v8068 = vpop.f32.mrb[0].mxu0
    %v8069 = vpop.f32.mrb[0].mxu0
    %v8070 = vadd.f32 %v7909, %v8069
    %v8071 = vpop.f32.mrb[0].mxu0
    %8072 = vmatprep.mubr.bf16.mxu0 %v7747
    %8073 = vmatmul.mubr.bf16.gmra.mrb[0].mxu0 %v7746
    %v8074 = vpop.f32.mrb[0].mxu0
    %v8075 = vadd.f32 %v7914, %v8074
    %v8076 = vpop.f32.mrb[0].mxu0
    %v8077 = vpop.f32.mrb[0].mxu0
    %v8078 = vadd.f32 %v7917, %v8077
    %v8079 = vpop.f32.mrb[0].mxu0
    %8080 = vmatprep.mubr.bf16.mxu0 %v7755
    %8081 = vmatmul.mubr.bf16.gmra.mrb[0].mxu0 %v7754
    %v8082 = vpop.f32.mrb[0].mxu0
    %v8083 = vadd.f32 %v7922, %v8082
    %v8084 = vpop.f32.mrb[0].mxu0
    %v8085 = vpop.f32.mrb[0].mxu0
    %v8086 = vadd.f32 %v7925, %v8085
    %v8087 = vpop.f32.mrb[0].mxu0
    %8088 = vmatprep.mubr.bf16.mxu0 %v7763
    %8089 = vmatmul.mubr.bf16.gmra.mrb[0].mxu0 %v7762
    %v8090 = vpop.f32.mrb[0].mxu0
    %v8091 = vadd.f32 %v7930, %v8090
    %v8092 = vpop.f32.mrb[0].mxu0
    %v8093 = vpop.f32.mrb[0].mxu0
    %v8094 = vadd.f32 %v7933, %v8093
    %v8095 = vpop.f32.mrb[0].mxu0
    %8096 = vmatprep.mubr.bf16.mxu0 %v7771
    %8097 = vmatmul.mubr.bf16.gmra.mrb[0].mxu0 %v7770
    %v8098 = vpop.f32.mrb[0].mxu0
    %v8099 = vadd.f32 %v7938, %v8098
    %v8100 = vpop.f32.mrb[0].mxu0
    %v8101 = vpop.f32.mrb[0].mxu0
    %v8102 = vadd.f32 %v7941, %v8101
    %v8103 = vpop.f32.mrb[0].mxu0
    %8104 = vmatprep.mubr.bf16.mxu0 %v7779
    %8105 = vmatmul.mubr.bf16.gmra.mrb[0].mxu0 %v7778
    %v8106 = vpop.f32.mrb[0].mxu0
    %v8107 = vadd.f32 %v7946, %v8106
    %v8108 = vpop.f32.mrb[0].mxu0
    %v8109 = vpop.f32.mrb[0].mxu0
    %v8110 = vadd.f32 %v7949, %v8109
    %v8111 = vpop.f32.mrb[0].mxu0
    %8112 = vmatprep.mubr.bf16.mxu0 %v7787
    %8113 = vmatmul.mubr.bf16.gmra.mrb[0].mxu0 %v7786
    %v8114 = vpop.f32.mrb[0].mxu0
    %v8115 = vadd.f32 %v7954, %v8114
    %v8116 = vpop.f32.mrb[0].mxu0
    %v8117 = vpop.f32.mrb[0].mxu0
    %v8118 = vadd.f32 %v7957, %v8117
    %v8119 = vpop.f32.mrb[0].mxu0
    %8120 = vmatprep.mubr.bf16.mxu0 %v7795
    %8121 = vmatmul.mubr.bf16.gmra.mrb[0].mxu0 %v7794
    %v8122 = vpop.f32.mrb[0].mxu0
    %v8123 = vadd.f32 %v7962, %v8122
    %v8124 = vpop.f32.mrb[0].mxu0
    %v8125 = vpop.f32.mrb[0].mxu0
    %v8126 = vadd.f32 %v7965, %v8125
    %v8127 = vpop.f32.mrb[0].mxu0
    %8128 = vmatprep.mubr.bf16.mxu0 %v7803
    %8129 = vmatmul.mubr.bf16.gmra.mrb[0].mxu0 %v7802
    %v8130 = vpop.f32.mrb[0].mxu0
    %v8131 = vadd.f32 %v7970, %v8130
    %v8132 = vpop.f32.mrb[0].mxu0
    %v8133 = vpop.f32.mrb[0].mxu0
    %v8134 = vadd.f32 %v7973, %v8133
    %v8135 = vpop.f32.mrb[0].mxu0
    %8136 = vmatprep.mubr.bf16.mxu0 %v7811
    %8137 = vmatmul.mubr.bf16.gmra.mrb[0].mxu0 %v7810
    %v8138 = vpop.f32.mrb[0].mxu0
    %v8139 = vadd.f32 %v7978, %v8138
    %v8140 = vpop.f32.mrb[0].mxu0
    %v8141 = vpop.f32.mrb[0].mxu0
    %v8142 = vadd.f32 %v7981, %v8141
    %v8143 = vpop.f32.mrb[0].mxu0
    %8144 = vmatprep.mubr.bf16.mxu0 %v7819
    %8145 = vmatmul.mubr.bf16.gmra.mrb[0].mxu0 %v7818
    %v8146 = vpop.f32.mrb[0].mxu0
    %v8147 = vadd.f32 %v7986, %v8146
    %v8148 = vpop.f32.mrb[0].mxu0
    %v8149 = vpop.f32.mrb[0].mxu0
    %v8150 = vadd.f32 %v7989, %v8149
    %v8151 = vpop.f32.mrb[0].mxu0
    %8152 = vmatprep.mubr.bf16.mxu0 %v7827
    %8153 = vmatmul.mubr.bf16.gmra.mrb[0].mxu0 %v7826
    %v8154 = vpop.f32.mrb[0].mxu0
    %v8155 = vadd.f32 %v7994, %v8154
    %v8156 = vpop.f32.mrb[0].mxu0
    %v8157 = vpop.f32.mrb[0].mxu0
    %v8158 = vadd.f32 %v7997, %v8157
    %v8159 = vpop.f32.mrb[0].mxu0
    %8160 = vmatprep.mubr.bf16.mxu0 %v7835
    %8161 = vmatmul.mubr.bf16.gmra.mrb[0].mxu0 %v7834
    %v8162 = vpop.f32.mrb[0].mxu0
    %v8163 = vadd.f32 %v8002, %v8162
    %v8164 = vpop.f32.mrb[0].mxu0
    %v8165 = vpop.f32.mrb[0].mxu0
    %v8166 = vadd.f32 %v8005, %v8165
    %v8167 = vpop.f32.mrb[0].mxu0
    %8168 = vmatprep.mubr.bf16.mxu0 %v7843
    %8169 = vmatmul.mubr.bf16.gmra.mrb[0].mxu0 %v7842
    %v8170 = vpop.f32.mrb[0].mxu0
    %v8171 = vadd.f32 %v8010, %v8170
    %v8172 = vpop.f32.mrb[0].mxu0
    %v8173 = vpop.f32.mrb[0].mxu0
    %v8174 = vadd.f32 %v8013, %v8173
    %v8175 = vpop.f32.mrb[0].mxu0
    %8176 = vdwg.mxu0
    %8177 = vmatprep.subr.bf16.mxu0 0
    %8178 = vmatpush1.bf16.msra.mxu0 %v7688
    %8179 = vmatprep.subr.bf16.mxu0 0
    %8180 = vmatpush1.bf16.msra.mxu0 %v7689
    %8181 = vmatprep.subr.bf16.mxu0 0
    %8182 = vmatpush1.bf16.msra.mxu0 %v7690
    %8183 = vmatprep.subr.bf16.mxu0 0
    %8184 = vmatpush1.bf16.msra.mxu0 %v7691
    %8185 = vmatprep.subr.bf16.mxu0 0
    %8186 = vmatpush1.bf16.msra.mxu0 %v7692
    %8187 = vmatprep.subr.bf16.mxu0 0
    %8188 = vmatpush1.bf16.msra.mxu0 %v7693
    %8189 = vmatprep.subr.bf16.mxu0 0
    %8190 = vmatpush1.bf16.msra.mxu0 %v7694
    %8191 = vmatprep.subr.bf16.mxu0 0
    %8192 = vmatpush1.bf16.msra.mxu0 %v7695
    %8193 = vmatprep.subr.bf16.mxu0 0
    %8194 = vmatpush1.bf16.msra.mxu0 %v7696
    %8195 = vmatprep.subr.bf16.mxu0 0
    %8196 = vmatpush1.bf16.msra.mxu0 %v7697
    %8197 = vmatprep.subr.bf16.mxu0 0
    %8198 = vmatpush1.bf16.msra.mxu0 %v7698
    %8199 = vmatprep.subr.bf16.mxu0 0
    %8200 = vmatpush1.bf16.msra.mxu0 %v7699
    %8201 = vmatprep.subr.bf16.mxu0 0
    %8202 = vmatpush1.bf16.msra.mxu0 %v7700
    %8203 = vmatprep.subr.bf16.mxu0 0
    %8204 = vmatpush1.bf16.msra.mxu0 %v7701
    %8205 = vmatprep.subr.bf16.mxu0 0
    %8206 = vmatpush1.bf16.msra.mxu0 %v7702
    %8207 = vmatprep.subr.bf16.mxu0 0
    %8208 = vmatpush1.bf16.msra.mxu0 %v7703
    %8209 = vmatprep.mubr.bf16.mxu0 %v7725
    %8210 = vmatmul.mubr.bf16.gmra.mrb[0].mxu0 %v7724
    %v8211 = vpop.f32.mrb[0].mxu0
    %v8212 = vadd.f32 %v8051, %v8211
    %v8213 = vpop.f32.mrb[0].mxu0
    %v8214 = vpop.f32.mrb[0].mxu0
    %v8215 = vadd.f32 %v8054, %v8214
    %v8216 = vpop.f32.mrb[0].mxu0
    %8217 = vmatprep.mubr.bf16.mxu0 %v7733
    %8218 = vmatmul.mubr.bf16.gmra.mrb[0].mxu0 %v7732
    %v8219 = vpop.f32.mrb[0].mxu0
    %v8220 = vadd.f32 %v8059, %v8219
    %v8221 = vpop.f32.mrb[0].mxu0
    %v8222 = vpop.f32.mrb[0].mxu0
    %v8223 = vadd.f32 %v8062, %v8222
    %v8224 = vpop.f32.mrb[0].mxu0
    %8225 = vmatprep.mubr.bf16.mxu0 %v7741
    %8226 = vmatmul.mubr.bf16.gmra.mrb[0].mxu0 %v7740
    %v8227 = vpop.f32.mrb[0].mxu0
    %v8228 = vadd.f32 %v8067, %v8227
    %v8229 = vpop.f32.mrb[0].mxu0
    %v8230 = vpop.f32.mrb[0].mxu0
    %v8231 = vadd.f32 %v8070, %v8230
    %v8232 = vpop.f32.mrb[0].mxu0
    %8233 = vmatprep.mubr.bf16.mxu0 %v7749
    %8234 = vmatmul.mubr.bf16.gmra.mrb[0].mxu0 %v7748
    %v8235 = vpop.f32.mrb[0].mxu0
    %v8236 = vadd.f32 %v8075, %v8235
    %v8237 = vpop.f32.mrb[0].mxu0
    %v8238 = vpop.f32.mrb[0].mxu0
    %v8239 = vadd.f32 %v8078, %v8238
    %v8240 = vpop.f32.mrb[0].mxu0
    %8241 = vmatprep.mubr.bf16.mxu0 %v7757
    %8242 = vmatmul.mubr.bf16.gmra.mrb[0].mxu0 %v7756
    %v8243 = vpop.f32.mrb[0].mxu0
    %v8244 = vadd.f32 %v8083, %v8243
    %v8245 = vpop.f32.mrb[0].mxu0
    %v8246 = vpop.f32.mrb[0].mxu0
    %v8247 = vadd.f32 %v8086, %v8246
    %v8248 = vpop.f32.mrb[0].mxu0
    %8249 = vmatprep.mubr.bf16.mxu0 %v7765
    %8250 = vmatmul.mubr.bf16.gmra.mrb[0].mxu0 %v7764
    %v8251 = vpop.f32.mrb[0].mxu0
    %v8252 = vadd.f32 %v8091, %v8251
    %v8253 = vpop.f32.mrb[0].mxu0
    %v8254 = vpop.f32.mrb[0].mxu0
    %v8255 = vadd.f32 %v8094, %v8254
    %v8256 = vpop.f32.mrb[0].mxu0
    %8257 = vmatprep.mubr.bf16.mxu0 %v7773
    %8258 = vmatmul.mubr.bf16.gmra.mrb[0].mxu0 %v7772
    %v8259 = vpop.f32.mrb[0].mxu0
    %v8260 = vadd.f32 %v8099, %v8259
    %v8261 = vpop.f32.mrb[0].mxu0
    %v8262 = vpop.f32.mrb[0].mxu0
    %v8263 = vadd.f32 %v8102, %v8262
    %v8264 = vpop.f32.mrb[0].mxu0
    %8265 = vmatprep.mubr.bf16.mxu0 %v7781
    %8266 = vmatmul.mubr.bf16.gmra.mrb[0].mxu0 %v7780
    %v8267 = vpop.f32.mrb[0].mxu0
    %v8268 = vadd.f32 %v8107, %v8267
    %v8269 = vpop.f32.mrb[0].mxu0
    %v8270 = vpop.f32.mrb[0].mxu0
    %v8271 = vadd.f32 %v8110, %v8270
    %v8272 = vpop.f32.mrb[0].mxu0
    %8273 = vmatprep.mubr.bf16.mxu0 %v7789
    %8274 = vmatmul.mubr.bf16.gmra.mrb[0].mxu0 %v7788
    %v8275 = vpop.f32.mrb[0].mxu0
    %v8276 = vadd.f32 %v8115, %v8275
    %v8277 = vpop.f32.mrb[0].mxu0
    %v8278 = vpop.f32.mrb[0].mxu0
    %v8279 = vadd.f32 %v8118, %v8278
    %v8280 = vpop.f32.mrb[0].mxu0
    %8281 = vmatprep.mubr.bf16.mxu0 %v7797
    %8282 = vmatmul.mubr.bf16.gmra.mrb[0].mxu0 %v7796
    %v8283 = vpop.f32.mrb[0].mxu0
    %v8284 = vadd.f32 %v8123, %v8283
    %v8285 = vpop.f32.mrb[0].mxu0
    %v8286 = vpop.f32.mrb[0].mxu0
    %v8287 = vadd.f32 %v8126, %v8286
    %v8288 = vpop.f32.mrb[0].mxu0
    %8289 = vmatprep.mubr.bf16.mxu0 %v7805
    %8290 = vmatmul.mubr.bf16.gmra.mrb[0].mxu0 %v7804
    %v8291 = vpop.f32.mrb[0].mxu0
    %v8292 = vadd.f32 %v8131, %v8291
    %v8293 = vpop.f32.mrb[0].mxu0
    %v8294 = vpop.f32.mrb[0].mxu0
    %v8295 = vadd.f32 %v8134, %v8294
    %v8296 = vpop.f32.mrb[0].mxu0
    %8297 = vmatprep.mubr.bf16.mxu0 %v7813
    %8298 = vmatmul.mubr.bf16.gmra.mrb[0].mxu0 %v7812
    %v8299 = vpop.f32.mrb[0].mxu0
    %v8300 = vadd.f32 %v8139, %v8299
    %v8301 = vpop.f32.mrb[0].mxu0
    %v8302 = vpop.f32.mrb[0].mxu0
    %v8303 = vadd.f32 %v8142, %v8302
    %v8304 = vpop.f32.mrb[0].mxu0
    %8305 = vmatprep.mubr.bf16.mxu0 %v7821
    %8306 = vmatmul.mubr.bf16.gmra.mrb[0].mxu0 %v7820
    %v8307 = vpop.f32.mrb[0].mxu0
    %v8308 = vadd.f32 %v8147, %v8307
    %v8309 = vpop.f32.mrb[0].mxu0
    %v8310 = vpop.f32.mrb[0].mxu0
    %v8311 = vadd.f32 %v8150, %v8310
    %v8312 = vpop.f32.mrb[0].mxu0
    %8313 = vmatprep.mubr.bf16.mxu0 %v7829
    %8314 = vmatmul.mubr.bf16.gmra.mrb[0].mxu0 %v7828
    %v8315 = vpop.f32.mrb[0].mxu0
    %v8316 = vadd.f32 %v8155, %v8315
    %v8317 = vpop.f32.mrb[0].mxu0
    %v8318 = vpop.f32.mrb[0].mxu0
    %v8319 = vadd.f32 %v8158, %v8318
    %v8320 = vpop.f32.mrb[0].mxu0
    %8321 = vmatprep.mubr.bf16.mxu0 %v7837
    %8322 = vmatmul.mubr.bf16.gmra.mrb[0].mxu0 %v7836
    %v8323 = vpop.f32.mrb[0].mxu0
    %v8324 = vadd.f32 %v8163, %v8323
    %v8325 = vpop.f32.mrb[0].mxu0
    %v8326 = vpop.f32.mrb[0].mxu0
    %v8327 = vadd.f32 %v8166, %v8326
    %v8328 = vpop.f32.mrb[0].mxu0
    %8329 = vmatprep.mubr.bf16.mxu0 %v7845
    %8330 = vmatmul.mubr.bf16.gmra.mrb[0].mxu0 %v7844
    %v8331 = vpop.f32.mrb[0].mxu0
    %v8332 = vadd.f32 %v8171, %v8331
    %v8333 = vpop.f32.mrb[0].mxu0
    %v8334 = vpop.f32.mrb[0].mxu0
    %v8335 = vadd.f32 %v8174, %v8334
    %v8336 = vpop.f32.mrb[0].mxu0
    %8337 = vdwg.mxu0
    %8338 = vmatprep.subr.bf16.mxu0 0
    %8339 = vmatpush1.bf16.msra.mxu0 %v7704
    %8340 = vmatprep.subr.bf16.mxu0 0
    %8341 = vmatpush1.bf16.msra.mxu0 %v7705
    %8342 = vmatprep.subr.bf16.mxu0 0
    %8343 = vmatpush1.bf16.msra.mxu0 %v7706
    %8344 = vmatprep.subr.bf16.mxu0 0
    %8345 = vmatpush1.bf16.msra.mxu0 %v7707
    %8346 = vmatprep.subr.bf16.mxu0 0
    %8347 = vmatpush1.bf16.msra.mxu0 %v7708
    %8348 = vmatprep.subr.bf16.mxu0 0
    %8349 = vmatpush1.bf16.msra.mxu0 %v7709
    %8350 = vmatprep.subr.bf16.mxu0 0
    %8351 = vmatpush1.bf16.msra.mxu0 %v7710
    %8352 = vmatprep.subr.bf16.mxu0 0
    %8353 = vmatpush1.bf16.msra.mxu0 %v7711
    %8354 = vmatprep.subr.bf16.mxu0 0
    %8355 = vmatpush1.bf16.msra.mxu0 %v7712
    %8356 = vmatprep.subr.bf16.mxu0 0
    %8357 = vmatpush1.bf16.msra.mxu0 %v7713
    %8358 = vmatprep.subr.bf16.mxu0 0
    %8359 = vmatpush1.bf16.msra.mxu0 %v7714
    %8360 = vmatprep.subr.bf16.mxu0 0
    %8361 = vmatpush1.bf16.msra.mxu0 %v7715
    %8362 = vmatprep.subr.bf16.mxu0 0
    %8363 = vmatpush1.bf16.msra.mxu0 %v7716
    %8364 = vmatprep.subr.bf16.mxu0 0
    %8365 = vmatpush1.bf16.msra.mxu0 %v7717
    %8366 = vmatprep.subr.bf16.mxu0 0
    %8367 = vmatpush1.bf16.msra.mxu0 %v7718
    %8368 = vmatprep.subr.bf16.mxu0 0
    %8369 = vmatpush1.bf16.msra.mxu0 %v7719
    %8370 = vmatprep.mubr.bf16.mxu0 %v7727
    %8371 = vmatmul.mubr.bf16.gmra.mrb[0].mxu0 %v7726
    %v8372 = vpop.f32.mrb[0].mxu0
    %v8373 = vadd.f32 %v8212, %v8372
    %v8374 = vpop.f32.mrb[0].mxu0
    %v8375 = vpop.f32.mrb[0].mxu0
    %v8376 = vadd.f32 %v8215, %v8375
    %v8377 = vpop.f32.mrb[0].mxu0
    %8378 = vmatprep.mubr.bf16.mxu0 %v7735
    %8379 = vmatmul.mubr.bf16.gmra.mrb[0].mxu0 %v7734
    %v8380 = vpop.f32.mrb[0].mxu0
    %v8381 = vadd.f32 %v8220, %v8380
    %v8382 = vpop.f32.mrb[0].mxu0
    %v8383 = vpop.f32.mrb[0].mxu0
    %v8384 = vadd.f32 %v8223, %v8383
    %v8385 = vpop.f32.mrb[0].mxu0
    %8386 = vmatprep.mubr.bf16.mxu0 %v7743
    %8387 = vmatmul.mubr.bf16.gmra.mrb[0].mxu0 %v7742
    %v8388 = vpop.f32.mrb[0].mxu0
    %v8389 = vadd.f32 %v8228, %v8388
    %v8390 = vpop.f32.mrb[0].mxu0
    %v8391 = vpop.f32.mrb[0].mxu0
    %v8392 = vadd.f32 %v8231, %v8391
    %v8393 = vpop.f32.mrb[0].mxu0
    %8394 = vmatprep.mubr.bf16.mxu0 %v7751
    %8395 = vmatmul.mubr.bf16.gmra.mrb[0].mxu0 %v7750
    %v8396 = vpop.f32.mrb[0].mxu0
    %v8397 = vadd.f32 %v8236, %v8396
    %v8398 = vpop.f32.mrb[0].mxu0
    %v8399 = vpop.f32.mrb[0].mxu0
    %v8400 = vadd.f32 %v8239, %v8399
    %v8401 = vpop.f32.mrb[0].mxu0
    %8402 = vmatprep.mubr.bf16.mxu0 %v7759
    %8403 = vmatmul.mubr.bf16.gmra.mrb[0].mxu0 %v7758
    %v8404 = vpop.f32.mrb[0].mxu0
    %v8405 = vadd.f32 %v8244, %v8404
    %v8406 = vpop.f32.mrb[0].mxu0
    %v8407 = vpop.f32.mrb[0].mxu0
    %v8408 = vadd.f32 %v8247, %v8407
    %v8409 = vpop.f32.mrb[0].mxu0
    %8410 = vmatprep.mubr.bf16.mxu0 %v7767
    %8411 = vmatmul.mubr.bf16.gmra.mrb[0].mxu0 %v7766
    %v8412 = vpop.f32.mrb[0].mxu0
    %v8413 = vadd.f32 %v8252, %v8412
    %v8414 = vpop.f32.mrb[0].mxu0
    %v8415 = vpop.f32.mrb[0].mxu0
    %v8416 = vadd.f32 %v8255, %v8415
    %v8417 = vpop.f32.mrb[0].mxu0
    %8418 = vmatprep.mubr.bf16.mxu0 %v7775
    %8419 = vmatmul.mubr.bf16.gmra.mrb[0].mxu0 %v7774
    %v8420 = vpop.f32.mrb[0].mxu0
    %v8421 = vadd.f32 %v8260, %v8420
    %v8422 = vpop.f32.mrb[0].mxu0
    %v8423 = vpop.f32.mrb[0].mxu0
    %v8424 = vadd.f32 %v8263, %v8423
    %v8425 = vpop.f32.mrb[0].mxu0
    %8426 = vmatprep.mubr.bf16.mxu0 %v7783
    %8427 = vmatmul.mubr.bf16.gmra.mrb[0].mxu0 %v7782
    %v8428 = vpop.f32.mrb[0].mxu0
    %v8429 = vadd.f32 %v8268, %v8428
    %v8430 = vpop.f32.mrb[0].mxu0
    %v8431 = vpop.f32.mrb[0].mxu0
    %v8432 = vadd.f32 %v8271, %v8431
    %v8433 = vpop.f32.mrb[0].mxu0
    %8434 = vmatprep.mubr.bf16.mxu0 %v7791
    %8435 = vmatmul.mubr.bf16.gmra.mrb[0].mxu0 %v7790
    %v8436 = vpop.f32.mrb[0].mxu0
    %v8437 = vadd.f32 %v8276, %v8436
    %v8438 = vpop.f32.mrb[0].mxu0
    %v8439 = vpop.f32.mrb[0].mxu0
    %v8440 = vadd.f32 %v8279, %v8439
    %v8441 = vpop.f32.mrb[0].mxu0
    %8442 = vmatprep.mubr.bf16.mxu0 %v7799
    %8443 = vmatmul.mubr.bf16.gmra.mrb[0].mxu0 %v7798
    %v8444 = vpop.f32.mrb[0].mxu0
    %v8445 = vadd.f32 %v8284, %v8444
    %v8446 = vpop.f32.mrb[0].mxu0
    %v8447 = vpop.f32.mrb[0].mxu0
    %v8448 = vadd.f32 %v8287, %v8447
    %v8449 = vpop.f32.mrb[0].mxu0
    %8450 = vmatprep.mubr.bf16.mxu0 %v7807
    %8451 = vmatmul.mubr.bf16.gmra.mrb[0].mxu0 %v7806
    %v8452 = vpop.f32.mrb[0].mxu0
    %v8453 = vadd.f32 %v8292, %v8452
    %v8454 = vpop.f32.mrb[0].mxu0
    %v8455 = vpop.f32.mrb[0].mxu0
    %v8456 = vadd.f32 %v8295, %v8455
    %v8457 = vpop.f32.mrb[0].mxu0
    %8458 = vmatprep.mubr.bf16.mxu0 %v7815
    %8459 = vmatmul.mubr.bf16.gmra.mrb[0].mxu0 %v7814
    %v8460 = vpop.f32.mrb[0].mxu0
    %v8461 = vadd.f32 %v8300, %v8460
    %v8462 = vpop.f32.mrb[0].mxu0
    %v8463 = vpop.f32.mrb[0].mxu0
    %v8464 = vadd.f32 %v8303, %v8463
    %v8465 = vpop.f32.mrb[0].mxu0
    %8466 = vmatprep.mubr.bf16.mxu0 %v7823
    %8467 = vmatmul.mubr.bf16.gmra.mrb[0].mxu0 %v7822
    %v8468 = vpop.f32.mrb[0].mxu0
    %v8469 = vadd.f32 %v8308, %v8468
    %v8470 = vpop.f32.mrb[0].mxu0
    %v8471 = vpop.f32.mrb[0].mxu0
    %v8472 = vadd.f32 %v8311, %v8471
    %v8473 = vpop.f32.mrb[0].mxu0
    %8474 = vmatprep.mubr.bf16.mxu0 %v7831
    %8475 = vmatmul.mubr.bf16.gmra.mrb[0].mxu0 %v7830
    %v8476 = vpop.f32.mrb[0].mxu0
    %v8477 = vadd.f32 %v8316, %v8476
    %v8478 = vpop.f32.mrb[0].mxu0
    %v8479 = vpop.f32.mrb[0].mxu0
    %v8480 = vadd.f32 %v8319, %v8479
    %v8481 = vpop.f32.mrb[0].mxu0
    %8482 = vmatprep.mubr.bf16.mxu0 %v7839
    %8483 = vmatmul.mubr.bf16.gmra.mrb[0].mxu0 %v7838
    %v8484 = vpop.f32.mrb[0].mxu0
    %v8485 = vadd.f32 %v8324, %v8484
    %v8486 = vpop.f32.mrb[0].mxu0
    %v8487 = vpop.f32.mrb[0].mxu0
    %v8488 = vadd.f32 %v8327, %v8487
    %v8489 = vpop.f32.mrb[0].mxu0
    %8490 = vmatprep.mubr.bf16.mxu0 %v7847
    %8491 = vmatmul.mubr.bf16.gmra.mrb[0].mxu0 %v7846
    %v8492 = vpop.f32.mrb[0].mxu0
    %v8493 = vadd.f32 %v8332, %v8492
    %v8494 = vpop.f32.mrb[0].mxu0
    %v8495 = vpop.f32.mrb[0].mxu0
    %v8496 = vadd.f32 %v8335, %v8495
    %v8497 = vpop.f32.mrb[0].mxu0
    %8498 = vdwg.mxu0
    %v8499 = vtanh.pop %v8373
    %v8500 = vtanh.pop %v8376
    %v8501 = vtanh.pop %v8381
    %v8502 = vtanh.pop %v8384
    %v8503 = vtanh.pop %v8389
    %v8504 = vtanh.pop %v8392
    %v8505 = vtanh.pop %v8397
    %v8506 = vtanh.pop %v8400
    %v8507 = vtanh.pop %v8405
    %v8508 = vtanh.pop %v8408
    %v8509 = vtanh.pop %v8413
    %v8510 = vtanh.pop %v8416
    %v8511 = vtanh.pop %v8421
    %v8512 = vtanh.pop %v8424
    %v8513 = vtanh.pop %v8429
    %v8514 = vtanh.pop %v8432
    %v8515 = vtanh.pop %v8437
    %v8516 = vtanh.pop %v8440
    %v8517 = vtanh.pop %v8445
    %v8518 = vtanh.pop %v8448
    %v8519 = vtanh.pop %v8453
    %v8520 = vtanh.pop %v8456
    %v8521 = vtanh.pop %v8461
    %v8522 = vtanh.pop %v8464
    %v8523 = vtanh.pop %v8469
    %v8524 = vtanh.pop %v8472
    %v8525 = vtanh.pop %v8477
    %v8526 = vtanh.pop %v8480
    %v8527 = vtanh.pop %v8485
    %v8528 = vtanh.pop %v8488
    %v8529 = vtanh.pop %v8493
    %v8530 = vtanh.pop %v8496
    %vm8531 = vcmask 523264
    %8532 = vst.msk [vmem:[%s14] sm:$0xff] %vm8531, %v8499
    %8533 = vst.msk [vmem:[%s14 + $0x8] sm:$0xff] %vm8531, %v8500
    %8534 = vst.msk [vmem:[%s14 + $0x10] sm:$0xff] %vm8531, %v8501
    %8535 = vst.msk [vmem:[%s14 + $0x18] sm:$0xff] %vm8531, %v8502
    %8536 = vst.msk [vmem:[%s14 + $0x20] sm:$0xff] %vm8531, %v8503
    %8537 = vst.msk [vmem:[%s14 + $0x28] sm:$0xff] %vm8531, %v8504
    %8538 = vst.msk [vmem:[%s14 + $0x30] sm:$0xff] %vm8531, %v8505
    %8539 = vst.msk [vmem:[%s14 + $0x38] sm:$0xff] %vm8531, %v8506
    %8540 = vst.msk [vmem:[%s14 + $0x40] sm:$0xff] %vm8531, %v8507
    %8541 = vst.msk [vmem:[%s14 + $0x48] sm:$0xff] %vm8531, %v8508
    %8542 = vst.msk [vmem:[%s14 + $0x50] sm:$0xff] %vm8531, %v8509
    %8543 = vst.msk [vmem:[%s14 + $0x58] sm:$0xff] %vm8531, %v8510
    %8544 = vst.msk [vmem:[%s14 + $0x60] sm:$0xff] %vm8531, %v8511
    %8545 = vst.msk [vmem:[%s14 + $0x68] sm:$0xff] %vm8531, %v8512
    %8546 = vst.msk [vmem:[%s14 + $0x70] sm:$0xff] %vm8531, %v8513
    %8547 = vst.msk [vmem:[%s14 + $0x78] sm:$0xff] %vm8531, %v8514
    %8548 = vst.msk [vmem:[%s14 + $0x80] sm:$0xff] %vm8531, %v8515
    %8549 = vst.msk [vmem:[%s14 + $0x88] sm:$0xff] %vm8531, %v8516
    %8550 = vst.msk [vmem:[%s14 + $0x90] sm:$0xff] %vm8531, %v8517
    %8551 = vst.msk [vmem:[%s14 + $0x98] sm:$0xff] %vm8531, %v8518
    %8552 = vst.msk [vmem:[%s14 + $0xa0] sm:$0xff] %vm8531, %v8519
    %8553 = vst.msk [vmem:[%s14 + $0xa8] sm:$0xff] %vm8531, %v8520
    %8554 = vst.msk [vmem:[%s14 + $0xb0] sm:$0xff] %vm8531, %v8521
    %8555 = vst.msk [vmem:[%s14 + $0xb8] sm:$0xff] %vm8531, %v8522
    %8556 = vst.msk [vmem:[%s14 + $0xc0] sm:$0xff] %vm8531, %v8523
    %8557 = vst.msk [vmem:[%s14 + $0xc8] sm:$0xff] %vm8531, %v8524
    %8558 = vst.msk [vmem:[%s14 + $0xd0] sm:$0xff] %vm8531, %v8525
    %8559 = vst.msk [vmem:[%s14 + $0xd8] sm:$0xff] %vm8531, %v8526
    %8560 = vst.msk [vmem:[%s14 + $0xe0] sm:$0xff] %vm8531, %v8527
    %8561 = vst.msk [vmem:[%s14 + $0xe8] sm:$0xff] %vm8531, %v8528
    %8562 = vst.msk [vmem:[%s14 + $0xf0] sm:$0xff] %vm8531, %v8529
    %8563 = vst.msk [vmem:[%s14 + $0xf8] sm:$0xff] %vm8531, %v8530
    // Predicated region
    $region150: #{generator_forward.1} parent=1 // pred_check
      _
    $region151: #{generator_forward.1} parent=1 // pred_check_branch
      %8565 = sbr.rel (0) target = $region153
    $region152: #{generator_forward.1} parent=1 // pred_region
      _
    $region153: #{generator_forward.1} parent=1 // pred_fallthru
      _
    // Predicated region
    $region154: #{generator_forward.1} parent=1 // pred_check
      _
    $region155: #{generator_forward.1} parent=1 // pred_check_branch
      %8567 = sbr.rel (0) target = $region157
    $region156: #{generator_forward.1} parent=1 // pred_region
      _
    $region157: #{generator_forward.1} parent=1 // pred_fallthru
      _
  %8568 = vsyncmov [#allocation6]
  %s8569 = vpop.sfrf %8568
  %p8570 = scmp.eq.s32.totalorder %s8569, 0
  %p8571 = pneg %p8570
  %8573 = shalt.err (%p8571)
  %s8574 = scalar_lea.sflag [#allocation6], 1
  %8575 = vsyncmov %s8574
  %s8576 = vpop.sfrf %8575
  %p8577 = scmp.eq.s32.totalorder %s8576, 0
  %p8578 = pneg %p8577
  %8580 = shalt.err (%p8578)
  %s8581 = scalar_lea.sflag [#allocation6], 2
  %8582 = vsyncmov %s8581
  %s8583 = vpop.sfrf %8582
  %p8584 = scmp.eq.s32.totalorder %s8583, 0
  %p8585 = pneg %p8584
  %8587 = shalt.err (%p8585)
  %s8588 = scalar_lea.sflag [#allocation6], 3
  %8589 = vsyncmov %s8588
  %s8590 = vpop.sfrf %8589
  %p8591 = scmp.eq.s32.totalorder %s8590, 0
  %p8592 = pneg %p8591
  %8594 = shalt.err (%p8592)

</llo_original>
